<compile_context>
chip_gen: v5e
topology: v5e:2x2
jax: 0.10.0
libtpu: 0.0.40
codegen_flags: <defaults>
</compile_context>

<pallas_src>
import jax
import jax.numpy as jnp
from jax import lax
from jax.experimental import pallas as pl
from jax.experimental.pallas import tpu as pltpu

# Model hyper-parameters (PyTorch module defaults).
OUTPUT_DIM = 32          # conv output channels
KERNEL_SIZE = 5
EMBEDDING_SIZE = 256
IN_H, IN_W = 10, 128     # module implies (N, 1, 10, 128) inputs
CONV_H = IN_H - (KERNEL_SIZE - 1)    # 6
CONV_W = IN_W - (KERNEL_SIZE - 1)    # 124
POOL_H = CONV_H // 2                 # 3  (= s1)
POOL_W = CONV_W // 2                 # 62 (= s2)
FLAT = OUTPUT_DIM * POOL_H * POOL_W  # 5952

SB = 4                               # samples packed per conv grid step
LANES = SB * OUTPUT_DIM              # 4 * 32 = 128 -> lane-dense vregs
HEAD_TM_MAX = 128                    # max batch rows per head grid step


def _prelu(x, a):
    return jnp.maximum(x, 0.0) + a * jnp.minimum(x, 0.0)


# ---------------------------------------------------------------------------
# Kernel 1: Conv2d(1, 32, 5) + PReLU + MaxPool2d(2, 2)
#           (SB = 4 samples per grid step, lane = slot*32 + channel)
# ---------------------------------------------------------------------------
def conv_pool_kernel(a1_ref, xe_ref, xo_ref, w_ref, b_ref, o_ref):
    a1 = a1_ref[0]                        # PReLU slope (SMEM scalar)
    wv = w_ref[...]                       # (5, 5, 128)
    bias = b_ref[...]                     # (1, 1, 128)
    # Pre-slice the 25 weight rows once; reused by both output-column parities.
    wrow = [[wv[kh, kw, :] for kw in range(KERNEL_SIZE)]
            for kh in range(KERNEL_SIZE)]

    pooled = [None] * POOL_H              # per pooled-H row: (62, 128) f32
    for p in range(2):                    # parity of the conv-output column
        acc = None
        for kh in range(KERNEL_SIZE):
            for kw in range(KERNEL_SIZE):
                src_ref = xe_ref if (p + kw) % 2 == 0 else xo_ref
                off = (p + kw) // 2
                patch = src_ref[kh:kh + CONV_H, off:off + POOL_W, :]  # (6,62,128)
                term = patch * wrow[kh][kw]
                acc = term if acc is None else acc + term
        acc = _prelu(acc + bias, a1)      # bias + PReLU before pooling (as in module)
        for r in range(POOL_H):           # max-pool over H row pairs
            hp = jnp.maximum(acc[2 * r], acc[2 * r + 1])              # (62, 128)
            # W-pooling is the max across the two parities.
            pooled[r] = hp if p == 0 else jnp.maximum(pooled[r], hp)

    for r in range(POOL_H):
        o_ref[r, :, :] = pooled[r].astype(o_ref.dtype)


# ---------------------------------------------------------------------------
# Kernel 2: Flatten -> Linear(5952, 256) -> PReLU -> Linear(256, 2)
#           (bf16 GEMM, f32 accumulation, tiled over batch rows)
# ---------------------------------------------------------------------------
def mlp_head_kernel(a2_ref, x_ref, w1_ref, b1_ref, w2_ref, b2_ref, o_ref):
    h = jnp.dot(x_ref[...], w1_ref[...], preferred_element_type=jnp.float32)
    h = _prelu(h + b1_ref[...], a2_ref[0])
    o_ref[...] = jnp.dot(h, w2_ref[...],
                         preferred_element_type=jnp.float32) + b2_ref[...]


# ---------------------------------------------------------------------------
# One-time parameter layout / dtype preparation (run ONCE, outside forward)
# ---------------------------------------------------------------------------
def prepare_params(params):
    """Permute / transpose / retile / cast the PyTorch-layout params once."""
    # Conv weight (32, 1, 5, 5) -> (kh, kw, Cout) = (5, 5, 32), tiled x SB
    # along lanes so it matches the packed lane layout (slot*32 + channel).
    w_conv = jnp.transpose(params["w_conv"][:, 0], (1, 2, 0))
    w_conv = jnp.tile(w_conv, (1, 1, SB))                       # (5, 5, 128)
    b_conv = jnp.tile(params["b_conv"], SB).reshape(1, 1, LANES)

    # w1 is (256, 5952) with NCHW-flatten columns (c*186 + h*62 + w).
    # Permute its columns to the kernel's (h, w, c) flatten order, transpose
    # once to (FLAT, 256), and cast to bf16 (MXU-native; halves the HBM read).
    w1 = params["w1"].reshape(EMBEDDING_SIZE, OUTPUT_DIM, POOL_H, POOL_W)
    w1 = jnp.transpose(w1, (0, 2, 3, 1)).reshape(EMBEDDING_SIZE, FLAT)
    w1 = jnp.asarray(w1.T, dtype=jnp.bfloat16)                  # (FLAT, 256)

    return {
        "a1": params["a1"],
        "a2": params["a2"],
        "w_conv": w_conv,
        "b_conv": b_conv,
        "w1": w1,
        "b1": params["b1"].reshape(1, EMBEDDING_SIZE),
        "w2": jnp.asarray(params["w2"].T, jnp.float32),         # (256, 2)
        "b2": params["b2"].reshape(1, 2),
    }


# ---------------------------------------------------------------------------
# Forward wrapper (input-dependent glue only)
# ---------------------------------------------------------------------------
def embedding_net_vggish_small(x, prep):
    """x: (N, 1, 10, 128) float32 (NCHW). prep: prepare_params(...). -> (N, 2)."""
    n = x.shape[0]
    assert x.shape[1:] == (1, IN_H, IN_W)

    # Batch padding: conv packs SB samples/step; the head tiles tm rows/step.
    n_pad = -(-n // SB) * SB
    if n_pad > HEAD_TM_MAX:
        tm = HEAD_TM_MAX
        n_pad = -(-n_pad // tm) * tm
    else:
        tm = n_pad
    nb = n_pad // SB
    grid_m = n_pad // tm

    x2 = x[:, 0]                                   # (n, 10, 128)
    if n_pad != n:
        x2 = jnp.pad(x2, ((0, n_pad - n), (0, 0), (0, 0)))

    # Even/odd column split + lane packing: (nb, 10, 64, SB) broadcast x32
    # along the lane axis so lane = slot*32 + channel.
    def pack(a):
        a = a.reshape(nb, SB, IN_H, IN_W // 2)
        a = jnp.transpose(a, (0, 2, 3, 1))          # (nb, 10, 64, SB)
        return jnp.repeat(a, OUTPUT_DIM, axis=-1)   # (nb, 10, 64, 128)

    xe = pack(x2[:, :, 0::2])
    xo = pack(x2[:, :, 1::2])

    pooled = pl.pallas_call(
        conv_pool_kernel,
        out_shape=jax.ShapeDtypeStruct((nb, POOL_H, POOL_W, LANES),
                                       jnp.bfloat16),
        grid=(nb,),
        in_specs=[
            pl.BlockSpec(memory_space=pltpu.MemorySpace.SMEM),            # a1
            pl.BlockSpec((None, IN_H, IN_W // 2, LANES),
                         lambda i: (i, 0, 0, 0)),
            pl.BlockSpec((None, IN_H, IN_W // 2, LANES),
                         lambda i: (i, 0, 0, 0)),
            pl.BlockSpec((KERNEL_SIZE, KERNEL_SIZE, LANES),
                         lambda i: (0, 0, 0)),
            pl.BlockSpec((1, 1, LANES), lambda i: (0, 0, 0)),
        ],
        out_specs=pl.BlockSpec((None, POOL_H, POOL_W, LANES),
                               lambda i: (i, 0, 0, 0)),
        compiler_params=pltpu.CompilerParams(
            dimension_semantics=("parallel",)),
    )(prep["a1"], xe, xo, prep["w_conv"], prep["b_conv"])

    # Unpack the 4 lane-packed samples back to per-sample rows in (h, w, c)
    # order (w1's rows were permuted once in prepare_params to match); bf16.
    flat = pooled.reshape(nb, POOL_H, POOL_W, SB, OUTPUT_DIM)
    flat = jnp.transpose(flat, (0, 3, 1, 2, 4)).reshape(n_pad, FLAT)
    # TODO(synk): nn.Dropout(p=0.5) is the identity in eval mode; training-mode
    # stochastic masking is not implemented.

    out = pl.pallas_call(
        mlp_head_kernel,
        out_shape=jax.ShapeDtypeStruct((n_pad, 2), jnp.float32),
        grid=(grid_m,),
        in_specs=[
            pl.BlockSpec(memory_space=pltpu.MemorySpace.SMEM),            # a2
            pl.BlockSpec((tm, FLAT), lambda i: (i, 0)),
            pl.BlockSpec((FLAT, EMBEDDING_SIZE), lambda i: (0, 0)),  # resident
            pl.BlockSpec((1, EMBEDDING_SIZE), lambda i: (0, 0)),
            pl.BlockSpec((EMBEDDING_SIZE, 2), lambda i: (0, 0)),
            pl.BlockSpec((1, 2), lambda i: (0, 0)),
        ],
        out_specs=pl.BlockSpec((tm, 2), lambda i: (i, 0)),
        compiler_params=pltpu.CompilerParams(
            dimension_semantics=("parallel",),
            vmem_limit_bytes=32 * 1024 * 1024),
    )(prep["a2"], flat, prep["w1"], prep["b1"], prep["w2"], prep["b2"])
    return out[:n]


# ---------------------------------------------------------------------------
# Deterministic parameter init (shapes match the PyTorch module)
# ---------------------------------------------------------------------------
def init_params(key):
    ks = jax.random.split(key, 6)
    return {
        "w_conv": 0.1 * jax.random.normal(
            ks[0], (OUTPUT_DIM, 1, KERNEL_SIZE, KERNEL_SIZE), jnp.float32),
        "b_conv": 0.1 * jax.random.normal(ks[1], (OUTPUT_DIM,), jnp.float32),
        "a1": jnp.array([0.25], jnp.float32),        # nn.PReLU() default
        "w1": 0.01 * jax.random.normal(
            ks[2], (EMBEDDING_SIZE, FLAT), jnp.float32),
        "b1": 0.01 * jax.random.normal(ks[3], (EMBEDDING_SIZE,), jnp.float32),
        "a2": jnp.array([0.25], jnp.float32),        # nn.PReLU() default
        "w2": 0.1 * jax.random.normal(ks[4], (2, EMBEDDING_SIZE), jnp.float32),
        "b2": 0.1 * jax.random.normal(ks[5], (2,), jnp.float32),
    }


# Pure-JAX reference mirroring the PyTorch forward (eval mode).
def reference_forward(x, params):
    y = lax.conv_general_dilated(
        x, params["w_conv"], window_strides=(1, 1), padding="VALID",
        dimension_numbers=("NCHW", "OIHW", "NCHW"))
    y = y + params["b_conv"].reshape(1, -1, 1, 1)
    y = _prelu(y, params["a1"][0])
    y = lax.reduce_window(y, -jnp.inf, lax.max,
                          window_dimensions=(1, 1, 2, 2),
                          window_strides=(1, 1, 2, 2), padding="VALID")
    flat = y.reshape(x.shape[0], -1)
    h = _prelu(flat @ params["w1"].T + params["b1"], params["a2"][0])
    return h @ params["w2"].T + params["b2"]


if __name__ == "__main__":
    key = jax.random.PRNGKey(0)
    pkey, xkey = jax.random.split(key)
    params = init_params(pkey)
    prep = prepare_params(params)          # one-time weight layout / dtype prep
    x = jax.random.normal(xkey, (2, 1, IN_H, IN_W), jnp.float32)

    fwd = jax.jit(embedding_net_vggish_small)
    out = jax.block_until_ready(fwd(x, prep))
    ref = jax.block_until_ready(reference_forward(x, params))

    assert out.shape == (2, 2)
    assert jnp.allclose(out, ref, rtol=5e-2, atol=5e-2)
    print("KERNEL_OK")
</pallas_src>

<mosaic_0001>
module attributes {stable_mosaic.version = 11 : i64} {
  func.func @conv_pool_kernel(%arg0: i32, %arg1: memref<1xf32, #tpu.memory_space<smem>>, %arg2: memref<1x10x64x128xf32, #tpu.memory_space<vmem>>, %arg3: memref<1x10x64x128xf32, #tpu.memory_space<vmem>>, %arg4: memref<5x5x128xf32, #tpu.memory_space<vmem>>, %arg5: memref<1x1x128xf32, #tpu.memory_space<vmem>>, %arg6: memref<1x3x62x128xbf16, #tpu.memory_space<vmem>>) attributes {dimension_semantics = [#tpu.dimension_semantics<parallel>], iteration_bounds = array<i64: 1>, scalar_prefetch = 0 : i64, scratch_operands = 0 : i64, tpu.core_type = #tpu.core_type<tc>, window_params = [{transform_indices = @transform_0, window_bounds = array<i64: 1>}, {transform_indices = @transform_1, window_bounds = array<i64: 1, 10, 64, 128>}, {transform_indices = @transform_2, window_bounds = array<i64: 1, 10, 64, 128>}, {pipeline_mode = #tpu.pipeline_mode<synchronous>, transform_indices = @transform_3, window_bounds = array<i64: 5, 5, 128>}, {pipeline_mode = #tpu.pipeline_mode<synchronous>, transform_indices = @transform_4, window_bounds = array<i64: 1, 1, 128>}, {transform_indices = @transform_5, window_bounds = array<i64: 1, 3, 62, 128>}]} {
    %c0 = arith.constant 0 : index
    %0 = memref.load %arg1[%c0] : memref<1xf32, #tpu.memory_space<smem>>
    %c0_0 = arith.constant 0 : index
    %c0_1 = arith.constant 0 : index
    %c0_2 = arith.constant 0 : index
    %1 = vector.load %arg4[%c0_0, %c0_1, %c0_2] : memref<5x5x128xf32, #tpu.memory_space<vmem>>, vector<5x5x128xf32>
    %c0_3 = arith.constant 0 : index
    %c0_4 = arith.constant 0 : index
    %c0_5 = arith.constant 0 : index
    %2 = vector.load %arg5[%c0_3, %c0_4, %c0_5] : memref<1x1x128xf32, #tpu.memory_space<vmem>>, vector<1x1x128xf32>
    %3 = vector.extract_strided_slice %1 {offsets = [0, 0, 0], sizes = [1, 1, 128], strides = [1, 1, 1]} : vector<5x5x128xf32> to vector<1x1x128xf32>
    %4 = vector.shape_cast %3 : vector<1x1x128xf32> to vector<128xf32>
    %5 = vector.extract_strided_slice %1 {offsets = [0, 1, 0], sizes = [1, 1, 128], strides = [1, 1, 1]} : vector<5x5x128xf32> to vector<1x1x128xf32>
    %6 = vector.shape_cast %5 : vector<1x1x128xf32> to vector<128xf32>
    %7 = vector.extract_strided_slice %1 {offsets = [0, 2, 0], sizes = [1, 1, 128], strides = [1, 1, 1]} : vector<5x5x128xf32> to vector<1x1x128xf32>
    %8 = vector.shape_cast %7 : vector<1x1x128xf32> to vector<128xf32>
    %9 = vector.extract_strided_slice %1 {offsets = [0, 3, 0], sizes = [1, 1, 128], strides = [1, 1, 1]} : vector<5x5x128xf32> to vector<1x1x128xf32>
    %10 = vector.shape_cast %9 : vector<1x1x128xf32> to vector<128xf32>
    %11 = vector.extract_strided_slice %1 {offsets = [0, 4, 0], sizes = [1, 1, 128], strides = [1, 1, 1]} : vector<5x5x128xf32> to vector<1x1x128xf32>
    %12 = vector.shape_cast %11 : vector<1x1x128xf32> to vector<128xf32>
    %13 = vector.extract_strided_slice %1 {offsets = [1, 0, 0], sizes = [1, 1, 128], strides = [1, 1, 1]} : vector<5x5x128xf32> to vector<1x1x128xf32>
    %14 = vector.shape_cast %13 : vector<1x1x128xf32> to vector<128xf32>
    %15 = vector.extract_strided_slice %1 {offsets = [1, 1, 0], sizes = [1, 1, 128], strides = [1, 1, 1]} : vector<5x5x128xf32> to vector<1x1x128xf32>
    %16 = vector.shape_cast %15 : vector<1x1x128xf32> to vector<128xf32>
    %17 = vector.extract_strided_slice %1 {offsets = [1, 2, 0], sizes = [1, 1, 128], strides = [1, 1, 1]} : vector<5x5x128xf32> to vector<1x1x128xf32>
    %18 = vector.shape_cast %17 : vector<1x1x128xf32> to vector<128xf32>
    %19 = vector.extract_strided_slice %1 {offsets = [1, 3, 0], sizes = [1, 1, 128], strides = [1, 1, 1]} : vector<5x5x128xf32> to vector<1x1x128xf32>
    %20 = vector.shape_cast %19 : vector<1x1x128xf32> to vector<128xf32>
    %21 = vector.extract_strided_slice %1 {offsets = [1, 4, 0], sizes = [1, 1, 128], strides = [1, 1, 1]} : vector<5x5x128xf32> to vector<1x1x128xf32>
    %22 = vector.shape_cast %21 : vector<1x1x128xf32> to vector<128xf32>
    %23 = vector.extract_strided_slice %1 {offsets = [2, 0, 0], sizes = [1, 1, 128], strides = [1, 1, 1]} : vector<5x5x128xf32> to vector<1x1x128xf32>
    %24 = vector.shape_cast %23 : vector<1x1x128xf32> to vector<128xf32>
    %25 = vector.extract_strided_slice %1 {offsets = [2, 1, 0], sizes = [1, 1, 128], strides = [1, 1, 1]} : vector<5x5x128xf32> to vector<1x1x128xf32>
    %26 = vector.shape_cast %25 : vector<1x1x128xf32> to vector<128xf32>
    %27 = vector.extract_strided_slice %1 {offsets = [2, 2, 0], sizes = [1, 1, 128], strides = [1, 1, 1]} : vector<5x5x128xf32> to vector<1x1x128xf32>
    %28 = vector.shape_cast %27 : vector<1x1x128xf32> to vector<128xf32>
    %29 = vector.extract_strided_slice %1 {offsets = [2, 3, 0], sizes = [1, 1, 128], strides = [1, 1, 1]} : vector<5x5x128xf32> to vector<1x1x128xf32>
    %30 = vector.shape_cast %29 : vector<1x1x128xf32> to vector<128xf32>
    %31 = vector.extract_strided_slice %1 {offsets = [2, 4, 0], sizes = [1, 1, 128], strides = [1, 1, 1]} : vector<5x5x128xf32> to vector<1x1x128xf32>
    %32 = vector.shape_cast %31 : vector<1x1x128xf32> to vector<128xf32>
    %33 = vector.extract_strided_slice %1 {offsets = [3, 0, 0], sizes = [1, 1, 128], strides = [1, 1, 1]} : vector<5x5x128xf32> to vector<1x1x128xf32>
    %34 = vector.shape_cast %33 : vector<1x1x128xf32> to vector<128xf32>
    %35 = vector.extract_strided_slice %1 {offsets = [3, 1, 0], sizes = [1, 1, 128], strides = [1, 1, 1]} : vector<5x5x128xf32> to vector<1x1x128xf32>
    %36 = vector.shape_cast %35 : vector<1x1x128xf32> to vector<128xf32>
    %37 = vector.extract_strided_slice %1 {offsets = [3, 2, 0], sizes = [1, 1, 128], strides = [1, 1, 1]} : vector<5x5x128xf32> to vector<1x1x128xf32>
    %38 = vector.shape_cast %37 : vector<1x1x128xf32> to vector<128xf32>
    %39 = vector.extract_strided_slice %1 {offsets = [3, 3, 0], sizes = [1, 1, 128], strides = [1, 1, 1]} : vector<5x5x128xf32> to vector<1x1x128xf32>
    %40 = vector.shape_cast %39 : vector<1x1x128xf32> to vector<128xf32>
    %41 = vector.extract_strided_slice %1 {offsets = [3, 4, 0], sizes = [1, 1, 128], strides = [1, 1, 1]} : vector<5x5x128xf32> to vector<1x1x128xf32>
    %42 = vector.shape_cast %41 : vector<1x1x128xf32> to vector<128xf32>
    %43 = vector.extract_strided_slice %1 {offsets = [4, 0, 0], sizes = [1, 1, 128], strides = [1, 1, 1]} : vector<5x5x128xf32> to vector<1x1x128xf32>
    %44 = vector.shape_cast %43 : vector<1x1x128xf32> to vector<128xf32>
    %45 = vector.extract_strided_slice %1 {offsets = [4, 1, 0], sizes = [1, 1, 128], strides = [1, 1, 1]} : vector<5x5x128xf32> to vector<1x1x128xf32>
    %46 = vector.shape_cast %45 : vector<1x1x128xf32> to vector<128xf32>
    %47 = vector.extract_strided_slice %1 {offsets = [4, 2, 0], sizes = [1, 1, 128], strides = [1, 1, 1]} : vector<5x5x128xf32> to vector<1x1x128xf32>
    %48 = vector.shape_cast %47 : vector<1x1x128xf32> to vector<128xf32>
    %49 = vector.extract_strided_slice %1 {offsets = [4, 3, 0], sizes = [1, 1, 128], strides = [1, 1, 1]} : vector<5x5x128xf32> to vector<1x1x128xf32>
    %50 = vector.shape_cast %49 : vector<1x1x128xf32> to vector<128xf32>
    %51 = vector.extract_strided_slice %1 {offsets = [4, 4, 0], sizes = [1, 1, 128], strides = [1, 1, 1]} : vector<5x5x128xf32> to vector<1x1x128xf32>
    %52 = vector.shape_cast %51 : vector<1x1x128xf32> to vector<128xf32>
    %c0_6 = arith.constant 0 : index
    %c0_7 = arith.constant 0 : index
    %c0_8 = arith.constant 0 : index
    %c0_9 = arith.constant 0 : index
    %53 = vector.load %arg2[%c0_6, %c0_7, %c0_8, %c0_9] : memref<1x10x64x128xf32, #tpu.memory_space<vmem>>, vector<1x6x62x128xf32>
    %54 = vector.shape_cast %53 : vector<1x6x62x128xf32> to vector<6x62x128xf32>
    %55 = vector.shape_cast %4 : vector<128xf32> to vector<1x1x128xf32>
    %56 = vector.broadcast %55 : vector<1x1x128xf32> to vector<6x62x128xf32>
    %57 = arith.mulf %54, %56 : vector<6x62x128xf32>
    %c0_10 = arith.constant 0 : index
    %c0_11 = arith.constant 0 : index
    %c0_12 = arith.constant 0 : index
    %c0_13 = arith.constant 0 : index
    %58 = vector.load %arg3[%c0_10, %c0_11, %c0_12, %c0_13] : memref<1x10x64x128xf32, #tpu.memory_space<vmem>>, vector<1x6x62x128xf32>
    %59 = vector.shape_cast %58 : vector<1x6x62x128xf32> to vector<6x62x128xf32>
    %60 = vector.shape_cast %6 : vector<128xf32> to vector<1x1x128xf32>
    %61 = vector.broadcast %60 : vector<1x1x128xf32> to vector<6x62x128xf32>
    %62 = arith.mulf %59, %61 : vector<6x62x128xf32>
    %63 = arith.addf %57, %62 : vector<6x62x128xf32>
    %c0_14 = arith.constant 0 : index
    %c0_15 = arith.constant 0 : index
    %c1 = arith.constant 1 : index
    %c0_16 = arith.constant 0 : index
    %64 = vector.load %arg2[%c0_14, %c0_15, %c1, %c0_16] : memref<1x10x64x128xf32, #tpu.memory_space<vmem>>, vector<1x6x62x128xf32>
    %65 = vector.shape_cast %64 : vector<1x6x62x128xf32> to vector<6x62x128xf32>
    %66 = vector.shape_cast %8 : vector<128xf32> to vector<1x1x128xf32>
    %67 = vector.broadcast %66 : vector<1x1x128xf32> to vector<6x62x128xf32>
    %68 = arith.mulf %65, %67 : vector<6x62x128xf32>
    %69 = arith.addf %63, %68 : vector<6x62x128xf32>
    %c0_17 = arith.constant 0 : index
    %c0_18 = arith.constant 0 : index
    %c1_19 = arith.constant 1 : index
    %c0_20 = arith.constant 0 : index
    %70 = vector.load %arg3[%c0_17, %c0_18, %c1_19, %c0_20] : memref<1x10x64x128xf32, #tpu.memory_space<vmem>>, vector<1x6x62x128xf32>
    %71 = vector.shape_cast %70 : vector<1x6x62x128xf32> to vector<6x62x128xf32>
    %72 = vector.shape_cast %10 : vector<128xf32> to vector<1x1x128xf32>
    %73 = vector.broadcast %72 : vector<1x1x128xf32> to vector<6x62x128xf32>
    %74 = arith.mulf %71, %73 : vector<6x62x128xf32>
    %75 = arith.addf %69, %74 : vector<6x62x128xf32>
    %c0_21 = arith.constant 0 : index
    %c0_22 = arith.constant 0 : index
    %c2 = arith.constant 2 : index
    %c0_23 = arith.constant 0 : index
    %76 = vector.load %arg2[%c0_21, %c0_22, %c2, %c0_23] : memref<1x10x64x128xf32, #tpu.memory_space<vmem>>, vector<1x6x62x128xf32>
    %77 = vector.shape_cast %76 : vector<1x6x62x128xf32> to vector<6x62x128xf32>
    %78 = vector.shape_cast %12 : vector<128xf32> to vector<1x1x128xf32>
    %79 = vector.broadcast %78 : vector<1x1x128xf32> to vector<6x62x128xf32>
    %80 = arith.mulf %77, %79 : vector<6x62x128xf32>
    %81 = arith.addf %75, %80 : vector<6x62x128xf32>
    %c0_24 = arith.constant 0 : index
    %c1_25 = arith.constant 1 : index
    %c0_26 = arith.constant 0 : index
    %c0_27 = arith.constant 0 : index
    %82 = vector.load %arg2[%c0_24, %c1_25, %c0_26, %c0_27] : memref<1x10x64x128xf32, #tpu.memory_space<vmem>>, vector<1x6x62x128xf32>
    %83 = vector.shape_cast %82 : vector<1x6x62x128xf32> to vector<6x62x128xf32>
    %84 = vector.shape_cast %14 : vector<128xf32> to vector<1x1x128xf32>
    %85 = vector.broadcast %84 : vector<1x1x128xf32> to vector<6x62x128xf32>
    %86 = arith.mulf %83, %85 : vector<6x62x128xf32>
    %87 = arith.addf %81, %86 : vector<6x62x128xf32>
    %c0_28 = arith.constant 0 : index
    %c1_29 = arith.constant 1 : index
    %c0_30 = arith.constant 0 : index
    %c0_31 = arith.constant 0 : index
    %88 = vector.load %arg3[%c0_28, %c1_29, %c0_30, %c0_31] : memref<1x10x64x128xf32, #tpu.memory_space<vmem>>, vector<1x6x62x128xf32>
    %89 = vector.shape_cast %88 : vector<1x6x62x128xf32> to vector<6x62x128xf32>
    %90 = vector.shape_cast %16 : vector<128xf32> to vector<1x1x128xf32>
    %91 = vector.broadcast %90 : vector<1x1x128xf32> to vector<6x62x128xf32>
    %92 = arith.mulf %89, %91 : vector<6x62x128xf32>
    %93 = arith.addf %87, %92 : vector<6x62x128xf32>
    %c0_32 = arith.constant 0 : index
    %c1_33 = arith.constant 1 : index
    %c1_34 = arith.constant 1 : index
    %c0_35 = arith.constant 0 : index
    %94 = vector.load %arg2[%c0_32, %c1_33, %c1_34, %c0_35] : memref<1x10x64x128xf32, #tpu.memory_space<vmem>>, vector<1x6x62x128xf32>
    %95 = vector.shape_cast %94 : vector<1x6x62x128xf32> to vector<6x62x128xf32>
    %96 = vector.shape_cast %18 : vector<128xf32> to vector<1x1x128xf32>
    %97 = vector.broadcast %96 : vector<1x1x128xf32> to vector<6x62x128xf32>
    %98 = arith.mulf %95, %97 : vector<6x62x128xf32>
    %99 = arith.addf %93, %98 : vector<6x62x128xf32>
    %c0_36 = arith.constant 0 : index
    %c1_37 = arith.constant 1 : index
    %c1_38 = arith.constant 1 : index
    %c0_39 = arith.constant 0 : index
    %100 = vector.load %arg3[%c0_36, %c1_37, %c1_38, %c0_39] : memref<1x10x64x128xf32, #tpu.memory_space<vmem>>, vector<1x6x62x128xf32>
    %101 = vector.shape_cast %100 : vector<1x6x62x128xf32> to vector<6x62x128xf32>
    %102 = vector.shape_cast %20 : vector<128xf32> to vector<1x1x128xf32>
    %103 = vector.broadcast %102 : vector<1x1x128xf32> to vector<6x62x128xf32>
    %104 = arith.mulf %101, %103 : vector<6x62x128xf32>
    %105 = arith.addf %99, %104 : vector<6x62x128xf32>
    %c0_40 = arith.constant 0 : index
    %c1_41 = arith.constant 1 : index
    %c2_42 = arith.constant 2 : index
    %c0_43 = arith.constant 0 : index
    %106 = vector.load %arg2[%c0_40, %c1_41, %c2_42, %c0_43] : memref<1x10x64x128xf32, #tpu.memory_space<vmem>>, vector<1x6x62x128xf32>
    %107 = vector.shape_cast %106 : vector<1x6x62x128xf32> to vector<6x62x128xf32>
    %108 = vector.shape_cast %22 : vector<128xf32> to vector<1x1x128xf32>
    %109 = vector.broadcast %108 : vector<1x1x128xf32> to vector<6x62x128xf32>
    %110 = arith.mulf %107, %109 : vector<6x62x128xf32>
    %111 = arith.addf %105, %110 : vector<6x62x128xf32>
    %c0_44 = arith.constant 0 : index
    %c2_45 = arith.constant 2 : index
    %c0_46 = arith.constant 0 : index
    %c0_47 = arith.constant 0 : index
    %112 = vector.load %arg2[%c0_44, %c2_45, %c0_46, %c0_47] : memref<1x10x64x128xf32, #tpu.memory_space<vmem>>, vector<1x6x62x128xf32>
    %113 = vector.shape_cast %112 : vector<1x6x62x128xf32> to vector<6x62x128xf32>
    %114 = vector.shape_cast %24 : vector<128xf32> to vector<1x1x128xf32>
    %115 = vector.broadcast %114 : vector<1x1x128xf32> to vector<6x62x128xf32>
    %116 = arith.mulf %113, %115 : vector<6x62x128xf32>
    %117 = arith.addf %111, %116 : vector<6x62x128xf32>
    %c0_48 = arith.constant 0 : index
    %c2_49 = arith.constant 2 : index
    %c0_50 = arith.constant 0 : index
    %c0_51 = arith.constant 0 : index
    %118 = vector.load %arg3[%c0_48, %c2_49, %c0_50, %c0_51] : memref<1x10x64x128xf32, #tpu.memory_space<vmem>>, vector<1x6x62x128xf32>
    %119 = vector.shape_cast %118 : vector<1x6x62x128xf32> to vector<6x62x128xf32>
    %120 = vector.shape_cast %26 : vector<128xf32> to vector<1x1x128xf32>
    %121 = vector.broadcast %120 : vector<1x1x128xf32> to vector<6x62x128xf32>
    %122 = arith.mulf %119, %121 : vector<6x62x128xf32>
    %123 = arith.addf %117, %122 : vector<6x62x128xf32>
    %c0_52 = arith.constant 0 : index
    %c2_53 = arith.constant 2 : index
    %c1_54 = arith.constant 1 : index
    %c0_55 = arith.constant 0 : index
    %124 = vector.load %arg2[%c0_52, %c2_53, %c1_54, %c0_55] : memref<1x10x64x128xf32, #tpu.memory_space<vmem>>, vector<1x6x62x128xf32>
    %125 = vector.shape_cast %124 : vector<1x6x62x128xf32> to vector<6x62x128xf32>
    %126 = vector.shape_cast %28 : vector<128xf32> to vector<1x1x128xf32>
    %127 = vector.broadcast %126 : vector<1x1x128xf32> to vector<6x62x128xf32>
    %128 = arith.mulf %125, %127 : vector<6x62x128xf32>
    %129 = arith.addf %123, %128 : vector<6x62x128xf32>
    %c0_56 = arith.constant 0 : index
    %c2_57 = arith.constant 2 : index
    %c1_58 = arith.constant 1 : index
    %c0_59 = arith.constant 0 : index
    %130 = vector.load %arg3[%c0_56, %c2_57, %c1_58, %c0_59] : memref<1x10x64x128xf32, #tpu.memory_space<vmem>>, vector<1x6x62x128xf32>
    %131 = vector.shape_cast %130 : vector<1x6x62x128xf32> to vector<6x62x128xf32>
    %132 = vector.shape_cast %30 : vector<128xf32> to vector<1x1x128xf32>
    %133 = vector.broadcast %132 : vector<1x1x128xf32> to vector<6x62x128xf32>
    %134 = arith.mulf %131, %133 : vector<6x62x128xf32>
    %135 = arith.addf %129, %134 : vector<6x62x128xf32>
    %c0_60 = arith.constant 0 : index
    %c2_61 = arith.constant 2 : index
    %c2_62 = arith.constant 2 : index
    %c0_63 = arith.constant 0 : index
    %136 = vector.load %arg2[%c0_60, %c2_61, %c2_62, %c0_63] : memref<1x10x64x128xf32, #tpu.memory_space<vmem>>, vector<1x6x62x128xf32>
    %137 = vector.shape_cast %136 : vector<1x6x62x128xf32> to vector<6x62x128xf32>
    %138 = vector.shape_cast %32 : vector<128xf32> to vector<1x1x128xf32>
    %139 = vector.broadcast %138 : vector<1x1x128xf32> to vector<6x62x128xf32>
    %140 = arith.mulf %137, %139 : vector<6x62x128xf32>
    %141 = arith.addf %135, %140 : vector<6x62x128xf32>
    %c0_64 = arith.constant 0 : index
    %c3 = arith.constant 3 : index
    %c0_65 = arith.constant 0 : index
    %c0_66 = arith.constant 0 : index
    %142 = vector.load %arg2[%c0_64, %c3, %c0_65, %c0_66] : memref<1x10x64x128xf32, #tpu.memory_space<vmem>>, vector<1x6x62x128xf32>
    %143 = vector.shape_cast %142 : vector<1x6x62x128xf32> to vector<6x62x128xf32>
    %144 = vector.shape_cast %34 : vector<128xf32> to vector<1x1x128xf32>
    %145 = vector.broadcast %144 : vector<1x1x128xf32> to vector<6x62x128xf32>
    %146 = arith.mulf %143, %145 : vector<6x62x128xf32>
    %147 = arith.addf %141, %146 : vector<6x62x128xf32>
    %c0_67 = arith.constant 0 : index
    %c3_68 = arith.constant 3 : index
    %c0_69 = arith.constant 0 : index
    %c0_70 = arith.constant 0 : index
    %148 = vector.load %arg3[%c0_67, %c3_68, %c0_69, %c0_70] : memref<1x10x64x128xf32, #tpu.memory_space<vmem>>, vector<1x6x62x128xf32>
    %149 = vector.shape_cast %148 : vector<1x6x62x128xf32> to vector<6x62x128xf32>
    %150 = vector.shape_cast %36 : vector<128xf32> to vector<1x1x128xf32>
    %151 = vector.broadcast %150 : vector<1x1x128xf32> to vector<6x62x128xf32>
    %152 = arith.mulf %149, %151 : vector<6x62x128xf32>
    %153 = arith.addf %147, %152 : vector<6x62x128xf32>
    %c0_71 = arith.constant 0 : index
    %c3_72 = arith.constant 3 : index
    %c1_73 = arith.constant 1 : index
    %c0_74 = arith.constant 0 : index
    %154 = vector.load %arg2[%c0_71, %c3_72, %c1_73, %c0_74] : memref<1x10x64x128xf32, #tpu.memory_space<vmem>>, vector<1x6x62x128xf32>
    %155 = vector.shape_cast %154 : vector<1x6x62x128xf32> to vector<6x62x128xf32>
    %156 = vector.shape_cast %38 : vector<128xf32> to vector<1x1x128xf32>
    %157 = vector.broadcast %156 : vector<1x1x128xf32> to vector<6x62x128xf32>
    %158 = arith.mulf %155, %157 : vector<6x62x128xf32>
    %159 = arith.addf %153, %158 : vector<6x62x128xf32>
    %c0_75 = arith.constant 0 : index
    %c3_76 = arith.constant 3 : index
    %c1_77 = arith.constant 1 : index
    %c0_78 = arith.constant 0 : index
    %160 = vector.load %arg3[%c0_75, %c3_76, %c1_77, %c0_78] : memref<1x10x64x128xf32, #tpu.memory_space<vmem>>, vector<1x6x62x128xf32>
    %161 = vector.shape_cast %160 : vector<1x6x62x128xf32> to vector<6x62x128xf32>
    %162 = vector.shape_cast %40 : vector<128xf32> to vector<1x1x128xf32>
    %163 = vector.broadcast %162 : vector<1x1x128xf32> to vector<6x62x128xf32>
    %164 = arith.mulf %161, %163 : vector<6x62x128xf32>
    %165 = arith.addf %159, %164 : vector<6x62x128xf32>
    %c0_79 = arith.constant 0 : index
    %c3_80 = arith.constant 3 : index
    %c2_81 = arith.constant 2 : index
    %c0_82 = arith.constant 0 : index
    %166 = vector.load %arg2[%c0_79, %c3_80, %c2_81, %c0_82] : memref<1x10x64x128xf32, #tpu.memory_space<vmem>>, vector<1x6x62x128xf32>
    %167 = vector.shape_cast %166 : vector<1x6x62x128xf32> to vector<6x62x128xf32>
    %168 = vector.shape_cast %42 : vector<128xf32> to vector<1x1x128xf32>
    %169 = vector.broadcast %168 : vector<1x1x128xf32> to vector<6x62x128xf32>
    %170 = arith.mulf %167, %169 : vector<6x62x128xf32>
    %171 = arith.addf %165, %170 : vector<6x62x128xf32>
    %c0_83 = arith.constant 0 : index
    %c4 = arith.constant 4 : index
    %c0_84 = arith.constant 0 : index
    %c0_85 = arith.constant 0 : index
    %172 = vector.load %arg2[%c0_83, %c4, %c0_84, %c0_85] : memref<1x10x64x128xf32, #tpu.memory_space<vmem>>, vector<1x6x62x128xf32>
    %173 = vector.shape_cast %172 : vector<1x6x62x128xf32> to vector<6x62x128xf32>
    %174 = vector.shape_cast %44 : vector<128xf32> to vector<1x1x128xf32>
    %175 = vector.broadcast %174 : vector<1x1x128xf32> to vector<6x62x128xf32>
    %176 = arith.mulf %173, %175 : vector<6x62x128xf32>
    %177 = arith.addf %171, %176 : vector<6x62x128xf32>
    %c0_86 = arith.constant 0 : index
    %c4_87 = arith.constant 4 : index
    %c0_88 = arith.constant 0 : index
    %c0_89 = arith.constant 0 : index
    %178 = vector.load %arg3[%c0_86, %c4_87, %c0_88, %c0_89] : memref<1x10x64x128xf32, #tpu.memory_space<vmem>>, vector<1x6x62x128xf32>
    %179 = vector.shape_cast %178 : vector<1x6x62x128xf32> to vector<6x62x128xf32>
    %180 = vector.shape_cast %46 : vector<128xf32> to vector<1x1x128xf32>
    %181 = vector.broadcast %180 : vector<1x1x128xf32> to vector<6x62x128xf32>
    %182 = arith.mulf %179, %181 : vector<6x62x128xf32>
    %183 = arith.addf %177, %182 : vector<6x62x128xf32>
    %c0_90 = arith.constant 0 : index
    %c4_91 = arith.constant 4 : index
    %c1_92 = arith.constant 1 : index
    %c0_93 = arith.constant 0 : index
    %184 = vector.load %arg2[%c0_90, %c4_91, %c1_92, %c0_93] : memref<1x10x64x128xf32, #tpu.memory_space<vmem>>, vector<1x6x62x128xf32>
    %185 = vector.shape_cast %184 : vector<1x6x62x128xf32> to vector<6x62x128xf32>
    %186 = vector.shape_cast %48 : vector<128xf32> to vector<1x1x128xf32>
    %187 = vector.broadcast %186 : vector<1x1x128xf32> to vector<6x62x128xf32>
    %188 = arith.mulf %185, %187 : vector<6x62x128xf32>
    %189 = arith.addf %183, %188 : vector<6x62x128xf32>
    %c0_94 = arith.constant 0 : index
    %c4_95 = arith.constant 4 : index
    %c1_96 = arith.constant 1 : index
    %c0_97 = arith.constant 0 : index
    %190 = vector.load %arg3[%c0_94, %c4_95, %c1_96, %c0_97] : memref<1x10x64x128xf32, #tpu.memory_space<vmem>>, vector<1x6x62x128xf32>
    %191 = vector.shape_cast %190 : vector<1x6x62x128xf32> to vector<6x62x128xf32>
    %192 = vector.shape_cast %50 : vector<128xf32> to vector<1x1x128xf32>
    %193 = vector.broadcast %192 : vector<1x1x128xf32> to vector<6x62x128xf32>
    %194 = arith.mulf %191, %193 : vector<6x62x128xf32>
    %195 = arith.addf %189, %194 : vector<6x62x128xf32>
    %c0_98 = arith.constant 0 : index
    %c4_99 = arith.constant 4 : index
    %c2_100 = arith.constant 2 : index
    %c0_101 = arith.constant 0 : index
    %196 = vector.load %arg2[%c0_98, %c4_99, %c2_100, %c0_101] : memref<1x10x64x128xf32, #tpu.memory_space<vmem>>, vector<1x6x62x128xf32>
    %197 = vector.shape_cast %196 : vector<1x6x62x128xf32> to vector<6x62x128xf32>
    %198 = vector.shape_cast %52 : vector<128xf32> to vector<1x1x128xf32>
    %199 = vector.broadcast %198 : vector<1x1x128xf32> to vector<6x62x128xf32>
    %200 = arith.mulf %197, %199 : vector<6x62x128xf32>
    %201 = arith.addf %195, %200 : vector<6x62x128xf32>
    %202 = vector.broadcast %2 : vector<1x1x128xf32> to vector<6x62x128xf32>
    %203 = arith.addf %201, %202 : vector<6x62x128xf32>
    %cst = arith.constant 0.000000e+00 : f32
    %204 = vector.broadcast %cst : f32 to vector<6x62x128xf32>
    %205 = arith.maximumf %203, %204 : vector<6x62x128xf32>
    %cst_102 = arith.constant 0.000000e+00 : f32
    %206 = vector.broadcast %cst_102 : f32 to vector<6x62x128xf32>
    %207 = arith.minimumf %203, %206 : vector<6x62x128xf32>
    %208 = vector.broadcast %0 : f32 to vector<6x62x128xf32>
    %209 = arith.mulf %208, %207 : vector<6x62x128xf32>
    %210 = arith.addf %205, %209 : vector<6x62x128xf32>
    %211 = vector.extract_strided_slice %210 {offsets = [0, 0, 0], sizes = [1, 62, 128], strides = [1, 1, 1]} : vector<6x62x128xf32> to vector<1x62x128xf32>
    %212 = vector.shape_cast %211 : vector<1x62x128xf32> to vector<62x128xf32>
    %213 = vector.extract_strided_slice %210 {offsets = [1, 0, 0], sizes = [1, 62, 128], strides = [1, 1, 1]} : vector<6x62x128xf32> to vector<1x62x128xf32>
    %214 = vector.shape_cast %213 : vector<1x62x128xf32> to vector<62x128xf32>
    %215 = arith.maximumf %212, %214 : vector<62x128xf32>
    %216 = vector.extract_strided_slice %210 {offsets = [2, 0, 0], sizes = [1, 62, 128], strides = [1, 1, 1]} : vector<6x62x128xf32> to vector<1x62x128xf32>
    %217 = vector.shape_cast %216 : vector<1x62x128xf32> to vector<62x128xf32>
    %218 = vector.extract_strided_slice %210 {offsets = [3, 0, 0], sizes = [1, 62, 128], strides = [1, 1, 1]} : vector<6x62x128xf32> to vector<1x62x128xf32>
    %219 = vector.shape_cast %218 : vector<1x62x128xf32> to vector<62x128xf32>
    %220 = arith.maximumf %217, %219 : vector<62x128xf32>
    %221 = vector.extract_strided_slice %210 {offsets = [4, 0, 0], sizes = [1, 62, 128], strides = [1, 1, 1]} : vector<6x62x128xf32> to vector<1x62x128xf32>
    %222 = vector.shape_cast %221 : vector<1x62x128xf32> to vector<62x128xf32>
    %223 = vector.extract_strided_slice %210 {offsets = [5, 0, 0], sizes = [1, 62, 128], strides = [1, 1, 1]} : vector<6x62x128xf32> to vector<1x62x128xf32>
    %224 = vector.shape_cast %223 : vector<1x62x128xf32> to vector<62x128xf32>
    %225 = arith.maximumf %222, %224 : vector<62x128xf32>
    %c0_103 = arith.constant 0 : index
    %c0_104 = arith.constant 0 : index
    %c0_105 = arith.constant 0 : index
    %c0_106 = arith.constant 0 : index
    %226 = vector.load %arg3[%c0_103, %c0_104, %c0_105, %c0_106] : memref<1x10x64x128xf32, #tpu.memory_space<vmem>>, vector<1x6x62x128xf32>
    %227 = vector.shape_cast %226 : vector<1x6x62x128xf32> to vector<6x62x128xf32>
    %228 = vector.shape_cast %4 : vector<128xf32> to vector<1x1x128xf32>
    %229 = vector.broadcast %228 : vector<1x1x128xf32> to vector<6x62x128xf32>
    %230 = arith.mulf %227, %229 : vector<6x62x128xf32>
    %c0_107 = arith.constant 0 : index
    %c0_108 = arith.constant 0 : index
    %c1_109 = arith.constant 1 : index
    %c0_110 = arith.constant 0 : index
    %231 = vector.load %arg2[%c0_107, %c0_108, %c1_109, %c0_110] : memref<1x10x64x128xf32, #tpu.memory_space<vmem>>, vector<1x6x62x128xf32>
    %232 = vector.shape_cast %231 : vector<1x6x62x128xf32> to vector<6x62x128xf32>
    %233 = vector.shape_cast %6 : vector<128xf32> to vector<1x1x128xf32>
    %234 = vector.broadcast %233 : vector<1x1x128xf32> to vector<6x62x128xf32>
    %235 = arith.mulf %232, %234 : vector<6x62x128xf32>
    %236 = arith.addf %230, %235 : vector<6x62x128xf32>
    %c0_111 = arith.constant 0 : index
    %c0_112 = arith.constant 0 : index
    %c1_113 = arith.constant 1 : index
    %c0_114 = arith.constant 0 : index
    %237 = vector.load %arg3[%c0_111, %c0_112, %c1_113, %c0_114] : memref<1x10x64x128xf32, #tpu.memory_space<vmem>>, vector<1x6x62x128xf32>
    %238 = vector.shape_cast %237 : vector<1x6x62x128xf32> to vector<6x62x128xf32>
    %239 = vector.shape_cast %8 : vector<128xf32> to vector<1x1x128xf32>
    %240 = vector.broadcast %239 : vector<1x1x128xf32> to vector<6x62x128xf32>
    %241 = arith.mulf %238, %240 : vector<6x62x128xf32>
    %242 = arith.addf %236, %241 : vector<6x62x128xf32>
    %c0_115 = arith.constant 0 : index
    %c0_116 = arith.constant 0 : index
    %c2_117 = arith.constant 2 : index
    %c0_118 = arith.constant 0 : index
    %243 = vector.load %arg2[%c0_115, %c0_116, %c2_117, %c0_118] : memref<1x10x64x128xf32, #tpu.memory_space<vmem>>, vector<1x6x62x128xf32>
    %244 = vector.shape_cast %243 : vector<1x6x62x128xf32> to vector<6x62x128xf32>
    %245 = vector.shape_cast %10 : vector<128xf32> to vector<1x1x128xf32>
    %246 = vector.broadcast %245 : vector<1x1x128xf32> to vector<6x62x128xf32>
    %247 = arith.mulf %244, %246 : vector<6x62x128xf32>
    %248 = arith.addf %242, %247 : vector<6x62x128xf32>
    %c0_119 = arith.constant 0 : index
    %c0_120 = arith.constant 0 : index
    %c2_121 = arith.constant 2 : index
    %c0_122 = arith.constant 0 : index
    %249 = vector.load %arg3[%c0_119, %c0_120, %c2_121, %c0_122] : memref<1x10x64x128xf32, #tpu.memory_space<vmem>>, vector<1x6x62x128xf32>
    %250 = vector.shape_cast %249 : vector<1x6x62x128xf32> to vector<6x62x128xf32>
    %251 = vector.shape_cast %12 : vector<128xf32> to vector<1x1x128xf32>
    %252 = vector.broadcast %251 : vector<1x1x128xf32> to vector<6x62x128xf32>
    %253 = arith.mulf %250, %252 : vector<6x62x128xf32>
    %254 = arith.addf %248, %253 : vector<6x62x128xf32>
    %c0_123 = arith.constant 0 : index
    %c1_124 = arith.constant 1 : index
    %c0_125 = arith.constant 0 : index
    %c0_126 = arith.constant 0 : index
    %255 = vector.load %arg3[%c0_123, %c1_124, %c0_125, %c0_126] : memref<1x10x64x128xf32, #tpu.memory_space<vmem>>, vector<1x6x62x128xf32>
    %256 = vector.shape_cast %255 : vector<1x6x62x128xf32> to vector<6x62x128xf32>
    %257 = vector.shape_cast %14 : vector<128xf32> to vector<1x1x128xf32>
    %258 = vector.broadcast %257 : vector<1x1x128xf32> to vector<6x62x128xf32>
    %259 = arith.mulf %256, %258 : vector<6x62x128xf32>
    %260 = arith.addf %254, %259 : vector<6x62x128xf32>
    %c0_127 = arith.constant 0 : index
    %c1_128 = arith.constant 1 : index
    %c1_129 = arith.constant 1 : index
    %c0_130 = arith.constant 0 : index
    %261 = vector.load %arg2[%c0_127, %c1_128, %c1_129, %c0_130] : memref<1x10x64x128xf32, #tpu.memory_space<vmem>>, vector<1x6x62x128xf32>
    %262 = vector.shape_cast %261 : vector<1x6x62x128xf32> to vector<6x62x128xf32>
    %263 = vector.shape_cast %16 : vector<128xf32> to vector<1x1x128xf32>
    %264 = vector.broadcast %263 : vector<1x1x128xf32> to vector<6x62x128xf32>
    %265 = arith.mulf %262, %264 : vector<6x62x128xf32>
    %266 = arith.addf %260, %265 : vector<6x62x128xf32>
    %c0_131 = arith.constant 0 : index
    %c1_132 = arith.constant 1 : index
    %c1_133 = arith.constant 1 : index
    %c0_134 = arith.constant 0 : index
    %267 = vector.load %arg3[%c0_131, %c1_132, %c1_133, %c0_134] : memref<1x10x64x128xf32, #tpu.memory_space<vmem>>, vector<1x6x62x128xf32>
    %268 = vector.shape_cast %267 : vector<1x6x62x128xf32> to vector<6x62x128xf32>
    %269 = vector.shape_cast %18 : vector<128xf32> to vector<1x1x128xf32>
    %270 = vector.broadcast %269 : vector<1x1x128xf32> to vector<6x62x128xf32>
    %271 = arith.mulf %268, %270 : vector<6x62x128xf32>
    %272 = arith.addf %266, %271 : vector<6x62x128xf32>
    %c0_135 = arith.constant 0 : index
    %c1_136 = arith.constant 1 : index
    %c2_137 = arith.constant 2 : index
    %c0_138 = arith.constant 0 : index
    %273 = vector.load %arg2[%c0_135, %c1_136, %c2_137, %c0_138] : memref<1x10x64x128xf32, #tpu.memory_space<vmem>>, vector<1x6x62x128xf32>
    %274 = vector.shape_cast %273 : vector<1x6x62x128xf32> to vector<6x62x128xf32>
    %275 = vector.shape_cast %20 : vector<128xf32> to vector<1x1x128xf32>
    %276 = vector.broadcast %275 : vector<1x1x128xf32> to vector<6x62x128xf32>
    %277 = arith.mulf %274, %276 : vector<6x62x128xf32>
    %278 = arith.addf %272, %277 : vector<6x62x128xf32>
    %c0_139 = arith.constant 0 : index
    %c1_140 = arith.constant 1 : index
    %c2_141 = arith.constant 2 : index
    %c0_142 = arith.constant 0 : index
    %279 = vector.load %arg3[%c0_139, %c1_140, %c2_141, %c0_142] : memref<1x10x64x128xf32, #tpu.memory_space<vmem>>, vector<1x6x62x128xf32>
    %280 = vector.shape_cast %279 : vector<1x6x62x128xf32> to vector<6x62x128xf32>
    %281 = vector.shape_cast %22 : vector<128xf32> to vector<1x1x128xf32>
    %282 = vector.broadcast %281 : vector<1x1x128xf32> to vector<6x62x128xf32>
    %283 = arith.mulf %280, %282 : vector<6x62x128xf32>
    %284 = arith.addf %278, %283 : vector<6x62x128xf32>
    %c0_143 = arith.constant 0 : index
    %c2_144 = arith.constant 2 : index
    %c0_145 = arith.constant 0 : index
    %c0_146 = arith.constant 0 : index
    %285 = vector.load %arg3[%c0_143, %c2_144, %c0_145, %c0_146] : memref<1x10x64x128xf32, #tpu.memory_space<vmem>>, vector<1x6x62x128xf32>
    %286 = vector.shape_cast %285 : vector<1x6x62x128xf32> to vector<6x62x128xf32>
    %287 = vector.shape_cast %24 : vector<128xf32> to vector<1x1x128xf32>
    %288 = vector.broadcast %287 : vector<1x1x128xf32> to vector<6x62x128xf32>
    %289 = arith.mulf %286, %288 : vector<6x62x128xf32>
    %290 = arith.addf %284, %289 : vector<6x62x128xf32>
    %c0_147 = arith.constant 0 : index
    %c2_148 = arith.constant 2 : index
    %c1_149 = arith.constant 1 : index
    %c0_150 = arith.constant 0 : index
    %291 = vector.load %arg2[%c0_147, %c2_148, %c1_149, %c0_150] : memref<1x10x64x128xf32, #tpu.memory_space<vmem>>, vector<1x6x62x128xf32>
    %292 = vector.shape_cast %291 : vector<1x6x62x128xf32> to vector<6x62x128xf32>
    %293 = vector.shape_cast %26 : vector<128xf32> to vector<1x1x128xf32>
    %294 = vector.broadcast %293 : vector<1x1x128xf32> to vector<6x62x128xf32>
    %295 = arith.mulf %292, %294 : vector<6x62x128xf32>
    %296 = arith.addf %290, %295 : vector<6x62x128xf32>
    %c0_151 = arith.constant 0 : index
    %c2_152 = arith.constant 2 : index
    %c1_153 = arith.constant 1 : index
    %c0_154 = arith.constant 0 : index
    %297 = vector.load %arg3[%c0_151, %c2_152, %c1_153, %c0_154] : memref<1x10x64x128xf32, #tpu.memory_space<vmem>>, vector<1x6x62x128xf32>
    %298 = vector.shape_cast %297 : vector<1x6x62x128xf32> to vector<6x62x128xf32>
    %299 = vector.shape_cast %28 : vector<128xf32> to vector<1x1x128xf32>
    %300 = vector.broadcast %299 : vector<1x1x128xf32> to vector<6x62x128xf32>
    %301 = arith.mulf %298, %300 : vector<6x62x128xf32>
    %302 = arith.addf %296, %301 : vector<6x62x128xf32>
    %c0_155 = arith.constant 0 : index
    %c2_156 = arith.constant 2 : index
    %c2_157 = arith.constant 2 : index
    %c0_158 = arith.constant 0 : index
    %303 = vector.load %arg2[%c0_155, %c2_156, %c2_157, %c0_158] : memref<1x10x64x128xf32, #tpu.memory_space<vmem>>, vector<1x6x62x128xf32>
    %304 = vector.shape_cast %303 : vector<1x6x62x128xf32> to vector<6x62x128xf32>
    %305 = vector.shape_cast %30 : vector<128xf32> to vector<1x1x128xf32>
    %306 = vector.broadcast %305 : vector<1x1x128xf32> to vector<6x62x128xf32>
    %307 = arith.mulf %304, %306 : vector<6x62x128xf32>
    %308 = arith.addf %302, %307 : vector<6x62x128xf32>
    %c0_159 = arith.constant 0 : index
    %c2_160 = arith.constant 2 : index
    %c2_161 = arith.constant 2 : index
    %c0_162 = arith.constant 0 : index
    %309 = vector.load %arg3[%c0_159, %c2_160, %c2_161, %c0_162] : memref<1x10x64x128xf32, #tpu.memory_space<vmem>>, vector<1x6x62x128xf32>
    %310 = vector.shape_cast %309 : vector<1x6x62x128xf32> to vector<6x62x128xf32>
    %311 = vector.shape_cast %32 : vector<128xf32> to vector<1x1x128xf32>
    %312 = vector.broadcast %311 : vector<1x1x128xf32> to vector<6x62x128xf32>
    %313 = arith.mulf %310, %312 : vector<6x62x128xf32>
    %314 = arith.addf %308, %313 : vector<6x62x128xf32>
    %c0_163 = arith.constant 0 : index
    %c3_164 = arith.constant 3 : index
    %c0_165 = arith.constant 0 : index
    %c0_166 = arith.constant 0 : index
    %315 = vector.load %arg3[%c0_163, %c3_164, %c0_165, %c0_166] : memref<1x10x64x128xf32, #tpu.memory_space<vmem>>, vector<1x6x62x128xf32>
    %316 = vector.shape_cast %315 : vector<1x6x62x128xf32> to vector<6x62x128xf32>
    %317 = vector.shape_cast %34 : vector<128xf32> to vector<1x1x128xf32>
    %318 = vector.broadcast %317 : vector<1x1x128xf32> to vector<6x62x128xf32>
    %319 = arith.mulf %316, %318 : vector<6x62x128xf32>
    %320 = arith.addf %314, %319 : vector<6x62x128xf32>
    %c0_167 = arith.constant 0 : index
    %c3_168 = arith.constant 3 : index
    %c1_169 = arith.constant 1 : index
    %c0_170 = arith.constant 0 : index
    %321 = vector.load %arg2[%c0_167, %c3_168, %c1_169, %c0_170] : memref<1x10x64x128xf32, #tpu.memory_space<vmem>>, vector<1x6x62x128xf32>
    %322 = vector.shape_cast %321 : vector<1x6x62x128xf32> to vector<6x62x128xf32>
    %323 = vector.shape_cast %36 : vector<128xf32> to vector<1x1x128xf32>
    %324 = vector.broadcast %323 : vector<1x1x128xf32> to vector<6x62x128xf32>
    %325 = arith.mulf %322, %324 : vector<6x62x128xf32>
    %326 = arith.addf %320, %325 : vector<6x62x128xf32>
    %c0_171 = arith.constant 0 : index
    %c3_172 = arith.constant 3 : index
    %c1_173 = arith.constant 1 : index
    %c0_174 = arith.constant 0 : index
    %327 = vector.load %arg3[%c0_171, %c3_172, %c1_173, %c0_174] : memref<1x10x64x128xf32, #tpu.memory_space<vmem>>, vector<1x6x62x128xf32>
    %328 = vector.shape_cast %327 : vector<1x6x62x128xf32> to vector<6x62x128xf32>
    %329 = vector.shape_cast %38 : vector<128xf32> to vector<1x1x128xf32>
    %330 = vector.broadcast %329 : vector<1x1x128xf32> to vector<6x62x128xf32>
    %331 = arith.mulf %328, %330 : vector<6x62x128xf32>
    %332 = arith.addf %326, %331 : vector<6x62x128xf32>
    %c0_175 = arith.constant 0 : index
    %c3_176 = arith.constant 3 : index
    %c2_177 = arith.constant 2 : index
    %c0_178 = arith.constant 0 : index
    %333 = vector.load %arg2[%c0_175, %c3_176, %c2_177, %c0_178] : memref<1x10x64x128xf32, #tpu.memory_space<vmem>>, vector<1x6x62x128xf32>
    %334 = vector.shape_cast %333 : vector<1x6x62x128xf32> to vector<6x62x128xf32>
    %335 = vector.shape_cast %40 : vector<128xf32> to vector<1x1x128xf32>
    %336 = vector.broadcast %335 : vector<1x1x128xf32> to vector<6x62x128xf32>
    %337 = arith.mulf %334, %336 : vector<6x62x128xf32>
    %338 = arith.addf %332, %337 : vector<6x62x128xf32>
    %c0_179 = arith.constant 0 : index
    %c3_180 = arith.constant 3 : index
    %c2_181 = arith.constant 2 : index
    %c0_182 = arith.constant 0 : index
    %339 = vector.load %arg3[%c0_179, %c3_180, %c2_181, %c0_182] : memref<1x10x64x128xf32, #tpu.memory_space<vmem>>, vector<1x6x62x128xf32>
    %340 = vector.shape_cast %339 : vector<1x6x62x128xf32> to vector<6x62x128xf32>
    %341 = vector.shape_cast %42 : vector<128xf32> to vector<1x1x128xf32>
    %342 = vector.broadcast %341 : vector<1x1x128xf32> to vector<6x62x128xf32>
    %343 = arith.mulf %340, %342 : vector<6x62x128xf32>
    %344 = arith.addf %338, %343 : vector<6x62x128xf32>
    %c0_183 = arith.constant 0 : index
    %c4_184 = arith.constant 4 : index
    %c0_185 = arith.constant 0 : index
    %c0_186 = arith.constant 0 : index
    %345 = vector.load %arg3[%c0_183, %c4_184, %c0_185, %c0_186] : memref<1x10x64x128xf32, #tpu.memory_space<vmem>>, vector<1x6x62x128xf32>
    %346 = vector.shape_cast %345 : vector<1x6x62x128xf32> to vector<6x62x128xf32>
    %347 = vector.shape_cast %44 : vector<128xf32> to vector<1x1x128xf32>
    %348 = vector.broadcast %347 : vector<1x1x128xf32> to vector<6x62x128xf32>
    %349 = arith.mulf %346, %348 : vector<6x62x128xf32>
    %350 = arith.addf %344, %349 : vector<6x62x128xf32>
    %c0_187 = arith.constant 0 : index
    %c4_188 = arith.constant 4 : index
    %c1_189 = arith.constant 1 : index
    %c0_190 = arith.constant 0 : index
    %351 = vector.load %arg2[%c0_187, %c4_188, %c1_189, %c0_190] : memref<1x10x64x128xf32, #tpu.memory_space<vmem>>, vector<1x6x62x128xf32>
    %352 = vector.shape_cast %351 : vector<1x6x62x128xf32> to vector<6x62x128xf32>
    %353 = vector.shape_cast %46 : vector<128xf32> to vector<1x1x128xf32>
    %354 = vector.broadcast %353 : vector<1x1x128xf32> to vector<6x62x128xf32>
    %355 = arith.mulf %352, %354 : vector<6x62x128xf32>
    %356 = arith.addf %350, %355 : vector<6x62x128xf32>
    %c0_191 = arith.constant 0 : index
    %c4_192 = arith.constant 4 : index
    %c1_193 = arith.constant 1 : index
    %c0_194 = arith.constant 0 : index
    %357 = vector.load %arg3[%c0_191, %c4_192, %c1_193, %c0_194] : memref<1x10x64x128xf32, #tpu.memory_space<vmem>>, vector<1x6x62x128xf32>
    %358 = vector.shape_cast %357 : vector<1x6x62x128xf32> to vector<6x62x128xf32>
    %359 = vector.shape_cast %48 : vector<128xf32> to vector<1x1x128xf32>
    %360 = vector.broadcast %359 : vector<1x1x128xf32> to vector<6x62x128xf32>
    %361 = arith.mulf %358, %360 : vector<6x62x128xf32>
    %362 = arith.addf %356, %361 : vector<6x62x128xf32>
    %c0_195 = arith.constant 0 : index
    %c4_196 = arith.constant 4 : index
    %c2_197 = arith.constant 2 : index
    %c0_198 = arith.constant 0 : index
    %363 = vector.load %arg2[%c0_195, %c4_196, %c2_197, %c0_198] : memref<1x10x64x128xf32, #tpu.memory_space<vmem>>, vector<1x6x62x128xf32>
    %364 = vector.shape_cast %363 : vector<1x6x62x128xf32> to vector<6x62x128xf32>
    %365 = vector.shape_cast %50 : vector<128xf32> to vector<1x1x128xf32>
    %366 = vector.broadcast %365 : vector<1x1x128xf32> to vector<6x62x128xf32>
    %367 = arith.mulf %364, %366 : vector<6x62x128xf32>
    %368 = arith.addf %362, %367 : vector<6x62x128xf32>
    %c0_199 = arith.constant 0 : index
    %c4_200 = arith.constant 4 : index
    %c2_201 = arith.constant 2 : index
    %c0_202 = arith.constant 0 : index
    %369 = vector.load %arg3[%c0_199, %c4_200, %c2_201, %c0_202] : memref<1x10x64x128xf32, #tpu.memory_space<vmem>>, vector<1x6x62x128xf32>
    %370 = vector.shape_cast %369 : vector<1x6x62x128xf32> to vector<6x62x128xf32>
    %371 = vector.shape_cast %52 : vector<128xf32> to vector<1x1x128xf32>
    %372 = vector.broadcast %371 : vector<1x1x128xf32> to vector<6x62x128xf32>
    %373 = arith.mulf %370, %372 : vector<6x62x128xf32>
    %374 = arith.addf %368, %373 : vector<6x62x128xf32>
    %375 = vector.broadcast %2 : vector<1x1x128xf32> to vector<6x62x128xf32>
    %376 = arith.addf %374, %375 : vector<6x62x128xf32>
    %cst_203 = arith.constant 0.000000e+00 : f32
    %377 = vector.broadcast %cst_203 : f32 to vector<6x62x128xf32>
    %378 = arith.maximumf %376, %377 : vector<6x62x128xf32>
    %cst_204 = arith.constant 0.000000e+00 : f32
    %379 = vector.broadcast %cst_204 : f32 to vector<6x62x128xf32>
    %380 = arith.minimumf %376, %379 : vector<6x62x128xf32>
    %381 = vector.broadcast %0 : f32 to vector<6x62x128xf32>
    %382 = arith.mulf %381, %380 : vector<6x62x128xf32>
    %383 = arith.addf %378, %382 : vector<6x62x128xf32>
    %384 = vector.extract_strided_slice %383 {offsets = [0, 0, 0], sizes = [1, 62, 128], strides = [1, 1, 1]} : vector<6x62x128xf32> to vector<1x62x128xf32>
    %385 = vector.shape_cast %384 : vector<1x62x128xf32> to vector<62x128xf32>
    %386 = vector.extract_strided_slice %383 {offsets = [1, 0, 0], sizes = [1, 62, 128], strides = [1, 1, 1]} : vector<6x62x128xf32> to vector<1x62x128xf32>
    %387 = vector.shape_cast %386 : vector<1x62x128xf32> to vector<62x128xf32>
    %388 = arith.maximumf %385, %387 : vector<62x128xf32>
    %389 = arith.maximumf %215, %388 : vector<62x128xf32>
    %390 = vector.extract_strided_slice %383 {offsets = [2, 0, 0], sizes = [1, 62, 128], strides = [1, 1, 1]} : vector<6x62x128xf32> to vector<1x62x128xf32>
    %391 = vector.shape_cast %390 : vector<1x62x128xf32> to vector<62x128xf32>
    %392 = vector.extract_strided_slice %383 {offsets = [3, 0, 0], sizes = [1, 62, 128], strides = [1, 1, 1]} : vector<6x62x128xf32> to vector<1x62x128xf32>
    %393 = vector.shape_cast %392 : vector<1x62x128xf32> to vector<62x128xf32>
    %394 = arith.maximumf %391, %393 : vector<62x128xf32>
    %395 = arith.maximumf %220, %394 : vector<62x128xf32>
    %396 = vector.extract_strided_slice %383 {offsets = [4, 0, 0], sizes = [1, 62, 128], strides = [1, 1, 1]} : vector<6x62x128xf32> to vector<1x62x128xf32>
    %397 = vector.shape_cast %396 : vector<1x62x128xf32> to vector<62x128xf32>
    %398 = vector.extract_strided_slice %383 {offsets = [5, 0, 0], sizes = [1, 62, 128], strides = [1, 1, 1]} : vector<6x62x128xf32> to vector<1x62x128xf32>
    %399 = vector.shape_cast %398 : vector<1x62x128xf32> to vector<62x128xf32>
    %400 = arith.maximumf %397, %399 : vector<62x128xf32>
    %401 = arith.maximumf %225, %400 : vector<62x128xf32>
    %402 = arith.truncf %389 : vector<62x128xf32> to vector<62x128xbf16>
    %c0_205 = arith.constant 0 : index
    %c0_206 = arith.constant 0 : index
    %c0_207 = arith.constant 0 : index
    %c0_208 = arith.constant 0 : index
    %403 = vector.load %arg6[%c0_205, %c0_206, %c0_207, %c0_208] : memref<1x3x62x128xbf16, #tpu.memory_space<vmem>>, vector<1x1x62x128xbf16>
    %404 = vector.shape_cast %403 : vector<1x1x62x128xbf16> to vector<62x128xbf16>
    %405 = vector.shape_cast %402 : vector<62x128xbf16> to vector<1x1x62x128xbf16>
    tpu.vector_store %arg6[%c0_205, %c0_206, %c0_207, %c0_208], %405 {strides = array<i32>} : memref<1x3x62x128xbf16, #tpu.memory_space<vmem>>, vector<1x1x62x128xbf16>,
    %406 = arith.truncf %395 : vector<62x128xf32> to vector<62x128xbf16>
    %c0_209 = arith.constant 0 : index
    %c1_210 = arith.constant 1 : index
    %c0_211 = arith.constant 0 : index
    %c0_212 = arith.constant 0 : index
    %407 = vector.load %arg6[%c0_209, %c1_210, %c0_211, %c0_212] : memref<1x3x62x128xbf16, #tpu.memory_space<vmem>>, vector<1x1x62x128xbf16>
    %408 = vector.shape_cast %407 : vector<1x1x62x128xbf16> to vector<62x128xbf16>
    %409 = vector.shape_cast %406 : vector<62x128xbf16> to vector<1x1x62x128xbf16>
    tpu.vector_store %arg6[%c0_209, %c1_210, %c0_211, %c0_212], %409 {strides = array<i32>} : memref<1x3x62x128xbf16, #tpu.memory_space<vmem>>, vector<1x1x62x128xbf16>,
    %410 = arith.truncf %401 : vector<62x128xf32> to vector<62x128xbf16>
    %c0_213 = arith.constant 0 : index
    %c2_214 = arith.constant 2 : index
    %c0_215 = arith.constant 0 : index
    %c0_216 = arith.constant 0 : index
    %411 = vector.load %arg6[%c0_213, %c2_214, %c0_215, %c0_216] : memref<1x3x62x128xbf16, #tpu.memory_space<vmem>>, vector<1x1x62x128xbf16>
    %412 = vector.shape_cast %411 : vector<1x1x62x128xbf16> to vector<62x128xbf16>
    %413 = vector.shape_cast %410 : vector<62x128xbf16> to vector<1x1x62x128xbf16>
    tpu.vector_store %arg6[%c0_213, %c2_214, %c0_215, %c0_216], %413 {strides = array<i32>} : memref<1x3x62x128xbf16, #tpu.memory_space<vmem>>, vector<1x1x62x128xbf16>,
    return
  }
  func.func @transform_0(%arg0: i32) -> i32 {
    %c0_i32 = arith.constant 0 : i32
    %c0_i32_0 = arith.constant 0 : i32
    return %c0_i32 : i32
  }
  func.func @transform_1(%arg0: i32) -> (i32, i32, i32, i32) {
    %c0_i32 = arith.constant 0 : i32
    %c0_i32_0 = arith.constant 0 : i32
    %c0_i32_1 = arith.constant 0 : i32
    %c0_i32_2 = arith.constant 0 : i32
    return %arg0, %c0_i32, %c0_i32_0, %c0_i32_1 : i32, i32, i32, i32
  }
  func.func @transform_2(%arg0: i32) -> (i32, i32, i32, i32) {
    %c0_i32 = arith.constant 0 : i32
    %c0_i32_0 = arith.constant 0 : i32
    %c0_i32_1 = arith.constant 0 : i32
    %c0_i32_2 = arith.constant 0 : i32
    return %arg0, %c0_i32, %c0_i32_0, %c0_i32_1 : i32, i32, i32, i32
  }
  func.func @transform_3(%arg0: i32) -> (i32, i32, i32) {
    %c0_i32 = arith.constant 0 : i32
    %c0_i32_0 = arith.constant 0 : i32
    %c0_i32_1 = arith.constant 0 : i32
    %c0_i32_2 = arith.constant 0 : i32
    return %c0_i32, %c0_i32_0, %c0_i32_1 : i32, i32, i32
  }
  func.func @transform_4(%arg0: i32) -> (i32, i32, i32) {
    %c0_i32 = arith.constant 0 : i32
    %c0_i32_0 = arith.constant 0 : i32
    %c0_i32_1 = arith.constant 0 : i32
    %c0_i32_2 = arith.constant 0 : i32
    return %c0_i32, %c0_i32_0, %c0_i32_1 : i32, i32, i32
  }
  func.func @transform_5(%arg0: i32) -> (i32, i32, i32, i32) {
    %c0_i32 = arith.constant 0 : i32
    %c0_i32_0 = arith.constant 0 : i32
    %c0_i32_1 = arith.constant 0 : i32
    %c0_i32_2 = arith.constant 0 : i32
    return %arg0, %c0_i32, %c0_i32_0, %c0_i32_1 : i32, i32, i32, i32
  }
}

module attributes {stable_mosaic.version = 11 : i64} {
  func.func @mlp_head_kernel(%arg0: i32, %arg1: memref<1xf32, #tpu.memory_space<smem>>, %arg2: memref<4x5952xbf16, #tpu.memory_space<vmem>>, %arg3: memref<5952x256xbf16, #tpu.memory_space<vmem>>, %arg4: memref<1x256xf32, #tpu.memory_space<vmem>>, %arg5: memref<256x2xf32, #tpu.memory_space<vmem>>, %arg6: memref<1x2xf32, #tpu.memory_space<vmem>>, %arg7: memref<4x2xf32, #tpu.memory_space<vmem>>) attributes {dimension_semantics = [#tpu.dimension_semantics<parallel>], iteration_bounds = array<i64: 1>, scalar_prefetch = 0 : i64, scratch_operands = 0 : i64, tpu.core_type = #tpu.core_type<tc>, window_params = [{transform_indices = @transform_0, window_bounds = array<i64: 1>}, {transform_indices = @transform_1, window_bounds = array<i64: 4, 5952>}, {pipeline_mode = #tpu.pipeline_mode<synchronous>, transform_indices = @transform_2, window_bounds = array<i64: 5952, 256>}, {pipeline_mode = #tpu.pipeline_mode<synchronous>, transform_indices = @transform_3, window_bounds = array<i64: 1, 256>}, {pipeline_mode = #tpu.pipeline_mode<synchronous>, transform_indices = @transform_4, window_bounds = array<i64: 256, 2>}, {pipeline_mode = #tpu.pipeline_mode<synchronous>, transform_indices = @transform_5, window_bounds = array<i64: 1, 2>}, {transform_indices = @transform_6, window_bounds = array<i64: 4, 2>}]} {
    %c0 = arith.constant 0 : index
    %c0_0 = arith.constant 0 : index
    %0 = vector.load %arg2[%c0, %c0_0] : memref<4x5952xbf16, #tpu.memory_space<vmem>>, vector<4x5952xbf16>
    %c0_1 = arith.constant 0 : index
    %c0_2 = arith.constant 0 : index
    %1 = vector.load %arg3[%c0_1, %c0_2] : memref<5952x256xbf16, #tpu.memory_space<vmem>>, vector<5952x256xbf16>
    %cst = arith.constant dense<0.000000e+00> : vector<4x256xf32>
    %2 = tpu.matmul %0, %1, %cst {dimension_numbers = #tpu.dot_dimension_numbers<[1], [0], [0], [1], [0, 0, 1, 1], [], []>} : vector<4x5952xbf16>, vector<5952x256xbf16>, vector<4x256xf32> -> vector<4x256xf32>
    %c0_3 = arith.constant 0 : index
    %c0_4 = arith.constant 0 : index
    %3 = vector.load %arg4[%c0_3, %c0_4] : memref<1x256xf32, #tpu.memory_space<vmem>>, vector<1x256xf32>
    %4 = vector.broadcast %3 : vector<1x256xf32> to vector<4x256xf32>
    %5 = arith.addf %2, %4 : vector<4x256xf32>
    %c0_5 = arith.constant 0 : index
    %6 = memref.load %arg1[%c0_5] : memref<1xf32, #tpu.memory_space<smem>>
    %cst_6 = arith.constant 0.000000e+00 : f32
    %7 = vector.broadcast %cst_6 : f32 to vector<4x256xf32>
    %8 = arith.maximumf %5, %7 : vector<4x256xf32>
    %cst_7 = arith.constant 0.000000e+00 : f32
    %9 = vector.broadcast %cst_7 : f32 to vector<4x256xf32>
    %10 = arith.minimumf %5, %9 : vector<4x256xf32>
    %11 = vector.broadcast %6 : f32 to vector<4x256xf32>
    %12 = arith.mulf %11, %10 : vector<4x256xf32>
    %13 = arith.addf %8, %12 : vector<4x256xf32>
    %c0_8 = arith.constant 0 : index
    %c0_9 = arith.constant 0 : index
    %14 = vector.load %arg5[%c0_8, %c0_9] : memref<256x2xf32, #tpu.memory_space<vmem>>, vector<256x2xf32>
    %cst_10 = arith.constant dense<0.000000e+00> : vector<4x2xf32>
    %15 = tpu.matmul %13, %14, %cst_10 {dimension_numbers = #tpu.dot_dimension_numbers<[1], [0], [0], [1], [0, 0, 1, 1], [], []>} : vector<4x256xf32>, vector<256x2xf32>, vector<4x2xf32> -> vector<4x2xf32>
    %c0_11 = arith.constant 0 : index
    %c0_12 = arith.constant 0 : index
    %16 = vector.load %arg6[%c0_11, %c0_12] : memref<1x2xf32, #tpu.memory_space<vmem>>, vector<1x2xf32>
    %17 = vector.broadcast %16 : vector<1x2xf32> to vector<4x2xf32>
    %18 = arith.addf %15, %17 : vector<4x2xf32>
    %c0_13 = arith.constant 0 : index
    %c0_14 = arith.constant 0 : index
    %19 = vector.load %arg7[%c0_13, %c0_14] : memref<4x2xf32, #tpu.memory_space<vmem>>, vector<4x2xf32>
    tpu.vector_store %arg7[%c0_13, %c0_14], %18 {strides = array<i32>} : memref<4x2xf32, #tpu.memory_space<vmem>>, vector<4x2xf32>,
    return
  }
  func.func @transform_0(%arg0: i32) -> i32 {
    %c0_i32 = arith.constant 0 : i32
    %c0_i32_0 = arith.constant 0 : i32
    return %c0_i32 : i32
  }
  func.func @transform_1(%arg0: i32) -> (i32, i32) {
    %c0_i32 = arith.constant 0 : i32
    %c0_i32_0 = arith.constant 0 : i32
    return %arg0, %c0_i32 : i32, i32
  }
  func.func @transform_2(%arg0: i32) -> (i32, i32) {
    %c0_i32 = arith.constant 0 : i32
    %c0_i32_0 = arith.constant 0 : i32
    %c0_i32_1 = arith.constant 0 : i32
    return %c0_i32, %c0_i32_0 : i32, i32
  }
  func.func @transform_3(%arg0: i32) -> (i32, i32) {
    %c0_i32 = arith.constant 0 : i32
    %c0_i32_0 = arith.constant 0 : i32
    %c0_i32_1 = arith.constant 0 : i32
    return %c0_i32, %c0_i32_0 : i32, i32
  }
  func.func @transform_4(%arg0: i32) -> (i32, i32) {
    %c0_i32 = arith.constant 0 : i32
    %c0_i32_0 = arith.constant 0 : i32
    %c0_i32_1 = arith.constant 0 : i32
    return %c0_i32, %c0_i32_0 : i32, i32
  }
  func.func @transform_5(%arg0: i32) -> (i32, i32) {
    %c0_i32 = arith.constant 0 : i32
    %c0_i32_0 = arith.constant 0 : i32
    %c0_i32_1 = arith.constant 0 : i32
    return %c0_i32, %c0_i32_0 : i32, i32
  }
  func.func @transform_6(%arg0: i32) -> (i32, i32) {
    %c0_i32 = arith.constant 0 : i32
    %c0_i32_0 = arith.constant 0 : i32
    return %arg0, %c0_i32 : i32, i32
  }
}

</mosaic_0001>

<llo_original>
// kernel: embedding_net_vggish_small.2
$region0: #{embedding_net_vggish_small.2}
  #allocation0 [shape = 'u32[]', space=smem, size = 0x4, offset = 0x4, fixed_abs, tag = 'smem constant byte address 0x4 - core index']
  #allocation1 [shape = 'u32[72,128]{1,0:T(1,128)}', space=vmem, size = 0x9000, scoped, tag = 'internal scratch']
  #allocation2 [shape = 'f32[1]{0:T(128)S(6)}', space=smem, size = 0x200, scoped, tag = 'scoped memory for embedding_net_vggish_small.2']
  %s0 = inlined_call_operand.<no memory space> [shape: f32[1], index: 0, kind: input, shape index: {}]
  %s1 = inlined_call_operand.vmem [shape: f32[1,10,64,128], index: 1, kind: input, shape index: {}]
  %s2 = inlined_call_operand.vmem [shape: f32[1,10,64,128], index: 2, kind: input, shape index: {}]
  %s3 = inlined_call_operand.vmem [shape: f32[5,5,128], index: 3, kind: input, shape index: {}]
  %s4 = inlined_call_operand.vmem [shape: f32[1,1,128], index: 4, kind: input, shape index: {}]
  %s5 = inlined_call_operand.vmem [shape: bf16[1,3,62,128], index: 5, kind: output, shape index: {}]
  %s6 = sld [smem:[#allocation0]]
  $region30: #{embedding_net_vggish_small.2} parent=0
    _
  %s8 = ssub.s32 1, %s6
  %s9 = scalar_select 0, %s8, %s6
  %10 = sst [smem:[#allocation2]] %s0
  // Predicated region
  $region2: #{embedding_net_vggish_small.2} parent=0 // pred_check
    _
  $region3: #{embedding_net_vggish_small.2} parent=0 // pred_check_branch
    %12 = sbr.rel (0) target = $region5
  $region4: #{embedding_net_vggish_small.2} parent=0 // pred_region
    _
  $region5: #{embedding_net_vggish_small.2} parent=0 // pred_fallthru
    _
  // Predicated region
  $region6: #{embedding_net_vggish_small.2} parent=0 // pred_check
    _
  $region7: #{embedding_net_vggish_small.2} parent=0 // pred_check_branch
    %14 = sbr.rel (0) target = $region9
  $region8: #{embedding_net_vggish_small.2} parent=0 // pred_region
    _
  $region9: #{embedding_net_vggish_small.2} parent=0 // pred_fallthru
    _
  // Predicated region
  $region10: #{embedding_net_vggish_small.2} parent=0 // pred_check
    _
  $region11: #{embedding_net_vggish_small.2} parent=0 // pred_check_branch
    %16 = sbr.rel (0) target = $region13
  $region12: #{embedding_net_vggish_small.2} parent=0 // pred_region
    _
  $region13: #{embedding_net_vggish_small.2} parent=0 // pred_fallthru
    _
  // Predicated region
  $region14: #{embedding_net_vggish_small.2} parent=0 // pred_check
    _
  $region15: #{embedding_net_vggish_small.2} parent=0 // pred_check_branch
    %18 = sbr.rel (0) target = $region17
  $region16: #{embedding_net_vggish_small.2} parent=0 // pred_region
    _
  $region17: #{embedding_net_vggish_small.2} parent=0 // pred_fallthru
    _
  // Predicated region
  $region18: #{embedding_net_vggish_small.2} parent=0 // pred_check
    _
  $region19: #{embedding_net_vggish_small.2} parent=0 // pred_check_branch
    %20 = sbr.rel (0) target = $region21
  $region20: #{embedding_net_vggish_small.2} parent=0 // pred_region
    _
  $region21: #{embedding_net_vggish_small.2} parent=0 // pred_fallthru
    _
  %s21 = sld [smem:[#allocation2]]
  %v22 = vld [vmem:[%s3] sm:$0x1f]
  %v23 = vld [vmem:[%s3 + $0x8] sm:$0x1f]
  %v24 = vld [vmem:[%s3 + $0x10] sm:$0x1f]
  %v25 = vld [vmem:[%s3 + $0x18] sm:$0x1f]
  %v26 = vld [vmem:[%s3 + $0x20] sm:$0x1f]
  %v27 = vld [vmem:[%s4] sm:$0x1]
  %v28 = vld [vmem:[%s1] sm:$0xff]
  %v29 = vld [vmem:[%s1 + $0x8] sm:$0xff]
  %v30 = vld [vmem:[%s1 + $0x10] sm:$0xff]
  %v31 = vld [vmem:[%s1 + $0x18] sm:$0xff]
  %v32 = vld [vmem:[%s1 + $0x20] sm:$0xff]
  %v33 = vld [vmem:[%s1 + $0x28] sm:$0xff]
  %v34 = vld [vmem:[%s1 + $0x30] sm:$0xff]
  %v35 = vld [vmem:[%s1 + $0x38] sm:$0x3f]
  %v36 = vld [vmem:[%s1 + $0x40] sm:$0xff]
  %v37 = vld [vmem:[%s1 + $0x48] sm:$0xff]
  %v38 = vld [vmem:[%s1 + $0x50] sm:$0xff]
  %v39 = vld [vmem:[%s1 + $0x58] sm:$0xff]
  %v40 = vld [vmem:[%s1 + $0x60] sm:$0xff]
  %v41 = vld [vmem:[%s1 + $0x68] sm:$0xff]
  %v42 = vld [vmem:[%s1 + $0x70] sm:$0xff]
  %v43 = vld [vmem:[%s1 + $0x78] sm:$0x3f]
  %v44 = vld [vmem:[%s1 + $0x80] sm:$0xff]
  %v45 = vld [vmem:[%s1 + $0x88] sm:$0xff]
  %v46 = vld [vmem:[%s1 + $0x90] sm:$0xff]
  %v47 = vld [vmem:[%s1 + $0x98] sm:$0xff]
  %v48 = vld [vmem:[%s1 + $0xa0] sm:$0xff]
  %v49 = vld [vmem:[%s1 + $0xa8] sm:$0xff]
  %v50 = vld [vmem:[%s1 + $0xb0] sm:$0xff]
  %v51 = vld [vmem:[%s1 + $0xb8] sm:$0x3f]
  %v52 = vld [vmem:[%s1 + $0xc0] sm:$0xff]
  %v53 = vld [vmem:[%s1 + $0xc8] sm:$0xff]
  %v54 = vld [vmem:[%s1 + $0xd0] sm:$0xff]
  %v55 = vld [vmem:[%s1 + $0xd8] sm:$0xff]
  %v56 = vld [vmem:[%s1 + $0xe0] sm:$0xff]
  %v57 = vld [vmem:[%s1 + $0xe8] sm:$0xff]
  %v58 = vld [vmem:[%s1 + $0xf0] sm:$0xff]
  %v59 = vld [vmem:[%s1 + $0xf8] sm:$0x3f]
  %v60 = vld [vmem:[%s1 + $0x100] sm:$0xff]
  %v61 = vld [vmem:[%s1 + $0x108] sm:$0xff]
  %v62 = vld [vmem:[%s1 + $0x110] sm:$0xff]
  %v63 = vld [vmem:[%s1 + $0x118] sm:$0xff]
  %v64 = vld [vmem:[%s1 + $0x120] sm:$0xff]
  %v65 = vld [vmem:[%s1 + $0x128] sm:$0xff]
  %v66 = vld [vmem:[%s1 + $0x130] sm:$0xff]
  %v67 = vld [vmem:[%s1 + $0x138] sm:$0x3f]
  %v68 = vld [vmem:[%s1 + $0x140] sm:$0xff]
  %v69 = vld [vmem:[%s1 + $0x148] sm:$0xff]
  %v70 = vld [vmem:[%s1 + $0x150] sm:$0xff]
  %v71 = vld [vmem:[%s1 + $0x158] sm:$0xff]
  %v72 = vld [vmem:[%s1 + $0x160] sm:$0xff]
  %v73 = vld [vmem:[%s1 + $0x168] sm:$0xff]
  %v74 = vld [vmem:[%s1 + $0x170] sm:$0xff]
  %v75 = vld [vmem:[%s1 + $0x178] sm:$0x3f]
  %v76 = vperm.slane %v22, 0
  %v77 = vmul.f32 %v28, %v76
  %v78 = vmul.f32 %v29, %v76
  %v79 = vmul.f32 %v30, %v76
  %v80 = vmul.f32 %v31, %v76
  %v81 = vmul.f32 %v32, %v76
  %v82 = vmul.f32 %v33, %v76
  %v83 = vmul.f32 %v34, %v76
  %v84 = vmul.f32 %v35, %v76
  %v85 = vmul.f32 %v36, %v76
  %v86 = vmul.f32 %v37, %v76
  %v87 = vmul.f32 %v38, %v76
  %v88 = vmul.f32 %v39, %v76
  %v89 = vmul.f32 %v40, %v76
  %v90 = vmul.f32 %v41, %v76
  %v91 = vmul.f32 %v42, %v76
  %v92 = vmul.f32 %v43, %v76
  %v93 = vmul.f32 %v44, %v76
  %v94 = vmul.f32 %v45, %v76
  %v95 = vmul.f32 %v46, %v76
  %v96 = vmul.f32 %v47, %v76
  %v97 = vmul.f32 %v48, %v76
  %v98 = vmul.f32 %v49, %v76
  %v99 = vmul.f32 %v50, %v76
  %v100 = vmul.f32 %v51, %v76
  %v101 = vmul.f32 %v52, %v76
  %v102 = vmul.f32 %v53, %v76
  %v103 = vmul.f32 %v54, %v76
  %v104 = vmul.f32 %v55, %v76
  %v105 = vmul.f32 %v56, %v76
  %v106 = vmul.f32 %v57, %v76
  %v107 = vmul.f32 %v58, %v76
  %v108 = vmul.f32 %v59, %v76
  %v109 = vmul.f32 %v60, %v76
  %v110 = vmul.f32 %v61, %v76
  %v111 = vmul.f32 %v62, %v76
  %v112 = vmul.f32 %v63, %v76
  %v113 = vmul.f32 %v64, %v76
  %v114 = vmul.f32 %v65, %v76
  %v115 = vmul.f32 %v66, %v76
  %v116 = vmul.f32 %v67, %v76
  %v117 = vmul.f32 %v68, %v76
  %v118 = vmul.f32 %v69, %v76
  %v119 = vmul.f32 %v70, %v76
  %v120 = vmul.f32 %v71, %v76
  %v121 = vmul.f32 %v72, %v76
  %v122 = vmul.f32 %v73, %v76
  %v123 = vmul.f32 %v74, %v76
  %v124 = vmul.f32 %v75, %v76
  %v125 = vld [vmem:[%s2] sm:$0xff]
  %v126 = vld [vmem:[%s2 + $0x8] sm:$0xff]
  %v127 = vld [vmem:[%s2 + $0x10] sm:$0xff]
  %v128 = vld [vmem:[%s2 + $0x18] sm:$0xff]
  %v129 = vld [vmem:[%s2 + $0x20] sm:$0xff]
  %v130 = vld [vmem:[%s2 + $0x28] sm:$0xff]
  %v131 = vld [vmem:[%s2 + $0x30] sm:$0xff]
  %v132 = vld [vmem:[%s2 + $0x38] sm:$0x3f]
  %v133 = vld [vmem:[%s2 + $0x40] sm:$0xff]
  %v134 = vld [vmem:[%s2 + $0x48] sm:$0xff]
  %v135 = vld [vmem:[%s2 + $0x50] sm:$0xff]
  %v136 = vld [vmem:[%s2 + $0x58] sm:$0xff]
  %v137 = vld [vmem:[%s2 + $0x60] sm:$0xff]
  %v138 = vld [vmem:[%s2 + $0x68] sm:$0xff]
  %v139 = vld [vmem:[%s2 + $0x70] sm:$0xff]
  %v140 = vld [vmem:[%s2 + $0x78] sm:$0x3f]
  %v141 = vld [vmem:[%s2 + $0x80] sm:$0xff]
  %v142 = vld [vmem:[%s2 + $0x88] sm:$0xff]
  %v143 = vld [vmem:[%s2 + $0x90] sm:$0xff]
  %v144 = vld [vmem:[%s2 + $0x98] sm:$0xff]
  %v145 = vld [vmem:[%s2 + $0xa0] sm:$0xff]
  %v146 = vld [vmem:[%s2 + $0xa8] sm:$0xff]
  %v147 = vld [vmem:[%s2 + $0xb0] sm:$0xff]
  %v148 = vld [vmem:[%s2 + $0xb8] sm:$0x3f]
  %v149 = vld [vmem:[%s2 + $0xc0] sm:$0xff]
  %v150 = vld [vmem:[%s2 + $0xc8] sm:$0xff]
  %v151 = vld [vmem:[%s2 + $0xd0] sm:$0xff]
  %v152 = vld [vmem:[%s2 + $0xd8] sm:$0xff]
  %v153 = vld [vmem:[%s2 + $0xe0] sm:$0xff]
  %v154 = vld [vmem:[%s2 + $0xe8] sm:$0xff]
  %v155 = vld [vmem:[%s2 + $0xf0] sm:$0xff]
  %v156 = vld [vmem:[%s2 + $0xf8] sm:$0x3f]
  %v157 = vld [vmem:[%s2 + $0x100] sm:$0xff]
  %v158 = vld [vmem:[%s2 + $0x108] sm:$0xff]
  %v159 = vld [vmem:[%s2 + $0x110] sm:$0xff]
  %v160 = vld [vmem:[%s2 + $0x118] sm:$0xff]
  %v161 = vld [vmem:[%s2 + $0x120] sm:$0xff]
  %v162 = vld [vmem:[%s2 + $0x128] sm:$0xff]
  %v163 = vld [vmem:[%s2 + $0x130] sm:$0xff]
  %v164 = vld [vmem:[%s2 + $0x138] sm:$0x3f]
  %v165 = vld [vmem:[%s2 + $0x140] sm:$0xff]
  %v166 = vld [vmem:[%s2 + $0x148] sm:$0xff]
  %v167 = vld [vmem:[%s2 + $0x150] sm:$0xff]
  %v168 = vld [vmem:[%s2 + $0x158] sm:$0xff]
  %v169 = vld [vmem:[%s2 + $0x160] sm:$0xff]
  %v170 = vld [vmem:[%s2 + $0x168] sm:$0xff]
  %v171 = vld [vmem:[%s2 + $0x170] sm:$0xff]
  %v172 = vld [vmem:[%s2 + $0x178] sm:$0x3f]
  %v173 = vperm.slane %v22, 1
  %v174 = vmul.f32 %v125, %v173
  %v175 = vmul.f32 %v126, %v173
  %v176 = vmul.f32 %v127, %v173
  %v177 = vmul.f32 %v128, %v173
  %v178 = vmul.f32 %v129, %v173
  %v179 = vmul.f32 %v130, %v173
  %v180 = vmul.f32 %v131, %v173
  %v181 = vmul.f32 %v132, %v173
  %v182 = vmul.f32 %v133, %v173
  %v183 = vmul.f32 %v134, %v173
  %v184 = vmul.f32 %v135, %v173
  %v185 = vmul.f32 %v136, %v173
  %v186 = vmul.f32 %v137, %v173
  %v187 = vmul.f32 %v138, %v173
  %v188 = vmul.f32 %v139, %v173
  %v189 = vmul.f32 %v140, %v173
  %v190 = vmul.f32 %v141, %v173
  %v191 = vmul.f32 %v142, %v173
  %v192 = vmul.f32 %v143, %v173
  %v193 = vmul.f32 %v144, %v173
  %v194 = vmul.f32 %v145, %v173
  %v195 = vmul.f32 %v146, %v173
  %v196 = vmul.f32 %v147, %v173
  %v197 = vmul.f32 %v148, %v173
  %v198 = vmul.f32 %v149, %v173
  %v199 = vmul.f32 %v150, %v173
  %v200 = vmul.f32 %v151, %v173
  %v201 = vmul.f32 %v152, %v173
  %v202 = vmul.f32 %v153, %v173
  %v203 = vmul.f32 %v154, %v173
  %v204 = vmul.f32 %v155, %v173
  %v205 = vmul.f32 %v156, %v173
  %v206 = vmul.f32 %v157, %v173
  %v207 = vmul.f32 %v158, %v173
  %v208 = vmul.f32 %v159, %v173
  %v209 = vmul.f32 %v160, %v173
  %v210 = vmul.f32 %v161, %v173
  %v211 = vmul.f32 %v162, %v173
  %v212 = vmul.f32 %v163, %v173
  %v213 = vmul.f32 %v164, %v173
  %v214 = vmul.f32 %v165, %v173
  %v215 = vmul.f32 %v166, %v173
  %v216 = vmul.f32 %v167, %v173
  %v217 = vmul.f32 %v168, %v173
  %v218 = vmul.f32 %v169, %v173
  %v219 = vmul.f32 %v170, %v173
  %v220 = vmul.f32 %v171, %v173
  %v221 = vmul.f32 %v172, %v173
  %v222 = vadd.f32 %v77, %v174
  %v223 = vadd.f32 %v78, %v175
  %v224 = vadd.f32 %v79, %v176
  %v225 = vadd.f32 %v80, %v177
  %v226 = vadd.f32 %v81, %v178
  %v227 = vadd.f32 %v82, %v179
  %v228 = vadd.f32 %v83, %v180
  %v229 = vadd.f32 %v84, %v181
  %v230 = vadd.f32 %v85, %v182
  %v231 = vadd.f32 %v86, %v183
  %v232 = vadd.f32 %v87, %v184
  %v233 = vadd.f32 %v88, %v185
  %v234 = vadd.f32 %v89, %v186
  %v235 = vadd.f32 %v90, %v187
  %v236 = vadd.f32 %v91, %v188
  %v237 = vadd.f32 %v92, %v189
  %v238 = vadd.f32 %v93, %v190
  %v239 = vadd.f32 %v94, %v191
  %v240 = vadd.f32 %v95, %v192
  %v241 = vadd.f32 %v96, %v193
  %v242 = vadd.f32 %v97, %v194
  %v243 = vadd.f32 %v98, %v195
  %v244 = vadd.f32 %v99, %v196
  %v245 = vadd.f32 %v100, %v197
  %v246 = vadd.f32 %v101, %v198
  %v247 = vadd.f32 %v102, %v199
  %v248 = vadd.f32 %v103, %v200
  %v249 = vadd.f32 %v104, %v201
  %v250 = vadd.f32 %v105, %v202
  %v251 = vadd.f32 %v106, %v203
  %v252 = vadd.f32 %v107, %v204
  %v253 = vadd.f32 %v108, %v205
  %v254 = vadd.f32 %v109, %v206
  %v255 = vadd.f32 %v110, %v207
  %v256 = vadd.f32 %v111, %v208
  %v257 = vadd.f32 %v112, %v209
  %v258 = vadd.f32 %v113, %v210
  %v259 = vadd.f32 %v114, %v211
  %v260 = vadd.f32 %v115, %v212
  %v261 = vadd.f32 %v116, %v213
  %v262 = vadd.f32 %v117, %v214
  %v263 = vadd.f32 %v118, %v215
  %v264 = vadd.f32 %v119, %v216
  %v265 = vadd.f32 %v120, %v217
  %v266 = vadd.f32 %v121, %v218
  %v267 = vadd.f32 %v122, %v219
  %v268 = vadd.f32 %v123, %v220
  %v269 = vadd.f32 %v124, %v221
  %v270 = vld [vmem:[%s1 + $0x1] sm:$0xff]
  %v271 = vld [vmem:[%s1 + $0x9] sm:$0xff]
  %v272 = vld [vmem:[%s1 + $0x11] sm:$0xff]
  %v273 = vld [vmem:[%s1 + $0x19] sm:$0xff]
  %v274 = vld [vmem:[%s1 + $0x21] sm:$0xff]
  %v275 = vld [vmem:[%s1 + $0x29] sm:$0xff]
  %v276 = vld [vmem:[%s1 + $0x31] sm:$0xff]
  %v277 = vld [vmem:[%s1 + $0x39] sm:$0x3f]
  %v278 = vld [vmem:[%s1 + $0x41] sm:$0xff]
  %v279 = vld [vmem:[%s1 + $0x49] sm:$0xff]
  %v280 = vld [vmem:[%s1 + $0x51] sm:$0xff]
  %v281 = vld [vmem:[%s1 + $0x59] sm:$0xff]
  %v282 = vld [vmem:[%s1 + $0x61] sm:$0xff]
  %v283 = vld [vmem:[%s1 + $0x69] sm:$0xff]
  %v284 = vld [vmem:[%s1 + $0x71] sm:$0xff]
  %v285 = vld [vmem:[%s1 + $0x79] sm:$0x3f]
  %v286 = vld [vmem:[%s1 + $0x81] sm:$0xff]
  %v287 = vld [vmem:[%s1 + $0x89] sm:$0xff]
  %v288 = vld [vmem:[%s1 + $0x91] sm:$0xff]
  %v289 = vld [vmem:[%s1 + $0x99] sm:$0xff]
  %v290 = vld [vmem:[%s1 + $0xa1] sm:$0xff]
  %v291 = vld [vmem:[%s1 + $0xa9] sm:$0xff]
  %v292 = vld [vmem:[%s1 + $0xb1] sm:$0xff]
  %v293 = vld [vmem:[%s1 + $0xb9] sm:$0x3f]
  %v294 = vld [vmem:[%s1 + $0xc1] sm:$0xff]
  %v295 = vld [vmem:[%s1 + $0xc9] sm:$0xff]
  %v296 = vld [vmem:[%s1 + $0xd1] sm:$0xff]
  %v297 = vld [vmem:[%s1 + $0xd9] sm:$0xff]
  %v298 = vld [vmem:[%s1 + $0xe1] sm:$0xff]
  %v299 = vld [vmem:[%s1 + $0xe9] sm:$0xff]
  %v300 = vld [vmem:[%s1 + $0xf1] sm:$0xff]
  %v301 = vld [vmem:[%s1 + $0xf9] sm:$0x3f]
  %v302 = vld [vmem:[%s1 + $0x101] sm:$0xff]
  %v303 = vld [vmem:[%s1 + $0x109] sm:$0xff]
  %v304 = vld [vmem:[%s1 + $0x111] sm:$0xff]
  %v305 = vld [vmem:[%s1 + $0x119] sm:$0xff]
  %v306 = vld [vmem:[%s1 + $0x121] sm:$0xff]
  %v307 = vld [vmem:[%s1 + $0x129] sm:$0xff]
  %v308 = vld [vmem:[%s1 + $0x131] sm:$0xff]
  %v309 = vld [vmem:[%s1 + $0x139] sm:$0x3f]
  %v310 = vld [vmem:[%s1 + $0x141] sm:$0xff]
  %v311 = vld [vmem:[%s1 + $0x149] sm:$0xff]
  %v312 = vld [vmem:[%s1 + $0x151] sm:$0xff]
  %v313 = vld [vmem:[%s1 + $0x159] sm:$0xff]
  %v314 = vld [vmem:[%s1 + $0x161] sm:$0xff]
  %v315 = vld [vmem:[%s1 + $0x169] sm:$0xff]
  %v316 = vld [vmem:[%s1 + $0x171] sm:$0xff]
  %v317 = vld [vmem:[%s1 + $0x179] sm:$0x3f]
  %v318 = vperm.slane %v22, 2
  %v319 = vmul.f32 %v270, %v318
  %v320 = vmul.f32 %v271, %v318
  %v321 = vmul.f32 %v272, %v318
  %v322 = vmul.f32 %v273, %v318
  %v323 = vmul.f32 %v274, %v318
  %v324 = vmul.f32 %v275, %v318
  %v325 = vmul.f32 %v276, %v318
  %v326 = vmul.f32 %v277, %v318
  %v327 = vmul.f32 %v278, %v318
  %v328 = vmul.f32 %v279, %v318
  %v329 = vmul.f32 %v280, %v318
  %v330 = vmul.f32 %v281, %v318
  %v331 = vmul.f32 %v282, %v318
  %v332 = vmul.f32 %v283, %v318
  %v333 = vmul.f32 %v284, %v318
  %v334 = vmul.f32 %v285, %v318
  %v335 = vmul.f32 %v286, %v318
  %v336 = vmul.f32 %v287, %v318
  %v337 = vmul.f32 %v288, %v318
  %v338 = vmul.f32 %v289, %v318
  %v339 = vmul.f32 %v290, %v318
  %v340 = vmul.f32 %v291, %v318
  %v341 = vmul.f32 %v292, %v318
  %v342 = vmul.f32 %v293, %v318
  %v343 = vmul.f32 %v294, %v318
  %v344 = vmul.f32 %v295, %v318
  %v345 = vmul.f32 %v296, %v318
  %v346 = vmul.f32 %v297, %v318
  %v347 = vmul.f32 %v298, %v318
  %v348 = vmul.f32 %v299, %v318
  %v349 = vmul.f32 %v300, %v318
  %v350 = vmul.f32 %v301, %v318
  %v351 = vmul.f32 %v302, %v318
  %v352 = vmul.f32 %v303, %v318
  %v353 = vmul.f32 %v304, %v318
  %v354 = vmul.f32 %v305, %v318
  %v355 = vmul.f32 %v306, %v318
  %v356 = vmul.f32 %v307, %v318
  %v357 = vmul.f32 %v308, %v318
  %v358 = vmul.f32 %v309, %v318
  %v359 = vmul.f32 %v310, %v318
  %v360 = vmul.f32 %v311, %v318
  %v361 = vmul.f32 %v312, %v318
  %v362 = vmul.f32 %v313, %v318
  %v363 = vmul.f32 %v314, %v318
  %v364 = vmul.f32 %v315, %v318
  %v365 = vmul.f32 %v316, %v318
  %v366 = vmul.f32 %v317, %v318
  %v367 = vadd.f32 %v222, %v319
  %v368 = vadd.f32 %v223, %v320
  %v369 = vadd.f32 %v224, %v321
  %v370 = vadd.f32 %v225, %v322
  %v371 = vadd.f32 %v226, %v323
  %v372 = vadd.f32 %v227, %v324
  %v373 = vadd.f32 %v228, %v325
  %v374 = vadd.f32 %v229, %v326
  %v375 = vadd.f32 %v230, %v327
  %v376 = vadd.f32 %v231, %v328
  %v377 = vadd.f32 %v232, %v329
  %v378 = vadd.f32 %v233, %v330
  %v379 = vadd.f32 %v234, %v331
  %v380 = vadd.f32 %v235, %v332
  %v381 = vadd.f32 %v236, %v333
  %v382 = vadd.f32 %v237, %v334
  %v383 = vadd.f32 %v238, %v335
  %v384 = vadd.f32 %v239, %v336
  %v385 = vadd.f32 %v240, %v337
  %v386 = vadd.f32 %v241, %v338
  %v387 = vadd.f32 %v242, %v339
  %v388 = vadd.f32 %v243, %v340
  %v389 = vadd.f32 %v244, %v341
  %v390 = vadd.f32 %v245, %v342
  %v391 = vadd.f32 %v246, %v343
  %v392 = vadd.f32 %v247, %v344
  %v393 = vadd.f32 %v248, %v345
  %v394 = vadd.f32 %v249, %v346
  %v395 = vadd.f32 %v250, %v347
  %v396 = vadd.f32 %v251, %v348
  %v397 = vadd.f32 %v252, %v349
  %v398 = vadd.f32 %v253, %v350
  %v399 = vadd.f32 %v254, %v351
  %v400 = vadd.f32 %v255, %v352
  %v401 = vadd.f32 %v256, %v353
  %v402 = vadd.f32 %v257, %v354
  %v403 = vadd.f32 %v258, %v355
  %v404 = vadd.f32 %v259, %v356
  %v405 = vadd.f32 %v260, %v357
  %v406 = vadd.f32 %v261, %v358
  %v407 = vadd.f32 %v262, %v359
  %v408 = vadd.f32 %v263, %v360
  %v409 = vadd.f32 %v264, %v361
  %v410 = vadd.f32 %v265, %v362
  %v411 = vadd.f32 %v266, %v363
  %v412 = vadd.f32 %v267, %v364
  %v413 = vadd.f32 %v268, %v365
  %v414 = vadd.f32 %v269, %v366
  %v415 = vld [vmem:[%s2 + $0x1] sm:$0xff]
  %v416 = vld [vmem:[%s2 + $0x9] sm:$0xff]
  %v417 = vld [vmem:[%s2 + $0x11] sm:$0xff]
  %v418 = vld [vmem:[%s2 + $0x19] sm:$0xff]
  %v419 = vld [vmem:[%s2 + $0x21] sm:$0xff]
  %v420 = vld [vmem:[%s2 + $0x29] sm:$0xff]
  %v421 = vld [vmem:[%s2 + $0x31] sm:$0xff]
  %v422 = vld [vmem:[%s2 + $0x39] sm:$0x3f]
  %v423 = vld [vmem:[%s2 + $0x41] sm:$0xff]
  %v424 = vld [vmem:[%s2 + $0x49] sm:$0xff]
  %v425 = vld [vmem:[%s2 + $0x51] sm:$0xff]
  %v426 = vld [vmem:[%s2 + $0x59] sm:$0xff]
  %v427 = vld [vmem:[%s2 + $0x61] sm:$0xff]
  %v428 = vld [vmem:[%s2 + $0x69] sm:$0xff]
  %v429 = vld [vmem:[%s2 + $0x71] sm:$0xff]
  %v430 = vld [vmem:[%s2 + $0x79] sm:$0x3f]
  %v431 = vld [vmem:[%s2 + $0x81] sm:$0xff]
  %v432 = vld [vmem:[%s2 + $0x89] sm:$0xff]
  %v433 = vld [vmem:[%s2 + $0x91] sm:$0xff]
  %v434 = vld [vmem:[%s2 + $0x99] sm:$0xff]
  %v435 = vld [vmem:[%s2 + $0xa1] sm:$0xff]
  %v436 = vld [vmem:[%s2 + $0xa9] sm:$0xff]
  %v437 = vld [vmem:[%s2 + $0xb1] sm:$0xff]
  %v438 = vld [vmem:[%s2 + $0xb9] sm:$0x3f]
  %v439 = vld [vmem:[%s2 + $0xc1] sm:$0xff]
  %v440 = vld [vmem:[%s2 + $0xc9] sm:$0xff]
  %v441 = vld [vmem:[%s2 + $0xd1] sm:$0xff]
  %v442 = vld [vmem:[%s2 + $0xd9] sm:$0xff]
  %v443 = vld [vmem:[%s2 + $0xe1] sm:$0xff]
  %v444 = vld [vmem:[%s2 + $0xe9] sm:$0xff]
  %v445 = vld [vmem:[%s2 + $0xf1] sm:$0xff]
  %v446 = vld [vmem:[%s2 + $0xf9] sm:$0x3f]
  %v447 = vld [vmem:[%s2 + $0x101] sm:$0xff]
  %v448 = vld [vmem:[%s2 + $0x109] sm:$0xff]
  %v449 = vld [vmem:[%s2 + $0x111] sm:$0xff]
  %v450 = vld [vmem:[%s2 + $0x119] sm:$0xff]
  %v451 = vld [vmem:[%s2 + $0x121] sm:$0xff]
  %v452 = vld [vmem:[%s2 + $0x129] sm:$0xff]
  %v453 = vld [vmem:[%s2 + $0x131] sm:$0xff]
  %v454 = vld [vmem:[%s2 + $0x139] sm:$0x3f]
  %v455 = vld [vmem:[%s2 + $0x141] sm:$0xff]
  %v456 = vld [vmem:[%s2 + $0x149] sm:$0xff]
  %v457 = vld [vmem:[%s2 + $0x151] sm:$0xff]
  %v458 = vld [vmem:[%s2 + $0x159] sm:$0xff]
  %v459 = vld [vmem:[%s2 + $0x161] sm:$0xff]
  %v460 = vld [vmem:[%s2 + $0x169] sm:$0xff]
  %v461 = vld [vmem:[%s2 + $0x171] sm:$0xff]
  %v462 = vld [vmem:[%s2 + $0x179] sm:$0x3f]
  %v463 = vperm.slane %v22, 3
  %v464 = vmul.f32 %v415, %v463
  %v465 = vmul.f32 %v416, %v463
  %v466 = vmul.f32 %v417, %v463
  %v467 = vmul.f32 %v418, %v463
  %v468 = vmul.f32 %v419, %v463
  %v469 = vmul.f32 %v420, %v463
  %v470 = vmul.f32 %v421, %v463
  %v471 = vmul.f32 %v422, %v463
  %v472 = vmul.f32 %v423, %v463
  %v473 = vmul.f32 %v424, %v463
  %v474 = vmul.f32 %v425, %v463
  %v475 = vmul.f32 %v426, %v463
  %v476 = vmul.f32 %v427, %v463
  %v477 = vmul.f32 %v428, %v463
  %v478 = vmul.f32 %v429, %v463
  %v479 = vmul.f32 %v430, %v463
  %v480 = vmul.f32 %v431, %v463
  %v481 = vmul.f32 %v432, %v463
  %v482 = vmul.f32 %v433, %v463
  %v483 = vmul.f32 %v434, %v463
  %v484 = vmul.f32 %v435, %v463
  %v485 = vmul.f32 %v436, %v463
  %v486 = vmul.f32 %v437, %v463
  %v487 = vmul.f32 %v438, %v463
  %v488 = vmul.f32 %v439, %v463
  %v489 = vmul.f32 %v440, %v463
  %v490 = vmul.f32 %v441, %v463
  %v491 = vmul.f32 %v442, %v463
  %v492 = vmul.f32 %v443, %v463
  %v493 = vmul.f32 %v444, %v463
  %v494 = vmul.f32 %v445, %v463
  %v495 = vmul.f32 %v446, %v463
  %v496 = vmul.f32 %v447, %v463
  %v497 = vmul.f32 %v448, %v463
  %v498 = vmul.f32 %v449, %v463
  %v499 = vmul.f32 %v450, %v463
  %v500 = vmul.f32 %v451, %v463
  %v501 = vmul.f32 %v452, %v463
  %v502 = vmul.f32 %v453, %v463
  %v503 = vmul.f32 %v454, %v463
  %v504 = vmul.f32 %v455, %v463
  %v505 = vmul.f32 %v456, %v463
  %v506 = vmul.f32 %v457, %v463
  %v507 = vmul.f32 %v458, %v463
  %v508 = vmul.f32 %v459, %v463
  %v509 = vmul.f32 %v460, %v463
  %v510 = vmul.f32 %v461, %v463
  %v511 = vmul.f32 %v462, %v463
  %v512 = vadd.f32 %v367, %v464
  %v513 = vadd.f32 %v368, %v465
  %v514 = vadd.f32 %v369, %v466
  %v515 = vadd.f32 %v370, %v467
  %v516 = vadd.f32 %v371, %v468
  %v517 = vadd.f32 %v372, %v469
  %v518 = vadd.f32 %v373, %v470
  %v519 = vadd.f32 %v374, %v471
  %v520 = vadd.f32 %v375, %v472
  %v521 = vadd.f32 %v376, %v473
  %v522 = vadd.f32 %v377, %v474
  %v523 = vadd.f32 %v378, %v475
  %v524 = vadd.f32 %v379, %v476
  %v525 = vadd.f32 %v380, %v477
  %v526 = vadd.f32 %v381, %v478
  %v527 = vadd.f32 %v382, %v479
  %v528 = vadd.f32 %v383, %v480
  %v529 = vadd.f32 %v384, %v481
  %v530 = vadd.f32 %v385, %v482
  %v531 = vadd.f32 %v386, %v483
  %v532 = vadd.f32 %v387, %v484
  %v533 = vadd.f32 %v388, %v485
  %v534 = vadd.f32 %v389, %v486
  %v535 = vadd.f32 %v390, %v487
  %v536 = vadd.f32 %v391, %v488
  %v537 = vadd.f32 %v392, %v489
  %v538 = vadd.f32 %v393, %v490
  %v539 = vadd.f32 %v394, %v491
  %v540 = vadd.f32 %v395, %v492
  %v541 = vadd.f32 %v396, %v493
  %v542 = vadd.f32 %v397, %v494
  %v543 = vadd.f32 %v398, %v495
  %v544 = vadd.f32 %v399, %v496
  %v545 = vadd.f32 %v400, %v497
  %v546 = vadd.f32 %v401, %v498
  %v547 = vadd.f32 %v402, %v499
  %v548 = vadd.f32 %v403, %v500
  %v549 = vadd.f32 %v404, %v501
  %v550 = vadd.f32 %v405, %v502
  %v551 = vadd.f32 %v406, %v503
  %v552 = vadd.f32 %v407, %v504
  %v553 = vadd.f32 %v408, %v505
  %v554 = vadd.f32 %v409, %v506
  %v555 = vadd.f32 %v410, %v507
  %v556 = vadd.f32 %v411, %v508
  %v557 = vadd.f32 %v412, %v509
  %v558 = vadd.f32 %v413, %v510
  %v559 = vadd.f32 %v414, %v511
  %v560 = vld [vmem:[%s1 + $0x2] sm:$0xff]
  %v561 = vld [vmem:[%s1 + $0xa] sm:$0xff]
  %v562 = vld [vmem:[%s1 + $0x12] sm:$0xff]
  %v563 = vld [vmem:[%s1 + $0x1a] sm:$0xff]
  %v564 = vld [vmem:[%s1 + $0x22] sm:$0xff]
  %v565 = vld [vmem:[%s1 + $0x2a] sm:$0xff]
  %v566 = vld [vmem:[%s1 + $0x32] sm:$0xff]
  %v567 = vld [vmem:[%s1 + $0x3a] sm:$0x3f]
  %v568 = vld [vmem:[%s1 + $0x42] sm:$0xff]
  %v569 = vld [vmem:[%s1 + $0x4a] sm:$0xff]
  %v570 = vld [vmem:[%s1 + $0x52] sm:$0xff]
  %v571 = vld [vmem:[%s1 + $0x5a] sm:$0xff]
  %v572 = vld [vmem:[%s1 + $0x62] sm:$0xff]
  %v573 = vld [vmem:[%s1 + $0x6a] sm:$0xff]
  %v574 = vld [vmem:[%s1 + $0x72] sm:$0xff]
  %v575 = vld [vmem:[%s1 + $0x7a] sm:$0x3f]
  %v576 = vld [vmem:[%s1 + $0x82] sm:$0xff]
  %v577 = vld [vmem:[%s1 + $0x8a] sm:$0xff]
  %v578 = vld [vmem:[%s1 + $0x92] sm:$0xff]
  %v579 = vld [vmem:[%s1 + $0x9a] sm:$0xff]
  %v580 = vld [vmem:[%s1 + $0xa2] sm:$0xff]
  %v581 = vld [vmem:[%s1 + $0xaa] sm:$0xff]
  %v582 = vld [vmem:[%s1 + $0xb2] sm:$0xff]
  %v583 = vld [vmem:[%s1 + $0xba] sm:$0x3f]
  %v584 = vld [vmem:[%s1 + $0xc2] sm:$0xff]
  %v585 = vld [vmem:[%s1 + $0xca] sm:$0xff]
  %v586 = vld [vmem:[%s1 + $0xd2] sm:$0xff]
  %v587 = vld [vmem:[%s1 + $0xda] sm:$0xff]
  %v588 = vld [vmem:[%s1 + $0xe2] sm:$0xff]
  %v589 = vld [vmem:[%s1 + $0xea] sm:$0xff]
  %v590 = vld [vmem:[%s1 + $0xf2] sm:$0xff]
  %v591 = vld [vmem:[%s1 + $0xfa] sm:$0x3f]
  %v592 = vld [vmem:[%s1 + $0x102] sm:$0xff]
  %v593 = vld [vmem:[%s1 + $0x10a] sm:$0xff]
  %v594 = vld [vmem:[%s1 + $0x112] sm:$0xff]
  %v595 = vld [vmem:[%s1 + $0x11a] sm:$0xff]
  %v596 = vld [vmem:[%s1 + $0x122] sm:$0xff]
  %v597 = vld [vmem:[%s1 + $0x12a] sm:$0xff]
  %v598 = vld [vmem:[%s1 + $0x132] sm:$0xff]
  %v599 = vld [vmem:[%s1 + $0x13a] sm:$0x3f]
  %v600 = vld [vmem:[%s1 + $0x142] sm:$0xff]
  %v601 = vld [vmem:[%s1 + $0x14a] sm:$0xff]
  %v602 = vld [vmem:[%s1 + $0x152] sm:$0xff]
  %v603 = vld [vmem:[%s1 + $0x15a] sm:$0xff]
  %v604 = vld [vmem:[%s1 + $0x162] sm:$0xff]
  %v605 = vld [vmem:[%s1 + $0x16a] sm:$0xff]
  %v606 = vld [vmem:[%s1 + $0x172] sm:$0xff]
  %v607 = vld [vmem:[%s1 + $0x17a] sm:$0x3f]
  %v608 = vperm.slane %v22, 4
  %v609 = vmul.f32 %v560, %v608
  %v610 = vmul.f32 %v561, %v608
  %v611 = vmul.f32 %v562, %v608
  %v612 = vmul.f32 %v563, %v608
  %v613 = vmul.f32 %v564, %v608
  %v614 = vmul.f32 %v565, %v608
  %v615 = vmul.f32 %v566, %v608
  %v616 = vmul.f32 %v567, %v608
  %v617 = vmul.f32 %v568, %v608
  %v618 = vmul.f32 %v569, %v608
  %v619 = vmul.f32 %v570, %v608
  %v620 = vmul.f32 %v571, %v608
  %v621 = vmul.f32 %v572, %v608
  %v622 = vmul.f32 %v573, %v608
  %v623 = vmul.f32 %v574, %v608
  %v624 = vmul.f32 %v575, %v608
  %v625 = vmul.f32 %v576, %v608
  %v626 = vmul.f32 %v577, %v608
  %v627 = vmul.f32 %v578, %v608
  %v628 = vmul.f32 %v579, %v608
  %v629 = vmul.f32 %v580, %v608
  %v630 = vmul.f32 %v581, %v608
  %v631 = vmul.f32 %v582, %v608
  %v632 = vmul.f32 %v583, %v608
  %v633 = vmul.f32 %v584, %v608
  %v634 = vmul.f32 %v585, %v608
  %v635 = vmul.f32 %v586, %v608
  %v636 = vmul.f32 %v587, %v608
  %v637 = vmul.f32 %v588, %v608
  %v638 = vmul.f32 %v589, %v608
  %v639 = vmul.f32 %v590, %v608
  %v640 = vmul.f32 %v591, %v608
  %v641 = vmul.f32 %v592, %v608
  %v642 = vmul.f32 %v593, %v608
  %v643 = vmul.f32 %v594, %v608
  %v644 = vmul.f32 %v595, %v608
  %v645 = vmul.f32 %v596, %v608
  %v646 = vmul.f32 %v597, %v608
  %v647 = vmul.f32 %v598, %v608
  %v648 = vmul.f32 %v599, %v608
  %v649 = vmul.f32 %v600, %v608
  %v650 = vmul.f32 %v601, %v608
  %v651 = vmul.f32 %v602, %v608
  %v652 = vmul.f32 %v603, %v608
  %v653 = vmul.f32 %v604, %v608
  %v654 = vmul.f32 %v605, %v608
  %v655 = vmul.f32 %v606, %v608
  %v656 = vmul.f32 %v607, %v608
  %v657 = vadd.f32 %v512, %v609
  %v658 = vadd.f32 %v513, %v610
  %v659 = vadd.f32 %v514, %v611
  %v660 = vadd.f32 %v515, %v612
  %v661 = vadd.f32 %v516, %v613
  %v662 = vadd.f32 %v517, %v614
  %v663 = vadd.f32 %v518, %v615
  %v664 = vadd.f32 %v519, %v616
  %v665 = vadd.f32 %v520, %v617
  %v666 = vadd.f32 %v521, %v618
  %v667 = vadd.f32 %v522, %v619
  %v668 = vadd.f32 %v523, %v620
  %v669 = vadd.f32 %v524, %v621
  %v670 = vadd.f32 %v525, %v622
  %v671 = vadd.f32 %v526, %v623
  %v672 = vadd.f32 %v527, %v624
  %v673 = vadd.f32 %v528, %v625
  %v674 = vadd.f32 %v529, %v626
  %v675 = vadd.f32 %v530, %v627
  %v676 = vadd.f32 %v531, %v628
  %v677 = vadd.f32 %v532, %v629
  %v678 = vadd.f32 %v533, %v630
  %v679 = vadd.f32 %v534, %v631
  %v680 = vadd.f32 %v535, %v632
  %v681 = vadd.f32 %v536, %v633
  %v682 = vadd.f32 %v537, %v634
  %v683 = vadd.f32 %v538, %v635
  %v684 = vadd.f32 %v539, %v636
  %v685 = vadd.f32 %v540, %v637
  %v686 = vadd.f32 %v541, %v638
  %v687 = vadd.f32 %v542, %v639
  %v688 = vadd.f32 %v543, %v640
  %v689 = vadd.f32 %v544, %v641
  %v690 = vadd.f32 %v545, %v642
  %v691 = vadd.f32 %v546, %v643
  %v692 = vadd.f32 %v547, %v644
  %v693 = vadd.f32 %v548, %v645
  %v694 = vadd.f32 %v549, %v646
  %v695 = vadd.f32 %v550, %v647
  %v696 = vadd.f32 %v551, %v648
  %v697 = vadd.f32 %v552, %v649
  %v698 = vadd.f32 %v553, %v650
  %v699 = vadd.f32 %v554, %v651
  %v700 = vadd.f32 %v555, %v652
  %v701 = vadd.f32 %v556, %v653
  %v702 = vadd.f32 %v557, %v654
  %v703 = vadd.f32 %v558, %v655
  %v704 = vadd.f32 %v559, %v656
  %s705 = scalar_lea.vmem %s1, 64
  %v706 = vld [vmem:[%s705] sm:$0xff]
  %v707 = vld [vmem:[%s705 + $0x8] sm:$0xff]
  %v708 = vld [vmem:[%s705 + $0x10] sm:$0xff]
  %v709 = vld [vmem:[%s705 + $0x18] sm:$0xff]
  %v710 = vld [vmem:[%s705 + $0x20] sm:$0xff]
  %v711 = vld [vmem:[%s705 + $0x28] sm:$0xff]
  %v712 = vld [vmem:[%s705 + $0x30] sm:$0xff]
  %v713 = vld [vmem:[%s705 + $0x38] sm:$0x3f]
  %v714 = vld [vmem:[%s705 + $0x40] sm:$0xff]
  %v715 = vld [vmem:[%s705 + $0x48] sm:$0xff]
  %v716 = vld [vmem:[%s705 + $0x50] sm:$0xff]
  %v717 = vld [vmem:[%s705 + $0x58] sm:$0xff]
  %v718 = vld [vmem:[%s705 + $0x60] sm:$0xff]
  %v719 = vld [vmem:[%s705 + $0x68] sm:$0xff]
  %v720 = vld [vmem:[%s705 + $0x70] sm:$0xff]
  %v721 = vld [vmem:[%s705 + $0x78] sm:$0x3f]
  %v722 = vld [vmem:[%s705 + $0x80] sm:$0xff]
  %v723 = vld [vmem:[%s705 + $0x88] sm:$0xff]
  %v724 = vld [vmem:[%s705 + $0x90] sm:$0xff]
  %v725 = vld [vmem:[%s705 + $0x98] sm:$0xff]
  %v726 = vld [vmem:[%s705 + $0xa0] sm:$0xff]
  %v727 = vld [vmem:[%s705 + $0xa8] sm:$0xff]
  %v728 = vld [vmem:[%s705 + $0xb0] sm:$0xff]
  %v729 = vld [vmem:[%s705 + $0xb8] sm:$0x3f]
  %v730 = vld [vmem:[%s705 + $0xc0] sm:$0xff]
  %v731 = vld [vmem:[%s705 + $0xc8] sm:$0xff]
  %v732 = vld [vmem:[%s705 + $0xd0] sm:$0xff]
  %v733 = vld [vmem:[%s705 + $0xd8] sm:$0xff]
  %v734 = vld [vmem:[%s705 + $0xe0] sm:$0xff]
  %v735 = vld [vmem:[%s705 + $0xe8] sm:$0xff]
  %v736 = vld [vmem:[%s705 + $0xf0] sm:$0xff]
  %v737 = vld [vmem:[%s705 + $0xf8] sm:$0x3f]
  %v738 = vld [vmem:[%s705 + $0x100] sm:$0xff]
  %v739 = vld [vmem:[%s705 + $0x108] sm:$0xff]
  %v740 = vld [vmem:[%s705 + $0x110] sm:$0xff]
  %v741 = vld [vmem:[%s705 + $0x118] sm:$0xff]
  %v742 = vld [vmem:[%s705 + $0x120] sm:$0xff]
  %v743 = vld [vmem:[%s705 + $0x128] sm:$0xff]
  %v744 = vld [vmem:[%s705 + $0x130] sm:$0xff]
  %v745 = vld [vmem:[%s705 + $0x138] sm:$0x3f]
  %v746 = vld [vmem:[%s705 + $0x140] sm:$0xff]
  %v747 = vld [vmem:[%s705 + $0x148] sm:$0xff]
  %v748 = vld [vmem:[%s705 + $0x150] sm:$0xff]
  %v749 = vld [vmem:[%s705 + $0x158] sm:$0xff]
  %v750 = vld [vmem:[%s705 + $0x160] sm:$0xff]
  %v751 = vld [vmem:[%s705 + $0x168] sm:$0xff]
  %v752 = vld [vmem:[%s705 + $0x170] sm:$0xff]
  %v753 = vld [vmem:[%s705 + $0x178] sm:$0x3f]
  %v754 = vperm.slane %v23, 0
  %v755 = vmul.f32 %v706, %v754
  %v756 = vmul.f32 %v707, %v754
  %v757 = vmul.f32 %v708, %v754
  %v758 = vmul.f32 %v709, %v754
  %v759 = vmul.f32 %v710, %v754
  %v760 = vmul.f32 %v711, %v754
  %v761 = vmul.f32 %v712, %v754
  %v762 = vmul.f32 %v713, %v754
  %v763 = vmul.f32 %v714, %v754
  %v764 = vmul.f32 %v715, %v754
  %v765 = vmul.f32 %v716, %v754
  %v766 = vmul.f32 %v717, %v754
  %v767 = vmul.f32 %v718, %v754
  %v768 = vmul.f32 %v719, %v754
  %v769 = vmul.f32 %v720, %v754
  %v770 = vmul.f32 %v721, %v754
  %v771 = vmul.f32 %v722, %v754
  %v772 = vmul.f32 %v723, %v754
  %v773 = vmul.f32 %v724, %v754
  %v774 = vmul.f32 %v725, %v754
  %v775 = vmul.f32 %v726, %v754
  %v776 = vmul.f32 %v727, %v754
  %v777 = vmul.f32 %v728, %v754
  %v778 = vmul.f32 %v729, %v754
  %v779 = vmul.f32 %v730, %v754
  %v780 = vmul.f32 %v731, %v754
  %v781 = vmul.f32 %v732, %v754
  %v782 = vmul.f32 %v733, %v754
  %v783 = vmul.f32 %v734, %v754
  %v784 = vmul.f32 %v735, %v754
  %v785 = vmul.f32 %v736, %v754
  %v786 = vmul.f32 %v737, %v754
  %v787 = vmul.f32 %v738, %v754
  %v788 = vmul.f32 %v739, %v754
  %v789 = vmul.f32 %v740, %v754
  %v790 = vmul.f32 %v741, %v754
  %v791 = vmul.f32 %v742, %v754
  %v792 = vmul.f32 %v743, %v754
  %v793 = vmul.f32 %v744, %v754
  %v794 = vmul.f32 %v745, %v754
  %v795 = vmul.f32 %v746, %v754
  %v796 = vmul.f32 %v747, %v754
  %v797 = vmul.f32 %v748, %v754
  %v798 = vmul.f32 %v749, %v754
  %v799 = vmul.f32 %v750, %v754
  %v800 = vmul.f32 %v751, %v754
  %v801 = vmul.f32 %v752, %v754
  %v802 = vmul.f32 %v753, %v754
  %v803 = vadd.f32 %v657, %v755
  %v804 = vadd.f32 %v658, %v756
  %v805 = vadd.f32 %v659, %v757
  %v806 = vadd.f32 %v660, %v758
  %v807 = vadd.f32 %v661, %v759
  %v808 = vadd.f32 %v662, %v760
  %v809 = vadd.f32 %v663, %v761
  %v810 = vadd.f32 %v664, %v762
  %v811 = vadd.f32 %v665, %v763
  %v812 = vadd.f32 %v666, %v764
  %v813 = vadd.f32 %v667, %v765
  %v814 = vadd.f32 %v668, %v766
  %v815 = vadd.f32 %v669, %v767
  %v816 = vadd.f32 %v670, %v768
  %v817 = vadd.f32 %v671, %v769
  %v818 = vadd.f32 %v672, %v770
  %v819 = vadd.f32 %v673, %v771
  %v820 = vadd.f32 %v674, %v772
  %v821 = vadd.f32 %v675, %v773
  %v822 = vadd.f32 %v676, %v774
  %v823 = vadd.f32 %v677, %v775
  %v824 = vadd.f32 %v678, %v776
  %v825 = vadd.f32 %v679, %v777
  %v826 = vadd.f32 %v680, %v778
  %v827 = vadd.f32 %v681, %v779
  %v828 = vadd.f32 %v682, %v780
  %v829 = vadd.f32 %v683, %v781
  %v830 = vadd.f32 %v684, %v782
  %v831 = vadd.f32 %v685, %v783
  %v832 = vadd.f32 %v686, %v784
  %v833 = vadd.f32 %v687, %v785
  %v834 = vadd.f32 %v688, %v786
  %v835 = vadd.f32 %v689, %v787
  %v836 = vadd.f32 %v690, %v788
  %v837 = vadd.f32 %v691, %v789
  %v838 = vadd.f32 %v692, %v790
  %v839 = vadd.f32 %v693, %v791
  %v840 = vadd.f32 %v694, %v792
  %v841 = vadd.f32 %v695, %v793
  %v842 = vadd.f32 %v696, %v794
  %v843 = vadd.f32 %v697, %v795
  %v844 = vadd.f32 %v698, %v796
  %v845 = vadd.f32 %v699, %v797
  %v846 = vadd.f32 %v700, %v798
  %v847 = vadd.f32 %v701, %v799
  %v848 = vadd.f32 %v702, %v800
  %v849 = vadd.f32 %v703, %v801
  %v850 = vadd.f32 %v704, %v802
  %s851 = scalar_lea.vmem %s2, 64
  %v852 = vld [vmem:[%s851] sm:$0xff]
  %v853 = vld [vmem:[%s851 + $0x8] sm:$0xff]
  %v854 = vld [vmem:[%s851 + $0x10] sm:$0xff]
  %v855 = vld [vmem:[%s851 + $0x18] sm:$0xff]
  %v856 = vld [vmem:[%s851 + $0x20] sm:$0xff]
  %v857 = vld [vmem:[%s851 + $0x28] sm:$0xff]
  %v858 = vld [vmem:[%s851 + $0x30] sm:$0xff]
  %v859 = vld [vmem:[%s851 + $0x38] sm:$0x3f]
  %v860 = vld [vmem:[%s851 + $0x40] sm:$0xff]
  %v861 = vld [vmem:[%s851 + $0x48] sm:$0xff]
  %v862 = vld [vmem:[%s851 + $0x50] sm:$0xff]
  %v863 = vld [vmem:[%s851 + $0x58] sm:$0xff]
  %v864 = vld [vmem:[%s851 + $0x60] sm:$0xff]
  %v865 = vld [vmem:[%s851 + $0x68] sm:$0xff]
  %v866 = vld [vmem:[%s851 + $0x70] sm:$0xff]
  %v867 = vld [vmem:[%s851 + $0x78] sm:$0x3f]
  %v868 = vld [vmem:[%s851 + $0x80] sm:$0xff]
  %v869 = vld [vmem:[%s851 + $0x88] sm:$0xff]
  %v870 = vld [vmem:[%s851 + $0x90] sm:$0xff]
  %v871 = vld [vmem:[%s851 + $0x98] sm:$0xff]
  %v872 = vld [vmem:[%s851 + $0xa0] sm:$0xff]
  %v873 = vld [vmem:[%s851 + $0xa8] sm:$0xff]
  %v874 = vld [vmem:[%s851 + $0xb0] sm:$0xff]
  %v875 = vld [vmem:[%s851 + $0xb8] sm:$0x3f]
  %v876 = vld [vmem:[%s851 + $0xc0] sm:$0xff]
  %v877 = vld [vmem:[%s851 + $0xc8] sm:$0xff]
  %v878 = vld [vmem:[%s851 + $0xd0] sm:$0xff]
  %v879 = vld [vmem:[%s851 + $0xd8] sm:$0xff]
  %v880 = vld [vmem:[%s851 + $0xe0] sm:$0xff]
  %v881 = vld [vmem:[%s851 + $0xe8] sm:$0xff]
  %v882 = vld [vmem:[%s851 + $0xf0] sm:$0xff]
  %v883 = vld [vmem:[%s851 + $0xf8] sm:$0x3f]
  %v884 = vld [vmem:[%s851 + $0x100] sm:$0xff]
  %v885 = vld [vmem:[%s851 + $0x108] sm:$0xff]
  %v886 = vld [vmem:[%s851 + $0x110] sm:$0xff]
  %v887 = vld [vmem:[%s851 + $0x118] sm:$0xff]
  %v888 = vld [vmem:[%s851 + $0x120] sm:$0xff]
  %v889 = vld [vmem:[%s851 + $0x128] sm:$0xff]
  %v890 = vld [vmem:[%s851 + $0x130] sm:$0xff]
  %v891 = vld [vmem:[%s851 + $0x138] sm:$0x3f]
  %v892 = vld [vmem:[%s851 + $0x140] sm:$0xff]
  %v893 = vld [vmem:[%s851 + $0x148] sm:$0xff]
  %v894 = vld [vmem:[%s851 + $0x150] sm:$0xff]
  %v895 = vld [vmem:[%s851 + $0x158] sm:$0xff]
  %v896 = vld [vmem:[%s851 + $0x160] sm:$0xff]
  %v897 = vld [vmem:[%s851 + $0x168] sm:$0xff]
  %v898 = vld [vmem:[%s851 + $0x170] sm:$0xff]
  %v899 = vld [vmem:[%s851 + $0x178] sm:$0x3f]
  %v900 = vperm.slane %v23, 1
  %v901 = vmul.f32 %v852, %v900
  %v902 = vmul.f32 %v853, %v900
  %v903 = vmul.f32 %v854, %v900
  %v904 = vmul.f32 %v855, %v900
  %v905 = vmul.f32 %v856, %v900
  %v906 = vmul.f32 %v857, %v900
  %v907 = vmul.f32 %v858, %v900
  %v908 = vmul.f32 %v859, %v900
  %v909 = vmul.f32 %v860, %v900
  %v910 = vmul.f32 %v861, %v900
  %v911 = vmul.f32 %v862, %v900
  %v912 = vmul.f32 %v863, %v900
  %v913 = vmul.f32 %v864, %v900
  %v914 = vmul.f32 %v865, %v900
  %v915 = vmul.f32 %v866, %v900
  %v916 = vmul.f32 %v867, %v900
  %v917 = vmul.f32 %v868, %v900
  %v918 = vmul.f32 %v869, %v900
  %v919 = vmul.f32 %v870, %v900
  %v920 = vmul.f32 %v871, %v900
  %v921 = vmul.f32 %v872, %v900
  %v922 = vmul.f32 %v873, %v900
  %v923 = vmul.f32 %v874, %v900
  %v924 = vmul.f32 %v875, %v900
  %v925 = vmul.f32 %v876, %v900
  %v926 = vmul.f32 %v877, %v900
  %v927 = vmul.f32 %v878, %v900
  %v928 = vmul.f32 %v879, %v900
  %v929 = vmul.f32 %v880, %v900
  %v930 = vmul.f32 %v881, %v900
  %v931 = vmul.f32 %v882, %v900
  %v932 = vmul.f32 %v883, %v900
  %v933 = vmul.f32 %v884, %v900
  %v934 = vmul.f32 %v885, %v900
  %v935 = vmul.f32 %v886, %v900
  %v936 = vmul.f32 %v887, %v900
  %v937 = vmul.f32 %v888, %v900
  %v938 = vmul.f32 %v889, %v900
  %v939 = vmul.f32 %v890, %v900
  %v940 = vmul.f32 %v891, %v900
  %v941 = vmul.f32 %v892, %v900
  %v942 = vmul.f32 %v893, %v900
  %v943 = vmul.f32 %v894, %v900
  %v944 = vmul.f32 %v895, %v900
  %v945 = vmul.f32 %v896, %v900
  %v946 = vmul.f32 %v897, %v900
  %v947 = vmul.f32 %v898, %v900
  %v948 = vmul.f32 %v899, %v900
  %v949 = vadd.f32 %v803, %v901
  %v950 = vadd.f32 %v804, %v902
  %v951 = vadd.f32 %v805, %v903
  %v952 = vadd.f32 %v806, %v904
  %v953 = vadd.f32 %v807, %v905
  %v954 = vadd.f32 %v808, %v906
  %v955 = vadd.f32 %v809, %v907
  %v956 = vadd.f32 %v810, %v908
  %v957 = vadd.f32 %v811, %v909
  %v958 = vadd.f32 %v812, %v910
  %v959 = vadd.f32 %v813, %v911
  %v960 = vadd.f32 %v814, %v912
  %v961 = vadd.f32 %v815, %v913
  %v962 = vadd.f32 %v816, %v914
  %v963 = vadd.f32 %v817, %v915
  %v964 = vadd.f32 %v818, %v916
  %v965 = vadd.f32 %v819, %v917
  %v966 = vadd.f32 %v820, %v918
  %v967 = vadd.f32 %v821, %v919
  %v968 = vadd.f32 %v822, %v920
  %v969 = vadd.f32 %v823, %v921
  %v970 = vadd.f32 %v824, %v922
  %v971 = vadd.f32 %v825, %v923
  %v972 = vadd.f32 %v826, %v924
  %v973 = vadd.f32 %v827, %v925
  %v974 = vadd.f32 %v828, %v926
  %v975 = vadd.f32 %v829, %v927
  %v976 = vadd.f32 %v830, %v928
  %v977 = vadd.f32 %v831, %v929
  %v978 = vadd.f32 %v832, %v930
  %v979 = vadd.f32 %v833, %v931
  %v980 = vadd.f32 %v834, %v932
  %v981 = vadd.f32 %v835, %v933
  %v982 = vadd.f32 %v836, %v934
  %v983 = vadd.f32 %v837, %v935
  %v984 = vadd.f32 %v838, %v936
  %v985 = vadd.f32 %v839, %v937
  %v986 = vadd.f32 %v840, %v938
  %v987 = vadd.f32 %v841, %v939
  %v988 = vadd.f32 %v842, %v940
  %v989 = vadd.f32 %v843, %v941
  %v990 = vadd.f32 %v844, %v942
  %v991 = vadd.f32 %v845, %v943
  %v992 = vadd.f32 %v846, %v944
  %v993 = vadd.f32 %v847, %v945
  %v994 = vadd.f32 %v848, %v946
  %v995 = vadd.f32 %v849, %v947
  %v996 = vadd.f32 %v850, %v948
  %v997 = vld [vmem:[%s705 + $0x1] sm:$0xff]
  %v998 = vld [vmem:[%s705 + $0x9] sm:$0xff]
  %v999 = vld [vmem:[%s705 + $0x11] sm:$0xff]
  %v1000 = vld [vmem:[%s705 + $0x19] sm:$0xff]
  %v1001 = vld [vmem:[%s705 + $0x21] sm:$0xff]
  %v1002 = vld [vmem:[%s705 + $0x29] sm:$0xff]
  %v1003 = vld [vmem:[%s705 + $0x31] sm:$0xff]
  %v1004 = vld [vmem:[%s705 + $0x39] sm:$0x3f]
  %v1005 = vld [vmem:[%s705 + $0x41] sm:$0xff]
  %v1006 = vld [vmem:[%s705 + $0x49] sm:$0xff]
  %v1007 = vld [vmem:[%s705 + $0x51] sm:$0xff]
  %v1008 = vld [vmem:[%s705 + $0x59] sm:$0xff]
  %v1009 = vld [vmem:[%s705 + $0x61] sm:$0xff]
  %v1010 = vld [vmem:[%s705 + $0x69] sm:$0xff]
  %v1011 = vld [vmem:[%s705 + $0x71] sm:$0xff]
  %v1012 = vld [vmem:[%s705 + $0x79] sm:$0x3f]
  %v1013 = vld [vmem:[%s705 + $0x81] sm:$0xff]
  %v1014 = vld [vmem:[%s705 + $0x89] sm:$0xff]
  %v1015 = vld [vmem:[%s705 + $0x91] sm:$0xff]
  %v1016 = vld [vmem:[%s705 + $0x99] sm:$0xff]
  %v1017 = vld [vmem:[%s705 + $0xa1] sm:$0xff]
  %v1018 = vld [vmem:[%s705 + $0xa9] sm:$0xff]
  %v1019 = vld [vmem:[%s705 + $0xb1] sm:$0xff]
  %v1020 = vld [vmem:[%s705 + $0xb9] sm:$0x3f]
  %v1021 = vld [vmem:[%s705 + $0xc1] sm:$0xff]
  %v1022 = vld [vmem:[%s705 + $0xc9] sm:$0xff]
  %v1023 = vld [vmem:[%s705 + $0xd1] sm:$0xff]
  %v1024 = vld [vmem:[%s705 + $0xd9] sm:$0xff]
  %v1025 = vld [vmem:[%s705 + $0xe1] sm:$0xff]
  %v1026 = vld [vmem:[%s705 + $0xe9] sm:$0xff]
  %v1027 = vld [vmem:[%s705 + $0xf1] sm:$0xff]
  %v1028 = vld [vmem:[%s705 + $0xf9] sm:$0x3f]
  %v1029 = vld [vmem:[%s705 + $0x101] sm:$0xff]
  %v1030 = vld [vmem:[%s705 + $0x109] sm:$0xff]
  %v1031 = vld [vmem:[%s705 + $0x111] sm:$0xff]
  %v1032 = vld [vmem:[%s705 + $0x119] sm:$0xff]
  %v1033 = vld [vmem:[%s705 + $0x121] sm:$0xff]
  %v1034 = vld [vmem:[%s705 + $0x129] sm:$0xff]
  %v1035 = vld [vmem:[%s705 + $0x131] sm:$0xff]
  %v1036 = vld [vmem:[%s705 + $0x139] sm:$0x3f]
  %v1037 = vld [vmem:[%s705 + $0x141] sm:$0xff]
  %v1038 = vld [vmem:[%s705 + $0x149] sm:$0xff]
  %v1039 = vld [vmem:[%s705 + $0x151] sm:$0xff]
  %v1040 = vld [vmem:[%s705 + $0x159] sm:$0xff]
  %v1041 = vld [vmem:[%s705 + $0x161] sm:$0xff]
  %v1042 = vld [vmem:[%s705 + $0x169] sm:$0xff]
  %v1043 = vld [vmem:[%s705 + $0x171] sm:$0xff]
  %v1044 = vld [vmem:[%s705 + $0x179] sm:$0x3f]
  %v1045 = vperm.slane %v23, 2
  %v1046 = vmul.f32 %v997, %v1045
  %v1047 = vmul.f32 %v998, %v1045
  %v1048 = vmul.f32 %v999, %v1045
  %v1049 = vmul.f32 %v1000, %v1045
  %v1050 = vmul.f32 %v1001, %v1045
  %v1051 = vmul.f32 %v1002, %v1045
  %v1052 = vmul.f32 %v1003, %v1045
  %v1053 = vmul.f32 %v1004, %v1045
  %v1054 = vmul.f32 %v1005, %v1045
  %v1055 = vmul.f32 %v1006, %v1045
  %v1056 = vmul.f32 %v1007, %v1045
  %v1057 = vmul.f32 %v1008, %v1045
  %v1058 = vmul.f32 %v1009, %v1045
  %v1059 = vmul.f32 %v1010, %v1045
  %v1060 = vmul.f32 %v1011, %v1045
  %v1061 = vmul.f32 %v1012, %v1045
  %v1062 = vmul.f32 %v1013, %v1045
  %v1063 = vmul.f32 %v1014, %v1045
  %v1064 = vmul.f32 %v1015, %v1045
  %v1065 = vmul.f32 %v1016, %v1045
  %v1066 = vmul.f32 %v1017, %v1045
  %v1067 = vmul.f32 %v1018, %v1045
  %v1068 = vmul.f32 %v1019, %v1045
  %v1069 = vmul.f32 %v1020, %v1045
  %v1070 = vmul.f32 %v1021, %v1045
  %v1071 = vmul.f32 %v1022, %v1045
  %v1072 = vmul.f32 %v1023, %v1045
  %v1073 = vmul.f32 %v1024, %v1045
  %v1074 = vmul.f32 %v1025, %v1045
  %v1075 = vmul.f32 %v1026, %v1045
  %v1076 = vmul.f32 %v1027, %v1045
  %v1077 = vmul.f32 %v1028, %v1045
  %v1078 = vmul.f32 %v1029, %v1045
  %v1079 = vmul.f32 %v1030, %v1045
  %v1080 = vmul.f32 %v1031, %v1045
  %v1081 = vmul.f32 %v1032, %v1045
  %v1082 = vmul.f32 %v1033, %v1045
  %v1083 = vmul.f32 %v1034, %v1045
  %v1084 = vmul.f32 %v1035, %v1045
  %v1085 = vmul.f32 %v1036, %v1045
  %v1086 = vmul.f32 %v1037, %v1045
  %v1087 = vmul.f32 %v1038, %v1045
  %v1088 = vmul.f32 %v1039, %v1045
  %v1089 = vmul.f32 %v1040, %v1045
  %v1090 = vmul.f32 %v1041, %v1045
  %v1091 = vmul.f32 %v1042, %v1045
  %v1092 = vmul.f32 %v1043, %v1045
  %v1093 = vmul.f32 %v1044, %v1045
  %v1094 = vadd.f32 %v949, %v1046
  %v1095 = vadd.f32 %v950, %v1047
  %v1096 = vadd.f32 %v951, %v1048
  %v1097 = vadd.f32 %v952, %v1049
  %v1098 = vadd.f32 %v953, %v1050
  %v1099 = vadd.f32 %v954, %v1051
  %v1100 = vadd.f32 %v955, %v1052
  %v1101 = vadd.f32 %v956, %v1053
  %v1102 = vadd.f32 %v957, %v1054
  %v1103 = vadd.f32 %v958, %v1055
  %v1104 = vadd.f32 %v959, %v1056
  %v1105 = vadd.f32 %v960, %v1057
  %v1106 = vadd.f32 %v961, %v1058
  %v1107 = vadd.f32 %v962, %v1059
  %v1108 = vadd.f32 %v963, %v1060
  %v1109 = vadd.f32 %v964, %v1061
  %v1110 = vadd.f32 %v965, %v1062
  %v1111 = vadd.f32 %v966, %v1063
  %v1112 = vadd.f32 %v967, %v1064
  %v1113 = vadd.f32 %v968, %v1065
  %v1114 = vadd.f32 %v969, %v1066
  %v1115 = vadd.f32 %v970, %v1067
  %v1116 = vadd.f32 %v971, %v1068
  %v1117 = vadd.f32 %v972, %v1069
  %v1118 = vadd.f32 %v973, %v1070
  %v1119 = vadd.f32 %v974, %v1071
  %v1120 = vadd.f32 %v975, %v1072
  %v1121 = vadd.f32 %v976, %v1073
  %v1122 = vadd.f32 %v977, %v1074
  %v1123 = vadd.f32 %v978, %v1075
  %v1124 = vadd.f32 %v979, %v1076
  %v1125 = vadd.f32 %v980, %v1077
  %v1126 = vadd.f32 %v981, %v1078
  %v1127 = vadd.f32 %v982, %v1079
  %v1128 = vadd.f32 %v983, %v1080
  %v1129 = vadd.f32 %v984, %v1081
  %v1130 = vadd.f32 %v985, %v1082
  %v1131 = vadd.f32 %v986, %v1083
  %v1132 = vadd.f32 %v987, %v1084
  %v1133 = vadd.f32 %v988, %v1085
  %v1134 = vadd.f32 %v989, %v1086
  %v1135 = vadd.f32 %v990, %v1087
  %v1136 = vadd.f32 %v991, %v1088
  %v1137 = vadd.f32 %v992, %v1089
  %v1138 = vadd.f32 %v993, %v1090
  %v1139 = vadd.f32 %v994, %v1091
  %v1140 = vadd.f32 %v995, %v1092
  %v1141 = vadd.f32 %v996, %v1093
  %v1142 = vld [vmem:[%s851 + $0x1] sm:$0xff]
  %v1143 = vld [vmem:[%s851 + $0x9] sm:$0xff]
  %v1144 = vld [vmem:[%s851 + $0x11] sm:$0xff]
  %v1145 = vld [vmem:[%s851 + $0x19] sm:$0xff]
  %v1146 = vld [vmem:[%s851 + $0x21] sm:$0xff]
  %v1147 = vld [vmem:[%s851 + $0x29] sm:$0xff]
  %v1148 = vld [vmem:[%s851 + $0x31] sm:$0xff]
  %v1149 = vld [vmem:[%s851 + $0x39] sm:$0x3f]
  %v1150 = vld [vmem:[%s851 + $0x41] sm:$0xff]
  %v1151 = vld [vmem:[%s851 + $0x49] sm:$0xff]
  %v1152 = vld [vmem:[%s851 + $0x51] sm:$0xff]
  %v1153 = vld [vmem:[%s851 + $0x59] sm:$0xff]
  %v1154 = vld [vmem:[%s851 + $0x61] sm:$0xff]
  %v1155 = vld [vmem:[%s851 + $0x69] sm:$0xff]
  %v1156 = vld [vmem:[%s851 + $0x71] sm:$0xff]
  %v1157 = vld [vmem:[%s851 + $0x79] sm:$0x3f]
  %v1158 = vld [vmem:[%s851 + $0x81] sm:$0xff]
  %v1159 = vld [vmem:[%s851 + $0x89] sm:$0xff]
  %v1160 = vld [vmem:[%s851 + $0x91] sm:$0xff]
  %v1161 = vld [vmem:[%s851 + $0x99] sm:$0xff]
  %v1162 = vld [vmem:[%s851 + $0xa1] sm:$0xff]
  %v1163 = vld [vmem:[%s851 + $0xa9] sm:$0xff]
  %v1164 = vld [vmem:[%s851 + $0xb1] sm:$0xff]
  %v1165 = vld [vmem:[%s851 + $0xb9] sm:$0x3f]
  %v1166 = vld [vmem:[%s851 + $0xc1] sm:$0xff]
  %v1167 = vld [vmem:[%s851 + $0xc9] sm:$0xff]
  %v1168 = vld [vmem:[%s851 + $0xd1] sm:$0xff]
  %v1169 = vld [vmem:[%s851 + $0xd9] sm:$0xff]
  %v1170 = vld [vmem:[%s851 + $0xe1] sm:$0xff]
  %v1171 = vld [vmem:[%s851 + $0xe9] sm:$0xff]
  %v1172 = vld [vmem:[%s851 + $0xf1] sm:$0xff]
  %v1173 = vld [vmem:[%s851 + $0xf9] sm:$0x3f]
  %v1174 = vld [vmem:[%s851 + $0x101] sm:$0xff]
  %v1175 = vld [vmem:[%s851 + $0x109] sm:$0xff]
  %v1176 = vld [vmem:[%s851 + $0x111] sm:$0xff]
  %v1177 = vld [vmem:[%s851 + $0x119] sm:$0xff]
  %v1178 = vld [vmem:[%s851 + $0x121] sm:$0xff]
  %v1179 = vld [vmem:[%s851 + $0x129] sm:$0xff]
  %v1180 = vld [vmem:[%s851 + $0x131] sm:$0xff]
  %v1181 = vld [vmem:[%s851 + $0x139] sm:$0x3f]
  %v1182 = vld [vmem:[%s851 + $0x141] sm:$0xff]
  %v1183 = vld [vmem:[%s851 + $0x149] sm:$0xff]
  %v1184 = vld [vmem:[%s851 + $0x151] sm:$0xff]
  %v1185 = vld [vmem:[%s851 + $0x159] sm:$0xff]
  %v1186 = vld [vmem:[%s851 + $0x161] sm:$0xff]
  %v1187 = vld [vmem:[%s851 + $0x169] sm:$0xff]
  %v1188 = vld [vmem:[%s851 + $0x171] sm:$0xff]
  %v1189 = vld [vmem:[%s851 + $0x179] sm:$0x3f]
  %v1190 = vperm.slane %v23, 3
  %v1191 = vmul.f32 %v1142, %v1190
  %v1192 = vmul.f32 %v1143, %v1190
  %v1193 = vmul.f32 %v1144, %v1190
  %v1194 = vmul.f32 %v1145, %v1190
  %v1195 = vmul.f32 %v1146, %v1190
  %v1196 = vmul.f32 %v1147, %v1190
  %v1197 = vmul.f32 %v1148, %v1190
  %v1198 = vmul.f32 %v1149, %v1190
  %v1199 = vmul.f32 %v1150, %v1190
  %v1200 = vmul.f32 %v1151, %v1190
  %v1201 = vmul.f32 %v1152, %v1190
  %v1202 = vmul.f32 %v1153, %v1190
  %v1203 = vmul.f32 %v1154, %v1190
  %v1204 = vmul.f32 %v1155, %v1190
  %v1205 = vmul.f32 %v1156, %v1190
  %v1206 = vmul.f32 %v1157, %v1190
  %v1207 = vmul.f32 %v1158, %v1190
  %v1208 = vmul.f32 %v1159, %v1190
  %v1209 = vmul.f32 %v1160, %v1190
  %v1210 = vmul.f32 %v1161, %v1190
  %v1211 = vmul.f32 %v1162, %v1190
  %v1212 = vmul.f32 %v1163, %v1190
  %v1213 = vmul.f32 %v1164, %v1190
  %v1214 = vmul.f32 %v1165, %v1190
  %v1215 = vmul.f32 %v1166, %v1190
  %v1216 = vmul.f32 %v1167, %v1190
  %v1217 = vmul.f32 %v1168, %v1190
  %v1218 = vmul.f32 %v1169, %v1190
  %v1219 = vmul.f32 %v1170, %v1190
  %v1220 = vmul.f32 %v1171, %v1190
  %v1221 = vmul.f32 %v1172, %v1190
  %v1222 = vmul.f32 %v1173, %v1190
  %v1223 = vmul.f32 %v1174, %v1190
  %v1224 = vmul.f32 %v1175, %v1190
  %v1225 = vmul.f32 %v1176, %v1190
  %v1226 = vmul.f32 %v1177, %v1190
  %v1227 = vmul.f32 %v1178, %v1190
  %v1228 = vmul.f32 %v1179, %v1190
  %v1229 = vmul.f32 %v1180, %v1190
  %v1230 = vmul.f32 %v1181, %v1190
  %v1231 = vmul.f32 %v1182, %v1190
  %v1232 = vmul.f32 %v1183, %v1190
  %v1233 = vmul.f32 %v1184, %v1190
  %v1234 = vmul.f32 %v1185, %v1190
  %v1235 = vmul.f32 %v1186, %v1190
  %v1236 = vmul.f32 %v1187, %v1190
  %v1237 = vmul.f32 %v1188, %v1190
  %v1238 = vmul.f32 %v1189, %v1190
  %v1239 = vadd.f32 %v1094, %v1191
  %v1240 = vadd.f32 %v1095, %v1192
  %v1241 = vadd.f32 %v1096, %v1193
  %v1242 = vadd.f32 %v1097, %v1194
  %v1243 = vadd.f32 %v1098, %v1195
  %v1244 = vadd.f32 %v1099, %v1196
  %v1245 = vadd.f32 %v1100, %v1197
  %v1246 = vadd.f32 %v1101, %v1198
  %v1247 = vadd.f32 %v1102, %v1199
  %v1248 = vadd.f32 %v1103, %v1200
  %v1249 = vadd.f32 %v1104, %v1201
  %v1250 = vadd.f32 %v1105, %v1202
  %v1251 = vadd.f32 %v1106, %v1203
  %v1252 = vadd.f32 %v1107, %v1204
  %v1253 = vadd.f32 %v1108, %v1205
  %v1254 = vadd.f32 %v1109, %v1206
  %v1255 = vadd.f32 %v1110, %v1207
  %v1256 = vadd.f32 %v1111, %v1208
  %v1257 = vadd.f32 %v1112, %v1209
  %v1258 = vadd.f32 %v1113, %v1210
  %v1259 = vadd.f32 %v1114, %v1211
  %v1260 = vadd.f32 %v1115, %v1212
  %v1261 = vadd.f32 %v1116, %v1213
  %v1262 = vadd.f32 %v1117, %v1214
  %v1263 = vadd.f32 %v1118, %v1215
  %v1264 = vadd.f32 %v1119, %v1216
  %v1265 = vadd.f32 %v1120, %v1217
  %v1266 = vadd.f32 %v1121, %v1218
  %v1267 = vadd.f32 %v1122, %v1219
  %v1268 = vadd.f32 %v1123, %v1220
  %v1269 = vadd.f32 %v1124, %v1221
  %v1270 = vadd.f32 %v1125, %v1222
  %v1271 = vadd.f32 %v1126, %v1223
  %v1272 = vadd.f32 %v1127, %v1224
  %v1273 = vadd.f32 %v1128, %v1225
  %v1274 = vadd.f32 %v1129, %v1226
  %v1275 = vadd.f32 %v1130, %v1227
  %v1276 = vadd.f32 %v1131, %v1228
  %v1277 = vadd.f32 %v1132, %v1229
  %v1278 = vadd.f32 %v1133, %v1230
  %v1279 = vadd.f32 %v1134, %v1231
  %v1280 = vadd.f32 %v1135, %v1232
  %v1281 = vadd.f32 %v1136, %v1233
  %v1282 = vadd.f32 %v1137, %v1234
  %v1283 = vadd.f32 %v1138, %v1235
  %v1284 = vadd.f32 %v1139, %v1236
  %v1285 = vadd.f32 %v1140, %v1237
  %v1286 = vadd.f32 %v1141, %v1238
  %v1287 = vld [vmem:[%s705 + $0x2] sm:$0xff]
  %v1288 = vld [vmem:[%s705 + $0xa] sm:$0xff]
  %v1289 = vld [vmem:[%s705 + $0x12] sm:$0xff]
  %v1290 = vld [vmem:[%s705 + $0x1a] sm:$0xff]
  %v1291 = vld [vmem:[%s705 + $0x22] sm:$0xff]
  %v1292 = vld [vmem:[%s705 + $0x2a] sm:$0xff]
  %v1293 = vld [vmem:[%s705 + $0x32] sm:$0xff]
  %v1294 = vld [vmem:[%s705 + $0x3a] sm:$0x3f]
  %v1295 = vld [vmem:[%s705 + $0x42] sm:$0xff]
  %v1296 = vld [vmem:[%s705 + $0x4a] sm:$0xff]
  %v1297 = vld [vmem:[%s705 + $0x52] sm:$0xff]
  %v1298 = vld [vmem:[%s705 + $0x5a] sm:$0xff]
  %v1299 = vld [vmem:[%s705 + $0x62] sm:$0xff]
  %v1300 = vld [vmem:[%s705 + $0x6a] sm:$0xff]
  %v1301 = vld [vmem:[%s705 + $0x72] sm:$0xff]
  %v1302 = vld [vmem:[%s705 + $0x7a] sm:$0x3f]
  %v1303 = vld [vmem:[%s705 + $0x82] sm:$0xff]
  %v1304 = vld [vmem:[%s705 + $0x8a] sm:$0xff]
  %v1305 = vld [vmem:[%s705 + $0x92] sm:$0xff]
  %v1306 = vld [vmem:[%s705 + $0x9a] sm:$0xff]
  %v1307 = vld [vmem:[%s705 + $0xa2] sm:$0xff]
  %v1308 = vld [vmem:[%s705 + $0xaa] sm:$0xff]
  %v1309 = vld [vmem:[%s705 + $0xb2] sm:$0xff]
  %v1310 = vld [vmem:[%s705 + $0xba] sm:$0x3f]
  %v1311 = vld [vmem:[%s705 + $0xc2] sm:$0xff]
  %v1312 = vld [vmem:[%s705 + $0xca] sm:$0xff]
  %v1313 = vld [vmem:[%s705 + $0xd2] sm:$0xff]
  %v1314 = vld [vmem:[%s705 + $0xda] sm:$0xff]
  %v1315 = vld [vmem:[%s705 + $0xe2] sm:$0xff]
  %v1316 = vld [vmem:[%s705 + $0xea] sm:$0xff]
  %v1317 = vld [vmem:[%s705 + $0xf2] sm:$0xff]
  %v1318 = vld [vmem:[%s705 + $0xfa] sm:$0x3f]
  %v1319 = vld [vmem:[%s705 + $0x102] sm:$0xff]
  %v1320 = vld [vmem:[%s705 + $0x10a] sm:$0xff]
  %v1321 = vld [vmem:[%s705 + $0x112] sm:$0xff]
  %v1322 = vld [vmem:[%s705 + $0x11a] sm:$0xff]
  %v1323 = vld [vmem:[%s705 + $0x122] sm:$0xff]
  %v1324 = vld [vmem:[%s705 + $0x12a] sm:$0xff]
  %v1325 = vld [vmem:[%s705 + $0x132] sm:$0xff]
  %v1326 = vld [vmem:[%s705 + $0x13a] sm:$0x3f]
  %v1327 = vld [vmem:[%s705 + $0x142] sm:$0xff]
  %v1328 = vld [vmem:[%s705 + $0x14a] sm:$0xff]
  %v1329 = vld [vmem:[%s705 + $0x152] sm:$0xff]
  %v1330 = vld [vmem:[%s705 + $0x15a] sm:$0xff]
  %v1331 = vld [vmem:[%s705 + $0x162] sm:$0xff]
  %v1332 = vld [vmem:[%s705 + $0x16a] sm:$0xff]
  %v1333 = vld [vmem:[%s705 + $0x172] sm:$0xff]
  %v1334 = vld [vmem:[%s705 + $0x17a] sm:$0x3f]
  %v1335 = vperm.slane %v23, 4
  %v1336 = vmul.f32 %v1287, %v1335
  %v1337 = vmul.f32 %v1288, %v1335
  %v1338 = vmul.f32 %v1289, %v1335
  %v1339 = vmul.f32 %v1290, %v1335
  %v1340 = vmul.f32 %v1291, %v1335
  %v1341 = vmul.f32 %v1292, %v1335
  %v1342 = vmul.f32 %v1293, %v1335
  %v1343 = vmul.f32 %v1294, %v1335
  %v1344 = vmul.f32 %v1295, %v1335
  %v1345 = vmul.f32 %v1296, %v1335
  %v1346 = vmul.f32 %v1297, %v1335
  %v1347 = vmul.f32 %v1298, %v1335
  %v1348 = vmul.f32 %v1299, %v1335
  %v1349 = vmul.f32 %v1300, %v1335
  %v1350 = vmul.f32 %v1301, %v1335
  %v1351 = vmul.f32 %v1302, %v1335
  %v1352 = vmul.f32 %v1303, %v1335
  %v1353 = vmul.f32 %v1304, %v1335
  %v1354 = vmul.f32 %v1305, %v1335
  %v1355 = vmul.f32 %v1306, %v1335
  %v1356 = vmul.f32 %v1307, %v1335
  %v1357 = vmul.f32 %v1308, %v1335
  %v1358 = vmul.f32 %v1309, %v1335
  %v1359 = vmul.f32 %v1310, %v1335
  %v1360 = vmul.f32 %v1311, %v1335
  %v1361 = vmul.f32 %v1312, %v1335
  %v1362 = vmul.f32 %v1313, %v1335
  %v1363 = vmul.f32 %v1314, %v1335
  %v1364 = vmul.f32 %v1315, %v1335
  %v1365 = vmul.f32 %v1316, %v1335
  %v1366 = vmul.f32 %v1317, %v1335
  %v1367 = vmul.f32 %v1318, %v1335
  %v1368 = vmul.f32 %v1319, %v1335
  %v1369 = vmul.f32 %v1320, %v1335
  %v1370 = vmul.f32 %v1321, %v1335
  %v1371 = vmul.f32 %v1322, %v1335
  %v1372 = vmul.f32 %v1323, %v1335
  %v1373 = vmul.f32 %v1324, %v1335
  %v1374 = vmul.f32 %v1325, %v1335
  %v1375 = vmul.f32 %v1326, %v1335
  %v1376 = vmul.f32 %v1327, %v1335
  %v1377 = vmul.f32 %v1328, %v1335
  %v1378 = vmul.f32 %v1329, %v1335
  %v1379 = vmul.f32 %v1330, %v1335
  %v1380 = vmul.f32 %v1331, %v1335
  %v1381 = vmul.f32 %v1332, %v1335
  %v1382 = vmul.f32 %v1333, %v1335
  %v1383 = vmul.f32 %v1334, %v1335
  %v1384 = vadd.f32 %v1239, %v1336
  %v1385 = vadd.f32 %v1240, %v1337
  %v1386 = vadd.f32 %v1241, %v1338
  %v1387 = vadd.f32 %v1242, %v1339
  %v1388 = vadd.f32 %v1243, %v1340
  %v1389 = vadd.f32 %v1244, %v1341
  %v1390 = vadd.f32 %v1245, %v1342
  %v1391 = vadd.f32 %v1246, %v1343
  %v1392 = vadd.f32 %v1247, %v1344
  %v1393 = vadd.f32 %v1248, %v1345
  %v1394 = vadd.f32 %v1249, %v1346
  %v1395 = vadd.f32 %v1250, %v1347
  %v1396 = vadd.f32 %v1251, %v1348
  %v1397 = vadd.f32 %v1252, %v1349
  %v1398 = vadd.f32 %v1253, %v1350
  %v1399 = vadd.f32 %v1254, %v1351
  %v1400 = vadd.f32 %v1255, %v1352
  %v1401 = vadd.f32 %v1256, %v1353
  %v1402 = vadd.f32 %v1257, %v1354
  %v1403 = vadd.f32 %v1258, %v1355
  %v1404 = vadd.f32 %v1259, %v1356
  %v1405 = vadd.f32 %v1260, %v1357
  %v1406 = vadd.f32 %v1261, %v1358
  %v1407 = vadd.f32 %v1262, %v1359
  %v1408 = vadd.f32 %v1263, %v1360
  %v1409 = vadd.f32 %v1264, %v1361
  %v1410 = vadd.f32 %v1265, %v1362
  %v1411 = vadd.f32 %v1266, %v1363
  %v1412 = vadd.f32 %v1267, %v1364
  %v1413 = vadd.f32 %v1268, %v1365
  %v1414 = vadd.f32 %v1269, %v1366
  %v1415 = vadd.f32 %v1270, %v1367
  %v1416 = vadd.f32 %v1271, %v1368
  %v1417 = vadd.f32 %v1272, %v1369
  %v1418 = vadd.f32 %v1273, %v1370
  %v1419 = vadd.f32 %v1274, %v1371
  %v1420 = vadd.f32 %v1275, %v1372
  %v1421 = vadd.f32 %v1276, %v1373
  %v1422 = vadd.f32 %v1277, %v1374
  %v1423 = vadd.f32 %v1278, %v1375
  %v1424 = vadd.f32 %v1279, %v1376
  %v1425 = vadd.f32 %v1280, %v1377
  %v1426 = vadd.f32 %v1281, %v1378
  %v1427 = vadd.f32 %v1282, %v1379
  %v1428 = vadd.f32 %v1283, %v1380
  %v1429 = vadd.f32 %v1284, %v1381
  %v1430 = vadd.f32 %v1285, %v1382
  %v1431 = vadd.f32 %v1286, %v1383
  %s1432 = scalar_lea.vmem %s1, 128
  %v1433 = vld [vmem:[%s1432] sm:$0xff]
  %v1434 = vld [vmem:[%s1432 + $0x8] sm:$0xff]
  %v1435 = vld [vmem:[%s1432 + $0x10] sm:$0xff]
  %v1436 = vld [vmem:[%s1432 + $0x18] sm:$0xff]
  %v1437 = vld [vmem:[%s1432 + $0x20] sm:$0xff]
  %v1438 = vld [vmem:[%s1432 + $0x28] sm:$0xff]
  %v1439 = vld [vmem:[%s1432 + $0x30] sm:$0xff]
  %v1440 = vld [vmem:[%s1432 + $0x38] sm:$0x3f]
  %v1441 = vld [vmem:[%s1432 + $0x40] sm:$0xff]
  %v1442 = vld [vmem:[%s1432 + $0x48] sm:$0xff]
  %v1443 = vld [vmem:[%s1432 + $0x50] sm:$0xff]
  %v1444 = vld [vmem:[%s1432 + $0x58] sm:$0xff]
  %v1445 = vld [vmem:[%s1432 + $0x60] sm:$0xff]
  %v1446 = vld [vmem:[%s1432 + $0x68] sm:$0xff]
  %v1447 = vld [vmem:[%s1432 + $0x70] sm:$0xff]
  %v1448 = vld [vmem:[%s1432 + $0x78] sm:$0x3f]
  %v1449 = vld [vmem:[%s1432 + $0x80] sm:$0xff]
  %v1450 = vld [vmem:[%s1432 + $0x88] sm:$0xff]
  %v1451 = vld [vmem:[%s1432 + $0x90] sm:$0xff]
  %v1452 = vld [vmem:[%s1432 + $0x98] sm:$0xff]
  %v1453 = vld [vmem:[%s1432 + $0xa0] sm:$0xff]
  %v1454 = vld [vmem:[%s1432 + $0xa8] sm:$0xff]
  %v1455 = vld [vmem:[%s1432 + $0xb0] sm:$0xff]
  %v1456 = vld [vmem:[%s1432 + $0xb8] sm:$0x3f]
  %v1457 = vld [vmem:[%s1432 + $0xc0] sm:$0xff]
  %v1458 = vld [vmem:[%s1432 + $0xc8] sm:$0xff]
  %v1459 = vld [vmem:[%s1432 + $0xd0] sm:$0xff]
  %v1460 = vld [vmem:[%s1432 + $0xd8] sm:$0xff]
  %v1461 = vld [vmem:[%s1432 + $0xe0] sm:$0xff]
  %v1462 = vld [vmem:[%s1432 + $0xe8] sm:$0xff]
  %v1463 = vld [vmem:[%s1432 + $0xf0] sm:$0xff]
  %v1464 = vld [vmem:[%s1432 + $0xf8] sm:$0x3f]
  %v1465 = vld [vmem:[%s1432 + $0x100] sm:$0xff]
  %v1466 = vld [vmem:[%s1432 + $0x108] sm:$0xff]
  %v1467 = vld [vmem:[%s1432 + $0x110] sm:$0xff]
  %v1468 = vld [vmem:[%s1432 + $0x118] sm:$0xff]
  %v1469 = vld [vmem:[%s1432 + $0x120] sm:$0xff]
  %v1470 = vld [vmem:[%s1432 + $0x128] sm:$0xff]
  %v1471 = vld [vmem:[%s1432 + $0x130] sm:$0xff]
  %v1472 = vld [vmem:[%s1432 + $0x138] sm:$0x3f]
  %v1473 = vld [vmem:[%s1432 + $0x140] sm:$0xff]
  %v1474 = vld [vmem:[%s1432 + $0x148] sm:$0xff]
  %v1475 = vld [vmem:[%s1432 + $0x150] sm:$0xff]
  %v1476 = vld [vmem:[%s1432 + $0x158] sm:$0xff]
  %v1477 = vld [vmem:[%s1432 + $0x160] sm:$0xff]
  %v1478 = vld [vmem:[%s1432 + $0x168] sm:$0xff]
  %v1479 = vld [vmem:[%s1432 + $0x170] sm:$0xff]
  %v1480 = vld [vmem:[%s1432 + $0x178] sm:$0x3f]
  %v1481 = vperm.slane %v24, 0
  %v1482 = vmul.f32 %v1433, %v1481
  %v1483 = vmul.f32 %v1434, %v1481
  %v1484 = vmul.f32 %v1435, %v1481
  %v1485 = vmul.f32 %v1436, %v1481
  %v1486 = vmul.f32 %v1437, %v1481
  %v1487 = vmul.f32 %v1438, %v1481
  %v1488 = vmul.f32 %v1439, %v1481
  %v1489 = vmul.f32 %v1440, %v1481
  %v1490 = vmul.f32 %v1441, %v1481
  %v1491 = vmul.f32 %v1442, %v1481
  %v1492 = vmul.f32 %v1443, %v1481
  %v1493 = vmul.f32 %v1444, %v1481
  %v1494 = vmul.f32 %v1445, %v1481
  %v1495 = vmul.f32 %v1446, %v1481
  %v1496 = vmul.f32 %v1447, %v1481
  %v1497 = vmul.f32 %v1448, %v1481
  %v1498 = vmul.f32 %v1449, %v1481
  %v1499 = vmul.f32 %v1450, %v1481
  %v1500 = vmul.f32 %v1451, %v1481
  %v1501 = vmul.f32 %v1452, %v1481
  %v1502 = vmul.f32 %v1453, %v1481
  %v1503 = vmul.f32 %v1454, %v1481
  %v1504 = vmul.f32 %v1455, %v1481
  %v1505 = vmul.f32 %v1456, %v1481
  %v1506 = vmul.f32 %v1457, %v1481
  %v1507 = vmul.f32 %v1458, %v1481
  %v1508 = vmul.f32 %v1459, %v1481
  %v1509 = vmul.f32 %v1460, %v1481
  %v1510 = vmul.f32 %v1461, %v1481
  %v1511 = vmul.f32 %v1462, %v1481
  %v1512 = vmul.f32 %v1463, %v1481
  %v1513 = vmul.f32 %v1464, %v1481
  %v1514 = vmul.f32 %v1465, %v1481
  %v1515 = vmul.f32 %v1466, %v1481
  %v1516 = vmul.f32 %v1467, %v1481
  %v1517 = vmul.f32 %v1468, %v1481
  %v1518 = vmul.f32 %v1469, %v1481
  %v1519 = vmul.f32 %v1470, %v1481
  %v1520 = vmul.f32 %v1471, %v1481
  %v1521 = vmul.f32 %v1472, %v1481
  %v1522 = vmul.f32 %v1473, %v1481
  %v1523 = vmul.f32 %v1474, %v1481
  %v1524 = vmul.f32 %v1475, %v1481
  %v1525 = vmul.f32 %v1476, %v1481
  %v1526 = vmul.f32 %v1477, %v1481
  %v1527 = vmul.f32 %v1478, %v1481
  %v1528 = vmul.f32 %v1479, %v1481
  %v1529 = vmul.f32 %v1480, %v1481
  %v1530 = vadd.f32 %v1384, %v1482
  %v1531 = vadd.f32 %v1385, %v1483
  %v1532 = vadd.f32 %v1386, %v1484
  %v1533 = vadd.f32 %v1387, %v1485
  %v1534 = vadd.f32 %v1388, %v1486
  %v1535 = vadd.f32 %v1389, %v1487
  %v1536 = vadd.f32 %v1390, %v1488
  %v1537 = vadd.f32 %v1391, %v1489
  %v1538 = vadd.f32 %v1392, %v1490
  %v1539 = vadd.f32 %v1393, %v1491
  %v1540 = vadd.f32 %v1394, %v1492
  %v1541 = vadd.f32 %v1395, %v1493
  %v1542 = vadd.f32 %v1396, %v1494
  %v1543 = vadd.f32 %v1397, %v1495
  %v1544 = vadd.f32 %v1398, %v1496
  %v1545 = vadd.f32 %v1399, %v1497
  %v1546 = vadd.f32 %v1400, %v1498
  %v1547 = vadd.f32 %v1401, %v1499
  %v1548 = vadd.f32 %v1402, %v1500
  %v1549 = vadd.f32 %v1403, %v1501
  %v1550 = vadd.f32 %v1404, %v1502
  %v1551 = vadd.f32 %v1405, %v1503
  %v1552 = vadd.f32 %v1406, %v1504
  %v1553 = vadd.f32 %v1407, %v1505
  %v1554 = vadd.f32 %v1408, %v1506
  %v1555 = vadd.f32 %v1409, %v1507
  %v1556 = vadd.f32 %v1410, %v1508
  %v1557 = vadd.f32 %v1411, %v1509
  %v1558 = vadd.f32 %v1412, %v1510
  %v1559 = vadd.f32 %v1413, %v1511
  %v1560 = vadd.f32 %v1414, %v1512
  %v1561 = vadd.f32 %v1415, %v1513
  %v1562 = vadd.f32 %v1416, %v1514
  %v1563 = vadd.f32 %v1417, %v1515
  %v1564 = vadd.f32 %v1418, %v1516
  %v1565 = vadd.f32 %v1419, %v1517
  %v1566 = vadd.f32 %v1420, %v1518
  %v1567 = vadd.f32 %v1421, %v1519
  %v1568 = vadd.f32 %v1422, %v1520
  %v1569 = vadd.f32 %v1423, %v1521
  %v1570 = vadd.f32 %v1424, %v1522
  %v1571 = vadd.f32 %v1425, %v1523
  %v1572 = vadd.f32 %v1426, %v1524
  %v1573 = vadd.f32 %v1427, %v1525
  %v1574 = vadd.f32 %v1428, %v1526
  %v1575 = vadd.f32 %v1429, %v1527
  %v1576 = vadd.f32 %v1430, %v1528
  %v1577 = vadd.f32 %v1431, %v1529
  %s1578 = scalar_lea.vmem %s2, 128
  %v1579 = vld [vmem:[%s1578] sm:$0xff]
  %v1580 = vld [vmem:[%s1578 + $0x8] sm:$0xff]
  %v1581 = vld [vmem:[%s1578 + $0x10] sm:$0xff]
  %v1582 = vld [vmem:[%s1578 + $0x18] sm:$0xff]
  %v1583 = vld [vmem:[%s1578 + $0x20] sm:$0xff]
  %v1584 = vld [vmem:[%s1578 + $0x28] sm:$0xff]
  %v1585 = vld [vmem:[%s1578 + $0x30] sm:$0xff]
  %v1586 = vld [vmem:[%s1578 + $0x38] sm:$0x3f]
  %v1587 = vld [vmem:[%s1578 + $0x40] sm:$0xff]
  %v1588 = vld [vmem:[%s1578 + $0x48] sm:$0xff]
  %v1589 = vld [vmem:[%s1578 + $0x50] sm:$0xff]
  %v1590 = vld [vmem:[%s1578 + $0x58] sm:$0xff]
  %v1591 = vld [vmem:[%s1578 + $0x60] sm:$0xff]
  %v1592 = vld [vmem:[%s1578 + $0x68] sm:$0xff]
  %v1593 = vld [vmem:[%s1578 + $0x70] sm:$0xff]
  %v1594 = vld [vmem:[%s1578 + $0x78] sm:$0x3f]
  %v1595 = vld [vmem:[%s1578 + $0x80] sm:$0xff]
  %v1596 = vld [vmem:[%s1578 + $0x88] sm:$0xff]
  %v1597 = vld [vmem:[%s1578 + $0x90] sm:$0xff]
  %v1598 = vld [vmem:[%s1578 + $0x98] sm:$0xff]
  %v1599 = vld [vmem:[%s1578 + $0xa0] sm:$0xff]
  %v1600 = vld [vmem:[%s1578 + $0xa8] sm:$0xff]
  %v1601 = vld [vmem:[%s1578 + $0xb0] sm:$0xff]
  %v1602 = vld [vmem:[%s1578 + $0xb8] sm:$0x3f]
  %v1603 = vld [vmem:[%s1578 + $0xc0] sm:$0xff]
  %v1604 = vld [vmem:[%s1578 + $0xc8] sm:$0xff]
  %v1605 = vld [vmem:[%s1578 + $0xd0] sm:$0xff]
  %v1606 = vld [vmem:[%s1578 + $0xd8] sm:$0xff]
  %v1607 = vld [vmem:[%s1578 + $0xe0] sm:$0xff]
  %v1608 = vld [vmem:[%s1578 + $0xe8] sm:$0xff]
  %v1609 = vld [vmem:[%s1578 + $0xf0] sm:$0xff]
  %v1610 = vld [vmem:[%s1578 + $0xf8] sm:$0x3f]
  %v1611 = vld [vmem:[%s1578 + $0x100] sm:$0xff]
  %v1612 = vld [vmem:[%s1578 + $0x108] sm:$0xff]
  %v1613 = vld [vmem:[%s1578 + $0x110] sm:$0xff]
  %v1614 = vld [vmem:[%s1578 + $0x118] sm:$0xff]
  %v1615 = vld [vmem:[%s1578 + $0x120] sm:$0xff]
  %v1616 = vld [vmem:[%s1578 + $0x128] sm:$0xff]
  %v1617 = vld [vmem:[%s1578 + $0x130] sm:$0xff]
  %v1618 = vld [vmem:[%s1578 + $0x138] sm:$0x3f]
  %v1619 = vld [vmem:[%s1578 + $0x140] sm:$0xff]
  %v1620 = vld [vmem:[%s1578 + $0x148] sm:$0xff]
  %v1621 = vld [vmem:[%s1578 + $0x150] sm:$0xff]
  %v1622 = vld [vmem:[%s1578 + $0x158] sm:$0xff]
  %v1623 = vld [vmem:[%s1578 + $0x160] sm:$0xff]
  %v1624 = vld [vmem:[%s1578 + $0x168] sm:$0xff]
  %v1625 = vld [vmem:[%s1578 + $0x170] sm:$0xff]
  %v1626 = vld [vmem:[%s1578 + $0x178] sm:$0x3f]
  %v1627 = vperm.slane %v24, 1
  %v1628 = vmul.f32 %v1579, %v1627
  %v1629 = vmul.f32 %v1580, %v1627
  %v1630 = vmul.f32 %v1581, %v1627
  %v1631 = vmul.f32 %v1582, %v1627
  %v1632 = vmul.f32 %v1583, %v1627
  %v1633 = vmul.f32 %v1584, %v1627
  %v1634 = vmul.f32 %v1585, %v1627
  %v1635 = vmul.f32 %v1586, %v1627
  %v1636 = vmul.f32 %v1587, %v1627
  %v1637 = vmul.f32 %v1588, %v1627
  %v1638 = vmul.f32 %v1589, %v1627
  %v1639 = vmul.f32 %v1590, %v1627
  %v1640 = vmul.f32 %v1591, %v1627
  %v1641 = vmul.f32 %v1592, %v1627
  %v1642 = vmul.f32 %v1593, %v1627
  %v1643 = vmul.f32 %v1594, %v1627
  %v1644 = vmul.f32 %v1595, %v1627
  %v1645 = vmul.f32 %v1596, %v1627
  %v1646 = vmul.f32 %v1597, %v1627
  %v1647 = vmul.f32 %v1598, %v1627
  %v1648 = vmul.f32 %v1599, %v1627
  %v1649 = vmul.f32 %v1600, %v1627
  %v1650 = vmul.f32 %v1601, %v1627
  %v1651 = vmul.f32 %v1602, %v1627
  %v1652 = vmul.f32 %v1603, %v1627
  %v1653 = vmul.f32 %v1604, %v1627
  %v1654 = vmul.f32 %v1605, %v1627
  %v1655 = vmul.f32 %v1606, %v1627
  %v1656 = vmul.f32 %v1607, %v1627
  %v1657 = vmul.f32 %v1608, %v1627
  %v1658 = vmul.f32 %v1609, %v1627
  %v1659 = vmul.f32 %v1610, %v1627
  %v1660 = vmul.f32 %v1611, %v1627
  %v1661 = vmul.f32 %v1612, %v1627
  %v1662 = vmul.f32 %v1613, %v1627
  %v1663 = vmul.f32 %v1614, %v1627
  %v1664 = vmul.f32 %v1615, %v1627
  %v1665 = vmul.f32 %v1616, %v1627
  %v1666 = vmul.f32 %v1617, %v1627
  %v1667 = vmul.f32 %v1618, %v1627
  %v1668 = vmul.f32 %v1619, %v1627
  %v1669 = vmul.f32 %v1620, %v1627
  %v1670 = vmul.f32 %v1621, %v1627
  %v1671 = vmul.f32 %v1622, %v1627
  %v1672 = vmul.f32 %v1623, %v1627
  %v1673 = vmul.f32 %v1624, %v1627
  %v1674 = vmul.f32 %v1625, %v1627
  %v1675 = vmul.f32 %v1626, %v1627
  %v1676 = vadd.f32 %v1530, %v1628
  %v1677 = vadd.f32 %v1531, %v1629
  %v1678 = vadd.f32 %v1532, %v1630
  %v1679 = vadd.f32 %v1533, %v1631
  %v1680 = vadd.f32 %v1534, %v1632
  %v1681 = vadd.f32 %v1535, %v1633
  %v1682 = vadd.f32 %v1536, %v1634
  %v1683 = vadd.f32 %v1537, %v1635
  %v1684 = vadd.f32 %v1538, %v1636
  %v1685 = vadd.f32 %v1539, %v1637
  %v1686 = vadd.f32 %v1540, %v1638
  %v1687 = vadd.f32 %v1541, %v1639
  %v1688 = vadd.f32 %v1542, %v1640
  %v1689 = vadd.f32 %v1543, %v1641
  %v1690 = vadd.f32 %v1544, %v1642
  %v1691 = vadd.f32 %v1545, %v1643
  %v1692 = vadd.f32 %v1546, %v1644
  %v1693 = vadd.f32 %v1547, %v1645
  %v1694 = vadd.f32 %v1548, %v1646
  %v1695 = vadd.f32 %v1549, %v1647
  %v1696 = vadd.f32 %v1550, %v1648
  %v1697 = vadd.f32 %v1551, %v1649
  %v1698 = vadd.f32 %v1552, %v1650
  %v1699 = vadd.f32 %v1553, %v1651
  %v1700 = vadd.f32 %v1554, %v1652
  %v1701 = vadd.f32 %v1555, %v1653
  %v1702 = vadd.f32 %v1556, %v1654
  %v1703 = vadd.f32 %v1557, %v1655
  %v1704 = vadd.f32 %v1558, %v1656
  %v1705 = vadd.f32 %v1559, %v1657
  %v1706 = vadd.f32 %v1560, %v1658
  %v1707 = vadd.f32 %v1561, %v1659
  %v1708 = vadd.f32 %v1562, %v1660
  %v1709 = vadd.f32 %v1563, %v1661
  %v1710 = vadd.f32 %v1564, %v1662
  %v1711 = vadd.f32 %v1565, %v1663
  %v1712 = vadd.f32 %v1566, %v1664
  %v1713 = vadd.f32 %v1567, %v1665
  %v1714 = vadd.f32 %v1568, %v1666
  %v1715 = vadd.f32 %v1569, %v1667
  %v1716 = vadd.f32 %v1570, %v1668
  %v1717 = vadd.f32 %v1571, %v1669
  %v1718 = vadd.f32 %v1572, %v1670
  %v1719 = vadd.f32 %v1573, %v1671
  %v1720 = vadd.f32 %v1574, %v1672
  %v1721 = vadd.f32 %v1575, %v1673
  %v1722 = vadd.f32 %v1576, %v1674
  %v1723 = vadd.f32 %v1577, %v1675
  %v1724 = vld [vmem:[%s1432 + $0x1] sm:$0xff]
  %v1725 = vld [vmem:[%s1432 + $0x9] sm:$0xff]
  %v1726 = vld [vmem:[%s1432 + $0x11] sm:$0xff]
  %v1727 = vld [vmem:[%s1432 + $0x19] sm:$0xff]
  %v1728 = vld [vmem:[%s1432 + $0x21] sm:$0xff]
  %v1729 = vld [vmem:[%s1432 + $0x29] sm:$0xff]
  %v1730 = vld [vmem:[%s1432 + $0x31] sm:$0xff]
  %v1731 = vld [vmem:[%s1432 + $0x39] sm:$0x3f]
  %v1732 = vld [vmem:[%s1432 + $0x41] sm:$0xff]
  %v1733 = vld [vmem:[%s1432 + $0x49] sm:$0xff]
  %v1734 = vld [vmem:[%s1432 + $0x51] sm:$0xff]
  %v1735 = vld [vmem:[%s1432 + $0x59] sm:$0xff]
  %v1736 = vld [vmem:[%s1432 + $0x61] sm:$0xff]
  %v1737 = vld [vmem:[%s1432 + $0x69] sm:$0xff]
  %v1738 = vld [vmem:[%s1432 + $0x71] sm:$0xff]
  %v1739 = vld [vmem:[%s1432 + $0x79] sm:$0x3f]
  %v1740 = vld [vmem:[%s1432 + $0x81] sm:$0xff]
  %v1741 = vld [vmem:[%s1432 + $0x89] sm:$0xff]
  %v1742 = vld [vmem:[%s1432 + $0x91] sm:$0xff]
  %v1743 = vld [vmem:[%s1432 + $0x99] sm:$0xff]
  %v1744 = vld [vmem:[%s1432 + $0xa1] sm:$0xff]
  %v1745 = vld [vmem:[%s1432 + $0xa9] sm:$0xff]
  %v1746 = vld [vmem:[%s1432 + $0xb1] sm:$0xff]
  %v1747 = vld [vmem:[%s1432 + $0xb9] sm:$0x3f]
  %v1748 = vld [vmem:[%s1432 + $0xc1] sm:$0xff]
  %v1749 = vld [vmem:[%s1432 + $0xc9] sm:$0xff]
  %v1750 = vld [vmem:[%s1432 + $0xd1] sm:$0xff]
  %v1751 = vld [vmem:[%s1432 + $0xd9] sm:$0xff]
  %v1752 = vld [vmem:[%s1432 + $0xe1] sm:$0xff]
  %v1753 = vld [vmem:[%s1432 + $0xe9] sm:$0xff]
  %v1754 = vld [vmem:[%s1432 + $0xf1] sm:$0xff]
  %v1755 = vld [vmem:[%s1432 + $0xf9] sm:$0x3f]
  %v1756 = vld [vmem:[%s1432 + $0x101] sm:$0xff]
  %v1757 = vld [vmem:[%s1432 + $0x109] sm:$0xff]
  %v1758 = vld [vmem:[%s1432 + $0x111] sm:$0xff]
  %v1759 = vld [vmem:[%s1432 + $0x119] sm:$0xff]
  %v1760 = vld [vmem:[%s1432 + $0x121] sm:$0xff]
  %v1761 = vld [vmem:[%s1432 + $0x129] sm:$0xff]
  %v1762 = vld [vmem:[%s1432 + $0x131] sm:$0xff]
  %v1763 = vld [vmem:[%s1432 + $0x139] sm:$0x3f]
  %v1764 = vld [vmem:[%s1432 + $0x141] sm:$0xff]
  %v1765 = vld [vmem:[%s1432 + $0x149] sm:$0xff]
  %v1766 = vld [vmem:[%s1432 + $0x151] sm:$0xff]
  %v1767 = vld [vmem:[%s1432 + $0x159] sm:$0xff]
  %v1768 = vld [vmem:[%s1432 + $0x161] sm:$0xff]
  %v1769 = vld [vmem:[%s1432 + $0x169] sm:$0xff]
  %v1770 = vld [vmem:[%s1432 + $0x171] sm:$0xff]
  %v1771 = vld [vmem:[%s1432 + $0x179] sm:$0x3f]
  %v1772 = vperm.slane %v24, 2
  %v1773 = vmul.f32 %v1724, %v1772
  %v1774 = vmul.f32 %v1725, %v1772
  %v1775 = vmul.f32 %v1726, %v1772
  %v1776 = vmul.f32 %v1727, %v1772
  %v1777 = vmul.f32 %v1728, %v1772
  %v1778 = vmul.f32 %v1729, %v1772
  %v1779 = vmul.f32 %v1730, %v1772
  %v1780 = vmul.f32 %v1731, %v1772
  %v1781 = vmul.f32 %v1732, %v1772
  %v1782 = vmul.f32 %v1733, %v1772
  %v1783 = vmul.f32 %v1734, %v1772
  %v1784 = vmul.f32 %v1735, %v1772
  %v1785 = vmul.f32 %v1736, %v1772
  %v1786 = vmul.f32 %v1737, %v1772
  %v1787 = vmul.f32 %v1738, %v1772
  %v1788 = vmul.f32 %v1739, %v1772
  %v1789 = vmul.f32 %v1740, %v1772
  %v1790 = vmul.f32 %v1741, %v1772
  %v1791 = vmul.f32 %v1742, %v1772
  %v1792 = vmul.f32 %v1743, %v1772
  %v1793 = vmul.f32 %v1744, %v1772
  %v1794 = vmul.f32 %v1745, %v1772
  %v1795 = vmul.f32 %v1746, %v1772
  %v1796 = vmul.f32 %v1747, %v1772
  %v1797 = vmul.f32 %v1748, %v1772
  %v1798 = vmul.f32 %v1749, %v1772
  %v1799 = vmul.f32 %v1750, %v1772
  %v1800 = vmul.f32 %v1751, %v1772
  %v1801 = vmul.f32 %v1752, %v1772
  %v1802 = vmul.f32 %v1753, %v1772
  %v1803 = vmul.f32 %v1754, %v1772
  %v1804 = vmul.f32 %v1755, %v1772
  %v1805 = vmul.f32 %v1756, %v1772
  %v1806 = vmul.f32 %v1757, %v1772
  %v1807 = vmul.f32 %v1758, %v1772
  %v1808 = vmul.f32 %v1759, %v1772
  %v1809 = vmul.f32 %v1760, %v1772
  %v1810 = vmul.f32 %v1761, %v1772
  %v1811 = vmul.f32 %v1762, %v1772
  %v1812 = vmul.f32 %v1763, %v1772
  %v1813 = vmul.f32 %v1764, %v1772
  %v1814 = vmul.f32 %v1765, %v1772
  %v1815 = vmul.f32 %v1766, %v1772
  %v1816 = vmul.f32 %v1767, %v1772
  %v1817 = vmul.f32 %v1768, %v1772
  %v1818 = vmul.f32 %v1769, %v1772
  %v1819 = vmul.f32 %v1770, %v1772
  %v1820 = vmul.f32 %v1771, %v1772
  %v1821 = vadd.f32 %v1676, %v1773
  %v1822 = vadd.f32 %v1677, %v1774
  %v1823 = vadd.f32 %v1678, %v1775
  %v1824 = vadd.f32 %v1679, %v1776
  %v1825 = vadd.f32 %v1680, %v1777
  %v1826 = vadd.f32 %v1681, %v1778
  %v1827 = vadd.f32 %v1682, %v1779
  %v1828 = vadd.f32 %v1683, %v1780
  %v1829 = vadd.f32 %v1684, %v1781
  %v1830 = vadd.f32 %v1685, %v1782
  %v1831 = vadd.f32 %v1686, %v1783
  %v1832 = vadd.f32 %v1687, %v1784
  %v1833 = vadd.f32 %v1688, %v1785
  %v1834 = vadd.f32 %v1689, %v1786
  %v1835 = vadd.f32 %v1690, %v1787
  %v1836 = vadd.f32 %v1691, %v1788
  %v1837 = vadd.f32 %v1692, %v1789
  %v1838 = vadd.f32 %v1693, %v1790
  %v1839 = vadd.f32 %v1694, %v1791
  %v1840 = vadd.f32 %v1695, %v1792
  %v1841 = vadd.f32 %v1696, %v1793
  %v1842 = vadd.f32 %v1697, %v1794
  %v1843 = vadd.f32 %v1698, %v1795
  %v1844 = vadd.f32 %v1699, %v1796
  %v1845 = vadd.f32 %v1700, %v1797
  %v1846 = vadd.f32 %v1701, %v1798
  %v1847 = vadd.f32 %v1702, %v1799
  %v1848 = vadd.f32 %v1703, %v1800
  %v1849 = vadd.f32 %v1704, %v1801
  %v1850 = vadd.f32 %v1705, %v1802
  %v1851 = vadd.f32 %v1706, %v1803
  %v1852 = vadd.f32 %v1707, %v1804
  %v1853 = vadd.f32 %v1708, %v1805
  %v1854 = vadd.f32 %v1709, %v1806
  %v1855 = vadd.f32 %v1710, %v1807
  %v1856 = vadd.f32 %v1711, %v1808
  %v1857 = vadd.f32 %v1712, %v1809
  %v1858 = vadd.f32 %v1713, %v1810
  %v1859 = vadd.f32 %v1714, %v1811
  %v1860 = vadd.f32 %v1715, %v1812
  %v1861 = vadd.f32 %v1716, %v1813
  %v1862 = vadd.f32 %v1717, %v1814
  %v1863 = vadd.f32 %v1718, %v1815
  %v1864 = vadd.f32 %v1719, %v1816
  %v1865 = vadd.f32 %v1720, %v1817
  %v1866 = vadd.f32 %v1721, %v1818
  %v1867 = vadd.f32 %v1722, %v1819
  %v1868 = vadd.f32 %v1723, %v1820
  %v1869 = vld [vmem:[%s1578 + $0x1] sm:$0xff]
  %v1870 = vld [vmem:[%s1578 + $0x9] sm:$0xff]
  %v1871 = vld [vmem:[%s1578 + $0x11] sm:$0xff]
  %v1872 = vld [vmem:[%s1578 + $0x19] sm:$0xff]
  %v1873 = vld [vmem:[%s1578 + $0x21] sm:$0xff]
  %v1874 = vld [vmem:[%s1578 + $0x29] sm:$0xff]
  %v1875 = vld [vmem:[%s1578 + $0x31] sm:$0xff]
  %v1876 = vld [vmem:[%s1578 + $0x39] sm:$0x3f]
  %v1877 = vld [vmem:[%s1578 + $0x41] sm:$0xff]
  %v1878 = vld [vmem:[%s1578 + $0x49] sm:$0xff]
  %v1879 = vld [vmem:[%s1578 + $0x51] sm:$0xff]
  %v1880 = vld [vmem:[%s1578 + $0x59] sm:$0xff]
  %v1881 = vld [vmem:[%s1578 + $0x61] sm:$0xff]
  %v1882 = vld [vmem:[%s1578 + $0x69] sm:$0xff]
  %v1883 = vld [vmem:[%s1578 + $0x71] sm:$0xff]
  %v1884 = vld [vmem:[%s1578 + $0x79] sm:$0x3f]
  %v1885 = vld [vmem:[%s1578 + $0x81] sm:$0xff]
  %v1886 = vld [vmem:[%s1578 + $0x89] sm:$0xff]
  %v1887 = vld [vmem:[%s1578 + $0x91] sm:$0xff]
  %v1888 = vld [vmem:[%s1578 + $0x99] sm:$0xff]
  %v1889 = vld [vmem:[%s1578 + $0xa1] sm:$0xff]
  %v1890 = vld [vmem:[%s1578 + $0xa9] sm:$0xff]
  %v1891 = vld [vmem:[%s1578 + $0xb1] sm:$0xff]
  %v1892 = vld [vmem:[%s1578 + $0xb9] sm:$0x3f]
  %v1893 = vld [vmem:[%s1578 + $0xc1] sm:$0xff]
  %v1894 = vld [vmem:[%s1578 + $0xc9] sm:$0xff]
  %v1895 = vld [vmem:[%s1578 + $0xd1] sm:$0xff]
  %v1896 = vld [vmem:[%s1578 + $0xd9] sm:$0xff]
  %v1897 = vld [vmem:[%s1578 + $0xe1] sm:$0xff]
  %v1898 = vld [vmem:[%s1578 + $0xe9] sm:$0xff]
  %v1899 = vld [vmem:[%s1578 + $0xf1] sm:$0xff]
  %v1900 = vld [vmem:[%s1578 + $0xf9] sm:$0x3f]
  %v1901 = vld [vmem:[%s1578 + $0x101] sm:$0xff]
  %v1902 = vld [vmem:[%s1578 + $0x109] sm:$0xff]
  %v1903 = vld [vmem:[%s1578 + $0x111] sm:$0xff]
  %v1904 = vld [vmem:[%s1578 + $0x119] sm:$0xff]
  %v1905 = vld [vmem:[%s1578 + $0x121] sm:$0xff]
  %v1906 = vld [vmem:[%s1578 + $0x129] sm:$0xff]
  %v1907 = vld [vmem:[%s1578 + $0x131] sm:$0xff]
  %v1908 = vld [vmem:[%s1578 + $0x139] sm:$0x3f]
  %v1909 = vld [vmem:[%s1578 + $0x141] sm:$0xff]
  %v1910 = vld [vmem:[%s1578 + $0x149] sm:$0xff]
  %v1911 = vld [vmem:[%s1578 + $0x151] sm:$0xff]
  %v1912 = vld [vmem:[%s1578 + $0x159] sm:$0xff]
  %v1913 = vld [vmem:[%s1578 + $0x161] sm:$0xff]
  %v1914 = vld [vmem:[%s1578 + $0x169] sm:$0xff]
  %v1915 = vld [vmem:[%s1578 + $0x171] sm:$0xff]
  %v1916 = vld [vmem:[%s1578 + $0x179] sm:$0x3f]
  %v1917 = vperm.slane %v24, 3
  %v1918 = vmul.f32 %v1869, %v1917
  %v1919 = vmul.f32 %v1870, %v1917
  %v1920 = vmul.f32 %v1871, %v1917
  %v1921 = vmul.f32 %v1872, %v1917
  %v1922 = vmul.f32 %v1873, %v1917
  %v1923 = vmul.f32 %v1874, %v1917
  %v1924 = vmul.f32 %v1875, %v1917
  %v1925 = vmul.f32 %v1876, %v1917
  %v1926 = vmul.f32 %v1877, %v1917
  %v1927 = vmul.f32 %v1878, %v1917
  %v1928 = vmul.f32 %v1879, %v1917
  %v1929 = vmul.f32 %v1880, %v1917
  %v1930 = vmul.f32 %v1881, %v1917
  %v1931 = vmul.f32 %v1882, %v1917
  %v1932 = vmul.f32 %v1883, %v1917
  %v1933 = vmul.f32 %v1884, %v1917
  %v1934 = vmul.f32 %v1885, %v1917
  %v1935 = vmul.f32 %v1886, %v1917
  %v1936 = vmul.f32 %v1887, %v1917
  %v1937 = vmul.f32 %v1888, %v1917
  %v1938 = vmul.f32 %v1889, %v1917
  %v1939 = vmul.f32 %v1890, %v1917
  %v1940 = vmul.f32 %v1891, %v1917
  %v1941 = vmul.f32 %v1892, %v1917
  %v1942 = vmul.f32 %v1893, %v1917
  %v1943 = vmul.f32 %v1894, %v1917
  %v1944 = vmul.f32 %v1895, %v1917
  %v1945 = vmul.f32 %v1896, %v1917
  %v1946 = vmul.f32 %v1897, %v1917
  %v1947 = vmul.f32 %v1898, %v1917
  %v1948 = vmul.f32 %v1899, %v1917
  %v1949 = vmul.f32 %v1900, %v1917
  %v1950 = vmul.f32 %v1901, %v1917
  %v1951 = vmul.f32 %v1902, %v1917
  %v1952 = vmul.f32 %v1903, %v1917
  %v1953 = vmul.f32 %v1904, %v1917
  %v1954 = vmul.f32 %v1905, %v1917
  %v1955 = vmul.f32 %v1906, %v1917
  %v1956 = vmul.f32 %v1907, %v1917
  %v1957 = vmul.f32 %v1908, %v1917
  %v1958 = vmul.f32 %v1909, %v1917
  %v1959 = vmul.f32 %v1910, %v1917
  %v1960 = vmul.f32 %v1911, %v1917
  %v1961 = vmul.f32 %v1912, %v1917
  %v1962 = vmul.f32 %v1913, %v1917
  %v1963 = vmul.f32 %v1914, %v1917
  %v1964 = vmul.f32 %v1915, %v1917
  %v1965 = vmul.f32 %v1916, %v1917
  %v1966 = vadd.f32 %v1821, %v1918
  %v1967 = vadd.f32 %v1822, %v1919
  %v1968 = vadd.f32 %v1823, %v1920
  %v1969 = vadd.f32 %v1824, %v1921
  %v1970 = vadd.f32 %v1825, %v1922
  %v1971 = vadd.f32 %v1826, %v1923
  %v1972 = vadd.f32 %v1827, %v1924
  %v1973 = vadd.f32 %v1828, %v1925
  %v1974 = vadd.f32 %v1829, %v1926
  %v1975 = vadd.f32 %v1830, %v1927
  %v1976 = vadd.f32 %v1831, %v1928
  %v1977 = vadd.f32 %v1832, %v1929
  %v1978 = vadd.f32 %v1833, %v1930
  %v1979 = vadd.f32 %v1834, %v1931
  %v1980 = vadd.f32 %v1835, %v1932
  %v1981 = vadd.f32 %v1836, %v1933
  %v1982 = vadd.f32 %v1837, %v1934
  %v1983 = vadd.f32 %v1838, %v1935
  %v1984 = vadd.f32 %v1839, %v1936
  %v1985 = vadd.f32 %v1840, %v1937
  %v1986 = vadd.f32 %v1841, %v1938
  %v1987 = vadd.f32 %v1842, %v1939
  %v1988 = vadd.f32 %v1843, %v1940
  %v1989 = vadd.f32 %v1844, %v1941
  %v1990 = vadd.f32 %v1845, %v1942
  %v1991 = vadd.f32 %v1846, %v1943
  %v1992 = vadd.f32 %v1847, %v1944
  %v1993 = vadd.f32 %v1848, %v1945
  %v1994 = vadd.f32 %v1849, %v1946
  %v1995 = vadd.f32 %v1850, %v1947
  %v1996 = vadd.f32 %v1851, %v1948
  %v1997 = vadd.f32 %v1852, %v1949
  %v1998 = vadd.f32 %v1853, %v1950
  %v1999 = vadd.f32 %v1854, %v1951
  %v2000 = vadd.f32 %v1855, %v1952
  %v2001 = vadd.f32 %v1856, %v1953
  %v2002 = vadd.f32 %v1857, %v1954
  %v2003 = vadd.f32 %v1858, %v1955
  %v2004 = vadd.f32 %v1859, %v1956
  %v2005 = vadd.f32 %v1860, %v1957
  %v2006 = vadd.f32 %v1861, %v1958
  %v2007 = vadd.f32 %v1862, %v1959
  %v2008 = vadd.f32 %v1863, %v1960
  %v2009 = vadd.f32 %v1864, %v1961
  %v2010 = vadd.f32 %v1865, %v1962
  %v2011 = vadd.f32 %v1866, %v1963
  %v2012 = vadd.f32 %v1867, %v1964
  %v2013 = vadd.f32 %v1868, %v1965
  %v2014 = vld [vmem:[%s1432 + $0x2] sm:$0xff]
  %v2015 = vld [vmem:[%s1432 + $0xa] sm:$0xff]
  %v2016 = vld [vmem:[%s1432 + $0x12] sm:$0xff]
  %v2017 = vld [vmem:[%s1432 + $0x1a] sm:$0xff]
  %v2018 = vld [vmem:[%s1432 + $0x22] sm:$0xff]
  %v2019 = vld [vmem:[%s1432 + $0x2a] sm:$0xff]
  %v2020 = vld [vmem:[%s1432 + $0x32] sm:$0xff]
  %v2021 = vld [vmem:[%s1432 + $0x3a] sm:$0x3f]
  %v2022 = vld [vmem:[%s1432 + $0x42] sm:$0xff]
  %v2023 = vld [vmem:[%s1432 + $0x4a] sm:$0xff]
  %v2024 = vld [vmem:[%s1432 + $0x52] sm:$0xff]
  %v2025 = vld [vmem:[%s1432 + $0x5a] sm:$0xff]
  %v2026 = vld [vmem:[%s1432 + $0x62] sm:$0xff]
  %v2027 = vld [vmem:[%s1432 + $0x6a] sm:$0xff]
  %v2028 = vld [vmem:[%s1432 + $0x72] sm:$0xff]
  %v2029 = vld [vmem:[%s1432 + $0x7a] sm:$0x3f]
  %v2030 = vld [vmem:[%s1432 + $0x82] sm:$0xff]
  %v2031 = vld [vmem:[%s1432 + $0x8a] sm:$0xff]
  %v2032 = vld [vmem:[%s1432 + $0x92] sm:$0xff]
  %v2033 = vld [vmem:[%s1432 + $0x9a] sm:$0xff]
  %v2034 = vld [vmem:[%s1432 + $0xa2] sm:$0xff]
  %v2035 = vld [vmem:[%s1432 + $0xaa] sm:$0xff]
  %v2036 = vld [vmem:[%s1432 + $0xb2] sm:$0xff]
  %v2037 = vld [vmem:[%s1432 + $0xba] sm:$0x3f]
  %v2038 = vld [vmem:[%s1432 + $0xc2] sm:$0xff]
  %v2039 = vld [vmem:[%s1432 + $0xca] sm:$0xff]
  %v2040 = vld [vmem:[%s1432 + $0xd2] sm:$0xff]
  %v2041 = vld [vmem:[%s1432 + $0xda] sm:$0xff]
  %v2042 = vld [vmem:[%s1432 + $0xe2] sm:$0xff]
  %v2043 = vld [vmem:[%s1432 + $0xea] sm:$0xff]
  %v2044 = vld [vmem:[%s1432 + $0xf2] sm:$0xff]
  %v2045 = vld [vmem:[%s1432 + $0xfa] sm:$0x3f]
  %v2046 = vld [vmem:[%s1432 + $0x102] sm:$0xff]
  %v2047 = vld [vmem:[%s1432 + $0x10a] sm:$0xff]
  %v2048 = vld [vmem:[%s1432 + $0x112] sm:$0xff]
  %v2049 = vld [vmem:[%s1432 + $0x11a] sm:$0xff]
  %v2050 = vld [vmem:[%s1432 + $0x122] sm:$0xff]
  %v2051 = vld [vmem:[%s1432 + $0x12a] sm:$0xff]
  %v2052 = vld [vmem:[%s1432 + $0x132] sm:$0xff]
  %v2053 = vld [vmem:[%s1432 + $0x13a] sm:$0x3f]
  %v2054 = vld [vmem:[%s1432 + $0x142] sm:$0xff]
  %v2055 = vld [vmem:[%s1432 + $0x14a] sm:$0xff]
  %v2056 = vld [vmem:[%s1432 + $0x152] sm:$0xff]
  %v2057 = vld [vmem:[%s1432 + $0x15a] sm:$0xff]
  %v2058 = vld [vmem:[%s1432 + $0x162] sm:$0xff]
  %v2059 = vld [vmem:[%s1432 + $0x16a] sm:$0xff]
  %v2060 = vld [vmem:[%s1432 + $0x172] sm:$0xff]
  %v2061 = vld [vmem:[%s1432 + $0x17a] sm:$0x3f]
  %v2062 = vperm.slane %v24, 4
  %v2063 = vmul.f32 %v2014, %v2062
  %v2064 = vmul.f32 %v2015, %v2062
  %v2065 = vmul.f32 %v2016, %v2062
  %v2066 = vmul.f32 %v2017, %v2062
  %v2067 = vmul.f32 %v2018, %v2062
  %v2068 = vmul.f32 %v2019, %v2062
  %v2069 = vmul.f32 %v2020, %v2062
  %v2070 = vmul.f32 %v2021, %v2062
  %v2071 = vmul.f32 %v2022, %v2062
  %v2072 = vmul.f32 %v2023, %v2062
  %v2073 = vmul.f32 %v2024, %v2062
  %v2074 = vmul.f32 %v2025, %v2062
  %v2075 = vmul.f32 %v2026, %v2062
  %v2076 = vmul.f32 %v2027, %v2062
  %v2077 = vmul.f32 %v2028, %v2062
  %v2078 = vmul.f32 %v2029, %v2062
  %v2079 = vmul.f32 %v2030, %v2062
  %v2080 = vmul.f32 %v2031, %v2062
  %v2081 = vmul.f32 %v2032, %v2062
  %v2082 = vmul.f32 %v2033, %v2062
  %v2083 = vmul.f32 %v2034, %v2062
  %v2084 = vmul.f32 %v2035, %v2062
  %v2085 = vmul.f32 %v2036, %v2062
  %v2086 = vmul.f32 %v2037, %v2062
  %v2087 = vmul.f32 %v2038, %v2062
  %v2088 = vmul.f32 %v2039, %v2062
  %v2089 = vmul.f32 %v2040, %v2062
  %v2090 = vmul.f32 %v2041, %v2062
  %v2091 = vmul.f32 %v2042, %v2062
  %v2092 = vmul.f32 %v2043, %v2062
  %v2093 = vmul.f32 %v2044, %v2062
  %v2094 = vmul.f32 %v2045, %v2062
  %v2095 = vmul.f32 %v2046, %v2062
  %v2096 = vmul.f32 %v2047, %v2062
  %v2097 = vmul.f32 %v2048, %v2062
  %v2098 = vmul.f32 %v2049, %v2062
  %v2099 = vmul.f32 %v2050, %v2062
  %v2100 = vmul.f32 %v2051, %v2062
  %v2101 = vmul.f32 %v2052, %v2062
  %v2102 = vmul.f32 %v2053, %v2062
  %v2103 = vmul.f32 %v2054, %v2062
  %v2104 = vmul.f32 %v2055, %v2062
  %v2105 = vmul.f32 %v2056, %v2062
  %v2106 = vmul.f32 %v2057, %v2062
  %v2107 = vmul.f32 %v2058, %v2062
  %v2108 = vmul.f32 %v2059, %v2062
  %v2109 = vmul.f32 %v2060, %v2062
  %v2110 = vmul.f32 %v2061, %v2062
  %v2111 = vadd.f32 %v1966, %v2063
  %v2112 = vadd.f32 %v1967, %v2064
  %v2113 = vadd.f32 %v1968, %v2065
  %v2114 = vadd.f32 %v1969, %v2066
  %v2115 = vadd.f32 %v1970, %v2067
  %v2116 = vadd.f32 %v1971, %v2068
  %v2117 = vadd.f32 %v1972, %v2069
  %v2118 = vadd.f32 %v1973, %v2070
  %v2119 = vadd.f32 %v1974, %v2071
  %v2120 = vadd.f32 %v1975, %v2072
  %v2121 = vadd.f32 %v1976, %v2073
  %v2122 = vadd.f32 %v1977, %v2074
  %v2123 = vadd.f32 %v1978, %v2075
  %v2124 = vadd.f32 %v1979, %v2076
  %v2125 = vadd.f32 %v1980, %v2077
  %v2126 = vadd.f32 %v1981, %v2078
  %v2127 = vadd.f32 %v1982, %v2079
  %v2128 = vadd.f32 %v1983, %v2080
  %v2129 = vadd.f32 %v1984, %v2081
  %v2130 = vadd.f32 %v1985, %v2082
  %v2131 = vadd.f32 %v1986, %v2083
  %v2132 = vadd.f32 %v1987, %v2084
  %v2133 = vadd.f32 %v1988, %v2085
  %v2134 = vadd.f32 %v1989, %v2086
  %v2135 = vadd.f32 %v1990, %v2087
  %v2136 = vadd.f32 %v1991, %v2088
  %v2137 = vadd.f32 %v1992, %v2089
  %v2138 = vadd.f32 %v1993, %v2090
  %v2139 = vadd.f32 %v1994, %v2091
  %v2140 = vadd.f32 %v1995, %v2092
  %v2141 = vadd.f32 %v1996, %v2093
  %v2142 = vadd.f32 %v1997, %v2094
  %v2143 = vadd.f32 %v1998, %v2095
  %v2144 = vadd.f32 %v1999, %v2096
  %v2145 = vadd.f32 %v2000, %v2097
  %v2146 = vadd.f32 %v2001, %v2098
  %v2147 = vadd.f32 %v2002, %v2099
  %v2148 = vadd.f32 %v2003, %v2100
  %v2149 = vadd.f32 %v2004, %v2101
  %v2150 = vadd.f32 %v2005, %v2102
  %v2151 = vadd.f32 %v2006, %v2103
  %v2152 = vadd.f32 %v2007, %v2104
  %v2153 = vadd.f32 %v2008, %v2105
  %v2154 = vadd.f32 %v2009, %v2106
  %v2155 = vadd.f32 %v2010, %v2107
  %v2156 = vadd.f32 %v2011, %v2108
  %v2157 = vadd.f32 %v2012, %v2109
  %v2158 = vadd.f32 %v2013, %v2110
  %s2159 = scalar_lea.vmem %s1, 192
  %v2160 = vld [vmem:[%s2159] sm:$0xff]
  %v2161 = vld [vmem:[%s2159 + $0x8] sm:$0xff]
  %v2162 = vld [vmem:[%s2159 + $0x10] sm:$0xff]
  %v2163 = vld [vmem:[%s2159 + $0x18] sm:$0xff]
  %v2164 = vld [vmem:[%s2159 + $0x20] sm:$0xff]
  %v2165 = vld [vmem:[%s2159 + $0x28] sm:$0xff]
  %v2166 = vld [vmem:[%s2159 + $0x30] sm:$0xff]
  %v2167 = vld [vmem:[%s2159 + $0x38] sm:$0x3f]
  %v2168 = vld [vmem:[%s2159 + $0x40] sm:$0xff]
  %v2169 = vld [vmem:[%s2159 + $0x48] sm:$0xff]
  %v2170 = vld [vmem:[%s2159 + $0x50] sm:$0xff]
  %v2171 = vld [vmem:[%s2159 + $0x58] sm:$0xff]
  %v2172 = vld [vmem:[%s2159 + $0x60] sm:$0xff]
  %v2173 = vld [vmem:[%s2159 + $0x68] sm:$0xff]
  %v2174 = vld [vmem:[%s2159 + $0x70] sm:$0xff]
  %v2175 = vld [vmem:[%s2159 + $0x78] sm:$0x3f]
  %v2176 = vld [vmem:[%s2159 + $0x80] sm:$0xff]
  %v2177 = vld [vmem:[%s2159 + $0x88] sm:$0xff]
  %v2178 = vld [vmem:[%s2159 + $0x90] sm:$0xff]
  %v2179 = vld [vmem:[%s2159 + $0x98] sm:$0xff]
  %v2180 = vld [vmem:[%s2159 + $0xa0] sm:$0xff]
  %v2181 = vld [vmem:[%s2159 + $0xa8] sm:$0xff]
  %v2182 = vld [vmem:[%s2159 + $0xb0] sm:$0xff]
  %v2183 = vld [vmem:[%s2159 + $0xb8] sm:$0x3f]
  %v2184 = vld [vmem:[%s2159 + $0xc0] sm:$0xff]
  %v2185 = vld [vmem:[%s2159 + $0xc8] sm:$0xff]
  %v2186 = vld [vmem:[%s2159 + $0xd0] sm:$0xff]
  %v2187 = vld [vmem:[%s2159 + $0xd8] sm:$0xff]
  %v2188 = vld [vmem:[%s2159 + $0xe0] sm:$0xff]
  %v2189 = vld [vmem:[%s2159 + $0xe8] sm:$0xff]
  %v2190 = vld [vmem:[%s2159 + $0xf0] sm:$0xff]
  %v2191 = vld [vmem:[%s2159 + $0xf8] sm:$0x3f]
  %v2192 = vld [vmem:[%s2159 + $0x100] sm:$0xff]
  %v2193 = vld [vmem:[%s2159 + $0x108] sm:$0xff]
  %v2194 = vld [vmem:[%s2159 + $0x110] sm:$0xff]
  %v2195 = vld [vmem:[%s2159 + $0x118] sm:$0xff]
  %v2196 = vld [vmem:[%s2159 + $0x120] sm:$0xff]
  %v2197 = vld [vmem:[%s2159 + $0x128] sm:$0xff]
  %v2198 = vld [vmem:[%s2159 + $0x130] sm:$0xff]
  %v2199 = vld [vmem:[%s2159 + $0x138] sm:$0x3f]
  %v2200 = vld [vmem:[%s2159 + $0x140] sm:$0xff]
  %v2201 = vld [vmem:[%s2159 + $0x148] sm:$0xff]
  %v2202 = vld [vmem:[%s2159 + $0x150] sm:$0xff]
  %v2203 = vld [vmem:[%s2159 + $0x158] sm:$0xff]
  %v2204 = vld [vmem:[%s2159 + $0x160] sm:$0xff]
  %v2205 = vld [vmem:[%s2159 + $0x168] sm:$0xff]
  %v2206 = vld [vmem:[%s2159 + $0x170] sm:$0xff]
  %v2207 = vld [vmem:[%s2159 + $0x178] sm:$0x3f]
  %v2208 = vperm.slane %v25, 0
  %v2209 = vmul.f32 %v2160, %v2208
  %v2210 = vmul.f32 %v2161, %v2208
  %v2211 = vmul.f32 %v2162, %v2208
  %v2212 = vmul.f32 %v2163, %v2208
  %v2213 = vmul.f32 %v2164, %v2208
  %v2214 = vmul.f32 %v2165, %v2208
  %v2215 = vmul.f32 %v2166, %v2208
  %v2216 = vmul.f32 %v2167, %v2208
  %v2217 = vmul.f32 %v2168, %v2208
  %v2218 = vmul.f32 %v2169, %v2208
  %v2219 = vmul.f32 %v2170, %v2208
  %v2220 = vmul.f32 %v2171, %v2208
  %v2221 = vmul.f32 %v2172, %v2208
  %v2222 = vmul.f32 %v2173, %v2208
  %v2223 = vmul.f32 %v2174, %v2208
  %v2224 = vmul.f32 %v2175, %v2208
  %v2225 = vmul.f32 %v2176, %v2208
  %v2226 = vmul.f32 %v2177, %v2208
  %v2227 = vmul.f32 %v2178, %v2208
  %v2228 = vmul.f32 %v2179, %v2208
  %v2229 = vmul.f32 %v2180, %v2208
  %v2230 = vmul.f32 %v2181, %v2208
  %v2231 = vmul.f32 %v2182, %v2208
  %v2232 = vmul.f32 %v2183, %v2208
  %v2233 = vmul.f32 %v2184, %v2208
  %v2234 = vmul.f32 %v2185, %v2208
  %v2235 = vmul.f32 %v2186, %v2208
  %v2236 = vmul.f32 %v2187, %v2208
  %v2237 = vmul.f32 %v2188, %v2208
  %v2238 = vmul.f32 %v2189, %v2208
  %v2239 = vmul.f32 %v2190, %v2208
  %v2240 = vmul.f32 %v2191, %v2208
  %v2241 = vmul.f32 %v2192, %v2208
  %v2242 = vmul.f32 %v2193, %v2208
  %v2243 = vmul.f32 %v2194, %v2208
  %v2244 = vmul.f32 %v2195, %v2208
  %v2245 = vmul.f32 %v2196, %v2208
  %v2246 = vmul.f32 %v2197, %v2208
  %v2247 = vmul.f32 %v2198, %v2208
  %v2248 = vmul.f32 %v2199, %v2208
  %v2249 = vmul.f32 %v2200, %v2208
  %v2250 = vmul.f32 %v2201, %v2208
  %v2251 = vmul.f32 %v2202, %v2208
  %v2252 = vmul.f32 %v2203, %v2208
  %v2253 = vmul.f32 %v2204, %v2208
  %v2254 = vmul.f32 %v2205, %v2208
  %v2255 = vmul.f32 %v2206, %v2208
  %v2256 = vmul.f32 %v2207, %v2208
  %v2257 = vadd.f32 %v2111, %v2209
  %v2258 = vadd.f32 %v2112, %v2210
  %v2259 = vadd.f32 %v2113, %v2211
  %v2260 = vadd.f32 %v2114, %v2212
  %v2261 = vadd.f32 %v2115, %v2213
  %v2262 = vadd.f32 %v2116, %v2214
  %v2263 = vadd.f32 %v2117, %v2215
  %v2264 = vadd.f32 %v2118, %v2216
  %v2265 = vadd.f32 %v2119, %v2217
  %v2266 = vadd.f32 %v2120, %v2218
  %v2267 = vadd.f32 %v2121, %v2219
  %v2268 = vadd.f32 %v2122, %v2220
  %v2269 = vadd.f32 %v2123, %v2221
  %v2270 = vadd.f32 %v2124, %v2222
  %v2271 = vadd.f32 %v2125, %v2223
  %v2272 = vadd.f32 %v2126, %v2224
  %v2273 = vadd.f32 %v2127, %v2225
  %v2274 = vadd.f32 %v2128, %v2226
  %v2275 = vadd.f32 %v2129, %v2227
  %v2276 = vadd.f32 %v2130, %v2228
  %v2277 = vadd.f32 %v2131, %v2229
  %v2278 = vadd.f32 %v2132, %v2230
  %v2279 = vadd.f32 %v2133, %v2231
  %v2280 = vadd.f32 %v2134, %v2232
  %v2281 = vadd.f32 %v2135, %v2233
  %v2282 = vadd.f32 %v2136, %v2234
  %v2283 = vadd.f32 %v2137, %v2235
  %v2284 = vadd.f32 %v2138, %v2236
  %v2285 = vadd.f32 %v2139, %v2237
  %v2286 = vadd.f32 %v2140, %v2238
  %v2287 = vadd.f32 %v2141, %v2239
  %v2288 = vadd.f32 %v2142, %v2240
  %v2289 = vadd.f32 %v2143, %v2241
  %v2290 = vadd.f32 %v2144, %v2242
  %v2291 = vadd.f32 %v2145, %v2243
  %v2292 = vadd.f32 %v2146, %v2244
  %v2293 = vadd.f32 %v2147, %v2245
  %v2294 = vadd.f32 %v2148, %v2246
  %v2295 = vadd.f32 %v2149, %v2247
  %v2296 = vadd.f32 %v2150, %v2248
  %v2297 = vadd.f32 %v2151, %v2249
  %v2298 = vadd.f32 %v2152, %v2250
  %v2299 = vadd.f32 %v2153, %v2251
  %v2300 = vadd.f32 %v2154, %v2252
  %v2301 = vadd.f32 %v2155, %v2253
  %v2302 = vadd.f32 %v2156, %v2254
  %v2303 = vadd.f32 %v2157, %v2255
  %v2304 = vadd.f32 %v2158, %v2256
  %s2305 = scalar_lea.vmem %s2, 192
  %v2306 = vld [vmem:[%s2305] sm:$0xff]
  %v2307 = vld [vmem:[%s2305 + $0x8] sm:$0xff]
  %v2308 = vld [vmem:[%s2305 + $0x10] sm:$0xff]
  %v2309 = vld [vmem:[%s2305 + $0x18] sm:$0xff]
  %v2310 = vld [vmem:[%s2305 + $0x20] sm:$0xff]
  %v2311 = vld [vmem:[%s2305 + $0x28] sm:$0xff]
  %v2312 = vld [vmem:[%s2305 + $0x30] sm:$0xff]
  %v2313 = vld [vmem:[%s2305 + $0x38] sm:$0x3f]
  %v2314 = vld [vmem:[%s2305 + $0x40] sm:$0xff]
  %v2315 = vld [vmem:[%s2305 + $0x48] sm:$0xff]
  %v2316 = vld [vmem:[%s2305 + $0x50] sm:$0xff]
  %v2317 = vld [vmem:[%s2305 + $0x58] sm:$0xff]
  %v2318 = vld [vmem:[%s2305 + $0x60] sm:$0xff]
  %v2319 = vld [vmem:[%s2305 + $0x68] sm:$0xff]
  %v2320 = vld [vmem:[%s2305 + $0x70] sm:$0xff]
  %v2321 = vld [vmem:[%s2305 + $0x78] sm:$0x3f]
  %v2322 = vld [vmem:[%s2305 + $0x80] sm:$0xff]
  %v2323 = vld [vmem:[%s2305 + $0x88] sm:$0xff]
  %v2324 = vld [vmem:[%s2305 + $0x90] sm:$0xff]
  %v2325 = vld [vmem:[%s2305 + $0x98] sm:$0xff]
  %v2326 = vld [vmem:[%s2305 + $0xa0] sm:$0xff]
  %v2327 = vld [vmem:[%s2305 + $0xa8] sm:$0xff]
  %v2328 = vld [vmem:[%s2305 + $0xb0] sm:$0xff]
  %v2329 = vld [vmem:[%s2305 + $0xb8] sm:$0x3f]
  %v2330 = vld [vmem:[%s2305 + $0xc0] sm:$0xff]
  %v2331 = vld [vmem:[%s2305 + $0xc8] sm:$0xff]
  %v2332 = vld [vmem:[%s2305 + $0xd0] sm:$0xff]
  %v2333 = vld [vmem:[%s2305 + $0xd8] sm:$0xff]
  %v2334 = vld [vmem:[%s2305 + $0xe0] sm:$0xff]
  %v2335 = vld [vmem:[%s2305 + $0xe8] sm:$0xff]
  %v2336 = vld [vmem:[%s2305 + $0xf0] sm:$0xff]
  %v2337 = vld [vmem:[%s2305 + $0xf8] sm:$0x3f]
  %v2338 = vld [vmem:[%s2305 + $0x100] sm:$0xff]
  %v2339 = vld [vmem:[%s2305 + $0x108] sm:$0xff]
  %v2340 = vld [vmem:[%s2305 + $0x110] sm:$0xff]
  %v2341 = vld [vmem:[%s2305 + $0x118] sm:$0xff]
  %v2342 = vld [vmem:[%s2305 + $0x120] sm:$0xff]
  %v2343 = vld [vmem:[%s2305 + $0x128] sm:$0xff]
  %v2344 = vld [vmem:[%s2305 + $0x130] sm:$0xff]
  %v2345 = vld [vmem:[%s2305 + $0x138] sm:$0x3f]
  %v2346 = vld [vmem:[%s2305 + $0x140] sm:$0xff]
  %v2347 = vld [vmem:[%s2305 + $0x148] sm:$0xff]
  %v2348 = vld [vmem:[%s2305 + $0x150] sm:$0xff]
  %v2349 = vld [vmem:[%s2305 + $0x158] sm:$0xff]
  %v2350 = vld [vmem:[%s2305 + $0x160] sm:$0xff]
  %v2351 = vld [vmem:[%s2305 + $0x168] sm:$0xff]
  %v2352 = vld [vmem:[%s2305 + $0x170] sm:$0xff]
  %v2353 = vld [vmem:[%s2305 + $0x178] sm:$0x3f]
  %v2354 = vperm.slane %v25, 1
  %v2355 = vmul.f32 %v2306, %v2354
  %v2356 = vmul.f32 %v2307, %v2354
  %v2357 = vmul.f32 %v2308, %v2354
  %v2358 = vmul.f32 %v2309, %v2354
  %v2359 = vmul.f32 %v2310, %v2354
  %v2360 = vmul.f32 %v2311, %v2354
  %v2361 = vmul.f32 %v2312, %v2354
  %v2362 = vmul.f32 %v2313, %v2354
  %v2363 = vmul.f32 %v2314, %v2354
  %v2364 = vmul.f32 %v2315, %v2354
  %v2365 = vmul.f32 %v2316, %v2354
  %v2366 = vmul.f32 %v2317, %v2354
  %v2367 = vmul.f32 %v2318, %v2354
  %v2368 = vmul.f32 %v2319, %v2354
  %v2369 = vmul.f32 %v2320, %v2354
  %v2370 = vmul.f32 %v2321, %v2354
  %v2371 = vmul.f32 %v2322, %v2354
  %v2372 = vmul.f32 %v2323, %v2354
  %v2373 = vmul.f32 %v2324, %v2354
  %v2374 = vmul.f32 %v2325, %v2354
  %v2375 = vmul.f32 %v2326, %v2354
  %v2376 = vmul.f32 %v2327, %v2354
  %v2377 = vmul.f32 %v2328, %v2354
  %v2378 = vmul.f32 %v2329, %v2354
  %v2379 = vmul.f32 %v2330, %v2354
  %v2380 = vmul.f32 %v2331, %v2354
  %v2381 = vmul.f32 %v2332, %v2354
  %v2382 = vmul.f32 %v2333, %v2354
  %v2383 = vmul.f32 %v2334, %v2354
  %v2384 = vmul.f32 %v2335, %v2354
  %v2385 = vmul.f32 %v2336, %v2354
  %v2386 = vmul.f32 %v2337, %v2354
  %v2387 = vmul.f32 %v2338, %v2354
  %v2388 = vmul.f32 %v2339, %v2354
  %v2389 = vmul.f32 %v2340, %v2354
  %v2390 = vmul.f32 %v2341, %v2354
  %v2391 = vmul.f32 %v2342, %v2354
  %v2392 = vmul.f32 %v2343, %v2354
  %v2393 = vmul.f32 %v2344, %v2354
  %v2394 = vmul.f32 %v2345, %v2354
  %v2395 = vmul.f32 %v2346, %v2354
  %v2396 = vmul.f32 %v2347, %v2354
  %v2397 = vmul.f32 %v2348, %v2354
  %v2398 = vmul.f32 %v2349, %v2354
  %v2399 = vmul.f32 %v2350, %v2354
  %v2400 = vmul.f32 %v2351, %v2354
  %v2401 = vmul.f32 %v2352, %v2354
  %v2402 = vmul.f32 %v2353, %v2354
  %v2403 = vadd.f32 %v2257, %v2355
  %v2404 = vadd.f32 %v2258, %v2356
  %v2405 = vadd.f32 %v2259, %v2357
  %v2406 = vadd.f32 %v2260, %v2358
  %v2407 = vadd.f32 %v2261, %v2359
  %v2408 = vadd.f32 %v2262, %v2360
  %v2409 = vadd.f32 %v2263, %v2361
  %v2410 = vadd.f32 %v2264, %v2362
  %v2411 = vadd.f32 %v2265, %v2363
  %v2412 = vadd.f32 %v2266, %v2364
  %v2413 = vadd.f32 %v2267, %v2365
  %v2414 = vadd.f32 %v2268, %v2366
  %v2415 = vadd.f32 %v2269, %v2367
  %v2416 = vadd.f32 %v2270, %v2368
  %v2417 = vadd.f32 %v2271, %v2369
  %v2418 = vadd.f32 %v2272, %v2370
  %v2419 = vadd.f32 %v2273, %v2371
  %v2420 = vadd.f32 %v2274, %v2372
  %v2421 = vadd.f32 %v2275, %v2373
  %v2422 = vadd.f32 %v2276, %v2374
  %v2423 = vadd.f32 %v2277, %v2375
  %v2424 = vadd.f32 %v2278, %v2376
  %v2425 = vadd.f32 %v2279, %v2377
  %v2426 = vadd.f32 %v2280, %v2378
  %v2427 = vadd.f32 %v2281, %v2379
  %v2428 = vadd.f32 %v2282, %v2380
  %v2429 = vadd.f32 %v2283, %v2381
  %v2430 = vadd.f32 %v2284, %v2382
  %v2431 = vadd.f32 %v2285, %v2383
  %v2432 = vadd.f32 %v2286, %v2384
  %v2433 = vadd.f32 %v2287, %v2385
  %v2434 = vadd.f32 %v2288, %v2386
  %v2435 = vadd.f32 %v2289, %v2387
  %v2436 = vadd.f32 %v2290, %v2388
  %v2437 = vadd.f32 %v2291, %v2389
  %v2438 = vadd.f32 %v2292, %v2390
  %v2439 = vadd.f32 %v2293, %v2391
  %v2440 = vadd.f32 %v2294, %v2392
  %v2441 = vadd.f32 %v2295, %v2393
  %v2442 = vadd.f32 %v2296, %v2394
  %v2443 = vadd.f32 %v2297, %v2395
  %v2444 = vadd.f32 %v2298, %v2396
  %v2445 = vadd.f32 %v2299, %v2397
  %v2446 = vadd.f32 %v2300, %v2398
  %v2447 = vadd.f32 %v2301, %v2399
  %v2448 = vadd.f32 %v2302, %v2400
  %v2449 = vadd.f32 %v2303, %v2401
  %v2450 = vadd.f32 %v2304, %v2402
  %v2451 = vld [vmem:[%s2159 + $0x1] sm:$0xff]
  %v2452 = vld [vmem:[%s2159 + $0x9] sm:$0xff]
  %v2453 = vld [vmem:[%s2159 + $0x11] sm:$0xff]
  %v2454 = vld [vmem:[%s2159 + $0x19] sm:$0xff]
  %v2455 = vld [vmem:[%s2159 + $0x21] sm:$0xff]
  %v2456 = vld [vmem:[%s2159 + $0x29] sm:$0xff]
  %v2457 = vld [vmem:[%s2159 + $0x31] sm:$0xff]
  %v2458 = vld [vmem:[%s2159 + $0x39] sm:$0x3f]
  %v2459 = vld [vmem:[%s2159 + $0x41] sm:$0xff]
  %v2460 = vld [vmem:[%s2159 + $0x49] sm:$0xff]
  %v2461 = vld [vmem:[%s2159 + $0x51] sm:$0xff]
  %v2462 = vld [vmem:[%s2159 + $0x59] sm:$0xff]
  %v2463 = vld [vmem:[%s2159 + $0x61] sm:$0xff]
  %v2464 = vld [vmem:[%s2159 + $0x69] sm:$0xff]
  %v2465 = vld [vmem:[%s2159 + $0x71] sm:$0xff]
  %v2466 = vld [vmem:[%s2159 + $0x79] sm:$0x3f]
  %v2467 = vld [vmem:[%s2159 + $0x81] sm:$0xff]
  %v2468 = vld [vmem:[%s2159 + $0x89] sm:$0xff]
  %v2469 = vld [vmem:[%s2159 + $0x91] sm:$0xff]
  %v2470 = vld [vmem:[%s2159 + $0x99] sm:$0xff]
  %v2471 = vld [vmem:[%s2159 + $0xa1] sm:$0xff]
  %v2472 = vld [vmem:[%s2159 + $0xa9] sm:$0xff]
  %v2473 = vld [vmem:[%s2159 + $0xb1] sm:$0xff]
  %v2474 = vld [vmem:[%s2159 + $0xb9] sm:$0x3f]
  %v2475 = vld [vmem:[%s2159 + $0xc1] sm:$0xff]
  %v2476 = vld [vmem:[%s2159 + $0xc9] sm:$0xff]
  %v2477 = vld [vmem:[%s2159 + $0xd1] sm:$0xff]
  %v2478 = vld [vmem:[%s2159 + $0xd9] sm:$0xff]
  %v2479 = vld [vmem:[%s2159 + $0xe1] sm:$0xff]
  %v2480 = vld [vmem:[%s2159 + $0xe9] sm:$0xff]
  %v2481 = vld [vmem:[%s2159 + $0xf1] sm:$0xff]
  %v2482 = vld [vmem:[%s2159 + $0xf9] sm:$0x3f]
  %v2483 = vld [vmem:[%s2159 + $0x101] sm:$0xff]
  %v2484 = vld [vmem:[%s2159 + $0x109] sm:$0xff]
  %v2485 = vld [vmem:[%s2159 + $0x111] sm:$0xff]
  %v2486 = vld [vmem:[%s2159 + $0x119] sm:$0xff]
  %v2487 = vld [vmem:[%s2159 + $0x121] sm:$0xff]
  %v2488 = vld [vmem:[%s2159 + $0x129] sm:$0xff]
  %v2489 = vld [vmem:[%s2159 + $0x131] sm:$0xff]
  %v2490 = vld [vmem:[%s2159 + $0x139] sm:$0x3f]
  %v2491 = vld [vmem:[%s2159 + $0x141] sm:$0xff]
  %v2492 = vld [vmem:[%s2159 + $0x149] sm:$0xff]
  %v2493 = vld [vmem:[%s2159 + $0x151] sm:$0xff]
  %v2494 = vld [vmem:[%s2159 + $0x159] sm:$0xff]
  %v2495 = vld [vmem:[%s2159 + $0x161] sm:$0xff]
  %v2496 = vld [vmem:[%s2159 + $0x169] sm:$0xff]
  %v2497 = vld [vmem:[%s2159 + $0x171] sm:$0xff]
  %v2498 = vld [vmem:[%s2159 + $0x179] sm:$0x3f]
  %v2499 = vperm.slane %v25, 2
  %v2500 = vmul.f32 %v2451, %v2499
  %v2501 = vmul.f32 %v2452, %v2499
  %v2502 = vmul.f32 %v2453, %v2499
  %v2503 = vmul.f32 %v2454, %v2499
  %v2504 = vmul.f32 %v2455, %v2499
  %v2505 = vmul.f32 %v2456, %v2499
  %v2506 = vmul.f32 %v2457, %v2499
  %v2507 = vmul.f32 %v2458, %v2499
  %v2508 = vmul.f32 %v2459, %v2499
  %v2509 = vmul.f32 %v2460, %v2499
  %v2510 = vmul.f32 %v2461, %v2499
  %v2511 = vmul.f32 %v2462, %v2499
  %v2512 = vmul.f32 %v2463, %v2499
  %v2513 = vmul.f32 %v2464, %v2499
  %v2514 = vmul.f32 %v2465, %v2499
  %v2515 = vmul.f32 %v2466, %v2499
  %v2516 = vmul.f32 %v2467, %v2499
  %v2517 = vmul.f32 %v2468, %v2499
  %v2518 = vmul.f32 %v2469, %v2499
  %v2519 = vmul.f32 %v2470, %v2499
  %v2520 = vmul.f32 %v2471, %v2499
  %v2521 = vmul.f32 %v2472, %v2499
  %v2522 = vmul.f32 %v2473, %v2499
  %v2523 = vmul.f32 %v2474, %v2499
  %v2524 = vmul.f32 %v2475, %v2499
  %v2525 = vmul.f32 %v2476, %v2499
  %v2526 = vmul.f32 %v2477, %v2499
  %v2527 = vmul.f32 %v2478, %v2499
  %v2528 = vmul.f32 %v2479, %v2499
  %v2529 = vmul.f32 %v2480, %v2499
  %v2530 = vmul.f32 %v2481, %v2499
  %v2531 = vmul.f32 %v2482, %v2499
  %v2532 = vmul.f32 %v2483, %v2499
  %v2533 = vmul.f32 %v2484, %v2499
  %v2534 = vmul.f32 %v2485, %v2499
  %v2535 = vmul.f32 %v2486, %v2499
  %v2536 = vmul.f32 %v2487, %v2499
  %v2537 = vmul.f32 %v2488, %v2499
  %v2538 = vmul.f32 %v2489, %v2499
  %v2539 = vmul.f32 %v2490, %v2499
  %v2540 = vmul.f32 %v2491, %v2499
  %v2541 = vmul.f32 %v2492, %v2499
  %v2542 = vmul.f32 %v2493, %v2499
  %v2543 = vmul.f32 %v2494, %v2499
  %v2544 = vmul.f32 %v2495, %v2499
  %v2545 = vmul.f32 %v2496, %v2499
  %v2546 = vmul.f32 %v2497, %v2499
  %v2547 = vmul.f32 %v2498, %v2499
  %v2548 = vadd.f32 %v2403, %v2500
  %v2549 = vadd.f32 %v2404, %v2501
  %v2550 = vadd.f32 %v2405, %v2502
  %v2551 = vadd.f32 %v2406, %v2503
  %v2552 = vadd.f32 %v2407, %v2504
  %v2553 = vadd.f32 %v2408, %v2505
  %v2554 = vadd.f32 %v2409, %v2506
  %v2555 = vadd.f32 %v2410, %v2507
  %v2556 = vadd.f32 %v2411, %v2508
  %v2557 = vadd.f32 %v2412, %v2509
  %v2558 = vadd.f32 %v2413, %v2510
  %v2559 = vadd.f32 %v2414, %v2511
  %v2560 = vadd.f32 %v2415, %v2512
  %v2561 = vadd.f32 %v2416, %v2513
  %v2562 = vadd.f32 %v2417, %v2514
  %v2563 = vadd.f32 %v2418, %v2515
  %v2564 = vadd.f32 %v2419, %v2516
  %v2565 = vadd.f32 %v2420, %v2517
  %v2566 = vadd.f32 %v2421, %v2518
  %v2567 = vadd.f32 %v2422, %v2519
  %v2568 = vadd.f32 %v2423, %v2520
  %v2569 = vadd.f32 %v2424, %v2521
  %v2570 = vadd.f32 %v2425, %v2522
  %v2571 = vadd.f32 %v2426, %v2523
  %v2572 = vadd.f32 %v2427, %v2524
  %v2573 = vadd.f32 %v2428, %v2525
  %v2574 = vadd.f32 %v2429, %v2526
  %v2575 = vadd.f32 %v2430, %v2527
  %v2576 = vadd.f32 %v2431, %v2528
  %v2577 = vadd.f32 %v2432, %v2529
  %v2578 = vadd.f32 %v2433, %v2530
  %v2579 = vadd.f32 %v2434, %v2531
  %v2580 = vadd.f32 %v2435, %v2532
  %v2581 = vadd.f32 %v2436, %v2533
  %v2582 = vadd.f32 %v2437, %v2534
  %v2583 = vadd.f32 %v2438, %v2535
  %v2584 = vadd.f32 %v2439, %v2536
  %v2585 = vadd.f32 %v2440, %v2537
  %v2586 = vadd.f32 %v2441, %v2538
  %v2587 = vadd.f32 %v2442, %v2539
  %v2588 = vadd.f32 %v2443, %v2540
  %v2589 = vadd.f32 %v2444, %v2541
  %v2590 = vadd.f32 %v2445, %v2542
  %v2591 = vadd.f32 %v2446, %v2543
  %v2592 = vadd.f32 %v2447, %v2544
  %v2593 = vadd.f32 %v2448, %v2545
  %v2594 = vadd.f32 %v2449, %v2546
  %v2595 = vadd.f32 %v2450, %v2547
  %v2596 = vld [vmem:[%s2305 + $0x1] sm:$0xff]
  %v2597 = vld [vmem:[%s2305 + $0x9] sm:$0xff]
  %v2598 = vld [vmem:[%s2305 + $0x11] sm:$0xff]
  %v2599 = vld [vmem:[%s2305 + $0x19] sm:$0xff]
  %v2600 = vld [vmem:[%s2305 + $0x21] sm:$0xff]
  %v2601 = vld [vmem:[%s2305 + $0x29] sm:$0xff]
  %v2602 = vld [vmem:[%s2305 + $0x31] sm:$0xff]
  %v2603 = vld [vmem:[%s2305 + $0x39] sm:$0x3f]
  %v2604 = vld [vmem:[%s2305 + $0x41] sm:$0xff]
  %v2605 = vld [vmem:[%s2305 + $0x49] sm:$0xff]
  %v2606 = vld [vmem:[%s2305 + $0x51] sm:$0xff]
  %v2607 = vld [vmem:[%s2305 + $0x59] sm:$0xff]
  %v2608 = vld [vmem:[%s2305 + $0x61] sm:$0xff]
  %v2609 = vld [vmem:[%s2305 + $0x69] sm:$0xff]
  %v2610 = vld [vmem:[%s2305 + $0x71] sm:$0xff]
  %v2611 = vld [vmem:[%s2305 + $0x79] sm:$0x3f]
  %v2612 = vld [vmem:[%s2305 + $0x81] sm:$0xff]
  %v2613 = vld [vmem:[%s2305 + $0x89] sm:$0xff]
  %v2614 = vld [vmem:[%s2305 + $0x91] sm:$0xff]
  %v2615 = vld [vmem:[%s2305 + $0x99] sm:$0xff]
  %v2616 = vld [vmem:[%s2305 + $0xa1] sm:$0xff]
  %v2617 = vld [vmem:[%s2305 + $0xa9] sm:$0xff]
  %v2618 = vld [vmem:[%s2305 + $0xb1] sm:$0xff]
  %v2619 = vld [vmem:[%s2305 + $0xb9] sm:$0x3f]
  %v2620 = vld [vmem:[%s2305 + $0xc1] sm:$0xff]
  %v2621 = vld [vmem:[%s2305 + $0xc9] sm:$0xff]
  %v2622 = vld [vmem:[%s2305 + $0xd1] sm:$0xff]
  %v2623 = vld [vmem:[%s2305 + $0xd9] sm:$0xff]
  %v2624 = vld [vmem:[%s2305 + $0xe1] sm:$0xff]
  %v2625 = vld [vmem:[%s2305 + $0xe9] sm:$0xff]
  %v2626 = vld [vmem:[%s2305 + $0xf1] sm:$0xff]
  %v2627 = vld [vmem:[%s2305 + $0xf9] sm:$0x3f]
  %v2628 = vld [vmem:[%s2305 + $0x101] sm:$0xff]
  %v2629 = vld [vmem:[%s2305 + $0x109] sm:$0xff]
  %v2630 = vld [vmem:[%s2305 + $0x111] sm:$0xff]
  %v2631 = vld [vmem:[%s2305 + $0x119] sm:$0xff]
  %v2632 = vld [vmem:[%s2305 + $0x121] sm:$0xff]
  %v2633 = vld [vmem:[%s2305 + $0x129] sm:$0xff]
  %v2634 = vld [vmem:[%s2305 + $0x131] sm:$0xff]
  %v2635 = vld [vmem:[%s2305 + $0x139] sm:$0x3f]
  %v2636 = vld [vmem:[%s2305 + $0x141] sm:$0xff]
  %v2637 = vld [vmem:[%s2305 + $0x149] sm:$0xff]
  %v2638 = vld [vmem:[%s2305 + $0x151] sm:$0xff]
  %v2639 = vld [vmem:[%s2305 + $0x159] sm:$0xff]
  %v2640 = vld [vmem:[%s2305 + $0x161] sm:$0xff]
  %v2641 = vld [vmem:[%s2305 + $0x169] sm:$0xff]
  %v2642 = vld [vmem:[%s2305 + $0x171] sm:$0xff]
  %v2643 = vld [vmem:[%s2305 + $0x179] sm:$0x3f]
  %v2644 = vperm.slane %v25, 3
  %v2645 = vmul.f32 %v2596, %v2644
  %v2646 = vmul.f32 %v2597, %v2644
  %v2647 = vmul.f32 %v2598, %v2644
  %v2648 = vmul.f32 %v2599, %v2644
  %v2649 = vmul.f32 %v2600, %v2644
  %v2650 = vmul.f32 %v2601, %v2644
  %v2651 = vmul.f32 %v2602, %v2644
  %v2652 = vmul.f32 %v2603, %v2644
  %v2653 = vmul.f32 %v2604, %v2644
  %v2654 = vmul.f32 %v2605, %v2644
  %v2655 = vmul.f32 %v2606, %v2644
  %v2656 = vmul.f32 %v2607, %v2644
  %v2657 = vmul.f32 %v2608, %v2644
  %v2658 = vmul.f32 %v2609, %v2644
  %v2659 = vmul.f32 %v2610, %v2644
  %v2660 = vmul.f32 %v2611, %v2644
  %v2661 = vmul.f32 %v2612, %v2644
  %v2662 = vmul.f32 %v2613, %v2644
  %v2663 = vmul.f32 %v2614, %v2644
  %v2664 = vmul.f32 %v2615, %v2644
  %v2665 = vmul.f32 %v2616, %v2644
  %v2666 = vmul.f32 %v2617, %v2644
  %v2667 = vmul.f32 %v2618, %v2644
  %v2668 = vmul.f32 %v2619, %v2644
  %v2669 = vmul.f32 %v2620, %v2644
  %v2670 = vmul.f32 %v2621, %v2644
  %v2671 = vmul.f32 %v2622, %v2644
  %v2672 = vmul.f32 %v2623, %v2644
  %v2673 = vmul.f32 %v2624, %v2644
  %v2674 = vmul.f32 %v2625, %v2644
  %v2675 = vmul.f32 %v2626, %v2644
  %v2676 = vmul.f32 %v2627, %v2644
  %v2677 = vmul.f32 %v2628, %v2644
  %v2678 = vmul.f32 %v2629, %v2644
  %v2679 = vmul.f32 %v2630, %v2644
  %v2680 = vmul.f32 %v2631, %v2644
  %v2681 = vmul.f32 %v2632, %v2644
  %v2682 = vmul.f32 %v2633, %v2644
  %v2683 = vmul.f32 %v2634, %v2644
  %v2684 = vmul.f32 %v2635, %v2644
  %v2685 = vmul.f32 %v2636, %v2644
  %v2686 = vmul.f32 %v2637, %v2644
  %v2687 = vmul.f32 %v2638, %v2644
  %v2688 = vmul.f32 %v2639, %v2644
  %v2689 = vmul.f32 %v2640, %v2644
  %v2690 = vmul.f32 %v2641, %v2644
  %v2691 = vmul.f32 %v2642, %v2644
  %v2692 = vmul.f32 %v2643, %v2644
  %v2693 = vadd.f32 %v2548, %v2645
  %v2694 = vadd.f32 %v2549, %v2646
  %v2695 = vadd.f32 %v2550, %v2647
  %v2696 = vadd.f32 %v2551, %v2648
  %v2697 = vadd.f32 %v2552, %v2649
  %v2698 = vadd.f32 %v2553, %v2650
  %v2699 = vadd.f32 %v2554, %v2651
  %v2700 = vadd.f32 %v2555, %v2652
  %v2701 = vadd.f32 %v2556, %v2653
  %v2702 = vadd.f32 %v2557, %v2654
  %v2703 = vadd.f32 %v2558, %v2655
  %v2704 = vadd.f32 %v2559, %v2656
  %v2705 = vadd.f32 %v2560, %v2657
  %v2706 = vadd.f32 %v2561, %v2658
  %v2707 = vadd.f32 %v2562, %v2659
  %v2708 = vadd.f32 %v2563, %v2660
  %v2709 = vadd.f32 %v2564, %v2661
  %v2710 = vadd.f32 %v2565, %v2662
  %v2711 = vadd.f32 %v2566, %v2663
  %v2712 = vadd.f32 %v2567, %v2664
  %v2713 = vadd.f32 %v2568, %v2665
  %v2714 = vadd.f32 %v2569, %v2666
  %v2715 = vadd.f32 %v2570, %v2667
  %v2716 = vadd.f32 %v2571, %v2668
  %v2717 = vadd.f32 %v2572, %v2669
  %v2718 = vadd.f32 %v2573, %v2670
  %v2719 = vadd.f32 %v2574, %v2671
  %v2720 = vadd.f32 %v2575, %v2672
  %v2721 = vadd.f32 %v2576, %v2673
  %v2722 = vadd.f32 %v2577, %v2674
  %v2723 = vadd.f32 %v2578, %v2675
  %v2724 = vadd.f32 %v2579, %v2676
  %v2725 = vadd.f32 %v2580, %v2677
  %v2726 = vadd.f32 %v2581, %v2678
  %v2727 = vadd.f32 %v2582, %v2679
  %v2728 = vadd.f32 %v2583, %v2680
  %v2729 = vadd.f32 %v2584, %v2681
  %v2730 = vadd.f32 %v2585, %v2682
  %v2731 = vadd.f32 %v2586, %v2683
  %v2732 = vadd.f32 %v2587, %v2684
  %v2733 = vadd.f32 %v2588, %v2685
  %v2734 = vadd.f32 %v2589, %v2686
  %v2735 = vadd.f32 %v2590, %v2687
  %v2736 = vadd.f32 %v2591, %v2688
  %v2737 = vadd.f32 %v2592, %v2689
  %v2738 = vadd.f32 %v2593, %v2690
  %v2739 = vadd.f32 %v2594, %v2691
  %v2740 = vadd.f32 %v2595, %v2692
  %v2741 = vld [vmem:[%s2159 + $0x2] sm:$0xff]
  %v2742 = vld [vmem:[%s2159 + $0xa] sm:$0xff]
  %v2743 = vld [vmem:[%s2159 + $0x12] sm:$0xff]
  %v2744 = vld [vmem:[%s2159 + $0x1a] sm:$0xff]
  %v2745 = vld [vmem:[%s2159 + $0x22] sm:$0xff]
  %v2746 = vld [vmem:[%s2159 + $0x2a] sm:$0xff]
  %v2747 = vld [vmem:[%s2159 + $0x32] sm:$0xff]
  %v2748 = vld [vmem:[%s2159 + $0x3a] sm:$0x3f]
  %v2749 = vld [vmem:[%s2159 + $0x42] sm:$0xff]
  %v2750 = vld [vmem:[%s2159 + $0x4a] sm:$0xff]
  %v2751 = vld [vmem:[%s2159 + $0x52] sm:$0xff]
  %v2752 = vld [vmem:[%s2159 + $0x5a] sm:$0xff]
  %v2753 = vld [vmem:[%s2159 + $0x62] sm:$0xff]
  %v2754 = vld [vmem:[%s2159 + $0x6a] sm:$0xff]
  %v2755 = vld [vmem:[%s2159 + $0x72] sm:$0xff]
  %v2756 = vld [vmem:[%s2159 + $0x7a] sm:$0x3f]
  %v2757 = vld [vmem:[%s2159 + $0x82] sm:$0xff]
  %v2758 = vld [vmem:[%s2159 + $0x8a] sm:$0xff]
  %v2759 = vld [vmem:[%s2159 + $0x92] sm:$0xff]
  %v2760 = vld [vmem:[%s2159 + $0x9a] sm:$0xff]
  %v2761 = vld [vmem:[%s2159 + $0xa2] sm:$0xff]
  %v2762 = vld [vmem:[%s2159 + $0xaa] sm:$0xff]
  %v2763 = vld [vmem:[%s2159 + $0xb2] sm:$0xff]
  %v2764 = vld [vmem:[%s2159 + $0xba] sm:$0x3f]
  %v2765 = vld [vmem:[%s2159 + $0xc2] sm:$0xff]
  %v2766 = vld [vmem:[%s2159 + $0xca] sm:$0xff]
  %v2767 = vld [vmem:[%s2159 + $0xd2] sm:$0xff]
  %v2768 = vld [vmem:[%s2159 + $0xda] sm:$0xff]
  %v2769 = vld [vmem:[%s2159 + $0xe2] sm:$0xff]
  %v2770 = vld [vmem:[%s2159 + $0xea] sm:$0xff]
  %v2771 = vld [vmem:[%s2159 + $0xf2] sm:$0xff]
  %v2772 = vld [vmem:[%s2159 + $0xfa] sm:$0x3f]
  %v2773 = vld [vmem:[%s2159 + $0x102] sm:$0xff]
  %v2774 = vld [vmem:[%s2159 + $0x10a] sm:$0xff]
  %v2775 = vld [vmem:[%s2159 + $0x112] sm:$0xff]
  %v2776 = vld [vmem:[%s2159 + $0x11a] sm:$0xff]
  %v2777 = vld [vmem:[%s2159 + $0x122] sm:$0xff]
  %v2778 = vld [vmem:[%s2159 + $0x12a] sm:$0xff]
  %v2779 = vld [vmem:[%s2159 + $0x132] sm:$0xff]
  %v2780 = vld [vmem:[%s2159 + $0x13a] sm:$0x3f]
  %v2781 = vld [vmem:[%s2159 + $0x142] sm:$0xff]
  %v2782 = vld [vmem:[%s2159 + $0x14a] sm:$0xff]
  %v2783 = vld [vmem:[%s2159 + $0x152] sm:$0xff]
  %v2784 = vld [vmem:[%s2159 + $0x15a] sm:$0xff]
  %v2785 = vld [vmem:[%s2159 + $0x162] sm:$0xff]
  %v2786 = vld [vmem:[%s2159 + $0x16a] sm:$0xff]
  %v2787 = vld [vmem:[%s2159 + $0x172] sm:$0xff]
  %v2788 = vld [vmem:[%s2159 + $0x17a] sm:$0x3f]
  %v2789 = vperm.slane %v25, 4
  %v2790 = vmul.f32 %v2741, %v2789
  %v2791 = vmul.f32 %v2742, %v2789
  %v2792 = vmul.f32 %v2743, %v2789
  %v2793 = vmul.f32 %v2744, %v2789
  %v2794 = vmul.f32 %v2745, %v2789
  %v2795 = vmul.f32 %v2746, %v2789
  %v2796 = vmul.f32 %v2747, %v2789
  %v2797 = vmul.f32 %v2748, %v2789
  %v2798 = vmul.f32 %v2749, %v2789
  %v2799 = vmul.f32 %v2750, %v2789
  %v2800 = vmul.f32 %v2751, %v2789
  %v2801 = vmul.f32 %v2752, %v2789
  %v2802 = vmul.f32 %v2753, %v2789
  %v2803 = vmul.f32 %v2754, %v2789
  %v2804 = vmul.f32 %v2755, %v2789
  %v2805 = vmul.f32 %v2756, %v2789
  %v2806 = vmul.f32 %v2757, %v2789
  %v2807 = vmul.f32 %v2758, %v2789
  %v2808 = vmul.f32 %v2759, %v2789
  %v2809 = vmul.f32 %v2760, %v2789
  %v2810 = vmul.f32 %v2761, %v2789
  %v2811 = vmul.f32 %v2762, %v2789
  %v2812 = vmul.f32 %v2763, %v2789
  %v2813 = vmul.f32 %v2764, %v2789
  %v2814 = vmul.f32 %v2765, %v2789
  %v2815 = vmul.f32 %v2766, %v2789
  %v2816 = vmul.f32 %v2767, %v2789
  %v2817 = vmul.f32 %v2768, %v2789
  %v2818 = vmul.f32 %v2769, %v2789
  %v2819 = vmul.f32 %v2770, %v2789
  %v2820 = vmul.f32 %v2771, %v2789
  %v2821 = vmul.f32 %v2772, %v2789
  %v2822 = vmul.f32 %v2773, %v2789
  %v2823 = vmul.f32 %v2774, %v2789
  %v2824 = vmul.f32 %v2775, %v2789
  %v2825 = vmul.f32 %v2776, %v2789
  %v2826 = vmul.f32 %v2777, %v2789
  %v2827 = vmul.f32 %v2778, %v2789
  %v2828 = vmul.f32 %v2779, %v2789
  %v2829 = vmul.f32 %v2780, %v2789
  %v2830 = vmul.f32 %v2781, %v2789
  %v2831 = vmul.f32 %v2782, %v2789
  %v2832 = vmul.f32 %v2783, %v2789
  %v2833 = vmul.f32 %v2784, %v2789
  %v2834 = vmul.f32 %v2785, %v2789
  %v2835 = vmul.f32 %v2786, %v2789
  %v2836 = vmul.f32 %v2787, %v2789
  %v2837 = vmul.f32 %v2788, %v2789
  %v2838 = vadd.f32 %v2693, %v2790
  %v2839 = vadd.f32 %v2694, %v2791
  %v2840 = vadd.f32 %v2695, %v2792
  %v2841 = vadd.f32 %v2696, %v2793
  %v2842 = vadd.f32 %v2697, %v2794
  %v2843 = vadd.f32 %v2698, %v2795
  %v2844 = vadd.f32 %v2699, %v2796
  %v2845 = vadd.f32 %v2700, %v2797
  %v2846 = vadd.f32 %v2701, %v2798
  %v2847 = vadd.f32 %v2702, %v2799
  %v2848 = vadd.f32 %v2703, %v2800
  %v2849 = vadd.f32 %v2704, %v2801
  %v2850 = vadd.f32 %v2705, %v2802
  %v2851 = vadd.f32 %v2706, %v2803
  %v2852 = vadd.f32 %v2707, %v2804
  %v2853 = vadd.f32 %v2708, %v2805
  %v2854 = vadd.f32 %v2709, %v2806
  %v2855 = vadd.f32 %v2710, %v2807
  %v2856 = vadd.f32 %v2711, %v2808
  %v2857 = vadd.f32 %v2712, %v2809
  %v2858 = vadd.f32 %v2713, %v2810
  %v2859 = vadd.f32 %v2714, %v2811
  %v2860 = vadd.f32 %v2715, %v2812
  %v2861 = vadd.f32 %v2716, %v2813
  %v2862 = vadd.f32 %v2717, %v2814
  %v2863 = vadd.f32 %v2718, %v2815
  %v2864 = vadd.f32 %v2719, %v2816
  %v2865 = vadd.f32 %v2720, %v2817
  %v2866 = vadd.f32 %v2721, %v2818
  %v2867 = vadd.f32 %v2722, %v2819
  %v2868 = vadd.f32 %v2723, %v2820
  %v2869 = vadd.f32 %v2724, %v2821
  %v2870 = vadd.f32 %v2725, %v2822
  %v2871 = vadd.f32 %v2726, %v2823
  %v2872 = vadd.f32 %v2727, %v2824
  %v2873 = vadd.f32 %v2728, %v2825
  %v2874 = vadd.f32 %v2729, %v2826
  %v2875 = vadd.f32 %v2730, %v2827
  %v2876 = vadd.f32 %v2731, %v2828
  %v2877 = vadd.f32 %v2732, %v2829
  %v2878 = vadd.f32 %v2733, %v2830
  %v2879 = vadd.f32 %v2734, %v2831
  %v2880 = vadd.f32 %v2735, %v2832
  %v2881 = vadd.f32 %v2736, %v2833
  %v2882 = vadd.f32 %v2737, %v2834
  %v2883 = vadd.f32 %v2738, %v2835
  %v2884 = vadd.f32 %v2739, %v2836
  %v2885 = vadd.f32 %v2740, %v2837
  %s2886 = scalar_lea.vmem %s1, 256
  %v2887 = vld [vmem:[%s2886] sm:$0xff]
  %v2888 = vld [vmem:[%s2886 + $0x8] sm:$0xff]
  %v2889 = vld [vmem:[%s2886 + $0x10] sm:$0xff]
  %v2890 = vld [vmem:[%s2886 + $0x18] sm:$0xff]
  %v2891 = vld [vmem:[%s2886 + $0x20] sm:$0xff]
  %v2892 = vld [vmem:[%s2886 + $0x28] sm:$0xff]
  %v2893 = vld [vmem:[%s2886 + $0x30] sm:$0xff]
  %v2894 = vld [vmem:[%s2886 + $0x38] sm:$0x3f]
  %v2895 = vld [vmem:[%s2886 + $0x40] sm:$0xff]
  %v2896 = vld [vmem:[%s2886 + $0x48] sm:$0xff]
  %v2897 = vld [vmem:[%s2886 + $0x50] sm:$0xff]
  %v2898 = vld [vmem:[%s2886 + $0x58] sm:$0xff]
  %v2899 = vld [vmem:[%s2886 + $0x60] sm:$0xff]
  %v2900 = vld [vmem:[%s2886 + $0x68] sm:$0xff]
  %v2901 = vld [vmem:[%s2886 + $0x70] sm:$0xff]
  %v2902 = vld [vmem:[%s2886 + $0x78] sm:$0x3f]
  %v2903 = vld [vmem:[%s2886 + $0x80] sm:$0xff]
  %v2904 = vld [vmem:[%s2886 + $0x88] sm:$0xff]
  %v2905 = vld [vmem:[%s2886 + $0x90] sm:$0xff]
  %v2906 = vld [vmem:[%s2886 + $0x98] sm:$0xff]
  %v2907 = vld [vmem:[%s2886 + $0xa0] sm:$0xff]
  %v2908 = vld [vmem:[%s2886 + $0xa8] sm:$0xff]
  %v2909 = vld [vmem:[%s2886 + $0xb0] sm:$0xff]
  %v2910 = vld [vmem:[%s2886 + $0xb8] sm:$0x3f]
  %v2911 = vld [vmem:[%s2886 + $0xc0] sm:$0xff]
  %v2912 = vld [vmem:[%s2886 + $0xc8] sm:$0xff]
  %v2913 = vld [vmem:[%s2886 + $0xd0] sm:$0xff]
  %v2914 = vld [vmem:[%s2886 + $0xd8] sm:$0xff]
  %v2915 = vld [vmem:[%s2886 + $0xe0] sm:$0xff]
  %v2916 = vld [vmem:[%s2886 + $0xe8] sm:$0xff]
  %v2917 = vld [vmem:[%s2886 + $0xf0] sm:$0xff]
  %v2918 = vld [vmem:[%s2886 + $0xf8] sm:$0x3f]
  %v2919 = vld [vmem:[%s2886 + $0x100] sm:$0xff]
  %v2920 = vld [vmem:[%s2886 + $0x108] sm:$0xff]
  %v2921 = vld [vmem:[%s2886 + $0x110] sm:$0xff]
  %v2922 = vld [vmem:[%s2886 + $0x118] sm:$0xff]
  %v2923 = vld [vmem:[%s2886 + $0x120] sm:$0xff]
  %v2924 = vld [vmem:[%s2886 + $0x128] sm:$0xff]
  %v2925 = vld [vmem:[%s2886 + $0x130] sm:$0xff]
  %v2926 = vld [vmem:[%s2886 + $0x138] sm:$0x3f]
  %v2927 = vld [vmem:[%s2886 + $0x140] sm:$0xff]
  %v2928 = vld [vmem:[%s2886 + $0x148] sm:$0xff]
  %v2929 = vld [vmem:[%s2886 + $0x150] sm:$0xff]
  %v2930 = vld [vmem:[%s2886 + $0x158] sm:$0xff]
  %v2931 = vld [vmem:[%s2886 + $0x160] sm:$0xff]
  %v2932 = vld [vmem:[%s2886 + $0x168] sm:$0xff]
  %v2933 = vld [vmem:[%s2886 + $0x170] sm:$0xff]
  %v2934 = vld [vmem:[%s2886 + $0x178] sm:$0x3f]
  %v2935 = vperm.slane %v26, 0
  %v2936 = vmul.f32 %v2887, %v2935
  %v2937 = vmul.f32 %v2888, %v2935
  %v2938 = vmul.f32 %v2889, %v2935
  %v2939 = vmul.f32 %v2890, %v2935
  %v2940 = vmul.f32 %v2891, %v2935
  %v2941 = vmul.f32 %v2892, %v2935
  %v2942 = vmul.f32 %v2893, %v2935
  %v2943 = vmul.f32 %v2894, %v2935
  %v2944 = vmul.f32 %v2895, %v2935
  %v2945 = vmul.f32 %v2896, %v2935
  %v2946 = vmul.f32 %v2897, %v2935
  %v2947 = vmul.f32 %v2898, %v2935
  %v2948 = vmul.f32 %v2899, %v2935
  %v2949 = vmul.f32 %v2900, %v2935
  %v2950 = vmul.f32 %v2901, %v2935
  %v2951 = vmul.f32 %v2902, %v2935
  %v2952 = vmul.f32 %v2903, %v2935
  %v2953 = vmul.f32 %v2904, %v2935
  %v2954 = vmul.f32 %v2905, %v2935
  %v2955 = vmul.f32 %v2906, %v2935
  %v2956 = vmul.f32 %v2907, %v2935
  %v2957 = vmul.f32 %v2908, %v2935
  %v2958 = vmul.f32 %v2909, %v2935
  %v2959 = vmul.f32 %v2910, %v2935
  %v2960 = vmul.f32 %v2911, %v2935
  %v2961 = vmul.f32 %v2912, %v2935
  %v2962 = vmul.f32 %v2913, %v2935
  %v2963 = vmul.f32 %v2914, %v2935
  %v2964 = vmul.f32 %v2915, %v2935
  %v2965 = vmul.f32 %v2916, %v2935
  %v2966 = vmul.f32 %v2917, %v2935
  %v2967 = vmul.f32 %v2918, %v2935
  %v2968 = vmul.f32 %v2919, %v2935
  %v2969 = vmul.f32 %v2920, %v2935
  %v2970 = vmul.f32 %v2921, %v2935
  %v2971 = vmul.f32 %v2922, %v2935
  %v2972 = vmul.f32 %v2923, %v2935
  %v2973 = vmul.f32 %v2924, %v2935
  %v2974 = vmul.f32 %v2925, %v2935
  %v2975 = vmul.f32 %v2926, %v2935
  %v2976 = vmul.f32 %v2927, %v2935
  %v2977 = vmul.f32 %v2928, %v2935
  %v2978 = vmul.f32 %v2929, %v2935
  %v2979 = vmul.f32 %v2930, %v2935
  %v2980 = vmul.f32 %v2931, %v2935
  %v2981 = vmul.f32 %v2932, %v2935
  %v2982 = vmul.f32 %v2933, %v2935
  %v2983 = vmul.f32 %v2934, %v2935
  %v2984 = vadd.f32 %v2838, %v2936
  %v2985 = vadd.f32 %v2839, %v2937
  %v2986 = vadd.f32 %v2840, %v2938
  %v2987 = vadd.f32 %v2841, %v2939
  %v2988 = vadd.f32 %v2842, %v2940
  %v2989 = vadd.f32 %v2843, %v2941
  %v2990 = vadd.f32 %v2844, %v2942
  %v2991 = vadd.f32 %v2845, %v2943
  %v2992 = vadd.f32 %v2846, %v2944
  %v2993 = vadd.f32 %v2847, %v2945
  %v2994 = vadd.f32 %v2848, %v2946
  %v2995 = vadd.f32 %v2849, %v2947
  %v2996 = vadd.f32 %v2850, %v2948
  %v2997 = vadd.f32 %v2851, %v2949
  %v2998 = vadd.f32 %v2852, %v2950
  %v2999 = vadd.f32 %v2853, %v2951
  %v3000 = vadd.f32 %v2854, %v2952
  %v3001 = vadd.f32 %v2855, %v2953
  %v3002 = vadd.f32 %v2856, %v2954
  %v3003 = vadd.f32 %v2857, %v2955
  %v3004 = vadd.f32 %v2858, %v2956
  %v3005 = vadd.f32 %v2859, %v2957
  %v3006 = vadd.f32 %v2860, %v2958
  %v3007 = vadd.f32 %v2861, %v2959
  %v3008 = vadd.f32 %v2862, %v2960
  %v3009 = vadd.f32 %v2863, %v2961
  %v3010 = vadd.f32 %v2864, %v2962
  %v3011 = vadd.f32 %v2865, %v2963
  %v3012 = vadd.f32 %v2866, %v2964
  %v3013 = vadd.f32 %v2867, %v2965
  %v3014 = vadd.f32 %v2868, %v2966
  %v3015 = vadd.f32 %v2869, %v2967
  %v3016 = vadd.f32 %v2870, %v2968
  %v3017 = vadd.f32 %v2871, %v2969
  %v3018 = vadd.f32 %v2872, %v2970
  %v3019 = vadd.f32 %v2873, %v2971
  %v3020 = vadd.f32 %v2874, %v2972
  %v3021 = vadd.f32 %v2875, %v2973
  %v3022 = vadd.f32 %v2876, %v2974
  %v3023 = vadd.f32 %v2877, %v2975
  %v3024 = vadd.f32 %v2878, %v2976
  %v3025 = vadd.f32 %v2879, %v2977
  %v3026 = vadd.f32 %v2880, %v2978
  %v3027 = vadd.f32 %v2881, %v2979
  %v3028 = vadd.f32 %v2882, %v2980
  %v3029 = vadd.f32 %v2883, %v2981
  %v3030 = vadd.f32 %v2884, %v2982
  %v3031 = vadd.f32 %v2885, %v2983
  %s3032 = scalar_lea.vmem %s2, 256
  %v3033 = vld [vmem:[%s3032] sm:$0xff]
  %v3034 = vld [vmem:[%s3032 + $0x8] sm:$0xff]
  %v3035 = vld [vmem:[%s3032 + $0x10] sm:$0xff]
  %v3036 = vld [vmem:[%s3032 + $0x18] sm:$0xff]
  %v3037 = vld [vmem:[%s3032 + $0x20] sm:$0xff]
  %v3038 = vld [vmem:[%s3032 + $0x28] sm:$0xff]
  %v3039 = vld [vmem:[%s3032 + $0x30] sm:$0xff]
  %v3040 = vld [vmem:[%s3032 + $0x38] sm:$0x3f]
  %v3041 = vld [vmem:[%s3032 + $0x40] sm:$0xff]
  %v3042 = vld [vmem:[%s3032 + $0x48] sm:$0xff]
  %v3043 = vld [vmem:[%s3032 + $0x50] sm:$0xff]
  %v3044 = vld [vmem:[%s3032 + $0x58] sm:$0xff]
  %v3045 = vld [vmem:[%s3032 + $0x60] sm:$0xff]
  %v3046 = vld [vmem:[%s3032 + $0x68] sm:$0xff]
  %v3047 = vld [vmem:[%s3032 + $0x70] sm:$0xff]
  %v3048 = vld [vmem:[%s3032 + $0x78] sm:$0x3f]
  %v3049 = vld [vmem:[%s3032 + $0x80] sm:$0xff]
  %v3050 = vld [vmem:[%s3032 + $0x88] sm:$0xff]
  %v3051 = vld [vmem:[%s3032 + $0x90] sm:$0xff]
  %v3052 = vld [vmem:[%s3032 + $0x98] sm:$0xff]
  %v3053 = vld [vmem:[%s3032 + $0xa0] sm:$0xff]
  %v3054 = vld [vmem:[%s3032 + $0xa8] sm:$0xff]
  %v3055 = vld [vmem:[%s3032 + $0xb0] sm:$0xff]
  %v3056 = vld [vmem:[%s3032 + $0xb8] sm:$0x3f]
  %v3057 = vld [vmem:[%s3032 + $0xc0] sm:$0xff]
  %v3058 = vld [vmem:[%s3032 + $0xc8] sm:$0xff]
  %v3059 = vld [vmem:[%s3032 + $0xd0] sm:$0xff]
  %v3060 = vld [vmem:[%s3032 + $0xd8] sm:$0xff]
  %v3061 = vld [vmem:[%s3032 + $0xe0] sm:$0xff]
  %v3062 = vld [vmem:[%s3032 + $0xe8] sm:$0xff]
  %v3063 = vld [vmem:[%s3032 + $0xf0] sm:$0xff]
  %v3064 = vld [vmem:[%s3032 + $0xf8] sm:$0x3f]
  %v3065 = vld [vmem:[%s3032 + $0x100] sm:$0xff]
  %v3066 = vld [vmem:[%s3032 + $0x108] sm:$0xff]
  %v3067 = vld [vmem:[%s3032 + $0x110] sm:$0xff]
  %v3068 = vld [vmem:[%s3032 + $0x118] sm:$0xff]
  %v3069 = vld [vmem:[%s3032 + $0x120] sm:$0xff]
  %v3070 = vld [vmem:[%s3032 + $0x128] sm:$0xff]
  %v3071 = vld [vmem:[%s3032 + $0x130] sm:$0xff]
  %v3072 = vld [vmem:[%s3032 + $0x138] sm:$0x3f]
  %v3073 = vld [vmem:[%s3032 + $0x140] sm:$0xff]
  %v3074 = vld [vmem:[%s3032 + $0x148] sm:$0xff]
  %v3075 = vld [vmem:[%s3032 + $0x150] sm:$0xff]
  %v3076 = vld [vmem:[%s3032 + $0x158] sm:$0xff]
  %v3077 = vld [vmem:[%s3032 + $0x160] sm:$0xff]
  %v3078 = vld [vmem:[%s3032 + $0x168] sm:$0xff]
  %v3079 = vld [vmem:[%s3032 + $0x170] sm:$0xff]
  %v3080 = vld [vmem:[%s3032 + $0x178] sm:$0x3f]
  %v3081 = vperm.slane %v26, 1
  %v3082 = vmul.f32 %v3033, %v3081
  %v3083 = vmul.f32 %v3034, %v3081
  %v3084 = vmul.f32 %v3035, %v3081
  %v3085 = vmul.f32 %v3036, %v3081
  %v3086 = vmul.f32 %v3037, %v3081
  %v3087 = vmul.f32 %v3038, %v3081
  %v3088 = vmul.f32 %v3039, %v3081
  %v3089 = vmul.f32 %v3040, %v3081
  %v3090 = vmul.f32 %v3041, %v3081
  %v3091 = vmul.f32 %v3042, %v3081
  %v3092 = vmul.f32 %v3043, %v3081
  %v3093 = vmul.f32 %v3044, %v3081
  %v3094 = vmul.f32 %v3045, %v3081
  %v3095 = vmul.f32 %v3046, %v3081
  %v3096 = vmul.f32 %v3047, %v3081
  %v3097 = vmul.f32 %v3048, %v3081
  %v3098 = vmul.f32 %v3049, %v3081
  %v3099 = vmul.f32 %v3050, %v3081
  %v3100 = vmul.f32 %v3051, %v3081
  %v3101 = vmul.f32 %v3052, %v3081
  %v3102 = vmul.f32 %v3053, %v3081
  %v3103 = vmul.f32 %v3054, %v3081
  %v3104 = vmul.f32 %v3055, %v3081
  %v3105 = vmul.f32 %v3056, %v3081
  %v3106 = vmul.f32 %v3057, %v3081
  %v3107 = vmul.f32 %v3058, %v3081
  %v3108 = vmul.f32 %v3059, %v3081
  %v3109 = vmul.f32 %v3060, %v3081
  %v3110 = vmul.f32 %v3061, %v3081
  %v3111 = vmul.f32 %v3062, %v3081
  %v3112 = vmul.f32 %v3063, %v3081
  %v3113 = vmul.f32 %v3064, %v3081
  %v3114 = vmul.f32 %v3065, %v3081
  %v3115 = vmul.f32 %v3066, %v3081
  %v3116 = vmul.f32 %v3067, %v3081
  %v3117 = vmul.f32 %v3068, %v3081
  %v3118 = vmul.f32 %v3069, %v3081
  %v3119 = vmul.f32 %v3070, %v3081
  %v3120 = vmul.f32 %v3071, %v3081
  %v3121 = vmul.f32 %v3072, %v3081
  %v3122 = vmul.f32 %v3073, %v3081
  %v3123 = vmul.f32 %v3074, %v3081
  %v3124 = vmul.f32 %v3075, %v3081
  %v3125 = vmul.f32 %v3076, %v3081
  %v3126 = vmul.f32 %v3077, %v3081
  %v3127 = vmul.f32 %v3078, %v3081
  %v3128 = vmul.f32 %v3079, %v3081
  %v3129 = vmul.f32 %v3080, %v3081
  %v3130 = vadd.f32 %v2984, %v3082
  %v3131 = vadd.f32 %v2985, %v3083
  %v3132 = vadd.f32 %v2986, %v3084
  %v3133 = vadd.f32 %v2987, %v3085
  %v3134 = vadd.f32 %v2988, %v3086
  %v3135 = vadd.f32 %v2989, %v3087
  %v3136 = vadd.f32 %v2990, %v3088
  %v3137 = vadd.f32 %v2991, %v3089
  %v3138 = vadd.f32 %v2992, %v3090
  %v3139 = vadd.f32 %v2993, %v3091
  %v3140 = vadd.f32 %v2994, %v3092
  %v3141 = vadd.f32 %v2995, %v3093
  %v3142 = vadd.f32 %v2996, %v3094
  %v3143 = vadd.f32 %v2997, %v3095
  %v3144 = vadd.f32 %v2998, %v3096
  %v3145 = vadd.f32 %v2999, %v3097
  %v3146 = vadd.f32 %v3000, %v3098
  %v3147 = vadd.f32 %v3001, %v3099
  %v3148 = vadd.f32 %v3002, %v3100
  %v3149 = vadd.f32 %v3003, %v3101
  %v3150 = vadd.f32 %v3004, %v3102
  %v3151 = vadd.f32 %v3005, %v3103
  %v3152 = vadd.f32 %v3006, %v3104
  %v3153 = vadd.f32 %v3007, %v3105
  %v3154 = vadd.f32 %v3008, %v3106
  %v3155 = vadd.f32 %v3009, %v3107
  %v3156 = vadd.f32 %v3010, %v3108
  %v3157 = vadd.f32 %v3011, %v3109
  %v3158 = vadd.f32 %v3012, %v3110
  %v3159 = vadd.f32 %v3013, %v3111
  %v3160 = vadd.f32 %v3014, %v3112
  %v3161 = vadd.f32 %v3015, %v3113
  %v3162 = vadd.f32 %v3016, %v3114
  %v3163 = vadd.f32 %v3017, %v3115
  %v3164 = vadd.f32 %v3018, %v3116
  %v3165 = vadd.f32 %v3019, %v3117
  %v3166 = vadd.f32 %v3020, %v3118
  %v3167 = vadd.f32 %v3021, %v3119
  %v3168 = vadd.f32 %v3022, %v3120
  %v3169 = vadd.f32 %v3023, %v3121
  %v3170 = vadd.f32 %v3024, %v3122
  %v3171 = vadd.f32 %v3025, %v3123
  %v3172 = vadd.f32 %v3026, %v3124
  %v3173 = vadd.f32 %v3027, %v3125
  %v3174 = vadd.f32 %v3028, %v3126
  %v3175 = vadd.f32 %v3029, %v3127
  %v3176 = vadd.f32 %v3030, %v3128
  %v3177 = vadd.f32 %v3031, %v3129
  %v3178 = vld [vmem:[%s2886 + $0x1] sm:$0xff]
  %v3179 = vld [vmem:[%s2886 + $0x9] sm:$0xff]
  %v3180 = vld [vmem:[%s2886 + $0x11] sm:$0xff]
  %v3181 = vld [vmem:[%s2886 + $0x19] sm:$0xff]
  %v3182 = vld [vmem:[%s2886 + $0x21] sm:$0xff]
  %v3183 = vld [vmem:[%s2886 + $0x29] sm:$0xff]
  %v3184 = vld [vmem:[%s2886 + $0x31] sm:$0xff]
  %v3185 = vld [vmem:[%s2886 + $0x39] sm:$0x3f]
  %v3186 = vld [vmem:[%s2886 + $0x41] sm:$0xff]
  %v3187 = vld [vmem:[%s2886 + $0x49] sm:$0xff]
  %v3188 = vld [vmem:[%s2886 + $0x51] sm:$0xff]
  %v3189 = vld [vmem:[%s2886 + $0x59] sm:$0xff]
  %v3190 = vld [vmem:[%s2886 + $0x61] sm:$0xff]
  %v3191 = vld [vmem:[%s2886 + $0x69] sm:$0xff]
  %v3192 = vld [vmem:[%s2886 + $0x71] sm:$0xff]
  %v3193 = vld [vmem:[%s2886 + $0x79] sm:$0x3f]
  %v3194 = vld [vmem:[%s2886 + $0x81] sm:$0xff]
  %v3195 = vld [vmem:[%s2886 + $0x89] sm:$0xff]
  %v3196 = vld [vmem:[%s2886 + $0x91] sm:$0xff]
  %v3197 = vld [vmem:[%s2886 + $0x99] sm:$0xff]
  %v3198 = vld [vmem:[%s2886 + $0xa1] sm:$0xff]
  %v3199 = vld [vmem:[%s2886 + $0xa9] sm:$0xff]
  %v3200 = vld [vmem:[%s2886 + $0xb1] sm:$0xff]
  %v3201 = vld [vmem:[%s2886 + $0xb9] sm:$0x3f]
  %v3202 = vld [vmem:[%s2886 + $0xc1] sm:$0xff]
  %v3203 = vld [vmem:[%s2886 + $0xc9] sm:$0xff]
  %v3204 = vld [vmem:[%s2886 + $0xd1] sm:$0xff]
  %v3205 = vld [vmem:[%s2886 + $0xd9] sm:$0xff]
  %v3206 = vld [vmem:[%s2886 + $0xe1] sm:$0xff]
  %v3207 = vld [vmem:[%s2886 + $0xe9] sm:$0xff]
  %v3208 = vld [vmem:[%s2886 + $0xf1] sm:$0xff]
  %v3209 = vld [vmem:[%s2886 + $0xf9] sm:$0x3f]
  %v3210 = vld [vmem:[%s2886 + $0x101] sm:$0xff]
  %v3211 = vld [vmem:[%s2886 + $0x109] sm:$0xff]
  %v3212 = vld [vmem:[%s2886 + $0x111] sm:$0xff]
  %v3213 = vld [vmem:[%s2886 + $0x119] sm:$0xff]
  %v3214 = vld [vmem:[%s2886 + $0x121] sm:$0xff]
  %v3215 = vld [vmem:[%s2886 + $0x129] sm:$0xff]
  %v3216 = vld [vmem:[%s2886 + $0x131] sm:$0xff]
  %v3217 = vld [vmem:[%s2886 + $0x139] sm:$0x3f]
  %v3218 = vld [vmem:[%s2886 + $0x141] sm:$0xff]
  %v3219 = vld [vmem:[%s2886 + $0x149] sm:$0xff]
  %v3220 = vld [vmem:[%s2886 + $0x151] sm:$0xff]
  %v3221 = vld [vmem:[%s2886 + $0x159] sm:$0xff]
  %v3222 = vld [vmem:[%s2886 + $0x161] sm:$0xff]
  %v3223 = vld [vmem:[%s2886 + $0x169] sm:$0xff]
  %v3224 = vld [vmem:[%s2886 + $0x171] sm:$0xff]
  %v3225 = vld [vmem:[%s2886 + $0x179] sm:$0x3f]
  %v3226 = vperm.slane %v26, 2
  %v3227 = vmul.f32 %v3178, %v3226
  %v3228 = vmul.f32 %v3179, %v3226
  %v3229 = vmul.f32 %v3180, %v3226
  %v3230 = vmul.f32 %v3181, %v3226
  %v3231 = vmul.f32 %v3182, %v3226
  %v3232 = vmul.f32 %v3183, %v3226
  %v3233 = vmul.f32 %v3184, %v3226
  %v3234 = vmul.f32 %v3185, %v3226
  %v3235 = vmul.f32 %v3186, %v3226
  %v3236 = vmul.f32 %v3187, %v3226
  %v3237 = vmul.f32 %v3188, %v3226
  %v3238 = vmul.f32 %v3189, %v3226
  %v3239 = vmul.f32 %v3190, %v3226
  %v3240 = vmul.f32 %v3191, %v3226
  %v3241 = vmul.f32 %v3192, %v3226
  %v3242 = vmul.f32 %v3193, %v3226
  %v3243 = vmul.f32 %v3194, %v3226
  %v3244 = vmul.f32 %v3195, %v3226
  %v3245 = vmul.f32 %v3196, %v3226
  %v3246 = vmul.f32 %v3197, %v3226
  %v3247 = vmul.f32 %v3198, %v3226
  %v3248 = vmul.f32 %v3199, %v3226
  %v3249 = vmul.f32 %v3200, %v3226
  %v3250 = vmul.f32 %v3201, %v3226
  %v3251 = vmul.f32 %v3202, %v3226
  %v3252 = vmul.f32 %v3203, %v3226
  %v3253 = vmul.f32 %v3204, %v3226
  %v3254 = vmul.f32 %v3205, %v3226
  %v3255 = vmul.f32 %v3206, %v3226
  %v3256 = vmul.f32 %v3207, %v3226
  %v3257 = vmul.f32 %v3208, %v3226
  %v3258 = vmul.f32 %v3209, %v3226
  %v3259 = vmul.f32 %v3210, %v3226
  %v3260 = vmul.f32 %v3211, %v3226
  %v3261 = vmul.f32 %v3212, %v3226
  %v3262 = vmul.f32 %v3213, %v3226
  %v3263 = vmul.f32 %v3214, %v3226
  %v3264 = vmul.f32 %v3215, %v3226
  %v3265 = vmul.f32 %v3216, %v3226
  %v3266 = vmul.f32 %v3217, %v3226
  %v3267 = vmul.f32 %v3218, %v3226
  %v3268 = vmul.f32 %v3219, %v3226
  %v3269 = vmul.f32 %v3220, %v3226
  %v3270 = vmul.f32 %v3221, %v3226
  %v3271 = vmul.f32 %v3222, %v3226
  %v3272 = vmul.f32 %v3223, %v3226
  %v3273 = vmul.f32 %v3224, %v3226
  %v3274 = vmul.f32 %v3225, %v3226
  %v3275 = vadd.f32 %v3130, %v3227
  %v3276 = vadd.f32 %v3131, %v3228
  %v3277 = vadd.f32 %v3132, %v3229
  %v3278 = vadd.f32 %v3133, %v3230
  %v3279 = vadd.f32 %v3134, %v3231
  %v3280 = vadd.f32 %v3135, %v3232
  %v3281 = vadd.f32 %v3136, %v3233
  %v3282 = vadd.f32 %v3137, %v3234
  %v3283 = vadd.f32 %v3138, %v3235
  %v3284 = vadd.f32 %v3139, %v3236
  %v3285 = vadd.f32 %v3140, %v3237
  %v3286 = vadd.f32 %v3141, %v3238
  %v3287 = vadd.f32 %v3142, %v3239
  %v3288 = vadd.f32 %v3143, %v3240
  %v3289 = vadd.f32 %v3144, %v3241
  %v3290 = vadd.f32 %v3145, %v3242
  %v3291 = vadd.f32 %v3146, %v3243
  %v3292 = vadd.f32 %v3147, %v3244
  %v3293 = vadd.f32 %v3148, %v3245
  %v3294 = vadd.f32 %v3149, %v3246
  %v3295 = vadd.f32 %v3150, %v3247
  %v3296 = vadd.f32 %v3151, %v3248
  %v3297 = vadd.f32 %v3152, %v3249
  %v3298 = vadd.f32 %v3153, %v3250
  %v3299 = vadd.f32 %v3154, %v3251
  %v3300 = vadd.f32 %v3155, %v3252
  %v3301 = vadd.f32 %v3156, %v3253
  %v3302 = vadd.f32 %v3157, %v3254
  %v3303 = vadd.f32 %v3158, %v3255
  %v3304 = vadd.f32 %v3159, %v3256
  %v3305 = vadd.f32 %v3160, %v3257
  %v3306 = vadd.f32 %v3161, %v3258
  %v3307 = vadd.f32 %v3162, %v3259
  %v3308 = vadd.f32 %v3163, %v3260
  %v3309 = vadd.f32 %v3164, %v3261
  %v3310 = vadd.f32 %v3165, %v3262
  %v3311 = vadd.f32 %v3166, %v3263
  %v3312 = vadd.f32 %v3167, %v3264
  %v3313 = vadd.f32 %v3168, %v3265
  %v3314 = vadd.f32 %v3169, %v3266
  %v3315 = vadd.f32 %v3170, %v3267
  %v3316 = vadd.f32 %v3171, %v3268
  %v3317 = vadd.f32 %v3172, %v3269
  %v3318 = vadd.f32 %v3173, %v3270
  %v3319 = vadd.f32 %v3174, %v3271
  %v3320 = vadd.f32 %v3175, %v3272
  %v3321 = vadd.f32 %v3176, %v3273
  %v3322 = vadd.f32 %v3177, %v3274
  %v3323 = vld [vmem:[%s3032 + $0x1] sm:$0xff]
  %v3324 = vld [vmem:[%s3032 + $0x9] sm:$0xff]
  %v3325 = vld [vmem:[%s3032 + $0x11] sm:$0xff]
  %v3326 = vld [vmem:[%s3032 + $0x19] sm:$0xff]
  %v3327 = vld [vmem:[%s3032 + $0x21] sm:$0xff]
  %v3328 = vld [vmem:[%s3032 + $0x29] sm:$0xff]
  %v3329 = vld [vmem:[%s3032 + $0x31] sm:$0xff]
  %v3330 = vld [vmem:[%s3032 + $0x39] sm:$0x3f]
  %v3331 = vld [vmem:[%s3032 + $0x41] sm:$0xff]
  %v3332 = vld [vmem:[%s3032 + $0x49] sm:$0xff]
  %v3333 = vld [vmem:[%s3032 + $0x51] sm:$0xff]
  %v3334 = vld [vmem:[%s3032 + $0x59] sm:$0xff]
  %v3335 = vld [vmem:[%s3032 + $0x61] sm:$0xff]
  %v3336 = vld [vmem:[%s3032 + $0x69] sm:$0xff]
  %v3337 = vld [vmem:[%s3032 + $0x71] sm:$0xff]
  %v3338 = vld [vmem:[%s3032 + $0x79] sm:$0x3f]
  %v3339 = vld [vmem:[%s3032 + $0x81] sm:$0xff]
  %v3340 = vld [vmem:[%s3032 + $0x89] sm:$0xff]
  %v3341 = vld [vmem:[%s3032 + $0x91] sm:$0xff]
  %v3342 = vld [vmem:[%s3032 + $0x99] sm:$0xff]
  %v3343 = vld [vmem:[%s3032 + $0xa1] sm:$0xff]
  %v3344 = vld [vmem:[%s3032 + $0xa9] sm:$0xff]
  %v3345 = vld [vmem:[%s3032 + $0xb1] sm:$0xff]
  %v3346 = vld [vmem:[%s3032 + $0xb9] sm:$0x3f]
  %v3347 = vld [vmem:[%s3032 + $0xc1] sm:$0xff]
  %v3348 = vld [vmem:[%s3032 + $0xc9] sm:$0xff]
  %v3349 = vld [vmem:[%s3032 + $0xd1] sm:$0xff]
  %v3350 = vld [vmem:[%s3032 + $0xd9] sm:$0xff]
  %v3351 = vld [vmem:[%s3032 + $0xe1] sm:$0xff]
  %v3352 = vld [vmem:[%s3032 + $0xe9] sm:$0xff]
  %v3353 = vld [vmem:[%s3032 + $0xf1] sm:$0xff]
  %v3354 = vld [vmem:[%s3032 + $0xf9] sm:$0x3f]
  %v3355 = vld [vmem:[%s3032 + $0x101] sm:$0xff]
  %v3356 = vld [vmem:[%s3032 + $0x109] sm:$0xff]
  %v3357 = vld [vmem:[%s3032 + $0x111] sm:$0xff]
  %v3358 = vld [vmem:[%s3032 + $0x119] sm:$0xff]
  %v3359 = vld [vmem:[%s3032 + $0x121] sm:$0xff]
  %v3360 = vld [vmem:[%s3032 + $0x129] sm:$0xff]
  %v3361 = vld [vmem:[%s3032 + $0x131] sm:$0xff]
  %v3362 = vld [vmem:[%s3032 + $0x139] sm:$0x3f]
  %v3363 = vld [vmem:[%s3032 + $0x141] sm:$0xff]
  %v3364 = vld [vmem:[%s3032 + $0x149] sm:$0xff]
  %v3365 = vld [vmem:[%s3032 + $0x151] sm:$0xff]
  %v3366 = vld [vmem:[%s3032 + $0x159] sm:$0xff]
  %v3367 = vld [vmem:[%s3032 + $0x161] sm:$0xff]
  %v3368 = vld [vmem:[%s3032 + $0x169] sm:$0xff]
  %v3369 = vld [vmem:[%s3032 + $0x171] sm:$0xff]
  %v3370 = vld [vmem:[%s3032 + $0x179] sm:$0x3f]
  %v3371 = vperm.slane %v26, 3
  %v3372 = vmul.f32 %v3323, %v3371
  %v3373 = vmul.f32 %v3324, %v3371
  %v3374 = vmul.f32 %v3325, %v3371
  %v3375 = vmul.f32 %v3326, %v3371
  %v3376 = vmul.f32 %v3327, %v3371
  %v3377 = vmul.f32 %v3328, %v3371
  %v3378 = vmul.f32 %v3329, %v3371
  %v3379 = vmul.f32 %v3330, %v3371
  %v3380 = vmul.f32 %v3331, %v3371
  %v3381 = vmul.f32 %v3332, %v3371
  %v3382 = vmul.f32 %v3333, %v3371
  %v3383 = vmul.f32 %v3334, %v3371
  %v3384 = vmul.f32 %v3335, %v3371
  %v3385 = vmul.f32 %v3336, %v3371
  %v3386 = vmul.f32 %v3337, %v3371
  %v3387 = vmul.f32 %v3338, %v3371
  %v3388 = vmul.f32 %v3339, %v3371
  %v3389 = vmul.f32 %v3340, %v3371
  %v3390 = vmul.f32 %v3341, %v3371
  %v3391 = vmul.f32 %v3342, %v3371
  %v3392 = vmul.f32 %v3343, %v3371
  %v3393 = vmul.f32 %v3344, %v3371
  %v3394 = vmul.f32 %v3345, %v3371
  %v3395 = vmul.f32 %v3346, %v3371
  %v3396 = vmul.f32 %v3347, %v3371
  %v3397 = vmul.f32 %v3348, %v3371
  %v3398 = vmul.f32 %v3349, %v3371
  %v3399 = vmul.f32 %v3350, %v3371
  %v3400 = vmul.f32 %v3351, %v3371
  %v3401 = vmul.f32 %v3352, %v3371
  %v3402 = vmul.f32 %v3353, %v3371
  %v3403 = vmul.f32 %v3354, %v3371
  %v3404 = vmul.f32 %v3355, %v3371
  %v3405 = vmul.f32 %v3356, %v3371
  %v3406 = vmul.f32 %v3357, %v3371
  %v3407 = vmul.f32 %v3358, %v3371
  %v3408 = vmul.f32 %v3359, %v3371
  %v3409 = vmul.f32 %v3360, %v3371
  %v3410 = vmul.f32 %v3361, %v3371
  %v3411 = vmul.f32 %v3362, %v3371
  %v3412 = vmul.f32 %v3363, %v3371
  %v3413 = vmul.f32 %v3364, %v3371
  %v3414 = vmul.f32 %v3365, %v3371
  %v3415 = vmul.f32 %v3366, %v3371
  %v3416 = vmul.f32 %v3367, %v3371
  %v3417 = vmul.f32 %v3368, %v3371
  %v3418 = vmul.f32 %v3369, %v3371
  %v3419 = vmul.f32 %v3370, %v3371
  %v3420 = vadd.f32 %v3275, %v3372
  %v3421 = vadd.f32 %v3276, %v3373
  %v3422 = vadd.f32 %v3277, %v3374
  %v3423 = vadd.f32 %v3278, %v3375
  %v3424 = vadd.f32 %v3279, %v3376
  %v3425 = vadd.f32 %v3280, %v3377
  %v3426 = vadd.f32 %v3281, %v3378
  %v3427 = vadd.f32 %v3282, %v3379
  %v3428 = vadd.f32 %v3283, %v3380
  %v3429 = vadd.f32 %v3284, %v3381
  %v3430 = vadd.f32 %v3285, %v3382
  %v3431 = vadd.f32 %v3286, %v3383
  %v3432 = vadd.f32 %v3287, %v3384
  %v3433 = vadd.f32 %v3288, %v3385
  %v3434 = vadd.f32 %v3289, %v3386
  %v3435 = vadd.f32 %v3290, %v3387
  %v3436 = vadd.f32 %v3291, %v3388
  %v3437 = vadd.f32 %v3292, %v3389
  %v3438 = vadd.f32 %v3293, %v3390
  %v3439 = vadd.f32 %v3294, %v3391
  %v3440 = vadd.f32 %v3295, %v3392
  %v3441 = vadd.f32 %v3296, %v3393
  %v3442 = vadd.f32 %v3297, %v3394
  %v3443 = vadd.f32 %v3298, %v3395
  %v3444 = vadd.f32 %v3299, %v3396
  %v3445 = vadd.f32 %v3300, %v3397
  %v3446 = vadd.f32 %v3301, %v3398
  %v3447 = vadd.f32 %v3302, %v3399
  %v3448 = vadd.f32 %v3303, %v3400
  %v3449 = vadd.f32 %v3304, %v3401
  %v3450 = vadd.f32 %v3305, %v3402
  %v3451 = vadd.f32 %v3306, %v3403
  %v3452 = vadd.f32 %v3307, %v3404
  %v3453 = vadd.f32 %v3308, %v3405
  %v3454 = vadd.f32 %v3309, %v3406
  %v3455 = vadd.f32 %v3310, %v3407
  %v3456 = vadd.f32 %v3311, %v3408
  %v3457 = vadd.f32 %v3312, %v3409
  %v3458 = vadd.f32 %v3313, %v3410
  %v3459 = vadd.f32 %v3314, %v3411
  %v3460 = vadd.f32 %v3315, %v3412
  %v3461 = vadd.f32 %v3316, %v3413
  %v3462 = vadd.f32 %v3317, %v3414
  %v3463 = vadd.f32 %v3318, %v3415
  %v3464 = vadd.f32 %v3319, %v3416
  %v3465 = vadd.f32 %v3320, %v3417
  %v3466 = vadd.f32 %v3321, %v3418
  %v3467 = vadd.f32 %v3322, %v3419
  %v3468 = vld [vmem:[%s2886 + $0x2] sm:$0xff]
  %v3469 = vld [vmem:[%s2886 + $0xa] sm:$0xff]
  %v3470 = vld [vmem:[%s2886 + $0x12] sm:$0xff]
  %v3471 = vld [vmem:[%s2886 + $0x1a] sm:$0xff]
  %v3472 = vld [vmem:[%s2886 + $0x22] sm:$0xff]
  %v3473 = vld [vmem:[%s2886 + $0x2a] sm:$0xff]
  %v3474 = vld [vmem:[%s2886 + $0x32] sm:$0xff]
  %v3475 = vld [vmem:[%s2886 + $0x3a] sm:$0x3f]
  %v3476 = vld [vmem:[%s2886 + $0x42] sm:$0xff]
  %v3477 = vld [vmem:[%s2886 + $0x4a] sm:$0xff]
  %v3478 = vld [vmem:[%s2886 + $0x52] sm:$0xff]
  %v3479 = vld [vmem:[%s2886 + $0x5a] sm:$0xff]
  %v3480 = vld [vmem:[%s2886 + $0x62] sm:$0xff]
  %v3481 = vld [vmem:[%s2886 + $0x6a] sm:$0xff]
  %v3482 = vld [vmem:[%s2886 + $0x72] sm:$0xff]
  %v3483 = vld [vmem:[%s2886 + $0x7a] sm:$0x3f]
  %v3484 = vld [vmem:[%s2886 + $0x82] sm:$0xff]
  %v3485 = vld [vmem:[%s2886 + $0x8a] sm:$0xff]
  %v3486 = vld [vmem:[%s2886 + $0x92] sm:$0xff]
  %v3487 = vld [vmem:[%s2886 + $0x9a] sm:$0xff]
  %v3488 = vld [vmem:[%s2886 + $0xa2] sm:$0xff]
  %v3489 = vld [vmem:[%s2886 + $0xaa] sm:$0xff]
  %v3490 = vld [vmem:[%s2886 + $0xb2] sm:$0xff]
  %v3491 = vld [vmem:[%s2886 + $0xba] sm:$0x3f]
  %v3492 = vld [vmem:[%s2886 + $0xc2] sm:$0xff]
  %v3493 = vld [vmem:[%s2886 + $0xca] sm:$0xff]
  %v3494 = vld [vmem:[%s2886 + $0xd2] sm:$0xff]
  %v3495 = vld [vmem:[%s2886 + $0xda] sm:$0xff]
  %v3496 = vld [vmem:[%s2886 + $0xe2] sm:$0xff]
  %v3497 = vld [vmem:[%s2886 + $0xea] sm:$0xff]
  %v3498 = vld [vmem:[%s2886 + $0xf2] sm:$0xff]
  %v3499 = vld [vmem:[%s2886 + $0xfa] sm:$0x3f]
  %v3500 = vld [vmem:[%s2886 + $0x102] sm:$0xff]
  %v3501 = vld [vmem:[%s2886 + $0x10a] sm:$0xff]
  %v3502 = vld [vmem:[%s2886 + $0x112] sm:$0xff]
  %v3503 = vld [vmem:[%s2886 + $0x11a] sm:$0xff]
  %v3504 = vld [vmem:[%s2886 + $0x122] sm:$0xff]
  %v3505 = vld [vmem:[%s2886 + $0x12a] sm:$0xff]
  %v3506 = vld [vmem:[%s2886 + $0x132] sm:$0xff]
  %v3507 = vld [vmem:[%s2886 + $0x13a] sm:$0x3f]
  %v3508 = vld [vmem:[%s2886 + $0x142] sm:$0xff]
  %v3509 = vld [vmem:[%s2886 + $0x14a] sm:$0xff]
  %v3510 = vld [vmem:[%s2886 + $0x152] sm:$0xff]
  %v3511 = vld [vmem:[%s2886 + $0x15a] sm:$0xff]
  %v3512 = vld [vmem:[%s2886 + $0x162] sm:$0xff]
  %v3513 = vld [vmem:[%s2886 + $0x16a] sm:$0xff]
  %v3514 = vld [vmem:[%s2886 + $0x172] sm:$0xff]
  %v3515 = vld [vmem:[%s2886 + $0x17a] sm:$0x3f]
  %v3516 = vperm.slane %v26, 4
  %v3517 = vmul.f32 %v3468, %v3516
  %v3518 = vmul.f32 %v3469, %v3516
  %v3519 = vmul.f32 %v3470, %v3516
  %v3520 = vmul.f32 %v3471, %v3516
  %v3521 = vmul.f32 %v3472, %v3516
  %v3522 = vmul.f32 %v3473, %v3516
  %v3523 = vmul.f32 %v3474, %v3516
  %v3524 = vmul.f32 %v3475, %v3516
  %v3525 = vmul.f32 %v3476, %v3516
  %v3526 = vmul.f32 %v3477, %v3516
  %v3527 = vmul.f32 %v3478, %v3516
  %v3528 = vmul.f32 %v3479, %v3516
  %v3529 = vmul.f32 %v3480, %v3516
  %v3530 = vmul.f32 %v3481, %v3516
  %v3531 = vmul.f32 %v3482, %v3516
  %v3532 = vmul.f32 %v3483, %v3516
  %v3533 = vmul.f32 %v3484, %v3516
  %v3534 = vmul.f32 %v3485, %v3516
  %v3535 = vmul.f32 %v3486, %v3516
  %v3536 = vmul.f32 %v3487, %v3516
  %v3537 = vmul.f32 %v3488, %v3516
  %v3538 = vmul.f32 %v3489, %v3516
  %v3539 = vmul.f32 %v3490, %v3516
  %v3540 = vmul.f32 %v3491, %v3516
  %v3541 = vmul.f32 %v3492, %v3516
  %v3542 = vmul.f32 %v3493, %v3516
  %v3543 = vmul.f32 %v3494, %v3516
  %v3544 = vmul.f32 %v3495, %v3516
  %v3545 = vmul.f32 %v3496, %v3516
  %v3546 = vmul.f32 %v3497, %v3516
  %v3547 = vmul.f32 %v3498, %v3516
  %v3548 = vmul.f32 %v3499, %v3516
  %v3549 = vmul.f32 %v3500, %v3516
  %v3550 = vmul.f32 %v3501, %v3516
  %v3551 = vmul.f32 %v3502, %v3516
  %v3552 = vmul.f32 %v3503, %v3516
  %v3553 = vmul.f32 %v3504, %v3516
  %v3554 = vmul.f32 %v3505, %v3516
  %v3555 = vmul.f32 %v3506, %v3516
  %v3556 = vmul.f32 %v3507, %v3516
  %v3557 = vmul.f32 %v3508, %v3516
  %v3558 = vmul.f32 %v3509, %v3516
  %v3559 = vmul.f32 %v3510, %v3516
  %v3560 = vmul.f32 %v3511, %v3516
  %v3561 = vmul.f32 %v3512, %v3516
  %v3562 = vmul.f32 %v3513, %v3516
  %v3563 = vmul.f32 %v3514, %v3516
  %v3564 = vmul.f32 %v3515, %v3516
  %v3565 = vadd.f32 %v3420, %v3517
  %v3566 = vadd.f32 %v3421, %v3518
  %v3567 = vadd.f32 %v3422, %v3519
  %v3568 = vadd.f32 %v3423, %v3520
  %v3569 = vadd.f32 %v3424, %v3521
  %v3570 = vadd.f32 %v3425, %v3522
  %v3571 = vadd.f32 %v3426, %v3523
  %v3572 = vadd.f32 %v3427, %v3524
  %v3573 = vadd.f32 %v3428, %v3525
  %v3574 = vadd.f32 %v3429, %v3526
  %v3575 = vadd.f32 %v3430, %v3527
  %v3576 = vadd.f32 %v3431, %v3528
  %v3577 = vadd.f32 %v3432, %v3529
  %v3578 = vadd.f32 %v3433, %v3530
  %v3579 = vadd.f32 %v3434, %v3531
  %v3580 = vadd.f32 %v3435, %v3532
  %v3581 = vadd.f32 %v3436, %v3533
  %v3582 = vadd.f32 %v3437, %v3534
  %v3583 = vadd.f32 %v3438, %v3535
  %v3584 = vadd.f32 %v3439, %v3536
  %v3585 = vadd.f32 %v3440, %v3537
  %v3586 = vadd.f32 %v3441, %v3538
  %v3587 = vadd.f32 %v3442, %v3539
  %v3588 = vadd.f32 %v3443, %v3540
  %v3589 = vadd.f32 %v3444, %v3541
  %v3590 = vadd.f32 %v3445, %v3542
  %v3591 = vadd.f32 %v3446, %v3543
  %v3592 = vadd.f32 %v3447, %v3544
  %v3593 = vadd.f32 %v3448, %v3545
  %v3594 = vadd.f32 %v3449, %v3546
  %v3595 = vadd.f32 %v3450, %v3547
  %v3596 = vadd.f32 %v3451, %v3548
  %v3597 = vadd.f32 %v3452, %v3549
  %v3598 = vadd.f32 %v3453, %v3550
  %v3599 = vadd.f32 %v3454, %v3551
  %v3600 = vadd.f32 %v3455, %v3552
  %v3601 = vadd.f32 %v3456, %v3553
  %v3602 = vadd.f32 %v3457, %v3554
  %v3603 = vadd.f32 %v3458, %v3555
  %v3604 = vadd.f32 %v3459, %v3556
  %v3605 = vadd.f32 %v3460, %v3557
  %v3606 = vadd.f32 %v3461, %v3558
  %v3607 = vadd.f32 %v3462, %v3559
  %v3608 = vadd.f32 %v3463, %v3560
  %v3609 = vadd.f32 %v3464, %v3561
  %v3610 = vadd.f32 %v3465, %v3562
  %v3611 = vadd.f32 %v3466, %v3563
  %v3612 = vadd.f32 %v3467, %v3564
  %v3614 = vperm.slane %v27, 0
  %v3616 = vadd.f32 %v3565, %v3614
  %v3617 = vadd.f32 %v3566, %v3614
  %v3618 = vadd.f32 %v3567, %v3614
  %v3619 = vadd.f32 %v3568, %v3614
  %v3620 = vadd.f32 %v3569, %v3614
  %v3621 = vadd.f32 %v3570, %v3614
  %v3622 = vadd.f32 %v3571, %v3614
  %v3623 = vadd.f32 %v3572, %v3614
  %v3624 = vadd.f32 %v3573, %v3614
  %v3625 = vadd.f32 %v3574, %v3614
  %v3626 = vadd.f32 %v3575, %v3614
  %v3627 = vadd.f32 %v3576, %v3614
  %v3628 = vadd.f32 %v3577, %v3614
  %v3629 = vadd.f32 %v3578, %v3614
  %v3630 = vadd.f32 %v3579, %v3614
  %v3631 = vadd.f32 %v3580, %v3614
  %v3632 = vadd.f32 %v3581, %v3614
  %v3633 = vadd.f32 %v3582, %v3614
  %v3634 = vadd.f32 %v3583, %v3614
  %v3635 = vadd.f32 %v3584, %v3614
  %v3636 = vadd.f32 %v3585, %v3614
  %v3637 = vadd.f32 %v3586, %v3614
  %v3638 = vadd.f32 %v3587, %v3614
  %v3639 = vadd.f32 %v3588, %v3614
  %v3640 = vadd.f32 %v3589, %v3614
  %v3641 = vadd.f32 %v3590, %v3614
  %v3642 = vadd.f32 %v3591, %v3614
  %v3643 = vadd.f32 %v3592, %v3614
  %v3644 = vadd.f32 %v3593, %v3614
  %v3645 = vadd.f32 %v3594, %v3614
  %v3646 = vadd.f32 %v3595, %v3614
  %v3647 = vadd.f32 %v3596, %v3614
  %v3648 = vadd.f32 %v3597, %v3614
  %v3649 = vadd.f32 %v3598, %v3614
  %v3650 = vadd.f32 %v3599, %v3614
  %v3651 = vadd.f32 %v3600, %v3614
  %v3652 = vadd.f32 %v3601, %v3614
  %v3653 = vadd.f32 %v3602, %v3614
  %v3654 = vadd.f32 %v3603, %v3614
  %v3655 = vadd.f32 %v3604, %v3614
  %v3656 = vadd.f32 %v3605, %v3614
  %v3657 = vadd.f32 %v3606, %v3614
  %v3658 = vadd.f32 %v3607, %v3614
  %v3659 = vadd.f32 %v3608, %v3614
  %v3660 = vadd.f32 %v3609, %v3614
  %v3661 = vadd.f32 %v3610, %v3614
  %v3662 = vadd.f32 %v3611, %v3614
  %v3663 = vadd.f32 %v3612, %v3614
  %v3664 = vmax.f32 %v3616, 0.0
  %v3665 = vmax.f32 %v3617, 0.0
  %v3666 = vmax.f32 %v3618, 0.0
  %v3667 = vmax.f32 %v3619, 0.0
  %v3668 = vmax.f32 %v3620, 0.0
  %v3669 = vmax.f32 %v3621, 0.0
  %v3670 = vmax.f32 %v3622, 0.0
  %v3671 = vmax.f32 %v3623, 0.0
  %v3672 = vmax.f32 %v3624, 0.0
  %v3673 = vmax.f32 %v3625, 0.0
  %v3674 = vmax.f32 %v3626, 0.0
  %v3675 = vmax.f32 %v3627, 0.0
  %v3676 = vmax.f32 %v3628, 0.0
  %v3677 = vmax.f32 %v3629, 0.0
  %v3678 = vmax.f32 %v3630, 0.0
  %v3679 = vmax.f32 %v3631, 0.0
  %v3680 = vmax.f32 %v3632, 0.0
  %v3681 = vmax.f32 %v3633, 0.0
  %v3682 = vmax.f32 %v3634, 0.0
  %v3683 = vmax.f32 %v3635, 0.0
  %v3684 = vmax.f32 %v3636, 0.0
  %v3685 = vmax.f32 %v3637, 0.0
  %v3686 = vmax.f32 %v3638, 0.0
  %v3687 = vmax.f32 %v3639, 0.0
  %v3688 = vmax.f32 %v3640, 0.0
  %v3689 = vmax.f32 %v3641, 0.0
  %v3690 = vmax.f32 %v3642, 0.0
  %v3691 = vmax.f32 %v3643, 0.0
  %v3692 = vmax.f32 %v3644, 0.0
  %v3693 = vmax.f32 %v3645, 0.0
  %v3694 = vmax.f32 %v3646, 0.0
  %v3695 = vmax.f32 %v3647, 0.0
  %v3696 = vmax.f32 %v3648, 0.0
  %v3697 = vmax.f32 %v3649, 0.0
  %v3698 = vmax.f32 %v3650, 0.0
  %v3699 = vmax.f32 %v3651, 0.0
  %v3700 = vmax.f32 %v3652, 0.0
  %v3701 = vmax.f32 %v3653, 0.0
  %v3702 = vmax.f32 %v3654, 0.0
  %v3703 = vmax.f32 %v3655, 0.0
  %v3704 = vmax.f32 %v3656, 0.0
  %v3705 = vmax.f32 %v3657, 0.0
  %v3706 = vmax.f32 %v3658, 0.0
  %v3707 = vmax.f32 %v3659, 0.0
  %v3708 = vmax.f32 %v3660, 0.0
  %v3709 = vmax.f32 %v3661, 0.0
  %v3710 = vmax.f32 %v3662, 0.0
  %v3711 = vmax.f32 %v3663, 0.0
  %v3712 = vmin.f32 %v3616, 0.0
  %v3713 = vmin.f32 %v3617, 0.0
  %v3714 = vmin.f32 %v3618, 0.0
  %v3715 = vmin.f32 %v3619, 0.0
  %v3716 = vmin.f32 %v3620, 0.0
  %v3717 = vmin.f32 %v3621, 0.0
  %v3718 = vmin.f32 %v3622, 0.0
  %v3719 = vmin.f32 %v3623, 0.0
  %v3720 = vmin.f32 %v3624, 0.0
  %v3721 = vmin.f32 %v3625, 0.0
  %v3722 = vmin.f32 %v3626, 0.0
  %v3723 = vmin.f32 %v3627, 0.0
  %v3724 = vmin.f32 %v3628, 0.0
  %v3725 = vmin.f32 %v3629, 0.0
  %v3726 = vmin.f32 %v3630, 0.0
  %v3727 = vmin.f32 %v3631, 0.0
  %v3728 = vmin.f32 %v3632, 0.0
  %v3729 = vmin.f32 %v3633, 0.0
  %v3730 = vmin.f32 %v3634, 0.0
  %v3731 = vmin.f32 %v3635, 0.0
  %v3732 = vmin.f32 %v3636, 0.0
  %v3733 = vmin.f32 %v3637, 0.0
  %v3734 = vmin.f32 %v3638, 0.0
  %v3735 = vmin.f32 %v3639, 0.0
  %v3736 = vmin.f32 %v3640, 0.0
  %v3737 = vmin.f32 %v3641, 0.0
  %v3738 = vmin.f32 %v3642, 0.0
  %v3739 = vmin.f32 %v3643, 0.0
  %v3740 = vmin.f32 %v3644, 0.0
  %v3741 = vmin.f32 %v3645, 0.0
  %v3742 = vmin.f32 %v3646, 0.0
  %v3743 = vmin.f32 %v3647, 0.0
  %v3744 = vmin.f32 %v3648, 0.0
  %v3745 = vmin.f32 %v3649, 0.0
  %v3746 = vmin.f32 %v3650, 0.0
  %v3747 = vmin.f32 %v3651, 0.0
  %v3748 = vmin.f32 %v3652, 0.0
  %v3749 = vmin.f32 %v3653, 0.0
  %v3750 = vmin.f32 %v3654, 0.0
  %v3751 = vmin.f32 %v3655, 0.0
  %v3752 = vmin.f32 %v3656, 0.0
  %v3753 = vmin.f32 %v3657, 0.0
  %v3754 = vmin.f32 %v3658, 0.0
  %v3755 = vmin.f32 %v3659, 0.0
  %v3756 = vmin.f32 %v3660, 0.0
  %v3757 = vmin.f32 %v3661, 0.0
  %v3758 = vmin.f32 %v3662, 0.0
  %v3759 = vmin.f32 %v3663, 0.0
  %v3760 = vstv %s21
  %v3761 = vmul.f32 %v3760, %v3712
  %v3762 = vmul.f32 %v3760, %v3713
  %v3763 = vmul.f32 %v3760, %v3714
  %v3764 = vmul.f32 %v3760, %v3715
  %v3765 = vmul.f32 %v3760, %v3716
  %v3766 = vmul.f32 %v3760, %v3717
  %v3767 = vmul.f32 %v3760, %v3718
  %v3768 = vmul.f32 %v3760, %v3719
  %v3769 = vmul.f32 %v3760, %v3720
  %v3770 = vmul.f32 %v3760, %v3721
  %v3771 = vmul.f32 %v3760, %v3722
  %v3772 = vmul.f32 %v3760, %v3723
  %v3773 = vmul.f32 %v3760, %v3724
  %v3774 = vmul.f32 %v3760, %v3725
  %v3775 = vmul.f32 %v3760, %v3726
  %v3776 = vmul.f32 %v3760, %v3727
  %v3777 = vmul.f32 %v3760, %v3728
  %v3778 = vmul.f32 %v3760, %v3729
  %v3779 = vmul.f32 %v3760, %v3730
  %v3780 = vmul.f32 %v3760, %v3731
  %v3781 = vmul.f32 %v3760, %v3732
  %v3782 = vmul.f32 %v3760, %v3733
  %v3783 = vmul.f32 %v3760, %v3734
  %v3784 = vmul.f32 %v3760, %v3735
  %v3785 = vmul.f32 %v3760, %v3736
  %v3786 = vmul.f32 %v3760, %v3737
  %v3787 = vmul.f32 %v3760, %v3738
  %v3788 = vmul.f32 %v3760, %v3739
  %v3789 = vmul.f32 %v3760, %v3740
  %v3790 = vmul.f32 %v3760, %v3741
  %v3791 = vmul.f32 %v3760, %v3742
  %v3792 = vmul.f32 %v3760, %v3743
  %v3793 = vmul.f32 %v3760, %v3744
  %v3794 = vmul.f32 %v3760, %v3745
  %v3795 = vmul.f32 %v3760, %v3746
  %v3796 = vmul.f32 %v3760, %v3747
  %v3797 = vmul.f32 %v3760, %v3748
  %v3798 = vmul.f32 %v3760, %v3749
  %v3799 = vmul.f32 %v3760, %v3750
  %v3800 = vmul.f32 %v3760, %v3751
  %v3801 = vmul.f32 %v3760, %v3752
  %v3802 = vmul.f32 %v3760, %v3753
  %v3803 = vmul.f32 %v3760, %v3754
  %v3804 = vmul.f32 %v3760, %v3755
  %v3805 = vmul.f32 %v3760, %v3756
  %v3806 = vmul.f32 %v3760, %v3757
  %v3807 = vmul.f32 %v3760, %v3758
  %v3808 = vmul.f32 %v3760, %v3759
  %v3809 = vadd.f32 %v3664, %v3761
  %v3810 = vadd.f32 %v3665, %v3762
  %v3811 = vadd.f32 %v3666, %v3763
  %v3812 = vadd.f32 %v3667, %v3764
  %v3813 = vadd.f32 %v3668, %v3765
  %v3814 = vadd.f32 %v3669, %v3766
  %v3815 = vadd.f32 %v3670, %v3767
  %v3816 = vadd.f32 %v3671, %v3768
  %v3817 = vadd.f32 %v3672, %v3769
  %v3818 = vadd.f32 %v3673, %v3770
  %v3819 = vadd.f32 %v3674, %v3771
  %v3820 = vadd.f32 %v3675, %v3772
  %v3821 = vadd.f32 %v3676, %v3773
  %v3822 = vadd.f32 %v3677, %v3774
  %v3823 = vadd.f32 %v3678, %v3775
  %v3824 = vadd.f32 %v3679, %v3776
  %v3825 = vadd.f32 %v3680, %v3777
  %v3826 = vadd.f32 %v3681, %v3778
  %v3827 = vadd.f32 %v3682, %v3779
  %v3828 = vadd.f32 %v3683, %v3780
  %v3829 = vadd.f32 %v3684, %v3781
  %v3830 = vadd.f32 %v3685, %v3782
  %v3831 = vadd.f32 %v3686, %v3783
  %v3832 = vadd.f32 %v3687, %v3784
  %v3833 = vadd.f32 %v3688, %v3785
  %v3834 = vadd.f32 %v3689, %v3786
  %v3835 = vadd.f32 %v3690, %v3787
  %v3836 = vadd.f32 %v3691, %v3788
  %v3837 = vadd.f32 %v3692, %v3789
  %v3838 = vadd.f32 %v3693, %v3790
  %v3839 = vadd.f32 %v3694, %v3791
  %v3840 = vadd.f32 %v3695, %v3792
  %v3841 = vadd.f32 %v3696, %v3793
  %v3842 = vadd.f32 %v3697, %v3794
  %v3843 = vadd.f32 %v3698, %v3795
  %v3844 = vadd.f32 %v3699, %v3796
  %v3845 = vadd.f32 %v3700, %v3797
  %v3846 = vadd.f32 %v3701, %v3798
  %v3847 = vadd.f32 %v3702, %v3799
  %v3848 = vadd.f32 %v3703, %v3800
  %v3849 = vadd.f32 %v3704, %v3801
  %v3850 = vadd.f32 %v3705, %v3802
  %v3851 = vadd.f32 %v3706, %v3803
  %v3852 = vadd.f32 %v3707, %v3804
  %v3853 = vadd.f32 %v3708, %v3805
  %v3854 = vadd.f32 %v3709, %v3806
  %v3855 = vadd.f32 %v3710, %v3807
  %v3856 = vadd.f32 %v3711, %v3808
  %v3857 = vmax.f32 %v3809, %v3817
  %v3858 = vmax.f32 %v3810, %v3818
  %v3859 = vmax.f32 %v3811, %v3819
  %v3860 = vmax.f32 %v3812, %v3820
  %v3861 = vmax.f32 %v3813, %v3821
  %v3862 = vmax.f32 %v3814, %v3822
  %v3863 = vmax.f32 %v3815, %v3823
  %v3864 = vmax.f32 %v3816, %v3824
  %v3865 = vmax.f32 %v3825, %v3833
  %v3866 = vmax.f32 %v3826, %v3834
  %v3867 = vmax.f32 %v3827, %v3835
  %v3868 = vmax.f32 %v3828, %v3836
  %v3869 = vmax.f32 %v3829, %v3837
  %v3870 = vmax.f32 %v3830, %v3838
  %v3871 = vmax.f32 %v3831, %v3839
  %v3872 = vmax.f32 %v3832, %v3840
  %v3873 = vmax.f32 %v3841, %v3849
  %v3874 = vmax.f32 %v3842, %v3850
  %v3875 = vmax.f32 %v3843, %v3851
  %v3876 = vmax.f32 %v3844, %v3852
  %v3877 = vmax.f32 %v3845, %v3853
  %v3878 = vmax.f32 %v3846, %v3854
  %v3879 = vmax.f32 %v3847, %v3855
  %v3880 = vmax.f32 %v3848, %v3856
  %v3881 = vmul.f32 %v125, %v76
  %v3882 = vmul.f32 %v126, %v76
  %v3883 = vmul.f32 %v127, %v76
  %v3884 = vmul.f32 %v128, %v76
  %v3885 = vmul.f32 %v129, %v76
  %v3886 = vmul.f32 %v130, %v76
  %v3887 = vmul.f32 %v131, %v76
  %v3888 = vmul.f32 %v132, %v76
  %v3889 = vmul.f32 %v133, %v76
  %v3890 = vmul.f32 %v134, %v76
  %v3891 = vmul.f32 %v135, %v76
  %v3892 = vmul.f32 %v136, %v76
  %v3893 = vmul.f32 %v137, %v76
  %v3894 = vmul.f32 %v138, %v76
  %v3895 = vmul.f32 %v139, %v76
  %v3896 = vmul.f32 %v140, %v76
  %v3897 = vmul.f32 %v141, %v76
  %v3898 = vmul.f32 %v142, %v76
  %v3899 = vmul.f32 %v143, %v76
  %v3900 = vmul.f32 %v144, %v76
  %v3901 = vmul.f32 %v145, %v76
  %v3902 = vmul.f32 %v146, %v76
  %v3903 = vmul.f32 %v147, %v76
  %v3904 = vmul.f32 %v148, %v76
  %v3905 = vmul.f32 %v149, %v76
  %v3906 = vmul.f32 %v150, %v76
  %v3907 = vmul.f32 %v151, %v76
  %v3908 = vmul.f32 %v152, %v76
  %v3909 = vmul.f32 %v153, %v76
  %v3910 = vmul.f32 %v154, %v76
  %v3911 = vmul.f32 %v155, %v76
  %v3912 = vmul.f32 %v156, %v76
  %v3913 = vmul.f32 %v157, %v76
  %v3914 = vmul.f32 %v158, %v76
  %v3915 = vmul.f32 %v159, %v76
  %v3916 = vmul.f32 %v160, %v76
  %v3917 = vmul.f32 %v161, %v76
  %v3918 = vmul.f32 %v162, %v76
  %v3919 = vmul.f32 %v163, %v76
  %v3920 = vmul.f32 %v164, %v76
  %v3921 = vmul.f32 %v165, %v76
  %v3922 = vmul.f32 %v166, %v76
  %v3923 = vmul.f32 %v167, %v76
  %v3924 = vmul.f32 %v168, %v76
  %v3925 = vmul.f32 %v169, %v76
  %v3926 = vmul.f32 %v170, %v76
  %v3927 = vmul.f32 %v171, %v76
  %v3928 = vmul.f32 %v172, %v76
  %v3929 = vmul.f32 %v270, %v173
  %v3930 = vmul.f32 %v271, %v173
  %v3931 = vmul.f32 %v272, %v173
  %v3932 = vmul.f32 %v273, %v173
  %v3933 = vmul.f32 %v274, %v173
  %v3934 = vmul.f32 %v275, %v173
  %v3935 = vmul.f32 %v276, %v173
  %v3936 = vmul.f32 %v277, %v173
  %v3937 = vmul.f32 %v278, %v173
  %v3938 = vmul.f32 %v279, %v173
  %v3939 = vmul.f32 %v280, %v173
  %v3940 = vmul.f32 %v281, %v173
  %v3941 = vmul.f32 %v282, %v173
  %v3942 = vmul.f32 %v283, %v173
  %v3943 = vmul.f32 %v284, %v173
  %v3944 = vmul.f32 %v285, %v173
  %v3945 = vmul.f32 %v286, %v173
  %v3946 = vmul.f32 %v287, %v173
  %v3947 = vmul.f32 %v288, %v173
  %v3948 = vmul.f32 %v289, %v173
  %v3949 = vmul.f32 %v290, %v173
  %v3950 = vmul.f32 %v291, %v173
  %v3951 = vmul.f32 %v292, %v173
  %v3952 = vmul.f32 %v293, %v173
  %v3953 = vmul.f32 %v294, %v173
  %v3954 = vmul.f32 %v295, %v173
  %v3955 = vmul.f32 %v296, %v173
  %v3956 = vmul.f32 %v297, %v173
  %v3957 = vmul.f32 %v298, %v173
  %v3958 = vmul.f32 %v299, %v173
  %v3959 = vmul.f32 %v300, %v173
  %v3960 = vmul.f32 %v301, %v173
  %v3961 = vmul.f32 %v302, %v173
  %v3962 = vmul.f32 %v303, %v173
  %v3963 = vmul.f32 %v304, %v173
  %v3964 = vmul.f32 %v305, %v173
  %v3965 = vmul.f32 %v306, %v173
  %v3966 = vmul.f32 %v307, %v173
  %v3967 = vmul.f32 %v308, %v173
  %v3968 = vmul.f32 %v309, %v173
  %v3969 = vmul.f32 %v310, %v173
  %v3970 = vmul.f32 %v311, %v173
  %v3971 = vmul.f32 %v312, %v173
  %v3972 = vmul.f32 %v313, %v173
  %v3973 = vmul.f32 %v314, %v173
  %v3974 = vmul.f32 %v315, %v173
  %v3975 = vmul.f32 %v316, %v173
  %v3976 = vmul.f32 %v317, %v173
  %v3977 = vadd.f32 %v3881, %v3929
  %v3978 = vadd.f32 %v3882, %v3930
  %v3979 = vadd.f32 %v3883, %v3931
  %v3980 = vadd.f32 %v3884, %v3932
  %v3981 = vadd.f32 %v3885, %v3933
  %v3982 = vadd.f32 %v3886, %v3934
  %v3983 = vadd.f32 %v3887, %v3935
  %v3984 = vadd.f32 %v3888, %v3936
  %v3985 = vadd.f32 %v3889, %v3937
  %v3986 = vadd.f32 %v3890, %v3938
  %v3987 = vadd.f32 %v3891, %v3939
  %v3988 = vadd.f32 %v3892, %v3940
  %v3989 = vadd.f32 %v3893, %v3941
  %v3990 = vadd.f32 %v3894, %v3942
  %v3991 = vadd.f32 %v3895, %v3943
  %v3992 = vadd.f32 %v3896, %v3944
  %v3993 = vadd.f32 %v3897, %v3945
  %v3994 = vadd.f32 %v3898, %v3946
  %v3995 = vadd.f32 %v3899, %v3947
  %v3996 = vadd.f32 %v3900, %v3948
  %v3997 = vadd.f32 %v3901, %v3949
  %v3998 = vadd.f32 %v3902, %v3950
  %v3999 = vadd.f32 %v3903, %v3951
  %v4000 = vadd.f32 %v3904, %v3952
  %v4001 = vadd.f32 %v3905, %v3953
  %v4002 = vadd.f32 %v3906, %v3954
  %v4003 = vadd.f32 %v3907, %v3955
  %v4004 = vadd.f32 %v3908, %v3956
  %v4005 = vadd.f32 %v3909, %v3957
  %v4006 = vadd.f32 %v3910, %v3958
  %v4007 = vadd.f32 %v3911, %v3959
  %v4008 = vadd.f32 %v3912, %v3960
  %v4009 = vadd.f32 %v3913, %v3961
  %v4010 = vadd.f32 %v3914, %v3962
  %v4011 = vadd.f32 %v3915, %v3963
  %v4012 = vadd.f32 %v3916, %v3964
  %v4013 = vadd.f32 %v3917, %v3965
  %v4014 = vadd.f32 %v3918, %v3966
  %v4015 = vadd.f32 %v3919, %v3967
  %v4016 = vadd.f32 %v3920, %v3968
  %v4017 = vadd.f32 %v3921, %v3969
  %v4018 = vadd.f32 %v3922, %v3970
  %v4019 = vadd.f32 %v3923, %v3971
  %v4020 = vadd.f32 %v3924, %v3972
  %v4021 = vadd.f32 %v3925, %v3973
  %v4022 = vadd.f32 %v3926, %v3974
  %v4023 = vadd.f32 %v3927, %v3975
  %v4024 = vadd.f32 %v3928, %v3976
  %v4025 = vmul.f32 %v415, %v318
  %v4026 = vmul.f32 %v416, %v318
  %v4027 = vmul.f32 %v417, %v318
  %v4028 = vmul.f32 %v418, %v318
  %v4029 = vmul.f32 %v419, %v318
  %v4030 = vmul.f32 %v420, %v318
  %v4031 = vmul.f32 %v421, %v318
  %v4032 = vmul.f32 %v422, %v318
  %v4033 = vmul.f32 %v423, %v318
  %v4034 = vmul.f32 %v424, %v318
  %v4035 = vmul.f32 %v425, %v318
  %v4036 = vmul.f32 %v426, %v318
  %v4037 = vmul.f32 %v427, %v318
  %v4038 = vmul.f32 %v428, %v318
  %v4039 = vmul.f32 %v429, %v318
  %v4040 = vmul.f32 %v430, %v318
  %v4041 = vmul.f32 %v431, %v318
  %v4042 = vmul.f32 %v432, %v318
  %v4043 = vmul.f32 %v433, %v318
  %v4044 = vmul.f32 %v434, %v318
  %v4045 = vmul.f32 %v435, %v318
  %v4046 = vmul.f32 %v436, %v318
  %v4047 = vmul.f32 %v437, %v318
  %v4048 = vmul.f32 %v438, %v318
  %v4049 = vmul.f32 %v439, %v318
  %v4050 = vmul.f32 %v440, %v318
  %v4051 = vmul.f32 %v441, %v318
  %v4052 = vmul.f32 %v442, %v318
  %v4053 = vmul.f32 %v443, %v318
  %v4054 = vmul.f32 %v444, %v318
  %v4055 = vmul.f32 %v445, %v318
  %v4056 = vmul.f32 %v446, %v318
  %v4057 = vmul.f32 %v447, %v318
  %v4058 = vmul.f32 %v448, %v318
  %v4059 = vmul.f32 %v449, %v318
  %v4060 = vmul.f32 %v450, %v318
  %v4061 = vmul.f32 %v451, %v318
  %v4062 = vmul.f32 %v452, %v318
  %v4063 = vmul.f32 %v453, %v318
  %v4064 = vmul.f32 %v454, %v318
  %v4065 = vmul.f32 %v455, %v318
  %v4066 = vmul.f32 %v456, %v318
  %v4067 = vmul.f32 %v457, %v318
  %v4068 = vmul.f32 %v458, %v318
  %v4069 = vmul.f32 %v459, %v318
  %v4070 = vmul.f32 %v460, %v318
  %v4071 = vmul.f32 %v461, %v318
  %v4072 = vmul.f32 %v462, %v318
  %v4073 = vadd.f32 %v3977, %v4025
  %v4074 = vadd.f32 %v3978, %v4026
  %v4075 = vadd.f32 %v3979, %v4027
  %v4076 = vadd.f32 %v3980, %v4028
  %v4077 = vadd.f32 %v3981, %v4029
  %v4078 = vadd.f32 %v3982, %v4030
  %v4079 = vadd.f32 %v3983, %v4031
  %v4080 = vadd.f32 %v3984, %v4032
  %v4081 = vadd.f32 %v3985, %v4033
  %v4082 = vadd.f32 %v3986, %v4034
  %v4083 = vadd.f32 %v3987, %v4035
  %v4084 = vadd.f32 %v3988, %v4036
  %v4085 = vadd.f32 %v3989, %v4037
  %v4086 = vadd.f32 %v3990, %v4038
  %v4087 = vadd.f32 %v3991, %v4039
  %v4088 = vadd.f32 %v3992, %v4040
  %v4089 = vadd.f32 %v3993, %v4041
  %v4090 = vadd.f32 %v3994, %v4042
  %v4091 = vadd.f32 %v3995, %v4043
  %v4092 = vadd.f32 %v3996, %v4044
  %v4093 = vadd.f32 %v3997, %v4045
  %v4094 = vadd.f32 %v3998, %v4046
  %v4095 = vadd.f32 %v3999, %v4047
  %v4096 = vadd.f32 %v4000, %v4048
  %v4097 = vadd.f32 %v4001, %v4049
  %v4098 = vadd.f32 %v4002, %v4050
  %v4099 = vadd.f32 %v4003, %v4051
  %v4100 = vadd.f32 %v4004, %v4052
  %v4101 = vadd.f32 %v4005, %v4053
  %v4102 = vadd.f32 %v4006, %v4054
  %v4103 = vadd.f32 %v4007, %v4055
  %v4104 = vadd.f32 %v4008, %v4056
  %v4105 = vadd.f32 %v4009, %v4057
  %v4106 = vadd.f32 %v4010, %v4058
  %v4107 = vadd.f32 %v4011, %v4059
  %v4108 = vadd.f32 %v4012, %v4060
  %v4109 = vadd.f32 %v4013, %v4061
  %v4110 = vadd.f32 %v4014, %v4062
  %v4111 = vadd.f32 %v4015, %v4063
  %v4112 = vadd.f32 %v4016, %v4064
  %v4113 = vadd.f32 %v4017, %v4065
  %v4114 = vadd.f32 %v4018, %v4066
  %v4115 = vadd.f32 %v4019, %v4067
  %v4116 = vadd.f32 %v4020, %v4068
  %v4117 = vadd.f32 %v4021, %v4069
  %v4118 = vadd.f32 %v4022, %v4070
  %v4119 = vadd.f32 %v4023, %v4071
  %v4120 = vadd.f32 %v4024, %v4072
  %v4121 = vmul.f32 %v560, %v463
  %v4122 = vmul.f32 %v561, %v463
  %v4123 = vmul.f32 %v562, %v463
  %v4124 = vmul.f32 %v563, %v463
  %v4125 = vmul.f32 %v564, %v463
  %v4126 = vmul.f32 %v565, %v463
  %v4127 = vmul.f32 %v566, %v463
  %v4128 = vmul.f32 %v567, %v463
  %v4129 = vmul.f32 %v568, %v463
  %v4130 = vmul.f32 %v569, %v463
  %v4131 = vmul.f32 %v570, %v463
  %v4132 = vmul.f32 %v571, %v463
  %v4133 = vmul.f32 %v572, %v463
  %v4134 = vmul.f32 %v573, %v463
  %v4135 = vmul.f32 %v574, %v463
  %v4136 = vmul.f32 %v575, %v463
  %v4137 = vmul.f32 %v576, %v463
  %v4138 = vmul.f32 %v577, %v463
  %v4139 = vmul.f32 %v578, %v463
  %v4140 = vmul.f32 %v579, %v463
  %v4141 = vmul.f32 %v580, %v463
  %v4142 = vmul.f32 %v581, %v463
  %v4143 = vmul.f32 %v582, %v463
  %v4144 = vmul.f32 %v583, %v463
  %v4145 = vmul.f32 %v584, %v463
  %v4146 = vmul.f32 %v585, %v463
  %v4147 = vmul.f32 %v586, %v463
  %v4148 = vmul.f32 %v587, %v463
  %v4149 = vmul.f32 %v588, %v463
  %v4150 = vmul.f32 %v589, %v463
  %v4151 = vmul.f32 %v590, %v463
  %v4152 = vmul.f32 %v591, %v463
  %v4153 = vmul.f32 %v592, %v463
  %v4154 = vmul.f32 %v593, %v463
  %v4155 = vmul.f32 %v594, %v463
  %v4156 = vmul.f32 %v595, %v463
  %v4157 = vmul.f32 %v596, %v463
  %v4158 = vmul.f32 %v597, %v463
  %v4159 = vmul.f32 %v598, %v463
  %v4160 = vmul.f32 %v599, %v463
  %v4161 = vmul.f32 %v600, %v463
  %v4162 = vmul.f32 %v601, %v463
  %v4163 = vmul.f32 %v602, %v463
  %v4164 = vmul.f32 %v603, %v463
  %v4165 = vmul.f32 %v604, %v463
  %v4166 = vmul.f32 %v605, %v463
  %v4167 = vmul.f32 %v606, %v463
  %v4168 = vmul.f32 %v607, %v463
  %v4169 = vadd.f32 %v4073, %v4121
  %v4170 = vadd.f32 %v4074, %v4122
  %v4171 = vadd.f32 %v4075, %v4123
  %v4172 = vadd.f32 %v4076, %v4124
  %v4173 = vadd.f32 %v4077, %v4125
  %v4174 = vadd.f32 %v4078, %v4126
  %v4175 = vadd.f32 %v4079, %v4127
  %v4176 = vadd.f32 %v4080, %v4128
  %v4177 = vadd.f32 %v4081, %v4129
  %v4178 = vadd.f32 %v4082, %v4130
  %v4179 = vadd.f32 %v4083, %v4131
  %v4180 = vadd.f32 %v4084, %v4132
  %v4181 = vadd.f32 %v4085, %v4133
  %v4182 = vadd.f32 %v4086, %v4134
  %v4183 = vadd.f32 %v4087, %v4135
  %v4184 = vadd.f32 %v4088, %v4136
  %v4185 = vadd.f32 %v4089, %v4137
  %v4186 = vadd.f32 %v4090, %v4138
  %v4187 = vadd.f32 %v4091, %v4139
  %v4188 = vadd.f32 %v4092, %v4140
  %v4189 = vadd.f32 %v4093, %v4141
  %v4190 = vadd.f32 %v4094, %v4142
  %v4191 = vadd.f32 %v4095, %v4143
  %v4192 = vadd.f32 %v4096, %v4144
  %v4193 = vadd.f32 %v4097, %v4145
  %v4194 = vadd.f32 %v4098, %v4146
  %v4195 = vadd.f32 %v4099, %v4147
  %v4196 = vadd.f32 %v4100, %v4148
  %v4197 = vadd.f32 %v4101, %v4149
  %v4198 = vadd.f32 %v4102, %v4150
  %v4199 = vadd.f32 %v4103, %v4151
  %v4200 = vadd.f32 %v4104, %v4152
  %v4201 = vadd.f32 %v4105, %v4153
  %v4202 = vadd.f32 %v4106, %v4154
  %v4203 = vadd.f32 %v4107, %v4155
  %v4204 = vadd.f32 %v4108, %v4156
  %v4205 = vadd.f32 %v4109, %v4157
  %v4206 = vadd.f32 %v4110, %v4158
  %v4207 = vadd.f32 %v4111, %v4159
  %v4208 = vadd.f32 %v4112, %v4160
  %v4209 = vadd.f32 %v4113, %v4161
  %v4210 = vadd.f32 %v4114, %v4162
  %v4211 = vadd.f32 %v4115, %v4163
  %v4212 = vadd.f32 %v4116, %v4164
  %v4213 = vadd.f32 %v4117, %v4165
  %v4214 = vadd.f32 %v4118, %v4166
  %v4215 = vadd.f32 %v4119, %v4167
  %v4216 = vadd.f32 %v4120, %v4168
  %v4217 = vld [vmem:[%s2 + $0x2] sm:$0xff]
  %v4218 = vld [vmem:[%s2 + $0xa] sm:$0xff]
  %v4219 = vld [vmem:[%s2 + $0x12] sm:$0xff]
  %v4220 = vld [vmem:[%s2 + $0x1a] sm:$0xff]
  %v4221 = vld [vmem:[%s2 + $0x22] sm:$0xff]
  %v4222 = vld [vmem:[%s2 + $0x2a] sm:$0xff]
  %v4223 = vld [vmem:[%s2 + $0x32] sm:$0xff]
  %v4224 = vld [vmem:[%s2 + $0x3a] sm:$0x3f]
  %v4225 = vld [vmem:[%s2 + $0x42] sm:$0xff]
  %v4226 = vld [vmem:[%s2 + $0x4a] sm:$0xff]
  %v4227 = vld [vmem:[%s2 + $0x52] sm:$0xff]
  %v4228 = vld [vmem:[%s2 + $0x5a] sm:$0xff]
  %v4229 = vld [vmem:[%s2 + $0x62] sm:$0xff]
  %v4230 = vld [vmem:[%s2 + $0x6a] sm:$0xff]
  %v4231 = vld [vmem:[%s2 + $0x72] sm:$0xff]
  %v4232 = vld [vmem:[%s2 + $0x7a] sm:$0x3f]
  %v4233 = vld [vmem:[%s2 + $0x82] sm:$0xff]
  %v4234 = vld [vmem:[%s2 + $0x8a] sm:$0xff]
  %v4235 = vld [vmem:[%s2 + $0x92] sm:$0xff]
  %v4236 = vld [vmem:[%s2 + $0x9a] sm:$0xff]
  %v4237 = vld [vmem:[%s2 + $0xa2] sm:$0xff]
  %v4238 = vld [vmem:[%s2 + $0xaa] sm:$0xff]
  %v4239 = vld [vmem:[%s2 + $0xb2] sm:$0xff]
  %v4240 = vld [vmem:[%s2 + $0xba] sm:$0x3f]
  %v4241 = vld [vmem:[%s2 + $0xc2] sm:$0xff]
  %v4242 = vld [vmem:[%s2 + $0xca] sm:$0xff]
  %v4243 = vld [vmem:[%s2 + $0xd2] sm:$0xff]
  %v4244 = vld [vmem:[%s2 + $0xda] sm:$0xff]
  %v4245 = vld [vmem:[%s2 + $0xe2] sm:$0xff]
  %v4246 = vld [vmem:[%s2 + $0xea] sm:$0xff]
  %v4247 = vld [vmem:[%s2 + $0xf2] sm:$0xff]
  %v4248 = vld [vmem:[%s2 + $0xfa] sm:$0x3f]
  %v4249 = vld [vmem:[%s2 + $0x102] sm:$0xff]
  %v4250 = vld [vmem:[%s2 + $0x10a] sm:$0xff]
  %v4251 = vld [vmem:[%s2 + $0x112] sm:$0xff]
  %v4252 = vld [vmem:[%s2 + $0x11a] sm:$0xff]
  %v4253 = vld [vmem:[%s2 + $0x122] sm:$0xff]
  %v4254 = vld [vmem:[%s2 + $0x12a] sm:$0xff]
  %v4255 = vld [vmem:[%s2 + $0x132] sm:$0xff]
  %v4256 = vld [vmem:[%s2 + $0x13a] sm:$0x3f]
  %v4257 = vld [vmem:[%s2 + $0x142] sm:$0xff]
  %v4258 = vld [vmem:[%s2 + $0x14a] sm:$0xff]
  %v4259 = vld [vmem:[%s2 + $0x152] sm:$0xff]
  %v4260 = vld [vmem:[%s2 + $0x15a] sm:$0xff]
  %v4261 = vld [vmem:[%s2 + $0x162] sm:$0xff]
  %v4262 = vld [vmem:[%s2 + $0x16a] sm:$0xff]
  %v4263 = vld [vmem:[%s2 + $0x172] sm:$0xff]
  %v4264 = vld [vmem:[%s2 + $0x17a] sm:$0x3f]
  %v4265 = vmul.f32 %v4217, %v608
  %v4266 = vmul.f32 %v4218, %v608
  %v4267 = vmul.f32 %v4219, %v608
  %v4268 = vmul.f32 %v4220, %v608
  %v4269 = vmul.f32 %v4221, %v608
  %v4270 = vmul.f32 %v4222, %v608
  %v4271 = vmul.f32 %v4223, %v608
  %v4272 = vmul.f32 %v4224, %v608
  %v4273 = vmul.f32 %v4225, %v608
  %v4274 = vmul.f32 %v4226, %v608
  %v4275 = vmul.f32 %v4227, %v608
  %v4276 = vmul.f32 %v4228, %v608
  %v4277 = vmul.f32 %v4229, %v608
  %v4278 = vmul.f32 %v4230, %v608
  %v4279 = vmul.f32 %v4231, %v608
  %v4280 = vmul.f32 %v4232, %v608
  %v4281 = vmul.f32 %v4233, %v608
  %v4282 = vmul.f32 %v4234, %v608
  %v4283 = vmul.f32 %v4235, %v608
  %v4284 = vmul.f32 %v4236, %v608
  %v4285 = vmul.f32 %v4237, %v608
  %v4286 = vmul.f32 %v4238, %v608
  %v4287 = vmul.f32 %v4239, %v608
  %v4288 = vmul.f32 %v4240, %v608
  %v4289 = vmul.f32 %v4241, %v608
  %v4290 = vmul.f32 %v4242, %v608
  %v4291 = vmul.f32 %v4243, %v608
  %v4292 = vmul.f32 %v4244, %v608
  %v4293 = vmul.f32 %v4245, %v608
  %v4294 = vmul.f32 %v4246, %v608
  %v4295 = vmul.f32 %v4247, %v608
  %v4296 = vmul.f32 %v4248, %v608
  %v4297 = vmul.f32 %v4249, %v608
  %v4298 = vmul.f32 %v4250, %v608
  %v4299 = vmul.f32 %v4251, %v608
  %v4300 = vmul.f32 %v4252, %v608
  %v4301 = vmul.f32 %v4253, %v608
  %v4302 = vmul.f32 %v4254, %v608
  %v4303 = vmul.f32 %v4255, %v608
  %v4304 = vmul.f32 %v4256, %v608
  %v4305 = vmul.f32 %v4257, %v608
  %v4306 = vmul.f32 %v4258, %v608
  %v4307 = vmul.f32 %v4259, %v608
  %v4308 = vmul.f32 %v4260, %v608
  %v4309 = vmul.f32 %v4261, %v608
  %v4310 = vmul.f32 %v4262, %v608
  %v4311 = vmul.f32 %v4263, %v608
  %v4312 = vmul.f32 %v4264, %v608
  %v4313 = vadd.f32 %v4169, %v4265
  %v4314 = vadd.f32 %v4170, %v4266
  %v4315 = vadd.f32 %v4171, %v4267
  %v4316 = vadd.f32 %v4172, %v4268
  %v4317 = vadd.f32 %v4173, %v4269
  %v4318 = vadd.f32 %v4174, %v4270
  %v4319 = vadd.f32 %v4175, %v4271
  %v4320 = vadd.f32 %v4176, %v4272
  %v4321 = vadd.f32 %v4177, %v4273
  %v4322 = vadd.f32 %v4178, %v4274
  %v4323 = vadd.f32 %v4179, %v4275
  %v4324 = vadd.f32 %v4180, %v4276
  %v4325 = vadd.f32 %v4181, %v4277
  %v4326 = vadd.f32 %v4182, %v4278
  %v4327 = vadd.f32 %v4183, %v4279
  %v4328 = vadd.f32 %v4184, %v4280
  %v4329 = vadd.f32 %v4185, %v4281
  %v4330 = vadd.f32 %v4186, %v4282
  %v4331 = vadd.f32 %v4187, %v4283
  %v4332 = vadd.f32 %v4188, %v4284
  %v4333 = vadd.f32 %v4189, %v4285
  %v4334 = vadd.f32 %v4190, %v4286
  %v4335 = vadd.f32 %v4191, %v4287
  %v4336 = vadd.f32 %v4192, %v4288
  %v4337 = vadd.f32 %v4193, %v4289
  %v4338 = vadd.f32 %v4194, %v4290
  %v4339 = vadd.f32 %v4195, %v4291
  %v4340 = vadd.f32 %v4196, %v4292
  %v4341 = vadd.f32 %v4197, %v4293
  %v4342 = vadd.f32 %v4198, %v4294
  %v4343 = vadd.f32 %v4199, %v4295
  %v4344 = vadd.f32 %v4200, %v4296
  %v4345 = vadd.f32 %v4201, %v4297
  %v4346 = vadd.f32 %v4202, %v4298
  %v4347 = vadd.f32 %v4203, %v4299
  %v4348 = vadd.f32 %v4204, %v4300
  %v4349 = vadd.f32 %v4205, %v4301
  %v4350 = vadd.f32 %v4206, %v4302
  %v4351 = vadd.f32 %v4207, %v4303
  %v4352 = vadd.f32 %v4208, %v4304
  %v4353 = vadd.f32 %v4209, %v4305
  %v4354 = vadd.f32 %v4210, %v4306
  %v4355 = vadd.f32 %v4211, %v4307
  %v4356 = vadd.f32 %v4212, %v4308
  %v4357 = vadd.f32 %v4213, %v4309
  %v4358 = vadd.f32 %v4214, %v4310
  %v4359 = vadd.f32 %v4215, %v4311
  %v4360 = vadd.f32 %v4216, %v4312
  %v4361 = vmul.f32 %v852, %v754
  %v4362 = vmul.f32 %v853, %v754
  %v4363 = vmul.f32 %v854, %v754
  %v4364 = vmul.f32 %v855, %v754
  %v4365 = vmul.f32 %v856, %v754
  %v4366 = vmul.f32 %v857, %v754
  %v4367 = vmul.f32 %v858, %v754
  %v4368 = vmul.f32 %v859, %v754
  %v4369 = vmul.f32 %v860, %v754
  %v4370 = vmul.f32 %v861, %v754
  %v4371 = vmul.f32 %v862, %v754
  %v4372 = vmul.f32 %v863, %v754
  %v4373 = vmul.f32 %v864, %v754
  %v4374 = vmul.f32 %v865, %v754
  %v4375 = vmul.f32 %v866, %v754
  %v4376 = vmul.f32 %v867, %v754
  %v4377 = vmul.f32 %v868, %v754
  %v4378 = vmul.f32 %v869, %v754
  %v4379 = vmul.f32 %v870, %v754
  %v4380 = vmul.f32 %v871, %v754
  %v4381 = vmul.f32 %v872, %v754
  %v4382 = vmul.f32 %v873, %v754
  %v4383 = vmul.f32 %v874, %v754
  %v4384 = vmul.f32 %v875, %v754
  %v4385 = vmul.f32 %v876, %v754
  %v4386 = vmul.f32 %v877, %v754
  %v4387 = vmul.f32 %v878, %v754
  %v4388 = vmul.f32 %v879, %v754
  %v4389 = vmul.f32 %v880, %v754
  %v4390 = vmul.f32 %v881, %v754
  %v4391 = vmul.f32 %v882, %v754
  %v4392 = vmul.f32 %v883, %v754
  %v4393 = vmul.f32 %v884, %v754
  %v4394 = vmul.f32 %v885, %v754
  %v4395 = vmul.f32 %v886, %v754
  %v4396 = vmul.f32 %v887, %v754
  %v4397 = vmul.f32 %v888, %v754
  %v4398 = vmul.f32 %v889, %v754
  %v4399 = vmul.f32 %v890, %v754
  %v4400 = vmul.f32 %v891, %v754
  %v4401 = vmul.f32 %v892, %v754
  %v4402 = vmul.f32 %v893, %v754
  %v4403 = vmul.f32 %v894, %v754
  %v4404 = vmul.f32 %v895, %v754
  %v4405 = vmul.f32 %v896, %v754
  %v4406 = vmul.f32 %v897, %v754
  %v4407 = vmul.f32 %v898, %v754
  %v4408 = vmul.f32 %v899, %v754
  %v4409 = vadd.f32 %v4313, %v4361
  %v4410 = vadd.f32 %v4314, %v4362
  %v4411 = vadd.f32 %v4315, %v4363
  %v4412 = vadd.f32 %v4316, %v4364
  %v4413 = vadd.f32 %v4317, %v4365
  %v4414 = vadd.f32 %v4318, %v4366
  %v4415 = vadd.f32 %v4319, %v4367
  %v4416 = vadd.f32 %v4320, %v4368
  %v4417 = vadd.f32 %v4321, %v4369
  %v4418 = vadd.f32 %v4322, %v4370
  %v4419 = vadd.f32 %v4323, %v4371
  %v4420 = vadd.f32 %v4324, %v4372
  %v4421 = vadd.f32 %v4325, %v4373
  %v4422 = vadd.f32 %v4326, %v4374
  %v4423 = vadd.f32 %v4327, %v4375
  %v4424 = vadd.f32 %v4328, %v4376
  %v4425 = vadd.f32 %v4329, %v4377
  %v4426 = vadd.f32 %v4330, %v4378
  %v4427 = vadd.f32 %v4331, %v4379
  %v4428 = vadd.f32 %v4332, %v4380
  %v4429 = vadd.f32 %v4333, %v4381
  %v4430 = vadd.f32 %v4334, %v4382
  %v4431 = vadd.f32 %v4335, %v4383
  %v4432 = vadd.f32 %v4336, %v4384
  %v4433 = vadd.f32 %v4337, %v4385
  %v4434 = vadd.f32 %v4338, %v4386
  %v4435 = vadd.f32 %v4339, %v4387
  %v4436 = vadd.f32 %v4340, %v4388
  %v4437 = vadd.f32 %v4341, %v4389
  %v4438 = vadd.f32 %v4342, %v4390
  %v4439 = vadd.f32 %v4343, %v4391
  %v4440 = vadd.f32 %v4344, %v4392
  %v4441 = vadd.f32 %v4345, %v4393
  %v4442 = vadd.f32 %v4346, %v4394
  %v4443 = vadd.f32 %v4347, %v4395
  %v4444 = vadd.f32 %v4348, %v4396
  %v4445 = vadd.f32 %v4349, %v4397
  %v4446 = vadd.f32 %v4350, %v4398
  %v4447 = vadd.f32 %v4351, %v4399
  %v4448 = vadd.f32 %v4352, %v4400
  %v4449 = vadd.f32 %v4353, %v4401
  %v4450 = vadd.f32 %v4354, %v4402
  %v4451 = vadd.f32 %v4355, %v4403
  %v4452 = vadd.f32 %v4356, %v4404
  %v4453 = vadd.f32 %v4357, %v4405
  %v4454 = vadd.f32 %v4358, %v4406
  %v4455 = vadd.f32 %v4359, %v4407
  %v4456 = vadd.f32 %v4360, %v4408
  %v4457 = vmul.f32 %v997, %v900
  %v4458 = vmul.f32 %v998, %v900
  %v4459 = vmul.f32 %v999, %v900
  %v4460 = vmul.f32 %v1000, %v900
  %v4461 = vmul.f32 %v1001, %v900
  %v4462 = vmul.f32 %v1002, %v900
  %v4463 = vmul.f32 %v1003, %v900
  %v4464 = vmul.f32 %v1004, %v900
  %v4465 = vmul.f32 %v1005, %v900
  %v4466 = vmul.f32 %v1006, %v900
  %v4467 = vmul.f32 %v1007, %v900
  %v4468 = vmul.f32 %v1008, %v900
  %v4469 = vmul.f32 %v1009, %v900
  %v4470 = vmul.f32 %v1010, %v900
  %v4471 = vmul.f32 %v1011, %v900
  %v4472 = vmul.f32 %v1012, %v900
  %v4473 = vmul.f32 %v1013, %v900
  %v4474 = vmul.f32 %v1014, %v900
  %v4475 = vmul.f32 %v1015, %v900
  %v4476 = vmul.f32 %v1016, %v900
  %v4477 = vmul.f32 %v1017, %v900
  %v4478 = vmul.f32 %v1018, %v900
  %v4479 = vmul.f32 %v1019, %v900
  %v4480 = vmul.f32 %v1020, %v900
  %v4481 = vmul.f32 %v1021, %v900
  %v4482 = vmul.f32 %v1022, %v900
  %v4483 = vmul.f32 %v1023, %v900
  %v4484 = vmul.f32 %v1024, %v900
  %v4485 = vmul.f32 %v1025, %v900
  %v4486 = vmul.f32 %v1026, %v900
  %v4487 = vmul.f32 %v1027, %v900
  %v4488 = vmul.f32 %v1028, %v900
  %v4489 = vmul.f32 %v1029, %v900
  %v4490 = vmul.f32 %v1030, %v900
  %v4491 = vmul.f32 %v1031, %v900
  %v4492 = vmul.f32 %v1032, %v900
  %v4493 = vmul.f32 %v1033, %v900
  %v4494 = vmul.f32 %v1034, %v900
  %v4495 = vmul.f32 %v1035, %v900
  %v4496 = vmul.f32 %v1036, %v900
  %v4497 = vmul.f32 %v1037, %v900
  %v4498 = vmul.f32 %v1038, %v900
  %v4499 = vmul.f32 %v1039, %v900
  %v4500 = vmul.f32 %v1040, %v900
  %v4501 = vmul.f32 %v1041, %v900
  %v4502 = vmul.f32 %v1042, %v900
  %v4503 = vmul.f32 %v1043, %v900
  %v4504 = vmul.f32 %v1044, %v900
  %v4505 = vadd.f32 %v4409, %v4457
  %v4506 = vadd.f32 %v4410, %v4458
  %v4507 = vadd.f32 %v4411, %v4459
  %v4508 = vadd.f32 %v4412, %v4460
  %v4509 = vadd.f32 %v4413, %v4461
  %v4510 = vadd.f32 %v4414, %v4462
  %v4511 = vadd.f32 %v4415, %v4463
  %v4512 = vadd.f32 %v4416, %v4464
  %v4513 = vadd.f32 %v4417, %v4465
  %v4514 = vadd.f32 %v4418, %v4466
  %v4515 = vadd.f32 %v4419, %v4467
  %v4516 = vadd.f32 %v4420, %v4468
  %v4517 = vadd.f32 %v4421, %v4469
  %v4518 = vadd.f32 %v4422, %v4470
  %v4519 = vadd.f32 %v4423, %v4471
  %v4520 = vadd.f32 %v4424, %v4472
  %v4521 = vadd.f32 %v4425, %v4473
  %v4522 = vadd.f32 %v4426, %v4474
  %v4523 = vadd.f32 %v4427, %v4475
  %v4524 = vadd.f32 %v4428, %v4476
  %v4525 = vadd.f32 %v4429, %v4477
  %v4526 = vadd.f32 %v4430, %v4478
  %v4527 = vadd.f32 %v4431, %v4479
  %v4528 = vadd.f32 %v4432, %v4480
  %v4529 = vadd.f32 %v4433, %v4481
  %v4530 = vadd.f32 %v4434, %v4482
  %v4531 = vadd.f32 %v4435, %v4483
  %v4532 = vadd.f32 %v4436, %v4484
  %v4533 = vadd.f32 %v4437, %v4485
  %v4534 = vadd.f32 %v4438, %v4486
  %v4535 = vadd.f32 %v4439, %v4487
  %v4536 = vadd.f32 %v4440, %v4488
  %v4537 = vadd.f32 %v4441, %v4489
  %v4538 = vadd.f32 %v4442, %v4490
  %v4539 = vadd.f32 %v4443, %v4491
  %v4540 = vadd.f32 %v4444, %v4492
  %v4541 = vadd.f32 %v4445, %v4493
  %v4542 = vadd.f32 %v4446, %v4494
  %v4543 = vadd.f32 %v4447, %v4495
  %v4544 = vadd.f32 %v4448, %v4496
  %v4545 = vadd.f32 %v4449, %v4497
  %v4546 = vadd.f32 %v4450, %v4498
  %v4547 = vadd.f32 %v4451, %v4499
  %v4548 = vadd.f32 %v4452, %v4500
  %v4549 = vadd.f32 %v4453, %v4501
  %v4550 = vadd.f32 %v4454, %v4502
  %v4551 = vadd.f32 %v4455, %v4503
  %v4552 = vadd.f32 %v4456, %v4504
  %v4553 = vmul.f32 %v1142, %v1045
  %v4554 = vmul.f32 %v1143, %v1045
  %v4555 = vmul.f32 %v1144, %v1045
  %v4556 = vmul.f32 %v1145, %v1045
  %v4557 = vmul.f32 %v1146, %v1045
  %v4558 = vmul.f32 %v1147, %v1045
  %v4559 = vmul.f32 %v1148, %v1045
  %v4560 = vmul.f32 %v1149, %v1045
  %v4561 = vmul.f32 %v1150, %v1045
  %v4562 = vmul.f32 %v1151, %v1045
  %v4563 = vmul.f32 %v1152, %v1045
  %v4564 = vmul.f32 %v1153, %v1045
  %v4565 = vmul.f32 %v1154, %v1045
  %v4566 = vmul.f32 %v1155, %v1045
  %v4567 = vmul.f32 %v1156, %v1045
  %v4568 = vmul.f32 %v1157, %v1045
  %v4569 = vmul.f32 %v1158, %v1045
  %v4570 = vmul.f32 %v1159, %v1045
  %v4571 = vmul.f32 %v1160, %v1045
  %v4572 = vmul.f32 %v1161, %v1045
  %v4573 = vmul.f32 %v1162, %v1045
  %v4574 = vmul.f32 %v1163, %v1045
  %v4575 = vmul.f32 %v1164, %v1045
  %v4576 = vmul.f32 %v1165, %v1045
  %v4577 = vmul.f32 %v1166, %v1045
  %v4578 = vmul.f32 %v1167, %v1045
  %v4579 = vmul.f32 %v1168, %v1045
  %v4580 = vmul.f32 %v1169, %v1045
  %v4581 = vmul.f32 %v1170, %v1045
  %v4582 = vmul.f32 %v1171, %v1045
  %v4583 = vmul.f32 %v1172, %v1045
  %v4584 = vmul.f32 %v1173, %v1045
  %v4585 = vmul.f32 %v1174, %v1045
  %v4586 = vmul.f32 %v1175, %v1045
  %v4587 = vmul.f32 %v1176, %v1045
  %v4588 = vmul.f32 %v1177, %v1045
  %v4589 = vmul.f32 %v1178, %v1045
  %v4590 = vmul.f32 %v1179, %v1045
  %v4591 = vmul.f32 %v1180, %v1045
  %v4592 = vmul.f32 %v1181, %v1045
  %v4593 = vmul.f32 %v1182, %v1045
  %v4594 = vmul.f32 %v1183, %v1045
  %v4595 = vmul.f32 %v1184, %v1045
  %v4596 = vmul.f32 %v1185, %v1045
  %v4597 = vmul.f32 %v1186, %v1045
  %v4598 = vmul.f32 %v1187, %v1045
  %v4599 = vmul.f32 %v1188, %v1045
  %v4600 = vmul.f32 %v1189, %v1045
  %v4601 = vadd.f32 %v4505, %v4553
  %v4602 = vadd.f32 %v4506, %v4554
  %v4603 = vadd.f32 %v4507, %v4555
  %v4604 = vadd.f32 %v4508, %v4556
  %v4605 = vadd.f32 %v4509, %v4557
  %v4606 = vadd.f32 %v4510, %v4558
  %v4607 = vadd.f32 %v4511, %v4559
  %v4608 = vadd.f32 %v4512, %v4560
  %v4609 = vadd.f32 %v4513, %v4561
  %v4610 = vadd.f32 %v4514, %v4562
  %v4611 = vadd.f32 %v4515, %v4563
  %v4612 = vadd.f32 %v4516, %v4564
  %v4613 = vadd.f32 %v4517, %v4565
  %v4614 = vadd.f32 %v4518, %v4566
  %v4615 = vadd.f32 %v4519, %v4567
  %v4616 = vadd.f32 %v4520, %v4568
  %v4617 = vadd.f32 %v4521, %v4569
  %v4618 = vadd.f32 %v4522, %v4570
  %v4619 = vadd.f32 %v4523, %v4571
  %v4620 = vadd.f32 %v4524, %v4572
  %v4621 = vadd.f32 %v4525, %v4573
  %v4622 = vadd.f32 %v4526, %v4574
  %v4623 = vadd.f32 %v4527, %v4575
  %v4624 = vadd.f32 %v4528, %v4576
  %v4625 = vadd.f32 %v4529, %v4577
  %v4626 = vadd.f32 %v4530, %v4578
  %v4627 = vadd.f32 %v4531, %v4579
  %v4628 = vadd.f32 %v4532, %v4580
  %v4629 = vadd.f32 %v4533, %v4581
  %v4630 = vadd.f32 %v4534, %v4582
  %v4631 = vadd.f32 %v4535, %v4583
  %v4632 = vadd.f32 %v4536, %v4584
  %v4633 = vadd.f32 %v4537, %v4585
  %v4634 = vadd.f32 %v4538, %v4586
  %v4635 = vadd.f32 %v4539, %v4587
  %v4636 = vadd.f32 %v4540, %v4588
  %v4637 = vadd.f32 %v4541, %v4589
  %v4638 = vadd.f32 %v4542, %v4590
  %v4639 = vadd.f32 %v4543, %v4591
  %v4640 = vadd.f32 %v4544, %v4592
  %v4641 = vadd.f32 %v4545, %v4593
  %v4642 = vadd.f32 %v4546, %v4594
  %v4643 = vadd.f32 %v4547, %v4595
  %v4644 = vadd.f32 %v4548, %v4596
  %v4645 = vadd.f32 %v4549, %v4597
  %v4646 = vadd.f32 %v4550, %v4598
  %v4647 = vadd.f32 %v4551, %v4599
  %v4648 = vadd.f32 %v4552, %v4600
  %v4649 = vmul.f32 %v1287, %v1190
  %v4650 = vmul.f32 %v1288, %v1190
  %v4651 = vmul.f32 %v1289, %v1190
  %v4652 = vmul.f32 %v1290, %v1190
  %v4653 = vmul.f32 %v1291, %v1190
  %v4654 = vmul.f32 %v1292, %v1190
  %v4655 = vmul.f32 %v1293, %v1190
  %v4656 = vmul.f32 %v1294, %v1190
  %v4657 = vmul.f32 %v1295, %v1190
  %v4658 = vmul.f32 %v1296, %v1190
  %v4659 = vmul.f32 %v1297, %v1190
  %v4660 = vmul.f32 %v1298, %v1190
  %v4661 = vmul.f32 %v1299, %v1190
  %v4662 = vmul.f32 %v1300, %v1190
  %v4663 = vmul.f32 %v1301, %v1190
  %v4664 = vmul.f32 %v1302, %v1190
  %v4665 = vmul.f32 %v1303, %v1190
  %v4666 = vmul.f32 %v1304, %v1190
  %v4667 = vmul.f32 %v1305, %v1190
  %v4668 = vmul.f32 %v1306, %v1190
  %v4669 = vmul.f32 %v1307, %v1190
  %v4670 = vmul.f32 %v1308, %v1190
  %v4671 = vmul.f32 %v1309, %v1190
  %v4672 = vmul.f32 %v1310, %v1190
  %v4673 = vmul.f32 %v1311, %v1190
  %v4674 = vmul.f32 %v1312, %v1190
  %v4675 = vmul.f32 %v1313, %v1190
  %v4676 = vmul.f32 %v1314, %v1190
  %v4677 = vmul.f32 %v1315, %v1190
  %v4678 = vmul.f32 %v1316, %v1190
  %v4679 = vmul.f32 %v1317, %v1190
  %v4680 = vmul.f32 %v1318, %v1190
  %v4681 = vmul.f32 %v1319, %v1190
  %v4682 = vmul.f32 %v1320, %v1190
  %v4683 = vmul.f32 %v1321, %v1190
  %v4684 = vmul.f32 %v1322, %v1190
  %v4685 = vmul.f32 %v1323, %v1190
  %v4686 = vmul.f32 %v1324, %v1190
  %v4687 = vmul.f32 %v1325, %v1190
  %v4688 = vmul.f32 %v1326, %v1190
  %v4689 = vmul.f32 %v1327, %v1190
  %v4690 = vmul.f32 %v1328, %v1190
  %v4691 = vmul.f32 %v1329, %v1190
  %v4692 = vmul.f32 %v1330, %v1190
  %v4693 = vmul.f32 %v1331, %v1190
  %v4694 = vmul.f32 %v1332, %v1190
  %v4695 = vmul.f32 %v1333, %v1190
  %v4696 = vmul.f32 %v1334, %v1190
  %v4697 = vadd.f32 %v4601, %v4649
  %v4698 = vadd.f32 %v4602, %v4650
  %v4699 = vadd.f32 %v4603, %v4651
  %v4700 = vadd.f32 %v4604, %v4652
  %v4701 = vadd.f32 %v4605, %v4653
  %v4702 = vadd.f32 %v4606, %v4654
  %v4703 = vadd.f32 %v4607, %v4655
  %v4704 = vadd.f32 %v4608, %v4656
  %v4705 = vadd.f32 %v4609, %v4657
  %v4706 = vadd.f32 %v4610, %v4658
  %v4707 = vadd.f32 %v4611, %v4659
  %v4708 = vadd.f32 %v4612, %v4660
  %v4709 = vadd.f32 %v4613, %v4661
  %v4710 = vadd.f32 %v4614, %v4662
  %v4711 = vadd.f32 %v4615, %v4663
  %v4712 = vadd.f32 %v4616, %v4664
  %v4713 = vadd.f32 %v4617, %v4665
  %v4714 = vadd.f32 %v4618, %v4666
  %v4715 = vadd.f32 %v4619, %v4667
  %v4716 = vadd.f32 %v4620, %v4668
  %v4717 = vadd.f32 %v4621, %v4669
  %v4718 = vadd.f32 %v4622, %v4670
  %v4719 = vadd.f32 %v4623, %v4671
  %v4720 = vadd.f32 %v4624, %v4672
  %v4721 = vadd.f32 %v4625, %v4673
  %v4722 = vadd.f32 %v4626, %v4674
  %v4723 = vadd.f32 %v4627, %v4675
  %v4724 = vadd.f32 %v4628, %v4676
  %v4725 = vadd.f32 %v4629, %v4677
  %v4726 = vadd.f32 %v4630, %v4678
  %v4727 = vadd.f32 %v4631, %v4679
  %v4728 = vadd.f32 %v4632, %v4680
  %v4729 = vadd.f32 %v4633, %v4681
  %v4730 = vadd.f32 %v4634, %v4682
  %v4731 = vadd.f32 %v4635, %v4683
  %v4732 = vadd.f32 %v4636, %v4684
  %v4733 = vadd.f32 %v4637, %v4685
  %v4734 = vadd.f32 %v4638, %v4686
  %v4735 = vadd.f32 %v4639, %v4687
  %v4736 = vadd.f32 %v4640, %v4688
  %v4737 = vadd.f32 %v4641, %v4689
  %v4738 = vadd.f32 %v4642, %v4690
  %v4739 = vadd.f32 %v4643, %v4691
  %v4740 = vadd.f32 %v4644, %v4692
  %v4741 = vadd.f32 %v4645, %v4693
  %v4742 = vadd.f32 %v4646, %v4694
  %v4743 = vadd.f32 %v4647, %v4695
  %v4744 = vadd.f32 %v4648, %v4696
  %v4745 = vld [vmem:[%s851 + $0x2] sm:$0xff]
  %v4746 = vld [vmem:[%s851 + $0xa] sm:$0xff]
  %v4747 = vld [vmem:[%s851 + $0x12] sm:$0xff]
  %v4748 = vld [vmem:[%s851 + $0x1a] sm:$0xff]
  %v4749 = vld [vmem:[%s851 + $0x22] sm:$0xff]
  %v4750 = vld [vmem:[%s851 + $0x2a] sm:$0xff]
  %v4751 = vld [vmem:[%s851 + $0x32] sm:$0xff]
  %v4752 = vld [vmem:[%s851 + $0x3a] sm:$0x3f]
  %v4753 = vld [vmem:[%s851 + $0x42] sm:$0xff]
  %v4754 = vld [vmem:[%s851 + $0x4a] sm:$0xff]
  %v4755 = vld [vmem:[%s851 + $0x52] sm:$0xff]
  %v4756 = vld [vmem:[%s851 + $0x5a] sm:$0xff]
  %v4757 = vld [vmem:[%s851 + $0x62] sm:$0xff]
  %v4758 = vld [vmem:[%s851 + $0x6a] sm:$0xff]
  %v4759 = vld [vmem:[%s851 + $0x72] sm:$0xff]
  %v4760 = vld [vmem:[%s851 + $0x7a] sm:$0x3f]
  %v4761 = vld [vmem:[%s851 + $0x82] sm:$0xff]
  %v4762 = vld [vmem:[%s851 + $0x8a] sm:$0xff]
  %v4763 = vld [vmem:[%s851 + $0x92] sm:$0xff]
  %v4764 = vld [vmem:[%s851 + $0x9a] sm:$0xff]
  %v4765 = vld [vmem:[%s851 + $0xa2] sm:$0xff]
  %v4766 = vld [vmem:[%s851 + $0xaa] sm:$0xff]
  %v4767 = vld [vmem:[%s851 + $0xb2] sm:$0xff]
  %v4768 = vld [vmem:[%s851 + $0xba] sm:$0x3f]
  %v4769 = vld [vmem:[%s851 + $0xc2] sm:$0xff]
  %v4770 = vld [vmem:[%s851 + $0xca] sm:$0xff]
  %v4771 = vld [vmem:[%s851 + $0xd2] sm:$0xff]
  %v4772 = vld [vmem:[%s851 + $0xda] sm:$0xff]
  %v4773 = vld [vmem:[%s851 + $0xe2] sm:$0xff]
  %v4774 = vld [vmem:[%s851 + $0xea] sm:$0xff]
  %v4775 = vld [vmem:[%s851 + $0xf2] sm:$0xff]
  %v4776 = vld [vmem:[%s851 + $0xfa] sm:$0x3f]
  %v4777 = vld [vmem:[%s851 + $0x102] sm:$0xff]
  %v4778 = vld [vmem:[%s851 + $0x10a] sm:$0xff]
  %v4779 = vld [vmem:[%s851 + $0x112] sm:$0xff]
  %v4780 = vld [vmem:[%s851 + $0x11a] sm:$0xff]
  %v4781 = vld [vmem:[%s851 + $0x122] sm:$0xff]
  %v4782 = vld [vmem:[%s851 + $0x12a] sm:$0xff]
  %v4783 = vld [vmem:[%s851 + $0x132] sm:$0xff]
  %v4784 = vld [vmem:[%s851 + $0x13a] sm:$0x3f]
  %v4785 = vld [vmem:[%s851 + $0x142] sm:$0xff]
  %v4786 = vld [vmem:[%s851 + $0x14a] sm:$0xff]
  %v4787 = vld [vmem:[%s851 + $0x152] sm:$0xff]
  %v4788 = vld [vmem:[%s851 + $0x15a] sm:$0xff]
  %v4789 = vld [vmem:[%s851 + $0x162] sm:$0xff]
  %v4790 = vld [vmem:[%s851 + $0x16a] sm:$0xff]
  %v4791 = vld [vmem:[%s851 + $0x172] sm:$0xff]
  %v4792 = vld [vmem:[%s851 + $0x17a] sm:$0x3f]
  %v4793 = vmul.f32 %v4745, %v1335
  %v4794 = vmul.f32 %v4746, %v1335
  %v4795 = vmul.f32 %v4747, %v1335
  %v4796 = vmul.f32 %v4748, %v1335
  %v4797 = vmul.f32 %v4749, %v1335
  %v4798 = vmul.f32 %v4750, %v1335
  %v4799 = vmul.f32 %v4751, %v1335
  %v4800 = vmul.f32 %v4752, %v1335
  %v4801 = vmul.f32 %v4753, %v1335
  %v4802 = vmul.f32 %v4754, %v1335
  %v4803 = vmul.f32 %v4755, %v1335
  %v4804 = vmul.f32 %v4756, %v1335
  %v4805 = vmul.f32 %v4757, %v1335
  %v4806 = vmul.f32 %v4758, %v1335
  %v4807 = vmul.f32 %v4759, %v1335
  %v4808 = vmul.f32 %v4760, %v1335
  %v4809 = vmul.f32 %v4761, %v1335
  %v4810 = vmul.f32 %v4762, %v1335
  %v4811 = vmul.f32 %v4763, %v1335
  %v4812 = vmul.f32 %v4764, %v1335
  %v4813 = vmul.f32 %v4765, %v1335
  %v4814 = vmul.f32 %v4766, %v1335
  %v4815 = vmul.f32 %v4767, %v1335
  %v4816 = vmul.f32 %v4768, %v1335
  %v4817 = vmul.f32 %v4769, %v1335
  %v4818 = vmul.f32 %v4770, %v1335
  %v4819 = vmul.f32 %v4771, %v1335
  %v4820 = vmul.f32 %v4772, %v1335
  %v4821 = vmul.f32 %v4773, %v1335
  %v4822 = vmul.f32 %v4774, %v1335
  %v4823 = vmul.f32 %v4775, %v1335
  %v4824 = vmul.f32 %v4776, %v1335
  %v4825 = vmul.f32 %v4777, %v1335
  %v4826 = vmul.f32 %v4778, %v1335
  %v4827 = vmul.f32 %v4779, %v1335
  %v4828 = vmul.f32 %v4780, %v1335
  %v4829 = vmul.f32 %v4781, %v1335
  %v4830 = vmul.f32 %v4782, %v1335
  %v4831 = vmul.f32 %v4783, %v1335
  %v4832 = vmul.f32 %v4784, %v1335
  %v4833 = vmul.f32 %v4785, %v1335
  %v4834 = vmul.f32 %v4786, %v1335
  %v4835 = vmul.f32 %v4787, %v1335
  %v4836 = vmul.f32 %v4788, %v1335
  %v4837 = vmul.f32 %v4789, %v1335
  %v4838 = vmul.f32 %v4790, %v1335
  %v4839 = vmul.f32 %v4791, %v1335
  %v4840 = vmul.f32 %v4792, %v1335
  %v4841 = vadd.f32 %v4697, %v4793
  %v4842 = vadd.f32 %v4698, %v4794
  %v4843 = vadd.f32 %v4699, %v4795
  %v4844 = vadd.f32 %v4700, %v4796
  %v4845 = vadd.f32 %v4701, %v4797
  %v4846 = vadd.f32 %v4702, %v4798
  %v4847 = vadd.f32 %v4703, %v4799
  %v4848 = vadd.f32 %v4704, %v4800
  %v4849 = vadd.f32 %v4705, %v4801
  %v4850 = vadd.f32 %v4706, %v4802
  %v4851 = vadd.f32 %v4707, %v4803
  %v4852 = vadd.f32 %v4708, %v4804
  %v4853 = vadd.f32 %v4709, %v4805
  %v4854 = vadd.f32 %v4710, %v4806
  %v4855 = vadd.f32 %v4711, %v4807
  %v4856 = vadd.f32 %v4712, %v4808
  %v4857 = vadd.f32 %v4713, %v4809
  %v4858 = vadd.f32 %v4714, %v4810
  %v4859 = vadd.f32 %v4715, %v4811
  %v4860 = vadd.f32 %v4716, %v4812
  %v4861 = vadd.f32 %v4717, %v4813
  %v4862 = vadd.f32 %v4718, %v4814
  %v4863 = vadd.f32 %v4719, %v4815
  %v4864 = vadd.f32 %v4720, %v4816
  %v4865 = vadd.f32 %v4721, %v4817
  %v4866 = vadd.f32 %v4722, %v4818
  %v4867 = vadd.f32 %v4723, %v4819
  %v4868 = vadd.f32 %v4724, %v4820
  %v4869 = vadd.f32 %v4725, %v4821
  %v4870 = vadd.f32 %v4726, %v4822
  %v4871 = vadd.f32 %v4727, %v4823
  %v4872 = vadd.f32 %v4728, %v4824
  %v4873 = vadd.f32 %v4729, %v4825
  %v4874 = vadd.f32 %v4730, %v4826
  %v4875 = vadd.f32 %v4731, %v4827
  %v4876 = vadd.f32 %v4732, %v4828
  %v4877 = vadd.f32 %v4733, %v4829
  %v4878 = vadd.f32 %v4734, %v4830
  %v4879 = vadd.f32 %v4735, %v4831
  %v4880 = vadd.f32 %v4736, %v4832
  %v4881 = vadd.f32 %v4737, %v4833
  %v4882 = vadd.f32 %v4738, %v4834
  %v4883 = vadd.f32 %v4739, %v4835
  %v4884 = vadd.f32 %v4740, %v4836
  %v4885 = vadd.f32 %v4741, %v4837
  %v4886 = vadd.f32 %v4742, %v4838
  %v4887 = vadd.f32 %v4743, %v4839
  %v4888 = vadd.f32 %v4744, %v4840
  %v4889 = vmul.f32 %v1579, %v1481
  %v4890 = vmul.f32 %v1580, %v1481
  %v4891 = vmul.f32 %v1581, %v1481
  %v4892 = vmul.f32 %v1582, %v1481
  %v4893 = vmul.f32 %v1583, %v1481
  %v4894 = vmul.f32 %v1584, %v1481
  %v4895 = vmul.f32 %v1585, %v1481
  %v4896 = vmul.f32 %v1586, %v1481
  %v4897 = vmul.f32 %v1587, %v1481
  %v4898 = vmul.f32 %v1588, %v1481
  %v4899 = vmul.f32 %v1589, %v1481
  %v4900 = vmul.f32 %v1590, %v1481
  %v4901 = vmul.f32 %v1591, %v1481
  %v4902 = vmul.f32 %v1592, %v1481
  %v4903 = vmul.f32 %v1593, %v1481
  %v4904 = vmul.f32 %v1594, %v1481
  %v4905 = vmul.f32 %v1595, %v1481
  %v4906 = vmul.f32 %v1596, %v1481
  %v4907 = vmul.f32 %v1597, %v1481
  %v4908 = vmul.f32 %v1598, %v1481
  %v4909 = vmul.f32 %v1599, %v1481
  %v4910 = vmul.f32 %v1600, %v1481
  %v4911 = vmul.f32 %v1601, %v1481
  %v4912 = vmul.f32 %v1602, %v1481
  %v4913 = vmul.f32 %v1603, %v1481
  %v4914 = vmul.f32 %v1604, %v1481
  %v4915 = vmul.f32 %v1605, %v1481
  %v4916 = vmul.f32 %v1606, %v1481
  %v4917 = vmul.f32 %v1607, %v1481
  %v4918 = vmul.f32 %v1608, %v1481
  %v4919 = vmul.f32 %v1609, %v1481
  %v4920 = vmul.f32 %v1610, %v1481
  %v4921 = vmul.f32 %v1611, %v1481
  %v4922 = vmul.f32 %v1612, %v1481
  %v4923 = vmul.f32 %v1613, %v1481
  %v4924 = vmul.f32 %v1614, %v1481
  %v4925 = vmul.f32 %v1615, %v1481
  %v4926 = vmul.f32 %v1616, %v1481
  %v4927 = vmul.f32 %v1617, %v1481
  %v4928 = vmul.f32 %v1618, %v1481
  %v4929 = vmul.f32 %v1619, %v1481
  %v4930 = vmul.f32 %v1620, %v1481
  %v4931 = vmul.f32 %v1621, %v1481
  %v4932 = vmul.f32 %v1622, %v1481
  %v4933 = vmul.f32 %v1623, %v1481
  %v4934 = vmul.f32 %v1624, %v1481
  %v4935 = vmul.f32 %v1625, %v1481
  %v4936 = vmul.f32 %v1626, %v1481
  %v4937 = vadd.f32 %v4841, %v4889
  %v4938 = vadd.f32 %v4842, %v4890
  %v4939 = vadd.f32 %v4843, %v4891
  %v4940 = vadd.f32 %v4844, %v4892
  %v4941 = vadd.f32 %v4845, %v4893
  %v4942 = vadd.f32 %v4846, %v4894
  %v4943 = vadd.f32 %v4847, %v4895
  %v4944 = vadd.f32 %v4848, %v4896
  %v4945 = vadd.f32 %v4849, %v4897
  %v4946 = vadd.f32 %v4850, %v4898
  %v4947 = vadd.f32 %v4851, %v4899
  %v4948 = vadd.f32 %v4852, %v4900
  %v4949 = vadd.f32 %v4853, %v4901
  %v4950 = vadd.f32 %v4854, %v4902
  %v4951 = vadd.f32 %v4855, %v4903
  %v4952 = vadd.f32 %v4856, %v4904
  %v4953 = vadd.f32 %v4857, %v4905
  %v4954 = vadd.f32 %v4858, %v4906
  %v4955 = vadd.f32 %v4859, %v4907
  %v4956 = vadd.f32 %v4860, %v4908
  %v4957 = vadd.f32 %v4861, %v4909
  %v4958 = vadd.f32 %v4862, %v4910
  %v4959 = vadd.f32 %v4863, %v4911
  %v4960 = vadd.f32 %v4864, %v4912
  %v4961 = vadd.f32 %v4865, %v4913
  %v4962 = vadd.f32 %v4866, %v4914
  %v4963 = vadd.f32 %v4867, %v4915
  %v4964 = vadd.f32 %v4868, %v4916
  %v4965 = vadd.f32 %v4869, %v4917
  %v4966 = vadd.f32 %v4870, %v4918
  %v4967 = vadd.f32 %v4871, %v4919
  %v4968 = vadd.f32 %v4872, %v4920
  %v4969 = vadd.f32 %v4873, %v4921
  %v4970 = vadd.f32 %v4874, %v4922
  %v4971 = vadd.f32 %v4875, %v4923
  %v4972 = vadd.f32 %v4876, %v4924
  %v4973 = vadd.f32 %v4877, %v4925
  %v4974 = vadd.f32 %v4878, %v4926
  %v4975 = vadd.f32 %v4879, %v4927
  %v4976 = vadd.f32 %v4880, %v4928
  %v4977 = vadd.f32 %v4881, %v4929
  %v4978 = vadd.f32 %v4882, %v4930
  %v4979 = vadd.f32 %v4883, %v4931
  %v4980 = vadd.f32 %v4884, %v4932
  %v4981 = vadd.f32 %v4885, %v4933
  %v4982 = vadd.f32 %v4886, %v4934
  %v4983 = vadd.f32 %v4887, %v4935
  %v4984 = vadd.f32 %v4888, %v4936
  %v4985 = vmul.f32 %v1724, %v1627
  %v4986 = vmul.f32 %v1725, %v1627
  %v4987 = vmul.f32 %v1726, %v1627
  %v4988 = vmul.f32 %v1727, %v1627
  %v4989 = vmul.f32 %v1728, %v1627
  %v4990 = vmul.f32 %v1729, %v1627
  %v4991 = vmul.f32 %v1730, %v1627
  %v4992 = vmul.f32 %v1731, %v1627
  %v4993 = vmul.f32 %v1732, %v1627
  %v4994 = vmul.f32 %v1733, %v1627
  %v4995 = vmul.f32 %v1734, %v1627
  %v4996 = vmul.f32 %v1735, %v1627
  %v4997 = vmul.f32 %v1736, %v1627
  %v4998 = vmul.f32 %v1737, %v1627
  %v4999 = vmul.f32 %v1738, %v1627
  %v5000 = vmul.f32 %v1739, %v1627
  %v5001 = vmul.f32 %v1740, %v1627
  %v5002 = vmul.f32 %v1741, %v1627
  %v5003 = vmul.f32 %v1742, %v1627
  %v5004 = vmul.f32 %v1743, %v1627
  %v5005 = vmul.f32 %v1744, %v1627
  %v5006 = vmul.f32 %v1745, %v1627
  %v5007 = vmul.f32 %v1746, %v1627
  %v5008 = vmul.f32 %v1747, %v1627
  %v5009 = vmul.f32 %v1748, %v1627
  %v5010 = vmul.f32 %v1749, %v1627
  %v5011 = vmul.f32 %v1750, %v1627
  %v5012 = vmul.f32 %v1751, %v1627
  %v5013 = vmul.f32 %v1752, %v1627
  %v5014 = vmul.f32 %v1753, %v1627
  %v5015 = vmul.f32 %v1754, %v1627
  %v5016 = vmul.f32 %v1755, %v1627
  %v5017 = vmul.f32 %v1756, %v1627
  %v5018 = vmul.f32 %v1757, %v1627
  %v5019 = vmul.f32 %v1758, %v1627
  %v5020 = vmul.f32 %v1759, %v1627
  %v5021 = vmul.f32 %v1760, %v1627
  %v5022 = vmul.f32 %v1761, %v1627
  %v5023 = vmul.f32 %v1762, %v1627
  %v5024 = vmul.f32 %v1763, %v1627
  %v5025 = vmul.f32 %v1764, %v1627
  %v5026 = vmul.f32 %v1765, %v1627
  %v5027 = vmul.f32 %v1766, %v1627
  %v5028 = vmul.f32 %v1767, %v1627
  %v5029 = vmul.f32 %v1768, %v1627
  %v5030 = vmul.f32 %v1769, %v1627
  %v5031 = vmul.f32 %v1770, %v1627
  %v5032 = vmul.f32 %v1771, %v1627
  %v5033 = vadd.f32 %v4937, %v4985
  %v5034 = vadd.f32 %v4938, %v4986
  %v5035 = vadd.f32 %v4939, %v4987
  %v5036 = vadd.f32 %v4940, %v4988
  %v5037 = vadd.f32 %v4941, %v4989
  %v5038 = vadd.f32 %v4942, %v4990
  %v5039 = vadd.f32 %v4943, %v4991
  %v5040 = vadd.f32 %v4944, %v4992
  %v5041 = vadd.f32 %v4945, %v4993
  %v5042 = vadd.f32 %v4946, %v4994
  %v5043 = vadd.f32 %v4947, %v4995
  %v5044 = vadd.f32 %v4948, %v4996
  %v5045 = vadd.f32 %v4949, %v4997
  %v5046 = vadd.f32 %v4950, %v4998
  %v5047 = vadd.f32 %v4951, %v4999
  %v5048 = vadd.f32 %v4952, %v5000
  %v5049 = vadd.f32 %v4953, %v5001
  %v5050 = vadd.f32 %v4954, %v5002
  %v5051 = vadd.f32 %v4955, %v5003
  %v5052 = vadd.f32 %v4956, %v5004
  %v5053 = vadd.f32 %v4957, %v5005
  %v5054 = vadd.f32 %v4958, %v5006
  %v5055 = vadd.f32 %v4959, %v5007
  %v5056 = vadd.f32 %v4960, %v5008
  %v5057 = vadd.f32 %v4961, %v5009
  %v5058 = vadd.f32 %v4962, %v5010
  %v5059 = vadd.f32 %v4963, %v5011
  %v5060 = vadd.f32 %v4964, %v5012
  %v5061 = vadd.f32 %v4965, %v5013
  %v5062 = vadd.f32 %v4966, %v5014
  %v5063 = vadd.f32 %v4967, %v5015
  %v5064 = vadd.f32 %v4968, %v5016
  %v5065 = vadd.f32 %v4969, %v5017
  %v5066 = vadd.f32 %v4970, %v5018
  %v5067 = vadd.f32 %v4971, %v5019
  %v5068 = vadd.f32 %v4972, %v5020
  %v5069 = vadd.f32 %v4973, %v5021
  %v5070 = vadd.f32 %v4974, %v5022
  %v5071 = vadd.f32 %v4975, %v5023
  %v5072 = vadd.f32 %v4976, %v5024
  %v5073 = vadd.f32 %v4977, %v5025
  %v5074 = vadd.f32 %v4978, %v5026
  %v5075 = vadd.f32 %v4979, %v5027
  %v5076 = vadd.f32 %v4980, %v5028
  %v5077 = vadd.f32 %v4981, %v5029
  %v5078 = vadd.f32 %v4982, %v5030
  %v5079 = vadd.f32 %v4983, %v5031
  %v5080 = vadd.f32 %v4984, %v5032
  %v5081 = vmul.f32 %v1869, %v1772
  %v5082 = vmul.f32 %v1870, %v1772
  %v5083 = vmul.f32 %v1871, %v1772
  %v5084 = vmul.f32 %v1872, %v1772
  %v5085 = vmul.f32 %v1873, %v1772
  %v5086 = vmul.f32 %v1874, %v1772
  %v5087 = vmul.f32 %v1875, %v1772
  %v5088 = vmul.f32 %v1876, %v1772
  %v5089 = vmul.f32 %v1877, %v1772
  %v5090 = vmul.f32 %v1878, %v1772
  %v5091 = vmul.f32 %v1879, %v1772
  %v5092 = vmul.f32 %v1880, %v1772
  %v5093 = vmul.f32 %v1881, %v1772
  %v5094 = vmul.f32 %v1882, %v1772
  %v5095 = vmul.f32 %v1883, %v1772
  %v5096 = vmul.f32 %v1884, %v1772
  %v5097 = vmul.f32 %v1885, %v1772
  %v5098 = vmul.f32 %v1886, %v1772
  %v5099 = vmul.f32 %v1887, %v1772
  %v5100 = vmul.f32 %v1888, %v1772
  %v5101 = vmul.f32 %v1889, %v1772
  %v5102 = vmul.f32 %v1890, %v1772
  %v5103 = vmul.f32 %v1891, %v1772
  %v5104 = vmul.f32 %v1892, %v1772
  %v5105 = vmul.f32 %v1893, %v1772
  %v5106 = vmul.f32 %v1894, %v1772
  %v5107 = vmul.f32 %v1895, %v1772
  %v5108 = vmul.f32 %v1896, %v1772
  %v5109 = vmul.f32 %v1897, %v1772
  %v5110 = vmul.f32 %v1898, %v1772
  %v5111 = vmul.f32 %v1899, %v1772
  %v5112 = vmul.f32 %v1900, %v1772
  %v5113 = vmul.f32 %v1901, %v1772
  %v5114 = vmul.f32 %v1902, %v1772
  %v5115 = vmul.f32 %v1903, %v1772
  %v5116 = vmul.f32 %v1904, %v1772
  %v5117 = vmul.f32 %v1905, %v1772
  %v5118 = vmul.f32 %v1906, %v1772
  %v5119 = vmul.f32 %v1907, %v1772
  %v5120 = vmul.f32 %v1908, %v1772
  %v5121 = vmul.f32 %v1909, %v1772
  %v5122 = vmul.f32 %v1910, %v1772
  %v5123 = vmul.f32 %v1911, %v1772
  %v5124 = vmul.f32 %v1912, %v1772
  %v5125 = vmul.f32 %v1913, %v1772
  %v5126 = vmul.f32 %v1914, %v1772
  %v5127 = vmul.f32 %v1915, %v1772
  %v5128 = vmul.f32 %v1916, %v1772
  %v5129 = vadd.f32 %v5033, %v5081
  %v5130 = vadd.f32 %v5034, %v5082
  %v5131 = vadd.f32 %v5035, %v5083
  %v5132 = vadd.f32 %v5036, %v5084
  %v5133 = vadd.f32 %v5037, %v5085
  %v5134 = vadd.f32 %v5038, %v5086
  %v5135 = vadd.f32 %v5039, %v5087
  %v5136 = vadd.f32 %v5040, %v5088
  %v5137 = vadd.f32 %v5041, %v5089
  %v5138 = vadd.f32 %v5042, %v5090
  %v5139 = vadd.f32 %v5043, %v5091
  %v5140 = vadd.f32 %v5044, %v5092
  %v5141 = vadd.f32 %v5045, %v5093
  %v5142 = vadd.f32 %v5046, %v5094
  %v5143 = vadd.f32 %v5047, %v5095
  %v5144 = vadd.f32 %v5048, %v5096
  %v5145 = vadd.f32 %v5049, %v5097
  %v5146 = vadd.f32 %v5050, %v5098
  %v5147 = vadd.f32 %v5051, %v5099
  %v5148 = vadd.f32 %v5052, %v5100
  %v5149 = vadd.f32 %v5053, %v5101
  %v5150 = vadd.f32 %v5054, %v5102
  %v5151 = vadd.f32 %v5055, %v5103
  %v5152 = vadd.f32 %v5056, %v5104
  %v5153 = vadd.f32 %v5057, %v5105
  %v5154 = vadd.f32 %v5058, %v5106
  %v5155 = vadd.f32 %v5059, %v5107
  %v5156 = vadd.f32 %v5060, %v5108
  %v5157 = vadd.f32 %v5061, %v5109
  %v5158 = vadd.f32 %v5062, %v5110
  %v5159 = vadd.f32 %v5063, %v5111
  %v5160 = vadd.f32 %v5064, %v5112
  %v5161 = vadd.f32 %v5065, %v5113
  %v5162 = vadd.f32 %v5066, %v5114
  %v5163 = vadd.f32 %v5067, %v5115
  %v5164 = vadd.f32 %v5068, %v5116
  %v5165 = vadd.f32 %v5069, %v5117
  %v5166 = vadd.f32 %v5070, %v5118
  %v5167 = vadd.f32 %v5071, %v5119
  %v5168 = vadd.f32 %v5072, %v5120
  %v5169 = vadd.f32 %v5073, %v5121
  %v5170 = vadd.f32 %v5074, %v5122
  %v5171 = vadd.f32 %v5075, %v5123
  %v5172 = vadd.f32 %v5076, %v5124
  %v5173 = vadd.f32 %v5077, %v5125
  %v5174 = vadd.f32 %v5078, %v5126
  %v5175 = vadd.f32 %v5079, %v5127
  %v5176 = vadd.f32 %v5080, %v5128
  %v5177 = vmul.f32 %v2014, %v1917
  %v5178 = vmul.f32 %v2015, %v1917
  %v5179 = vmul.f32 %v2016, %v1917
  %v5180 = vmul.f32 %v2017, %v1917
  %v5181 = vmul.f32 %v2018, %v1917
  %v5182 = vmul.f32 %v2019, %v1917
  %v5183 = vmul.f32 %v2020, %v1917
  %v5184 = vmul.f32 %v2021, %v1917
  %v5185 = vmul.f32 %v2022, %v1917
  %v5186 = vmul.f32 %v2023, %v1917
  %v5187 = vmul.f32 %v2024, %v1917
  %v5188 = vmul.f32 %v2025, %v1917
  %v5189 = vmul.f32 %v2026, %v1917
  %v5190 = vmul.f32 %v2027, %v1917
  %v5191 = vmul.f32 %v2028, %v1917
  %v5192 = vmul.f32 %v2029, %v1917
  %v5193 = vmul.f32 %v2030, %v1917
  %v5194 = vmul.f32 %v2031, %v1917
  %v5195 = vmul.f32 %v2032, %v1917
  %v5196 = vmul.f32 %v2033, %v1917
  %v5197 = vmul.f32 %v2034, %v1917
  %v5198 = vmul.f32 %v2035, %v1917
  %v5199 = vmul.f32 %v2036, %v1917
  %v5200 = vmul.f32 %v2037, %v1917
  %v5201 = vmul.f32 %v2038, %v1917
  %v5202 = vmul.f32 %v2039, %v1917
  %v5203 = vmul.f32 %v2040, %v1917
  %v5204 = vmul.f32 %v2041, %v1917
  %v5205 = vmul.f32 %v2042, %v1917
  %v5206 = vmul.f32 %v2043, %v1917
  %v5207 = vmul.f32 %v2044, %v1917
  %v5208 = vmul.f32 %v2045, %v1917
  %v5209 = vmul.f32 %v2046, %v1917
  %v5210 = vmul.f32 %v2047, %v1917
  %v5211 = vmul.f32 %v2048, %v1917
  %v5212 = vmul.f32 %v2049, %v1917
  %v5213 = vmul.f32 %v2050, %v1917
  %v5214 = vmul.f32 %v2051, %v1917
  %v5215 = vmul.f32 %v2052, %v1917
  %v5216 = vmul.f32 %v2053, %v1917
  %v5217 = vmul.f32 %v2054, %v1917
  %v5218 = vmul.f32 %v2055, %v1917
  %v5219 = vmul.f32 %v2056, %v1917
  %v5220 = vmul.f32 %v2057, %v1917
  %v5221 = vmul.f32 %v2058, %v1917
  %v5222 = vmul.f32 %v2059, %v1917
  %v5223 = vmul.f32 %v2060, %v1917
  %v5224 = vmul.f32 %v2061, %v1917
  %v5225 = vadd.f32 %v5129, %v5177
  %v5226 = vadd.f32 %v5130, %v5178
  %v5227 = vadd.f32 %v5131, %v5179
  %v5228 = vadd.f32 %v5132, %v5180
  %v5229 = vadd.f32 %v5133, %v5181
  %v5230 = vadd.f32 %v5134, %v5182
  %v5231 = vadd.f32 %v5135, %v5183
  %v5232 = vadd.f32 %v5136, %v5184
  %v5233 = vadd.f32 %v5137, %v5185
  %v5234 = vadd.f32 %v5138, %v5186
  %v5235 = vadd.f32 %v5139, %v5187
  %v5236 = vadd.f32 %v5140, %v5188
  %v5237 = vadd.f32 %v5141, %v5189
  %v5238 = vadd.f32 %v5142, %v5190
  %v5239 = vadd.f32 %v5143, %v5191
  %v5240 = vadd.f32 %v5144, %v5192
  %v5241 = vadd.f32 %v5145, %v5193
  %v5242 = vadd.f32 %v5146, %v5194
  %v5243 = vadd.f32 %v5147, %v5195
  %v5244 = vadd.f32 %v5148, %v5196
  %v5245 = vadd.f32 %v5149, %v5197
  %v5246 = vadd.f32 %v5150, %v5198
  %v5247 = vadd.f32 %v5151, %v5199
  %v5248 = vadd.f32 %v5152, %v5200
  %v5249 = vadd.f32 %v5153, %v5201
  %v5250 = vadd.f32 %v5154, %v5202
  %v5251 = vadd.f32 %v5155, %v5203
  %v5252 = vadd.f32 %v5156, %v5204
  %v5253 = vadd.f32 %v5157, %v5205
  %v5254 = vadd.f32 %v5158, %v5206
  %v5255 = vadd.f32 %v5159, %v5207
  %v5256 = vadd.f32 %v5160, %v5208
  %v5257 = vadd.f32 %v5161, %v5209
  %v5258 = vadd.f32 %v5162, %v5210
  %v5259 = vadd.f32 %v5163, %v5211
  %v5260 = vadd.f32 %v5164, %v5212
  %v5261 = vadd.f32 %v5165, %v5213
  %v5262 = vadd.f32 %v5166, %v5214
  %v5263 = vadd.f32 %v5167, %v5215
  %v5264 = vadd.f32 %v5168, %v5216
  %v5265 = vadd.f32 %v5169, %v5217
  %v5266 = vadd.f32 %v5170, %v5218
  %v5267 = vadd.f32 %v5171, %v5219
  %v5268 = vadd.f32 %v5172, %v5220
  %v5269 = vadd.f32 %v5173, %v5221
  %v5270 = vadd.f32 %v5174, %v5222
  %v5271 = vadd.f32 %v5175, %v5223
  %v5272 = vadd.f32 %v5176, %v5224
  %v5273 = vld [vmem:[%s1578 + $0x2] sm:$0xff]
  %v5274 = vld [vmem:[%s1578 + $0xa] sm:$0xff]
  %v5275 = vld [vmem:[%s1578 + $0x12] sm:$0xff]
  %v5276 = vld [vmem:[%s1578 + $0x1a] sm:$0xff]
  %v5277 = vld [vmem:[%s1578 + $0x22] sm:$0xff]
  %v5278 = vld [vmem:[%s1578 + $0x2a] sm:$0xff]
  %v5279 = vld [vmem:[%s1578 + $0x32] sm:$0xff]
  %v5280 = vld [vmem:[%s1578 + $0x3a] sm:$0x3f]
  %v5281 = vld [vmem:[%s1578 + $0x42] sm:$0xff]
  %v5282 = vld [vmem:[%s1578 + $0x4a] sm:$0xff]
  %v5283 = vld [vmem:[%s1578 + $0x52] sm:$0xff]
  %v5284 = vld [vmem:[%s1578 + $0x5a] sm:$0xff]
  %v5285 = vld [vmem:[%s1578 + $0x62] sm:$0xff]
  %v5286 = vld [vmem:[%s1578 + $0x6a] sm:$0xff]
  %v5287 = vld [vmem:[%s1578 + $0x72] sm:$0xff]
  %v5288 = vld [vmem:[%s1578 + $0x7a] sm:$0x3f]
  %v5289 = vld [vmem:[%s1578 + $0x82] sm:$0xff]
  %v5290 = vld [vmem:[%s1578 + $0x8a] sm:$0xff]
  %v5291 = vld [vmem:[%s1578 + $0x92] sm:$0xff]
  %v5292 = vld [vmem:[%s1578 + $0x9a] sm:$0xff]
  %v5293 = vld [vmem:[%s1578 + $0xa2] sm:$0xff]
  %v5294 = vld [vmem:[%s1578 + $0xaa] sm:$0xff]
  %v5295 = vld [vmem:[%s1578 + $0xb2] sm:$0xff]
  %v5296 = vld [vmem:[%s1578 + $0xba] sm:$0x3f]
  %v5297 = vld [vmem:[%s1578 + $0xc2] sm:$0xff]
  %v5298 = vld [vmem:[%s1578 + $0xca] sm:$0xff]
  %v5299 = vld [vmem:[%s1578 + $0xd2] sm:$0xff]
  %v5300 = vld [vmem:[%s1578 + $0xda] sm:$0xff]
  %v5301 = vld [vmem:[%s1578 + $0xe2] sm:$0xff]
  %v5302 = vld [vmem:[%s1578 + $0xea] sm:$0xff]
  %v5303 = vld [vmem:[%s1578 + $0xf2] sm:$0xff]
  %v5304 = vld [vmem:[%s1578 + $0xfa] sm:$0x3f]
  %v5305 = vld [vmem:[%s1578 + $0x102] sm:$0xff]
  %v5306 = vld [vmem:[%s1578 + $0x10a] sm:$0xff]
  %v5307 = vld [vmem:[%s1578 + $0x112] sm:$0xff]
  %v5308 = vld [vmem:[%s1578 + $0x11a] sm:$0xff]
  %v5309 = vld [vmem:[%s1578 + $0x122] sm:$0xff]
  %v5310 = vld [vmem:[%s1578 + $0x12a] sm:$0xff]
  %v5311 = vld [vmem:[%s1578 + $0x132] sm:$0xff]
  %v5312 = vld [vmem:[%s1578 + $0x13a] sm:$0x3f]
  %v5313 = vld [vmem:[%s1578 + $0x142] sm:$0xff]
  %v5314 = vld [vmem:[%s1578 + $0x14a] sm:$0xff]
  %v5315 = vld [vmem:[%s1578 + $0x152] sm:$0xff]
  %v5316 = vld [vmem:[%s1578 + $0x15a] sm:$0xff]
  %v5317 = vld [vmem:[%s1578 + $0x162] sm:$0xff]
  %v5318 = vld [vmem:[%s1578 + $0x16a] sm:$0xff]
  %v5319 = vld [vmem:[%s1578 + $0x172] sm:$0xff]
  %v5320 = vld [vmem:[%s1578 + $0x17a] sm:$0x3f]
  %v5321 = vmul.f32 %v5273, %v2062
  %v5322 = vmul.f32 %v5274, %v2062
  %v5323 = vmul.f32 %v5275, %v2062
  %v5324 = vmul.f32 %v5276, %v2062
  %v5325 = vmul.f32 %v5277, %v2062
  %v5326 = vmul.f32 %v5278, %v2062
  %v5327 = vmul.f32 %v5279, %v2062
  %v5328 = vmul.f32 %v5280, %v2062
  %v5329 = vmul.f32 %v5281, %v2062
  %v5330 = vmul.f32 %v5282, %v2062
  %v5331 = vmul.f32 %v5283, %v2062
  %v5332 = vmul.f32 %v5284, %v2062
  %v5333 = vmul.f32 %v5285, %v2062
  %v5334 = vmul.f32 %v5286, %v2062
  %v5335 = vmul.f32 %v5287, %v2062
  %v5336 = vmul.f32 %v5288, %v2062
  %v5337 = vmul.f32 %v5289, %v2062
  %v5338 = vmul.f32 %v5290, %v2062
  %v5339 = vmul.f32 %v5291, %v2062
  %v5340 = vmul.f32 %v5292, %v2062
  %v5341 = vmul.f32 %v5293, %v2062
  %v5342 = vmul.f32 %v5294, %v2062
  %v5343 = vmul.f32 %v5295, %v2062
  %v5344 = vmul.f32 %v5296, %v2062
  %v5345 = vmul.f32 %v5297, %v2062
  %v5346 = vmul.f32 %v5298, %v2062
  %v5347 = vmul.f32 %v5299, %v2062
  %v5348 = vmul.f32 %v5300, %v2062
  %v5349 = vmul.f32 %v5301, %v2062
  %v5350 = vmul.f32 %v5302, %v2062
  %v5351 = vmul.f32 %v5303, %v2062
  %v5352 = vmul.f32 %v5304, %v2062
  %v5353 = vmul.f32 %v5305, %v2062
  %v5354 = vmul.f32 %v5306, %v2062
  %v5355 = vmul.f32 %v5307, %v2062
  %v5356 = vmul.f32 %v5308, %v2062
  %v5357 = vmul.f32 %v5309, %v2062
  %v5358 = vmul.f32 %v5310, %v2062
  %v5359 = vmul.f32 %v5311, %v2062
  %v5360 = vmul.f32 %v5312, %v2062
  %v5361 = vmul.f32 %v5313, %v2062
  %v5362 = vmul.f32 %v5314, %v2062
  %v5363 = vmul.f32 %v5315, %v2062
  %v5364 = vmul.f32 %v5316, %v2062
  %v5365 = vmul.f32 %v5317, %v2062
  %v5366 = vmul.f32 %v5318, %v2062
  %v5367 = vmul.f32 %v5319, %v2062
  %v5368 = vmul.f32 %v5320, %v2062
  %v5369 = vadd.f32 %v5225, %v5321
  %v5370 = vadd.f32 %v5226, %v5322
  %v5371 = vadd.f32 %v5227, %v5323
  %v5372 = vadd.f32 %v5228, %v5324
  %v5373 = vadd.f32 %v5229, %v5325
  %v5374 = vadd.f32 %v5230, %v5326
  %v5375 = vadd.f32 %v5231, %v5327
  %v5376 = vadd.f32 %v5232, %v5328
  %v5377 = vadd.f32 %v5233, %v5329
  %v5378 = vadd.f32 %v5234, %v5330
  %v5379 = vadd.f32 %v5235, %v5331
  %v5380 = vadd.f32 %v5236, %v5332
  %v5381 = vadd.f32 %v5237, %v5333
  %v5382 = vadd.f32 %v5238, %v5334
  %v5383 = vadd.f32 %v5239, %v5335
  %v5384 = vadd.f32 %v5240, %v5336
  %v5385 = vadd.f32 %v5241, %v5337
  %v5386 = vadd.f32 %v5242, %v5338
  %v5387 = vadd.f32 %v5243, %v5339
  %v5388 = vadd.f32 %v5244, %v5340
  %v5389 = vadd.f32 %v5245, %v5341
  %v5390 = vadd.f32 %v5246, %v5342
  %v5391 = vadd.f32 %v5247, %v5343
  %v5392 = vadd.f32 %v5248, %v5344
  %v5393 = vadd.f32 %v5249, %v5345
  %v5394 = vadd.f32 %v5250, %v5346
  %v5395 = vadd.f32 %v5251, %v5347
  %v5396 = vadd.f32 %v5252, %v5348
  %v5397 = vadd.f32 %v5253, %v5349
  %v5398 = vadd.f32 %v5254, %v5350
  %v5399 = vadd.f32 %v5255, %v5351
  %v5400 = vadd.f32 %v5256, %v5352
  %v5401 = vadd.f32 %v5257, %v5353
  %v5402 = vadd.f32 %v5258, %v5354
  %v5403 = vadd.f32 %v5259, %v5355
  %v5404 = vadd.f32 %v5260, %v5356
  %v5405 = vadd.f32 %v5261, %v5357
  %v5406 = vadd.f32 %v5262, %v5358
  %v5407 = vadd.f32 %v5263, %v5359
  %v5408 = vadd.f32 %v5264, %v5360
  %v5409 = vadd.f32 %v5265, %v5361
  %v5410 = vadd.f32 %v5266, %v5362
  %v5411 = vadd.f32 %v5267, %v5363
  %v5412 = vadd.f32 %v5268, %v5364
  %v5413 = vadd.f32 %v5269, %v5365
  %v5414 = vadd.f32 %v5270, %v5366
  %v5415 = vadd.f32 %v5271, %v5367
  %v5416 = vadd.f32 %v5272, %v5368
  %v5417 = vmul.f32 %v2306, %v2208
  %v5418 = vmul.f32 %v2307, %v2208
  %v5419 = vmul.f32 %v2308, %v2208
  %v5420 = vmul.f32 %v2309, %v2208
  %v5421 = vmul.f32 %v2310, %v2208
  %v5422 = vmul.f32 %v2311, %v2208
  %v5423 = vmul.f32 %v2312, %v2208
  %v5424 = vmul.f32 %v2313, %v2208
  %v5425 = vmul.f32 %v2314, %v2208
  %v5426 = vmul.f32 %v2315, %v2208
  %v5427 = vmul.f32 %v2316, %v2208
  %v5428 = vmul.f32 %v2317, %v2208
  %v5429 = vmul.f32 %v2318, %v2208
  %v5430 = vmul.f32 %v2319, %v2208
  %v5431 = vmul.f32 %v2320, %v2208
  %v5432 = vmul.f32 %v2321, %v2208
  %v5433 = vmul.f32 %v2322, %v2208
  %v5434 = vmul.f32 %v2323, %v2208
  %v5435 = vmul.f32 %v2324, %v2208
  %v5436 = vmul.f32 %v2325, %v2208
  %v5437 = vmul.f32 %v2326, %v2208
  %v5438 = vmul.f32 %v2327, %v2208
  %v5439 = vmul.f32 %v2328, %v2208
  %v5440 = vmul.f32 %v2329, %v2208
  %v5441 = vmul.f32 %v2330, %v2208
  %v5442 = vmul.f32 %v2331, %v2208
  %v5443 = vmul.f32 %v2332, %v2208
  %v5444 = vmul.f32 %v2333, %v2208
  %v5445 = vmul.f32 %v2334, %v2208
  %v5446 = vmul.f32 %v2335, %v2208
  %v5447 = vmul.f32 %v2336, %v2208
  %v5448 = vmul.f32 %v2337, %v2208
  %v5449 = vmul.f32 %v2338, %v2208
  %v5450 = vmul.f32 %v2339, %v2208
  %v5451 = vmul.f32 %v2340, %v2208
  %v5452 = vmul.f32 %v2341, %v2208
  %v5453 = vmul.f32 %v2342, %v2208
  %v5454 = vmul.f32 %v2343, %v2208
  %v5455 = vmul.f32 %v2344, %v2208
  %v5456 = vmul.f32 %v2345, %v2208
  %v5457 = vmul.f32 %v2346, %v2208
  %v5458 = vmul.f32 %v2347, %v2208
  %v5459 = vmul.f32 %v2348, %v2208
  %v5460 = vmul.f32 %v2349, %v2208
  %v5461 = vmul.f32 %v2350, %v2208
  %v5462 = vmul.f32 %v2351, %v2208
  %v5463 = vmul.f32 %v2352, %v2208
  %v5464 = vmul.f32 %v2353, %v2208
  %v5465 = vadd.f32 %v5369, %v5417
  %v5466 = vadd.f32 %v5370, %v5418
  %v5467 = vadd.f32 %v5371, %v5419
  %v5468 = vadd.f32 %v5372, %v5420
  %v5469 = vadd.f32 %v5373, %v5421
  %v5470 = vadd.f32 %v5374, %v5422
  %v5471 = vadd.f32 %v5375, %v5423
  %v5472 = vadd.f32 %v5376, %v5424
  %v5473 = vadd.f32 %v5377, %v5425
  %v5474 = vadd.f32 %v5378, %v5426
  %v5475 = vadd.f32 %v5379, %v5427
  %v5476 = vadd.f32 %v5380, %v5428
  %v5477 = vadd.f32 %v5381, %v5429
  %v5478 = vadd.f32 %v5382, %v5430
  %v5479 = vadd.f32 %v5383, %v5431
  %v5480 = vadd.f32 %v5384, %v5432
  %v5481 = vadd.f32 %v5385, %v5433
  %v5482 = vadd.f32 %v5386, %v5434
  %v5483 = vadd.f32 %v5387, %v5435
  %v5484 = vadd.f32 %v5388, %v5436
  %v5485 = vadd.f32 %v5389, %v5437
  %v5486 = vadd.f32 %v5390, %v5438
  %v5487 = vadd.f32 %v5391, %v5439
  %v5488 = vadd.f32 %v5392, %v5440
  %v5489 = vadd.f32 %v5393, %v5441
  %v5490 = vadd.f32 %v5394, %v5442
  %v5491 = vadd.f32 %v5395, %v5443
  %v5492 = vadd.f32 %v5396, %v5444
  %v5493 = vadd.f32 %v5397, %v5445
  %v5494 = vadd.f32 %v5398, %v5446
  %v5495 = vadd.f32 %v5399, %v5447
  %v5496 = vadd.f32 %v5400, %v5448
  %v5497 = vadd.f32 %v5401, %v5449
  %v5498 = vadd.f32 %v5402, %v5450
  %v5499 = vadd.f32 %v5403, %v5451
  %v5500 = vadd.f32 %v5404, %v5452
  %v5501 = vadd.f32 %v5405, %v5453
  %v5502 = vadd.f32 %v5406, %v5454
  %v5503 = vadd.f32 %v5407, %v5455
  %v5504 = vadd.f32 %v5408, %v5456
  %v5505 = vadd.f32 %v5409, %v5457
  %v5506 = vadd.f32 %v5410, %v5458
  %v5507 = vadd.f32 %v5411, %v5459
  %v5508 = vadd.f32 %v5412, %v5460
  %v5509 = vadd.f32 %v5413, %v5461
  %v5510 = vadd.f32 %v5414, %v5462
  %v5511 = vadd.f32 %v5415, %v5463
  %v5512 = vadd.f32 %v5416, %v5464
  %v5513 = vmul.f32 %v2451, %v2354
  %v5514 = vmul.f32 %v2452, %v2354
  %v5515 = vmul.f32 %v2453, %v2354
  %v5516 = vmul.f32 %v2454, %v2354
  %v5517 = vmul.f32 %v2455, %v2354
  %v5518 = vmul.f32 %v2456, %v2354
  %v5519 = vmul.f32 %v2457, %v2354
  %v5520 = vmul.f32 %v2458, %v2354
  %v5521 = vmul.f32 %v2459, %v2354
  %v5522 = vmul.f32 %v2460, %v2354
  %v5523 = vmul.f32 %v2461, %v2354
  %v5524 = vmul.f32 %v2462, %v2354
  %v5525 = vmul.f32 %v2463, %v2354
  %v5526 = vmul.f32 %v2464, %v2354
  %v5527 = vmul.f32 %v2465, %v2354
  %v5528 = vmul.f32 %v2466, %v2354
  %v5529 = vmul.f32 %v2467, %v2354
  %v5530 = vmul.f32 %v2468, %v2354
  %v5531 = vmul.f32 %v2469, %v2354
  %v5532 = vmul.f32 %v2470, %v2354
  %v5533 = vmul.f32 %v2471, %v2354
  %v5534 = vmul.f32 %v2472, %v2354
  %v5535 = vmul.f32 %v2473, %v2354
  %v5536 = vmul.f32 %v2474, %v2354
  %v5537 = vmul.f32 %v2475, %v2354
  %v5538 = vmul.f32 %v2476, %v2354
  %v5539 = vmul.f32 %v2477, %v2354
  %v5540 = vmul.f32 %v2478, %v2354
  %v5541 = vmul.f32 %v2479, %v2354
  %v5542 = vmul.f32 %v2480, %v2354
  %v5543 = vmul.f32 %v2481, %v2354
  %v5544 = vmul.f32 %v2482, %v2354
  %v5545 = vmul.f32 %v2483, %v2354
  %v5546 = vmul.f32 %v2484, %v2354
  %v5547 = vmul.f32 %v2485, %v2354
  %v5548 = vmul.f32 %v2486, %v2354
  %v5549 = vmul.f32 %v2487, %v2354
  %v5550 = vmul.f32 %v2488, %v2354
  %v5551 = vmul.f32 %v2489, %v2354
  %v5552 = vmul.f32 %v2490, %v2354
  %v5553 = vmul.f32 %v2491, %v2354
  %v5554 = vmul.f32 %v2492, %v2354
  %v5555 = vmul.f32 %v2493, %v2354
  %v5556 = vmul.f32 %v2494, %v2354
  %v5557 = vmul.f32 %v2495, %v2354
  %v5558 = vmul.f32 %v2496, %v2354
  %v5559 = vmul.f32 %v2497, %v2354
  %v5560 = vmul.f32 %v2498, %v2354
  %v5561 = vadd.f32 %v5465, %v5513
  %v5562 = vadd.f32 %v5466, %v5514
  %v5563 = vadd.f32 %v5467, %v5515
  %v5564 = vadd.f32 %v5468, %v5516
  %v5565 = vadd.f32 %v5469, %v5517
  %v5566 = vadd.f32 %v5470, %v5518
  %v5567 = vadd.f32 %v5471, %v5519
  %v5568 = vadd.f32 %v5472, %v5520
  %v5569 = vadd.f32 %v5473, %v5521
  %v5570 = vadd.f32 %v5474, %v5522
  %v5571 = vadd.f32 %v5475, %v5523
  %v5572 = vadd.f32 %v5476, %v5524
  %v5573 = vadd.f32 %v5477, %v5525
  %v5574 = vadd.f32 %v5478, %v5526
  %v5575 = vadd.f32 %v5479, %v5527
  %v5576 = vadd.f32 %v5480, %v5528
  %v5577 = vadd.f32 %v5481, %v5529
  %v5578 = vadd.f32 %v5482, %v5530
  %v5579 = vadd.f32 %v5483, %v5531
  %v5580 = vadd.f32 %v5484, %v5532
  %v5581 = vadd.f32 %v5485, %v5533
  %v5582 = vadd.f32 %v5486, %v5534
  %v5583 = vadd.f32 %v5487, %v5535
  %v5584 = vadd.f32 %v5488, %v5536
  %v5585 = vadd.f32 %v5489, %v5537
  %v5586 = vadd.f32 %v5490, %v5538
  %v5587 = vadd.f32 %v5491, %v5539
  %v5588 = vadd.f32 %v5492, %v5540
  %v5589 = vadd.f32 %v5493, %v5541
  %v5590 = vadd.f32 %v5494, %v5542
  %v5591 = vadd.f32 %v5495, %v5543
  %v5592 = vadd.f32 %v5496, %v5544
  %v5593 = vadd.f32 %v5497, %v5545
  %v5594 = vadd.f32 %v5498, %v5546
  %v5595 = vadd.f32 %v5499, %v5547
  %v5596 = vadd.f32 %v5500, %v5548
  %v5597 = vadd.f32 %v5501, %v5549
  %v5598 = vadd.f32 %v5502, %v5550
  %v5599 = vadd.f32 %v5503, %v5551
  %v5600 = vadd.f32 %v5504, %v5552
  %v5601 = vadd.f32 %v5505, %v5553
  %v5602 = vadd.f32 %v5506, %v5554
  %v5603 = vadd.f32 %v5507, %v5555
  %v5604 = vadd.f32 %v5508, %v5556
  %v5605 = vadd.f32 %v5509, %v5557
  %v5606 = vadd.f32 %v5510, %v5558
  %v5607 = vadd.f32 %v5511, %v5559
  %v5608 = vadd.f32 %v5512, %v5560
  %v5609 = vmul.f32 %v2596, %v2499
  %v5610 = vmul.f32 %v2597, %v2499
  %v5611 = vmul.f32 %v2598, %v2499
  %v5612 = vmul.f32 %v2599, %v2499
  %v5613 = vmul.f32 %v2600, %v2499
  %v5614 = vmul.f32 %v2601, %v2499
  %v5615 = vmul.f32 %v2602, %v2499
  %v5616 = vmul.f32 %v2603, %v2499
  %v5617 = vmul.f32 %v2604, %v2499
  %v5618 = vmul.f32 %v2605, %v2499
  %v5619 = vmul.f32 %v2606, %v2499
  %v5620 = vmul.f32 %v2607, %v2499
  %v5621 = vmul.f32 %v2608, %v2499
  %v5622 = vmul.f32 %v2609, %v2499
  %v5623 = vmul.f32 %v2610, %v2499
  %v5624 = vmul.f32 %v2611, %v2499
  %v5625 = vmul.f32 %v2612, %v2499
  %v5626 = vmul.f32 %v2613, %v2499
  %v5627 = vmul.f32 %v2614, %v2499
  %v5628 = vmul.f32 %v2615, %v2499
  %v5629 = vmul.f32 %v2616, %v2499
  %v5630 = vmul.f32 %v2617, %v2499
  %v5631 = vmul.f32 %v2618, %v2499
  %v5632 = vmul.f32 %v2619, %v2499
  %v5633 = vmul.f32 %v2620, %v2499
  %v5634 = vmul.f32 %v2621, %v2499
  %v5635 = vmul.f32 %v2622, %v2499
  %v5636 = vmul.f32 %v2623, %v2499
  %v5637 = vmul.f32 %v2624, %v2499
  %v5638 = vmul.f32 %v2625, %v2499
  %v5639 = vmul.f32 %v2626, %v2499
  %v5640 = vmul.f32 %v2627, %v2499
  %v5641 = vmul.f32 %v2628, %v2499
  %v5642 = vmul.f32 %v2629, %v2499
  %v5643 = vmul.f32 %v2630, %v2499
  %v5644 = vmul.f32 %v2631, %v2499
  %v5645 = vmul.f32 %v2632, %v2499
  %v5646 = vmul.f32 %v2633, %v2499
  %v5647 = vmul.f32 %v2634, %v2499
  %v5648 = vmul.f32 %v2635, %v2499
  %v5649 = vmul.f32 %v2636, %v2499
  %v5650 = vmul.f32 %v2637, %v2499
  %v5651 = vmul.f32 %v2638, %v2499
  %v5652 = vmul.f32 %v2639, %v2499
  %v5653 = vmul.f32 %v2640, %v2499
  %v5654 = vmul.f32 %v2641, %v2499
  %v5655 = vmul.f32 %v2642, %v2499
  %v5656 = vmul.f32 %v2643, %v2499
  %v5657 = vadd.f32 %v5561, %v5609
  %v5658 = vadd.f32 %v5562, %v5610
  %v5659 = vadd.f32 %v5563, %v5611
  %v5660 = vadd.f32 %v5564, %v5612
  %v5661 = vadd.f32 %v5565, %v5613
  %v5662 = vadd.f32 %v5566, %v5614
  %v5663 = vadd.f32 %v5567, %v5615
  %v5664 = vadd.f32 %v5568, %v5616
  %v5665 = vadd.f32 %v5569, %v5617
  %v5666 = vadd.f32 %v5570, %v5618
  %v5667 = vadd.f32 %v5571, %v5619
  %v5668 = vadd.f32 %v5572, %v5620
  %v5669 = vadd.f32 %v5573, %v5621
  %v5670 = vadd.f32 %v5574, %v5622
  %v5671 = vadd.f32 %v5575, %v5623
  %v5672 = vadd.f32 %v5576, %v5624
  %v5673 = vadd.f32 %v5577, %v5625
  %v5674 = vadd.f32 %v5578, %v5626
  %v5675 = vadd.f32 %v5579, %v5627
  %v5676 = vadd.f32 %v5580, %v5628
  %v5677 = vadd.f32 %v5581, %v5629
  %v5678 = vadd.f32 %v5582, %v5630
  %v5679 = vadd.f32 %v5583, %v5631
  %v5680 = vadd.f32 %v5584, %v5632
  %v5681 = vadd.f32 %v5585, %v5633
  %v5682 = vadd.f32 %v5586, %v5634
  %v5683 = vadd.f32 %v5587, %v5635
  %v5684 = vadd.f32 %v5588, %v5636
  %v5685 = vadd.f32 %v5589, %v5637
  %v5686 = vadd.f32 %v5590, %v5638
  %v5687 = vadd.f32 %v5591, %v5639
  %v5688 = vadd.f32 %v5592, %v5640
  %v5689 = vadd.f32 %v5593, %v5641
  %v5690 = vadd.f32 %v5594, %v5642
  %v5691 = vadd.f32 %v5595, %v5643
  %v5692 = vadd.f32 %v5596, %v5644
  %v5693 = vadd.f32 %v5597, %v5645
  %v5694 = vadd.f32 %v5598, %v5646
  %v5695 = vadd.f32 %v5599, %v5647
  %v5696 = vadd.f32 %v5600, %v5648
  %v5697 = vadd.f32 %v5601, %v5649
  %v5698 = vadd.f32 %v5602, %v5650
  %v5699 = vadd.f32 %v5603, %v5651
  %v5700 = vadd.f32 %v5604, %v5652
  %v5701 = vadd.f32 %v5605, %v5653
  %v5702 = vadd.f32 %v5606, %v5654
  %v5703 = vadd.f32 %v5607, %v5655
  %v5704 = vadd.f32 %v5608, %v5656
  %v5705 = vmul.f32 %v2741, %v2644
  %v5706 = vmul.f32 %v2742, %v2644
  %v5707 = vmul.f32 %v2743, %v2644
  %v5708 = vmul.f32 %v2744, %v2644
  %v5709 = vmul.f32 %v2745, %v2644
  %v5710 = vmul.f32 %v2746, %v2644
  %v5711 = vmul.f32 %v2747, %v2644
  %v5712 = vmul.f32 %v2748, %v2644
  %v5713 = vmul.f32 %v2749, %v2644
  %v5714 = vmul.f32 %v2750, %v2644
  %v5715 = vmul.f32 %v2751, %v2644
  %v5716 = vmul.f32 %v2752, %v2644
  %v5717 = vmul.f32 %v2753, %v2644
  %v5718 = vmul.f32 %v2754, %v2644
  %v5719 = vmul.f32 %v2755, %v2644
  %v5720 = vmul.f32 %v2756, %v2644
  %v5721 = vmul.f32 %v2757, %v2644
  %v5722 = vmul.f32 %v2758, %v2644
  %v5723 = vmul.f32 %v2759, %v2644
  %v5724 = vmul.f32 %v2760, %v2644
  %v5725 = vmul.f32 %v2761, %v2644
  %v5726 = vmul.f32 %v2762, %v2644
  %v5727 = vmul.f32 %v2763, %v2644
  %v5728 = vmul.f32 %v2764, %v2644
  %v5729 = vmul.f32 %v2765, %v2644
  %v5730 = vmul.f32 %v2766, %v2644
  %v5731 = vmul.f32 %v2767, %v2644
  %v5732 = vmul.f32 %v2768, %v2644
  %v5733 = vmul.f32 %v2769, %v2644
  %v5734 = vmul.f32 %v2770, %v2644
  %v5735 = vmul.f32 %v2771, %v2644
  %v5736 = vmul.f32 %v2772, %v2644
  %v5737 = vmul.f32 %v2773, %v2644
  %v5738 = vmul.f32 %v2774, %v2644
  %v5739 = vmul.f32 %v2775, %v2644
  %v5740 = vmul.f32 %v2776, %v2644
  %v5741 = vmul.f32 %v2777, %v2644
  %v5742 = vmul.f32 %v2778, %v2644
  %v5743 = vmul.f32 %v2779, %v2644
  %v5744 = vmul.f32 %v2780, %v2644
  %v5745 = vmul.f32 %v2781, %v2644
  %v5746 = vmul.f32 %v2782, %v2644
  %v5747 = vmul.f32 %v2783, %v2644
  %v5748 = vmul.f32 %v2784, %v2644
  %v5749 = vmul.f32 %v2785, %v2644
  %v5750 = vmul.f32 %v2786, %v2644
  %v5751 = vmul.f32 %v2787, %v2644
  %v5752 = vmul.f32 %v2788, %v2644
  %v5753 = vadd.f32 %v5657, %v5705
  %v5754 = vadd.f32 %v5658, %v5706
  %v5755 = vadd.f32 %v5659, %v5707
  %v5756 = vadd.f32 %v5660, %v5708
  %v5757 = vadd.f32 %v5661, %v5709
  %v5758 = vadd.f32 %v5662, %v5710
  %v5759 = vadd.f32 %v5663, %v5711
  %v5760 = vadd.f32 %v5664, %v5712
  %v5761 = vadd.f32 %v5665, %v5713
  %v5762 = vadd.f32 %v5666, %v5714
  %v5763 = vadd.f32 %v5667, %v5715
  %v5764 = vadd.f32 %v5668, %v5716
  %v5765 = vadd.f32 %v5669, %v5717
  %v5766 = vadd.f32 %v5670, %v5718
  %v5767 = vadd.f32 %v5671, %v5719
  %v5768 = vadd.f32 %v5672, %v5720
  %v5769 = vadd.f32 %v5673, %v5721
  %v5770 = vadd.f32 %v5674, %v5722
  %v5771 = vadd.f32 %v5675, %v5723
  %v5772 = vadd.f32 %v5676, %v5724
  %v5773 = vadd.f32 %v5677, %v5725
  %v5774 = vadd.f32 %v5678, %v5726
  %v5775 = vadd.f32 %v5679, %v5727
  %v5776 = vadd.f32 %v5680, %v5728
  %v5777 = vadd.f32 %v5681, %v5729
  %v5778 = vadd.f32 %v5682, %v5730
  %v5779 = vadd.f32 %v5683, %v5731
  %v5780 = vadd.f32 %v5684, %v5732
  %v5781 = vadd.f32 %v5685, %v5733
  %v5782 = vadd.f32 %v5686, %v5734
  %v5783 = vadd.f32 %v5687, %v5735
  %v5784 = vadd.f32 %v5688, %v5736
  %v5785 = vadd.f32 %v5689, %v5737
  %v5786 = vadd.f32 %v5690, %v5738
  %v5787 = vadd.f32 %v5691, %v5739
  %v5788 = vadd.f32 %v5692, %v5740
  %v5789 = vadd.f32 %v5693, %v5741
  %v5790 = vadd.f32 %v5694, %v5742
  %v5791 = vadd.f32 %v5695, %v5743
  %v5792 = vadd.f32 %v5696, %v5744
  %v5793 = vadd.f32 %v5697, %v5745
  %v5794 = vadd.f32 %v5698, %v5746
  %v5795 = vadd.f32 %v5699, %v5747
  %v5796 = vadd.f32 %v5700, %v5748
  %v5797 = vadd.f32 %v5701, %v5749
  %v5798 = vadd.f32 %v5702, %v5750
  %v5799 = vadd.f32 %v5703, %v5751
  %v5800 = vadd.f32 %v5704, %v5752
  %v5801 = vld [vmem:[%s2305 + $0x2] sm:$0xff]
  %v5802 = vld [vmem:[%s2305 + $0xa] sm:$0xff]
  %v5803 = vld [vmem:[%s2305 + $0x12] sm:$0xff]
  %v5804 = vld [vmem:[%s2305 + $0x1a] sm:$0xff]
  %v5805 = vld [vmem:[%s2305 + $0x22] sm:$0xff]
  %v5806 = vld [vmem:[%s2305 + $0x2a] sm:$0xff]
  %v5807 = vld [vmem:[%s2305 + $0x32] sm:$0xff]
  %v5808 = vld [vmem:[%s2305 + $0x3a] sm:$0x3f]
  %v5809 = vld [vmem:[%s2305 + $0x42] sm:$0xff]
  %v5810 = vld [vmem:[%s2305 + $0x4a] sm:$0xff]
  %v5811 = vld [vmem:[%s2305 + $0x52] sm:$0xff]
  %v5812 = vld [vmem:[%s2305 + $0x5a] sm:$0xff]
  %v5813 = vld [vmem:[%s2305 + $0x62] sm:$0xff]
  %v5814 = vld [vmem:[%s2305 + $0x6a] sm:$0xff]
  %v5815 = vld [vmem:[%s2305 + $0x72] sm:$0xff]
  %v5816 = vld [vmem:[%s2305 + $0x7a] sm:$0x3f]
  %v5817 = vld [vmem:[%s2305 + $0x82] sm:$0xff]
  %v5818 = vld [vmem:[%s2305 + $0x8a] sm:$0xff]
  %v5819 = vld [vmem:[%s2305 + $0x92] sm:$0xff]
  %v5820 = vld [vmem:[%s2305 + $0x9a] sm:$0xff]
  %v5821 = vld [vmem:[%s2305 + $0xa2] sm:$0xff]
  %v5822 = vld [vmem:[%s2305 + $0xaa] sm:$0xff]
  %v5823 = vld [vmem:[%s2305 + $0xb2] sm:$0xff]
  %v5824 = vld [vmem:[%s2305 + $0xba] sm:$0x3f]
  %v5825 = vld [vmem:[%s2305 + $0xc2] sm:$0xff]
  %v5826 = vld [vmem:[%s2305 + $0xca] sm:$0xff]
  %v5827 = vld [vmem:[%s2305 + $0xd2] sm:$0xff]
  %v5828 = vld [vmem:[%s2305 + $0xda] sm:$0xff]
  %v5829 = vld [vmem:[%s2305 + $0xe2] sm:$0xff]
  %v5830 = vld [vmem:[%s2305 + $0xea] sm:$0xff]
  %v5831 = vld [vmem:[%s2305 + $0xf2] sm:$0xff]
  %v5832 = vld [vmem:[%s2305 + $0xfa] sm:$0x3f]
  %v5833 = vld [vmem:[%s2305 + $0x102] sm:$0xff]
  %v5834 = vld [vmem:[%s2305 + $0x10a] sm:$0xff]
  %v5835 = vld [vmem:[%s2305 + $0x112] sm:$0xff]
  %v5836 = vld [vmem:[%s2305 + $0x11a] sm:$0xff]
  %v5837 = vld [vmem:[%s2305 + $0x122] sm:$0xff]
  %v5838 = vld [vmem:[%s2305 + $0x12a] sm:$0xff]
  %v5839 = vld [vmem:[%s2305 + $0x132] sm:$0xff]
  %v5840 = vld [vmem:[%s2305 + $0x13a] sm:$0x3f]
  %v5841 = vld [vmem:[%s2305 + $0x142] sm:$0xff]
  %v5842 = vld [vmem:[%s2305 + $0x14a] sm:$0xff]
  %v5843 = vld [vmem:[%s2305 + $0x152] sm:$0xff]
  %v5844 = vld [vmem:[%s2305 + $0x15a] sm:$0xff]
  %v5845 = vld [vmem:[%s2305 + $0x162] sm:$0xff]
  %v5846 = vld [vmem:[%s2305 + $0x16a] sm:$0xff]
  %v5847 = vld [vmem:[%s2305 + $0x172] sm:$0xff]
  %v5848 = vld [vmem:[%s2305 + $0x17a] sm:$0x3f]
  %v5849 = vmul.f32 %v5801, %v2789
  %v5850 = vmul.f32 %v5802, %v2789
  %v5851 = vmul.f32 %v5803, %v2789
  %v5852 = vmul.f32 %v5804, %v2789
  %v5853 = vmul.f32 %v5805, %v2789
  %v5854 = vmul.f32 %v5806, %v2789
  %v5855 = vmul.f32 %v5807, %v2789
  %v5856 = vmul.f32 %v5808, %v2789
  %v5857 = vmul.f32 %v5809, %v2789
  %v5858 = vmul.f32 %v5810, %v2789
  %v5859 = vmul.f32 %v5811, %v2789
  %v5860 = vmul.f32 %v5812, %v2789
  %v5861 = vmul.f32 %v5813, %v2789
  %v5862 = vmul.f32 %v5814, %v2789
  %v5863 = vmul.f32 %v5815, %v2789
  %v5864 = vmul.f32 %v5816, %v2789
  %v5865 = vmul.f32 %v5817, %v2789
  %v5866 = vmul.f32 %v5818, %v2789
  %v5867 = vmul.f32 %v5819, %v2789
  %v5868 = vmul.f32 %v5820, %v2789
  %v5869 = vmul.f32 %v5821, %v2789
  %v5870 = vmul.f32 %v5822, %v2789
  %v5871 = vmul.f32 %v5823, %v2789
  %v5872 = vmul.f32 %v5824, %v2789
  %v5873 = vmul.f32 %v5825, %v2789
  %v5874 = vmul.f32 %v5826, %v2789
  %v5875 = vmul.f32 %v5827, %v2789
  %v5876 = vmul.f32 %v5828, %v2789
  %v5877 = vmul.f32 %v5829, %v2789
  %v5878 = vmul.f32 %v5830, %v2789
  %v5879 = vmul.f32 %v5831, %v2789
  %v5880 = vmul.f32 %v5832, %v2789
  %v5881 = vmul.f32 %v5833, %v2789
  %v5882 = vmul.f32 %v5834, %v2789
  %v5883 = vmul.f32 %v5835, %v2789
  %v5884 = vmul.f32 %v5836, %v2789
  %v5885 = vmul.f32 %v5837, %v2789
  %v5886 = vmul.f32 %v5838, %v2789
  %v5887 = vmul.f32 %v5839, %v2789
  %v5888 = vmul.f32 %v5840, %v2789
  %v5889 = vmul.f32 %v5841, %v2789
  %v5890 = vmul.f32 %v5842, %v2789
  %v5891 = vmul.f32 %v5843, %v2789
  %v5892 = vmul.f32 %v5844, %v2789
  %v5893 = vmul.f32 %v5845, %v2789
  %v5894 = vmul.f32 %v5846, %v2789
  %v5895 = vmul.f32 %v5847, %v2789
  %v5896 = vmul.f32 %v5848, %v2789
  %v5897 = vadd.f32 %v5753, %v5849
  %v5898 = vadd.f32 %v5754, %v5850
  %v5899 = vadd.f32 %v5755, %v5851
  %v5900 = vadd.f32 %v5756, %v5852
  %v5901 = vadd.f32 %v5757, %v5853
  %v5902 = vadd.f32 %v5758, %v5854
  %v5903 = vadd.f32 %v5759, %v5855
  %v5904 = vadd.f32 %v5760, %v5856
  %v5905 = vadd.f32 %v5761, %v5857
  %v5906 = vadd.f32 %v5762, %v5858
  %v5907 = vadd.f32 %v5763, %v5859
  %v5908 = vadd.f32 %v5764, %v5860
  %v5909 = vadd.f32 %v5765, %v5861
  %v5910 = vadd.f32 %v5766, %v5862
  %v5911 = vadd.f32 %v5767, %v5863
  %v5912 = vadd.f32 %v5768, %v5864
  %v5913 = vadd.f32 %v5769, %v5865
  %v5914 = vadd.f32 %v5770, %v5866
  %v5915 = vadd.f32 %v5771, %v5867
  %v5916 = vadd.f32 %v5772, %v5868
  %v5917 = vadd.f32 %v5773, %v5869
  %v5918 = vadd.f32 %v5774, %v5870
  %v5919 = vadd.f32 %v5775, %v5871
  %v5920 = vadd.f32 %v5776, %v5872
  %v5921 = vadd.f32 %v5777, %v5873
  %v5922 = vadd.f32 %v5778, %v5874
  %v5923 = vadd.f32 %v5779, %v5875
  %v5924 = vadd.f32 %v5780, %v5876
  %v5925 = vadd.f32 %v5781, %v5877
  %v5926 = vadd.f32 %v5782, %v5878
  %v5927 = vadd.f32 %v5783, %v5879
  %v5928 = vadd.f32 %v5784, %v5880
  %v5929 = vadd.f32 %v5785, %v5881
  %v5930 = vadd.f32 %v5786, %v5882
  %v5931 = vadd.f32 %v5787, %v5883
  %v5932 = vadd.f32 %v5788, %v5884
  %v5933 = vadd.f32 %v5789, %v5885
  %v5934 = vadd.f32 %v5790, %v5886
  %v5935 = vadd.f32 %v5791, %v5887
  %v5936 = vadd.f32 %v5792, %v5888
  %v5937 = vadd.f32 %v5793, %v5889
  %v5938 = vadd.f32 %v5794, %v5890
  %v5939 = vadd.f32 %v5795, %v5891
  %v5940 = vadd.f32 %v5796, %v5892
  %v5941 = vadd.f32 %v5797, %v5893
  %v5942 = vadd.f32 %v5798, %v5894
  %v5943 = vadd.f32 %v5799, %v5895
  %v5944 = vadd.f32 %v5800, %v5896
  %v5945 = vmul.f32 %v3033, %v2935
  %v5946 = vmul.f32 %v3034, %v2935
  %v5947 = vmul.f32 %v3035, %v2935
  %v5948 = vmul.f32 %v3036, %v2935
  %v5949 = vmul.f32 %v3037, %v2935
  %v5950 = vmul.f32 %v3038, %v2935
  %v5951 = vmul.f32 %v3039, %v2935
  %v5952 = vmul.f32 %v3040, %v2935
  %v5953 = vmul.f32 %v3041, %v2935
  %v5954 = vmul.f32 %v3042, %v2935
  %v5955 = vmul.f32 %v3043, %v2935
  %v5956 = vmul.f32 %v3044, %v2935
  %v5957 = vmul.f32 %v3045, %v2935
  %v5958 = vmul.f32 %v3046, %v2935
  %v5959 = vmul.f32 %v3047, %v2935
  %v5960 = vmul.f32 %v3048, %v2935
  %v5961 = vmul.f32 %v3049, %v2935
  %v5962 = vmul.f32 %v3050, %v2935
  %v5963 = vmul.f32 %v3051, %v2935
  %v5964 = vmul.f32 %v3052, %v2935
  %v5965 = vmul.f32 %v3053, %v2935
  %v5966 = vmul.f32 %v3054, %v2935
  %v5967 = vmul.f32 %v3055, %v2935
  %v5968 = vmul.f32 %v3056, %v2935
  %v5969 = vmul.f32 %v3057, %v2935
  %v5970 = vmul.f32 %v3058, %v2935
  %v5971 = vmul.f32 %v3059, %v2935
  %v5972 = vmul.f32 %v3060, %v2935
  %v5973 = vmul.f32 %v3061, %v2935
  %v5974 = vmul.f32 %v3062, %v2935
  %v5975 = vmul.f32 %v3063, %v2935
  %v5976 = vmul.f32 %v3064, %v2935
  %v5977 = vmul.f32 %v3065, %v2935
  %v5978 = vmul.f32 %v3066, %v2935
  %v5979 = vmul.f32 %v3067, %v2935
  %v5980 = vmul.f32 %v3068, %v2935
  %v5981 = vmul.f32 %v3069, %v2935
  %v5982 = vmul.f32 %v3070, %v2935
  %v5983 = vmul.f32 %v3071, %v2935
  %v5984 = vmul.f32 %v3072, %v2935
  %v5985 = vmul.f32 %v3073, %v2935
  %v5986 = vmul.f32 %v3074, %v2935
  %v5987 = vmul.f32 %v3075, %v2935
  %v5988 = vmul.f32 %v3076, %v2935
  %v5989 = vmul.f32 %v3077, %v2935
  %v5990 = vmul.f32 %v3078, %v2935
  %v5991 = vmul.f32 %v3079, %v2935
  %v5992 = vmul.f32 %v3080, %v2935
  %v5993 = vadd.f32 %v5897, %v5945
  %v5994 = vadd.f32 %v5898, %v5946
  %v5995 = vadd.f32 %v5899, %v5947
  %v5996 = vadd.f32 %v5900, %v5948
  %v5997 = vadd.f32 %v5901, %v5949
  %v5998 = vadd.f32 %v5902, %v5950
  %v5999 = vadd.f32 %v5903, %v5951
  %v6000 = vadd.f32 %v5904, %v5952
  %v6001 = vadd.f32 %v5905, %v5953
  %v6002 = vadd.f32 %v5906, %v5954
  %v6003 = vadd.f32 %v5907, %v5955
  %v6004 = vadd.f32 %v5908, %v5956
  %v6005 = vadd.f32 %v5909, %v5957
  %v6006 = vadd.f32 %v5910, %v5958
  %v6007 = vadd.f32 %v5911, %v5959
  %v6008 = vadd.f32 %v5912, %v5960
  %v6009 = vadd.f32 %v5913, %v5961
  %v6010 = vadd.f32 %v5914, %v5962
  %v6011 = vadd.f32 %v5915, %v5963
  %v6012 = vadd.f32 %v5916, %v5964
  %v6013 = vadd.f32 %v5917, %v5965
  %v6014 = vadd.f32 %v5918, %v5966
  %v6015 = vadd.f32 %v5919, %v5967
  %v6016 = vadd.f32 %v5920, %v5968
  %v6017 = vadd.f32 %v5921, %v5969
  %v6018 = vadd.f32 %v5922, %v5970
  %v6019 = vadd.f32 %v5923, %v5971
  %v6020 = vadd.f32 %v5924, %v5972
  %v6021 = vadd.f32 %v5925, %v5973
  %v6022 = vadd.f32 %v5926, %v5974
  %v6023 = vadd.f32 %v5927, %v5975
  %v6024 = vadd.f32 %v5928, %v5976
  %v6025 = vadd.f32 %v5929, %v5977
  %v6026 = vadd.f32 %v5930, %v5978
  %v6027 = vadd.f32 %v5931, %v5979
  %v6028 = vadd.f32 %v5932, %v5980
  %v6029 = vadd.f32 %v5933, %v5981
  %v6030 = vadd.f32 %v5934, %v5982
  %v6031 = vadd.f32 %v5935, %v5983
  %v6032 = vadd.f32 %v5936, %v5984
  %v6033 = vadd.f32 %v5937, %v5985
  %v6034 = vadd.f32 %v5938, %v5986
  %v6035 = vadd.f32 %v5939, %v5987
  %v6036 = vadd.f32 %v5940, %v5988
  %v6037 = vadd.f32 %v5941, %v5989
  %v6038 = vadd.f32 %v5942, %v5990
  %v6039 = vadd.f32 %v5943, %v5991
  %v6040 = vadd.f32 %v5944, %v5992
  %v6041 = vmul.f32 %v3178, %v3081
  %v6042 = vmul.f32 %v3179, %v3081
  %v6043 = vmul.f32 %v3180, %v3081
  %v6044 = vmul.f32 %v3181, %v3081
  %v6045 = vmul.f32 %v3182, %v3081
  %v6046 = vmul.f32 %v3183, %v3081
  %v6047 = vmul.f32 %v3184, %v3081
  %v6048 = vmul.f32 %v3185, %v3081
  %v6049 = vmul.f32 %v3186, %v3081
  %v6050 = vmul.f32 %v3187, %v3081
  %v6051 = vmul.f32 %v3188, %v3081
  %v6052 = vmul.f32 %v3189, %v3081
  %v6053 = vmul.f32 %v3190, %v3081
  %v6054 = vmul.f32 %v3191, %v3081
  %v6055 = vmul.f32 %v3192, %v3081
  %v6056 = vmul.f32 %v3193, %v3081
  %v6057 = vmul.f32 %v3194, %v3081
  %v6058 = vmul.f32 %v3195, %v3081
  %v6059 = vmul.f32 %v3196, %v3081
  %v6060 = vmul.f32 %v3197, %v3081
  %v6061 = vmul.f32 %v3198, %v3081
  %v6062 = vmul.f32 %v3199, %v3081
  %v6063 = vmul.f32 %v3200, %v3081
  %v6064 = vmul.f32 %v3201, %v3081
  %v6065 = vmul.f32 %v3202, %v3081
  %v6066 = vmul.f32 %v3203, %v3081
  %v6067 = vmul.f32 %v3204, %v3081
  %v6068 = vmul.f32 %v3205, %v3081
  %v6069 = vmul.f32 %v3206, %v3081
  %v6070 = vmul.f32 %v3207, %v3081
  %v6071 = vmul.f32 %v3208, %v3081
  %v6072 = vmul.f32 %v3209, %v3081
  %v6073 = vmul.f32 %v3210, %v3081
  %v6074 = vmul.f32 %v3211, %v3081
  %v6075 = vmul.f32 %v3212, %v3081
  %v6076 = vmul.f32 %v3213, %v3081
  %v6077 = vmul.f32 %v3214, %v3081
  %v6078 = vmul.f32 %v3215, %v3081
  %v6079 = vmul.f32 %v3216, %v3081
  %v6080 = vmul.f32 %v3217, %v3081
  %v6081 = vmul.f32 %v3218, %v3081
  %v6082 = vmul.f32 %v3219, %v3081
  %v6083 = vmul.f32 %v3220, %v3081
  %v6084 = vmul.f32 %v3221, %v3081
  %v6085 = vmul.f32 %v3222, %v3081
  %v6086 = vmul.f32 %v3223, %v3081
  %v6087 = vmul.f32 %v3224, %v3081
  %v6088 = vmul.f32 %v3225, %v3081
  %v6089 = vadd.f32 %v5993, %v6041
  %v6090 = vadd.f32 %v5994, %v6042
  %v6091 = vadd.f32 %v5995, %v6043
  %v6092 = vadd.f32 %v5996, %v6044
  %v6093 = vadd.f32 %v5997, %v6045
  %v6094 = vadd.f32 %v5998, %v6046
  %v6095 = vadd.f32 %v5999, %v6047
  %v6096 = vadd.f32 %v6000, %v6048
  %v6097 = vadd.f32 %v6001, %v6049
  %v6098 = vadd.f32 %v6002, %v6050
  %v6099 = vadd.f32 %v6003, %v6051
  %v6100 = vadd.f32 %v6004, %v6052
  %v6101 = vadd.f32 %v6005, %v6053
  %v6102 = vadd.f32 %v6006, %v6054
  %v6103 = vadd.f32 %v6007, %v6055
  %v6104 = vadd.f32 %v6008, %v6056
  %v6105 = vadd.f32 %v6009, %v6057
  %v6106 = vadd.f32 %v6010, %v6058
  %v6107 = vadd.f32 %v6011, %v6059
  %v6108 = vadd.f32 %v6012, %v6060
  %v6109 = vadd.f32 %v6013, %v6061
  %v6110 = vadd.f32 %v6014, %v6062
  %v6111 = vadd.f32 %v6015, %v6063
  %v6112 = vadd.f32 %v6016, %v6064
  %v6113 = vadd.f32 %v6017, %v6065
  %v6114 = vadd.f32 %v6018, %v6066
  %v6115 = vadd.f32 %v6019, %v6067
  %v6116 = vadd.f32 %v6020, %v6068
  %v6117 = vadd.f32 %v6021, %v6069
  %v6118 = vadd.f32 %v6022, %v6070
  %v6119 = vadd.f32 %v6023, %v6071
  %v6120 = vadd.f32 %v6024, %v6072
  %v6121 = vadd.f32 %v6025, %v6073
  %v6122 = vadd.f32 %v6026, %v6074
  %v6123 = vadd.f32 %v6027, %v6075
  %v6124 = vadd.f32 %v6028, %v6076
  %v6125 = vadd.f32 %v6029, %v6077
  %v6126 = vadd.f32 %v6030, %v6078
  %v6127 = vadd.f32 %v6031, %v6079
  %v6128 = vadd.f32 %v6032, %v6080
  %v6129 = vadd.f32 %v6033, %v6081
  %v6130 = vadd.f32 %v6034, %v6082
  %v6131 = vadd.f32 %v6035, %v6083
  %v6132 = vadd.f32 %v6036, %v6084
  %v6133 = vadd.f32 %v6037, %v6085
  %v6134 = vadd.f32 %v6038, %v6086
  %v6135 = vadd.f32 %v6039, %v6087
  %v6136 = vadd.f32 %v6040, %v6088
  %v6137 = vmul.f32 %v3323, %v3226
  %v6138 = vmul.f32 %v3324, %v3226
  %v6139 = vmul.f32 %v3325, %v3226
  %v6140 = vmul.f32 %v3326, %v3226
  %v6141 = vmul.f32 %v3327, %v3226
  %v6142 = vmul.f32 %v3328, %v3226
  %v6143 = vmul.f32 %v3329, %v3226
  %v6144 = vmul.f32 %v3330, %v3226
  %v6145 = vmul.f32 %v3331, %v3226
  %v6146 = vmul.f32 %v3332, %v3226
  %v6147 = vmul.f32 %v3333, %v3226
  %v6148 = vmul.f32 %v3334, %v3226
  %v6149 = vmul.f32 %v3335, %v3226
  %v6150 = vmul.f32 %v3336, %v3226
  %v6151 = vmul.f32 %v3337, %v3226
  %v6152 = vmul.f32 %v3338, %v3226
  %v6153 = vmul.f32 %v3339, %v3226
  %v6154 = vmul.f32 %v3340, %v3226
  %v6155 = vmul.f32 %v3341, %v3226
  %v6156 = vmul.f32 %v3342, %v3226
  %v6157 = vmul.f32 %v3343, %v3226
  %v6158 = vmul.f32 %v3344, %v3226
  %v6159 = vmul.f32 %v3345, %v3226
  %v6160 = vmul.f32 %v3346, %v3226
  %v6161 = vmul.f32 %v3347, %v3226
  %v6162 = vmul.f32 %v3348, %v3226
  %v6163 = vmul.f32 %v3349, %v3226
  %v6164 = vmul.f32 %v3350, %v3226
  %v6165 = vmul.f32 %v3351, %v3226
  %v6166 = vmul.f32 %v3352, %v3226
  %v6167 = vmul.f32 %v3353, %v3226
  %v6168 = vmul.f32 %v3354, %v3226
  %v6169 = vmul.f32 %v3355, %v3226
  %v6170 = vmul.f32 %v3356, %v3226
  %v6171 = vmul.f32 %v3357, %v3226
  %v6172 = vmul.f32 %v3358, %v3226
  %v6173 = vmul.f32 %v3359, %v3226
  %v6174 = vmul.f32 %v3360, %v3226
  %v6175 = vmul.f32 %v3361, %v3226
  %v6176 = vmul.f32 %v3362, %v3226
  %v6177 = vmul.f32 %v3363, %v3226
  %v6178 = vmul.f32 %v3364, %v3226
  %v6179 = vmul.f32 %v3365, %v3226
  %v6180 = vmul.f32 %v3366, %v3226
  %v6181 = vmul.f32 %v3367, %v3226
  %v6182 = vmul.f32 %v3368, %v3226
  %v6183 = vmul.f32 %v3369, %v3226
  %v6184 = vmul.f32 %v3370, %v3226
  %v6185 = vadd.f32 %v6089, %v6137
  %v6186 = vadd.f32 %v6090, %v6138
  %v6187 = vadd.f32 %v6091, %v6139
  %v6188 = vadd.f32 %v6092, %v6140
  %v6189 = vadd.f32 %v6093, %v6141
  %v6190 = vadd.f32 %v6094, %v6142
  %v6191 = vadd.f32 %v6095, %v6143
  %v6192 = vadd.f32 %v6096, %v6144
  %v6193 = vadd.f32 %v6097, %v6145
  %v6194 = vadd.f32 %v6098, %v6146
  %v6195 = vadd.f32 %v6099, %v6147
  %v6196 = vadd.f32 %v6100, %v6148
  %v6197 = vadd.f32 %v6101, %v6149
  %v6198 = vadd.f32 %v6102, %v6150
  %v6199 = vadd.f32 %v6103, %v6151
  %v6200 = vadd.f32 %v6104, %v6152
  %v6201 = vadd.f32 %v6105, %v6153
  %v6202 = vadd.f32 %v6106, %v6154
  %v6203 = vadd.f32 %v6107, %v6155
  %v6204 = vadd.f32 %v6108, %v6156
  %v6205 = vadd.f32 %v6109, %v6157
  %v6206 = vadd.f32 %v6110, %v6158
  %v6207 = vadd.f32 %v6111, %v6159
  %v6208 = vadd.f32 %v6112, %v6160
  %v6209 = vadd.f32 %v6113, %v6161
  %v6210 = vadd.f32 %v6114, %v6162
  %v6211 = vadd.f32 %v6115, %v6163
  %v6212 = vadd.f32 %v6116, %v6164
  %v6213 = vadd.f32 %v6117, %v6165
  %v6214 = vadd.f32 %v6118, %v6166
  %v6215 = vadd.f32 %v6119, %v6167
  %v6216 = vadd.f32 %v6120, %v6168
  %v6217 = vadd.f32 %v6121, %v6169
  %v6218 = vadd.f32 %v6122, %v6170
  %v6219 = vadd.f32 %v6123, %v6171
  %v6220 = vadd.f32 %v6124, %v6172
  %v6221 = vadd.f32 %v6125, %v6173
  %v6222 = vadd.f32 %v6126, %v6174
  %v6223 = vadd.f32 %v6127, %v6175
  %v6224 = vadd.f32 %v6128, %v6176
  %v6225 = vadd.f32 %v6129, %v6177
  %v6226 = vadd.f32 %v6130, %v6178
  %v6227 = vadd.f32 %v6131, %v6179
  %v6228 = vadd.f32 %v6132, %v6180
  %v6229 = vadd.f32 %v6133, %v6181
  %v6230 = vadd.f32 %v6134, %v6182
  %v6231 = vadd.f32 %v6135, %v6183
  %v6232 = vadd.f32 %v6136, %v6184
  %v6233 = vmul.f32 %v3468, %v3371
  %v6234 = vmul.f32 %v3469, %v3371
  %v6235 = vmul.f32 %v3470, %v3371
  %v6236 = vmul.f32 %v3471, %v3371
  %v6237 = vmul.f32 %v3472, %v3371
  %v6238 = vmul.f32 %v3473, %v3371
  %v6239 = vmul.f32 %v3474, %v3371
  %v6240 = vmul.f32 %v3475, %v3371
  %v6241 = vmul.f32 %v3476, %v3371
  %v6242 = vmul.f32 %v3477, %v3371
  %v6243 = vmul.f32 %v3478, %v3371
  %v6244 = vmul.f32 %v3479, %v3371
  %v6245 = vmul.f32 %v3480, %v3371
  %v6246 = vmul.f32 %v3481, %v3371
  %v6247 = vmul.f32 %v3482, %v3371
  %v6248 = vmul.f32 %v3483, %v3371
  %v6249 = vmul.f32 %v3484, %v3371
  %v6250 = vmul.f32 %v3485, %v3371
  %v6251 = vmul.f32 %v3486, %v3371
  %v6252 = vmul.f32 %v3487, %v3371
  %v6253 = vmul.f32 %v3488, %v3371
  %v6254 = vmul.f32 %v3489, %v3371
  %v6255 = vmul.f32 %v3490, %v3371
  %v6256 = vmul.f32 %v3491, %v3371
  %v6257 = vmul.f32 %v3492, %v3371
  %v6258 = vmul.f32 %v3493, %v3371
  %v6259 = vmul.f32 %v3494, %v3371
  %v6260 = vmul.f32 %v3495, %v3371
  %v6261 = vmul.f32 %v3496, %v3371
  %v6262 = vmul.f32 %v3497, %v3371
  %v6263 = vmul.f32 %v3498, %v3371
  %v6264 = vmul.f32 %v3499, %v3371
  %v6265 = vmul.f32 %v3500, %v3371
  %v6266 = vmul.f32 %v3501, %v3371
  %v6267 = vmul.f32 %v3502, %v3371
  %v6268 = vmul.f32 %v3503, %v3371
  %v6269 = vmul.f32 %v3504, %v3371
  %v6270 = vmul.f32 %v3505, %v3371
  %v6271 = vmul.f32 %v3506, %v3371
  %v6272 = vmul.f32 %v3507, %v3371
  %v6273 = vmul.f32 %v3508, %v3371
  %v6274 = vmul.f32 %v3509, %v3371
  %v6275 = vmul.f32 %v3510, %v3371
  %v6276 = vmul.f32 %v3511, %v3371
  %v6277 = vmul.f32 %v3512, %v3371
  %v6278 = vmul.f32 %v3513, %v3371
  %v6279 = vmul.f32 %v3514, %v3371
  %v6280 = vmul.f32 %v3515, %v3371
  %v6281 = vadd.f32 %v6185, %v6233
  %v6282 = vadd.f32 %v6186, %v6234
  %v6283 = vadd.f32 %v6187, %v6235
  %v6284 = vadd.f32 %v6188, %v6236
  %v6285 = vadd.f32 %v6189, %v6237
  %v6286 = vadd.f32 %v6190, %v6238
  %v6287 = vadd.f32 %v6191, %v6239
  %v6288 = vadd.f32 %v6192, %v6240
  %v6289 = vadd.f32 %v6193, %v6241
  %v6290 = vadd.f32 %v6194, %v6242
  %v6291 = vadd.f32 %v6195, %v6243
  %v6292 = vadd.f32 %v6196, %v6244
  %v6293 = vadd.f32 %v6197, %v6245
  %v6294 = vadd.f32 %v6198, %v6246
  %v6295 = vadd.f32 %v6199, %v6247
  %v6296 = vadd.f32 %v6200, %v6248
  %v6297 = vadd.f32 %v6201, %v6249
  %v6298 = vadd.f32 %v6202, %v6250
  %v6299 = vadd.f32 %v6203, %v6251
  %v6300 = vadd.f32 %v6204, %v6252
  %v6301 = vadd.f32 %v6205, %v6253
  %v6302 = vadd.f32 %v6206, %v6254
  %v6303 = vadd.f32 %v6207, %v6255
  %v6304 = vadd.f32 %v6208, %v6256
  %v6305 = vadd.f32 %v6209, %v6257
  %v6306 = vadd.f32 %v6210, %v6258
  %v6307 = vadd.f32 %v6211, %v6259
  %v6308 = vadd.f32 %v6212, %v6260
  %v6309 = vadd.f32 %v6213, %v6261
  %v6310 = vadd.f32 %v6214, %v6262
  %v6311 = vadd.f32 %v6215, %v6263
  %v6312 = vadd.f32 %v6216, %v6264
  %v6313 = vadd.f32 %v6217, %v6265
  %v6314 = vadd.f32 %v6218, %v6266
  %v6315 = vadd.f32 %v6219, %v6267
  %v6316 = vadd.f32 %v6220, %v6268
  %v6317 = vadd.f32 %v6221, %v6269
  %v6318 = vadd.f32 %v6222, %v6270
  %v6319 = vadd.f32 %v6223, %v6271
  %v6320 = vadd.f32 %v6224, %v6272
  %v6321 = vadd.f32 %v6225, %v6273
  %v6322 = vadd.f32 %v6226, %v6274
  %v6323 = vadd.f32 %v6227, %v6275
  %v6324 = vadd.f32 %v6228, %v6276
  %v6325 = vadd.f32 %v6229, %v6277
  %v6326 = vadd.f32 %v6230, %v6278
  %v6327 = vadd.f32 %v6231, %v6279
  %v6328 = vadd.f32 %v6232, %v6280
  %v6329 = vld [vmem:[%s3032 + $0x2] sm:$0xff]
  %v6330 = vld [vmem:[%s3032 + $0xa] sm:$0xff]
  %v6331 = vld [vmem:[%s3032 + $0x12] sm:$0xff]
  %v6332 = vld [vmem:[%s3032 + $0x1a] sm:$0xff]
  %v6333 = vld [vmem:[%s3032 + $0x22] sm:$0xff]
  %v6334 = vld [vmem:[%s3032 + $0x2a] sm:$0xff]
  %v6335 = vld [vmem:[%s3032 + $0x32] sm:$0xff]
  %v6336 = vld [vmem:[%s3032 + $0x3a] sm:$0x3f]
  %v6337 = vld [vmem:[%s3032 + $0x42] sm:$0xff]
  %v6338 = vld [vmem:[%s3032 + $0x4a] sm:$0xff]
  %v6339 = vld [vmem:[%s3032 + $0x52] sm:$0xff]
  %v6340 = vld [vmem:[%s3032 + $0x5a] sm:$0xff]
  %v6341 = vld [vmem:[%s3032 + $0x62] sm:$0xff]
  %v6342 = vld [vmem:[%s3032 + $0x6a] sm:$0xff]
  %v6343 = vld [vmem:[%s3032 + $0x72] sm:$0xff]
  %v6344 = vld [vmem:[%s3032 + $0x7a] sm:$0x3f]
  %v6345 = vld [vmem:[%s3032 + $0x82] sm:$0xff]
  %v6346 = vld [vmem:[%s3032 + $0x8a] sm:$0xff]
  %v6347 = vld [vmem:[%s3032 + $0x92] sm:$0xff]
  %v6348 = vld [vmem:[%s3032 + $0x9a] sm:$0xff]
  %v6349 = vld [vmem:[%s3032 + $0xa2] sm:$0xff]
  %v6350 = vld [vmem:[%s3032 + $0xaa] sm:$0xff]
  %v6351 = vld [vmem:[%s3032 + $0xb2] sm:$0xff]
  %v6352 = vld [vmem:[%s3032 + $0xba] sm:$0x3f]
  %v6353 = vld [vmem:[%s3032 + $0xc2] sm:$0xff]
  %v6354 = vld [vmem:[%s3032 + $0xca] sm:$0xff]
  %v6355 = vld [vmem:[%s3032 + $0xd2] sm:$0xff]
  %v6356 = vld [vmem:[%s3032 + $0xda] sm:$0xff]
  %v6357 = vld [vmem:[%s3032 + $0xe2] sm:$0xff]
  %v6358 = vld [vmem:[%s3032 + $0xea] sm:$0xff]
  %v6359 = vld [vmem:[%s3032 + $0xf2] sm:$0xff]
  %v6360 = vld [vmem:[%s3032 + $0xfa] sm:$0x3f]
  %v6361 = vld [vmem:[%s3032 + $0x102] sm:$0xff]
  %v6362 = vld [vmem:[%s3032 + $0x10a] sm:$0xff]
  %v6363 = vld [vmem:[%s3032 + $0x112] sm:$0xff]
  %v6364 = vld [vmem:[%s3032 + $0x11a] sm:$0xff]
  %v6365 = vld [vmem:[%s3032 + $0x122] sm:$0xff]
  %v6366 = vld [vmem:[%s3032 + $0x12a] sm:$0xff]
  %v6367 = vld [vmem:[%s3032 + $0x132] sm:$0xff]
  %v6368 = vld [vmem:[%s3032 + $0x13a] sm:$0x3f]
  %v6369 = vld [vmem:[%s3032 + $0x142] sm:$0xff]
  %v6370 = vld [vmem:[%s3032 + $0x14a] sm:$0xff]
  %v6371 = vld [vmem:[%s3032 + $0x152] sm:$0xff]
  %v6372 = vld [vmem:[%s3032 + $0x15a] sm:$0xff]
  %v6373 = vld [vmem:[%s3032 + $0x162] sm:$0xff]
  %v6374 = vld [vmem:[%s3032 + $0x16a] sm:$0xff]
  %v6375 = vld [vmem:[%s3032 + $0x172] sm:$0xff]
  %v6376 = vld [vmem:[%s3032 + $0x17a] sm:$0x3f]
  %v6377 = vmul.f32 %v6329, %v3516
  %v6378 = vmul.f32 %v6330, %v3516
  %v6379 = vmul.f32 %v6331, %v3516
  %v6380 = vmul.f32 %v6332, %v3516
  %v6381 = vmul.f32 %v6333, %v3516
  %v6382 = vmul.f32 %v6334, %v3516
  %v6383 = vmul.f32 %v6335, %v3516
  %v6384 = vmul.f32 %v6336, %v3516
  %v6385 = vmul.f32 %v6337, %v3516
  %v6386 = vmul.f32 %v6338, %v3516
  %v6387 = vmul.f32 %v6339, %v3516
  %v6388 = vmul.f32 %v6340, %v3516
  %v6389 = vmul.f32 %v6341, %v3516
  %v6390 = vmul.f32 %v6342, %v3516
  %v6391 = vmul.f32 %v6343, %v3516
  %v6392 = vmul.f32 %v6344, %v3516
  %v6393 = vmul.f32 %v6345, %v3516
  %v6394 = vmul.f32 %v6346, %v3516
  %v6395 = vmul.f32 %v6347, %v3516
  %v6396 = vmul.f32 %v6348, %v3516
  %v6397 = vmul.f32 %v6349, %v3516
  %v6398 = vmul.f32 %v6350, %v3516
  %v6399 = vmul.f32 %v6351, %v3516
  %v6400 = vmul.f32 %v6352, %v3516
  %v6401 = vmul.f32 %v6353, %v3516
  %v6402 = vmul.f32 %v6354, %v3516
  %v6403 = vmul.f32 %v6355, %v3516
  %v6404 = vmul.f32 %v6356, %v3516
  %v6405 = vmul.f32 %v6357, %v3516
  %v6406 = vmul.f32 %v6358, %v3516
  %v6407 = vmul.f32 %v6359, %v3516
  %v6408 = vmul.f32 %v6360, %v3516
  %v6409 = vmul.f32 %v6361, %v3516
  %v6410 = vmul.f32 %v6362, %v3516
  %v6411 = vmul.f32 %v6363, %v3516
  %v6412 = vmul.f32 %v6364, %v3516
  %v6413 = vmul.f32 %v6365, %v3516
  %v6414 = vmul.f32 %v6366, %v3516
  %v6415 = vmul.f32 %v6367, %v3516
  %v6416 = vmul.f32 %v6368, %v3516
  %v6417 = vmul.f32 %v6369, %v3516
  %v6418 = vmul.f32 %v6370, %v3516
  %v6419 = vmul.f32 %v6371, %v3516
  %v6420 = vmul.f32 %v6372, %v3516
  %v6421 = vmul.f32 %v6373, %v3516
  %v6422 = vmul.f32 %v6374, %v3516
  %v6423 = vmul.f32 %v6375, %v3516
  %v6424 = vmul.f32 %v6376, %v3516
  %v6425 = vadd.f32 %v6281, %v6377
  %v6426 = vadd.f32 %v6282, %v6378
  %v6427 = vadd.f32 %v6283, %v6379
  %v6428 = vadd.f32 %v6284, %v6380
  %v6429 = vadd.f32 %v6285, %v6381
  %v6430 = vadd.f32 %v6286, %v6382
  %v6431 = vadd.f32 %v6287, %v6383
  %v6432 = vadd.f32 %v6288, %v6384
  %v6433 = vadd.f32 %v6289, %v6385
  %v6434 = vadd.f32 %v6290, %v6386
  %v6435 = vadd.f32 %v6291, %v6387
  %v6436 = vadd.f32 %v6292, %v6388
  %v6437 = vadd.f32 %v6293, %v6389
  %v6438 = vadd.f32 %v6294, %v6390
  %v6439 = vadd.f32 %v6295, %v6391
  %v6440 = vadd.f32 %v6296, %v6392
  %v6441 = vadd.f32 %v6297, %v6393
  %v6442 = vadd.f32 %v6298, %v6394
  %v6443 = vadd.f32 %v6299, %v6395
  %v6444 = vadd.f32 %v6300, %v6396
  %v6445 = vadd.f32 %v6301, %v6397
  %v6446 = vadd.f32 %v6302, %v6398
  %v6447 = vadd.f32 %v6303, %v6399
  %v6448 = vadd.f32 %v6304, %v6400
  %v6449 = vadd.f32 %v6305, %v6401
  %v6450 = vadd.f32 %v6306, %v6402
  %v6451 = vadd.f32 %v6307, %v6403
  %v6452 = vadd.f32 %v6308, %v6404
  %v6453 = vadd.f32 %v6309, %v6405
  %v6454 = vadd.f32 %v6310, %v6406
  %v6455 = vadd.f32 %v6311, %v6407
  %v6456 = vadd.f32 %v6312, %v6408
  %v6457 = vadd.f32 %v6313, %v6409
  %v6458 = vadd.f32 %v6314, %v6410
  %v6459 = vadd.f32 %v6315, %v6411
  %v6460 = vadd.f32 %v6316, %v6412
  %v6461 = vadd.f32 %v6317, %v6413
  %v6462 = vadd.f32 %v6318, %v6414
  %v6463 = vadd.f32 %v6319, %v6415
  %v6464 = vadd.f32 %v6320, %v6416
  %v6465 = vadd.f32 %v6321, %v6417
  %v6466 = vadd.f32 %v6322, %v6418
  %v6467 = vadd.f32 %v6323, %v6419
  %v6468 = vadd.f32 %v6324, %v6420
  %v6469 = vadd.f32 %v6325, %v6421
  %v6470 = vadd.f32 %v6326, %v6422
  %v6471 = vadd.f32 %v6327, %v6423
  %v6472 = vadd.f32 %v6328, %v6424
  %v6473 = vadd.f32 %v6425, %v3614
  %v6474 = vadd.f32 %v6426, %v3614
  %v6475 = vadd.f32 %v6427, %v3614
  %v6476 = vadd.f32 %v6428, %v3614
  %v6477 = vadd.f32 %v6429, %v3614
  %v6478 = vadd.f32 %v6430, %v3614
  %v6479 = vadd.f32 %v6431, %v3614
  %v6480 = vadd.f32 %v6432, %v3614
  %v6481 = vadd.f32 %v6433, %v3614
  %v6482 = vadd.f32 %v6434, %v3614
  %v6483 = vadd.f32 %v6435, %v3614
  %v6484 = vadd.f32 %v6436, %v3614
  %v6485 = vadd.f32 %v6437, %v3614
  %v6486 = vadd.f32 %v6438, %v3614
  %v6487 = vadd.f32 %v6439, %v3614
  %v6488 = vadd.f32 %v6440, %v3614
  %v6489 = vadd.f32 %v6441, %v3614
  %v6490 = vadd.f32 %v6442, %v3614
  %v6491 = vadd.f32 %v6443, %v3614
  %v6492 = vadd.f32 %v6444, %v3614
  %v6493 = vadd.f32 %v6445, %v3614
  %v6494 = vadd.f32 %v6446, %v3614
  %v6495 = vadd.f32 %v6447, %v3614
  %v6496 = vadd.f32 %v6448, %v3614
  %v6497 = vadd.f32 %v6449, %v3614
  %v6498 = vadd.f32 %v6450, %v3614
  %v6499 = vadd.f32 %v6451, %v3614
  %v6500 = vadd.f32 %v6452, %v3614
  %v6501 = vadd.f32 %v6453, %v3614
  %v6502 = vadd.f32 %v6454, %v3614
  %v6503 = vadd.f32 %v6455, %v3614
  %v6504 = vadd.f32 %v6456, %v3614
  %v6505 = vadd.f32 %v6457, %v3614
  %v6506 = vadd.f32 %v6458, %v3614
  %v6507 = vadd.f32 %v6459, %v3614
  %v6508 = vadd.f32 %v6460, %v3614
  %v6509 = vadd.f32 %v6461, %v3614
  %v6510 = vadd.f32 %v6462, %v3614
  %v6511 = vadd.f32 %v6463, %v3614
  %v6512 = vadd.f32 %v6464, %v3614
  %v6513 = vadd.f32 %v6465, %v3614
  %v6514 = vadd.f32 %v6466, %v3614
  %v6515 = vadd.f32 %v6467, %v3614
  %v6516 = vadd.f32 %v6468, %v3614
  %v6517 = vadd.f32 %v6469, %v3614
  %v6518 = vadd.f32 %v6470, %v3614
  %v6519 = vadd.f32 %v6471, %v3614
  %v6520 = vadd.f32 %v6472, %v3614
  %v6521 = vmax.f32 %v6473, 0.0
  %v6522 = vmax.f32 %v6474, 0.0
  %v6523 = vmax.f32 %v6475, 0.0
  %v6524 = vmax.f32 %v6476, 0.0
  %v6525 = vmax.f32 %v6477, 0.0
  %v6526 = vmax.f32 %v6478, 0.0
  %v6527 = vmax.f32 %v6479, 0.0
  %v6528 = vmax.f32 %v6480, 0.0
  %v6529 = vmax.f32 %v6481, 0.0
  %v6530 = vmax.f32 %v6482, 0.0
  %v6531 = vmax.f32 %v6483, 0.0
  %v6532 = vmax.f32 %v6484, 0.0
  %v6533 = vmax.f32 %v6485, 0.0
  %v6534 = vmax.f32 %v6486, 0.0
  %v6535 = vmax.f32 %v6487, 0.0
  %v6536 = vmax.f32 %v6488, 0.0
  %v6537 = vmax.f32 %v6489, 0.0
  %v6538 = vmax.f32 %v6490, 0.0
  %v6539 = vmax.f32 %v6491, 0.0
  %v6540 = vmax.f32 %v6492, 0.0
  %v6541 = vmax.f32 %v6493, 0.0
  %v6542 = vmax.f32 %v6494, 0.0
  %v6543 = vmax.f32 %v6495, 0.0
  %v6544 = vmax.f32 %v6496, 0.0
  %v6545 = vmax.f32 %v6497, 0.0
  %v6546 = vmax.f32 %v6498, 0.0
  %v6547 = vmax.f32 %v6499, 0.0
  %v6548 = vmax.f32 %v6500, 0.0
  %v6549 = vmax.f32 %v6501, 0.0
  %v6550 = vmax.f32 %v6502, 0.0
  %v6551 = vmax.f32 %v6503, 0.0
  %v6552 = vmax.f32 %v6504, 0.0
  %v6553 = vmax.f32 %v6505, 0.0
  %v6554 = vmax.f32 %v6506, 0.0
  %v6555 = vmax.f32 %v6507, 0.0
  %v6556 = vmax.f32 %v6508, 0.0
  %v6557 = vmax.f32 %v6509, 0.0
  %v6558 = vmax.f32 %v6510, 0.0
  %v6559 = vmax.f32 %v6511, 0.0
  %v6560 = vmax.f32 %v6512, 0.0
  %v6561 = vmax.f32 %v6513, 0.0
  %v6562 = vmax.f32 %v6514, 0.0
  %v6563 = vmax.f32 %v6515, 0.0
  %v6564 = vmax.f32 %v6516, 0.0
  %v6565 = vmax.f32 %v6517, 0.0
  %v6566 = vmax.f32 %v6518, 0.0
  %v6567 = vmax.f32 %v6519, 0.0
  %v6568 = vmax.f32 %v6520, 0.0
  %v6569 = vmin.f32 %v6473, 0.0
  %v6570 = vmin.f32 %v6474, 0.0
  %v6571 = vmin.f32 %v6475, 0.0
  %v6572 = vmin.f32 %v6476, 0.0
  %v6573 = vmin.f32 %v6477, 0.0
  %v6574 = vmin.f32 %v6478, 0.0
  %v6575 = vmin.f32 %v6479, 0.0
  %v6576 = vmin.f32 %v6480, 0.0
  %v6577 = vmin.f32 %v6481, 0.0
  %v6578 = vmin.f32 %v6482, 0.0
  %v6579 = vmin.f32 %v6483, 0.0
  %v6580 = vmin.f32 %v6484, 0.0
  %v6581 = vmin.f32 %v6485, 0.0
  %v6582 = vmin.f32 %v6486, 0.0
  %v6583 = vmin.f32 %v6487, 0.0
  %v6584 = vmin.f32 %v6488, 0.0
  %v6585 = vmin.f32 %v6489, 0.0
  %v6586 = vmin.f32 %v6490, 0.0
  %v6587 = vmin.f32 %v6491, 0.0
  %v6588 = vmin.f32 %v6492, 0.0
  %v6589 = vmin.f32 %v6493, 0.0
  %v6590 = vmin.f32 %v6494, 0.0
  %v6591 = vmin.f32 %v6495, 0.0
  %v6592 = vmin.f32 %v6496, 0.0
  %v6593 = vmin.f32 %v6497, 0.0
  %v6594 = vmin.f32 %v6498, 0.0
  %v6595 = vmin.f32 %v6499, 0.0
  %v6596 = vmin.f32 %v6500, 0.0
  %v6597 = vmin.f32 %v6501, 0.0
  %v6598 = vmin.f32 %v6502, 0.0
  %v6599 = vmin.f32 %v6503, 0.0
  %v6600 = vmin.f32 %v6504, 0.0
  %v6601 = vmin.f32 %v6505, 0.0
  %v6602 = vmin.f32 %v6506, 0.0
  %v6603 = vmin.f32 %v6507, 0.0
  %v6604 = vmin.f32 %v6508, 0.0
  %v6605 = vmin.f32 %v6509, 0.0
  %v6606 = vmin.f32 %v6510, 0.0
  %v6607 = vmin.f32 %v6511, 0.0
  %v6608 = vmin.f32 %v6512, 0.0
  %v6609 = vmin.f32 %v6513, 0.0
  %v6610 = vmin.f32 %v6514, 0.0
  %v6611 = vmin.f32 %v6515, 0.0
  %v6612 = vmin.f32 %v6516, 0.0
  %v6613 = vmin.f32 %v6517, 0.0
  %v6614 = vmin.f32 %v6518, 0.0
  %v6615 = vmin.f32 %v6519, 0.0
  %v6616 = vmin.f32 %v6520, 0.0
  %v6617 = vmul.f32 %v3760, %v6569
  %v6618 = vmul.f32 %v3760, %v6570
  %v6619 = vmul.f32 %v3760, %v6571
  %v6620 = vmul.f32 %v3760, %v6572
  %v6621 = vmul.f32 %v3760, %v6573
  %v6622 = vmul.f32 %v3760, %v6574
  %v6623 = vmul.f32 %v3760, %v6575
  %v6624 = vmul.f32 %v3760, %v6576
  %v6625 = vmul.f32 %v3760, %v6577
  %v6626 = vmul.f32 %v3760, %v6578
  %v6627 = vmul.f32 %v3760, %v6579
  %v6628 = vmul.f32 %v3760, %v6580
  %v6629 = vmul.f32 %v3760, %v6581
  %v6630 = vmul.f32 %v3760, %v6582
  %v6631 = vmul.f32 %v3760, %v6583
  %v6632 = vmul.f32 %v3760, %v6584
  %v6633 = vmul.f32 %v3760, %v6585
  %v6634 = vmul.f32 %v3760, %v6586
  %v6635 = vmul.f32 %v3760, %v6587
  %v6636 = vmul.f32 %v3760, %v6588
  %v6637 = vmul.f32 %v3760, %v6589
  %v6638 = vmul.f32 %v3760, %v6590
  %v6639 = vmul.f32 %v3760, %v6591
  %v6640 = vmul.f32 %v3760, %v6592
  %v6641 = vmul.f32 %v3760, %v6593
  %v6642 = vmul.f32 %v3760, %v6594
  %v6643 = vmul.f32 %v3760, %v6595
  %v6644 = vmul.f32 %v3760, %v6596
  %v6645 = vmul.f32 %v3760, %v6597
  %v6646 = vmul.f32 %v3760, %v6598
  %v6647 = vmul.f32 %v3760, %v6599
  %v6648 = vmul.f32 %v3760, %v6600
  %v6649 = vmul.f32 %v3760, %v6601
  %v6650 = vmul.f32 %v3760, %v6602
  %v6651 = vmul.f32 %v3760, %v6603
  %v6652 = vmul.f32 %v3760, %v6604
  %v6653 = vmul.f32 %v3760, %v6605
  %v6654 = vmul.f32 %v3760, %v6606
  %v6655 = vmul.f32 %v3760, %v6607
  %v6656 = vmul.f32 %v3760, %v6608
  %v6657 = vmul.f32 %v3760, %v6609
  %v6658 = vmul.f32 %v3760, %v6610
  %v6659 = vmul.f32 %v3760, %v6611
  %v6660 = vmul.f32 %v3760, %v6612
  %v6661 = vmul.f32 %v3760, %v6613
  %v6662 = vmul.f32 %v3760, %v6614
  %v6663 = vmul.f32 %v3760, %v6615
  %v6664 = vmul.f32 %v3760, %v6616
  %v6665 = vadd.f32 %v6521, %v6617
  %v6666 = vadd.f32 %v6522, %v6618
  %v6667 = vadd.f32 %v6523, %v6619
  %v6668 = vadd.f32 %v6524, %v6620
  %v6669 = vadd.f32 %v6525, %v6621
  %v6670 = vadd.f32 %v6526, %v6622
  %v6671 = vadd.f32 %v6527, %v6623
  %v6672 = vadd.f32 %v6528, %v6624
  %v6673 = vadd.f32 %v6529, %v6625
  %v6674 = vadd.f32 %v6530, %v6626
  %v6675 = vadd.f32 %v6531, %v6627
  %v6676 = vadd.f32 %v6532, %v6628
  %v6677 = vadd.f32 %v6533, %v6629
  %v6678 = vadd.f32 %v6534, %v6630
  %v6679 = vadd.f32 %v6535, %v6631
  %v6680 = vadd.f32 %v6536, %v6632
  %v6681 = vadd.f32 %v6537, %v6633
  %v6682 = vadd.f32 %v6538, %v6634
  %v6683 = vadd.f32 %v6539, %v6635
  %v6684 = vadd.f32 %v6540, %v6636
  %v6685 = vadd.f32 %v6541, %v6637
  %v6686 = vadd.f32 %v6542, %v6638
  %v6687 = vadd.f32 %v6543, %v6639
  %v6688 = vadd.f32 %v6544, %v6640
  %v6689 = vadd.f32 %v6545, %v6641
  %v6690 = vadd.f32 %v6546, %v6642
  %v6691 = vadd.f32 %v6547, %v6643
  %v6692 = vadd.f32 %v6548, %v6644
  %v6693 = vadd.f32 %v6549, %v6645
  %v6694 = vadd.f32 %v6550, %v6646
  %v6695 = vadd.f32 %v6551, %v6647
  %v6696 = vadd.f32 %v6552, %v6648
  %v6697 = vadd.f32 %v6553, %v6649
  %v6698 = vadd.f32 %v6554, %v6650
  %v6699 = vadd.f32 %v6555, %v6651
  %v6700 = vadd.f32 %v6556, %v6652
  %v6701 = vadd.f32 %v6557, %v6653
  %v6702 = vadd.f32 %v6558, %v6654
  %v6703 = vadd.f32 %v6559, %v6655
  %v6704 = vadd.f32 %v6560, %v6656
  %v6705 = vadd.f32 %v6561, %v6657
  %v6706 = vadd.f32 %v6562, %v6658
  %v6707 = vadd.f32 %v6563, %v6659
  %v6708 = vadd.f32 %v6564, %v6660
  %v6709 = vadd.f32 %v6565, %v6661
  %v6710 = vadd.f32 %v6566, %v6662
  %v6711 = vadd.f32 %v6567, %v6663
  %v6712 = vadd.f32 %v6568, %v6664
  %v6713 = vmax.f32 %v6665, %v6673
  %v6714 = vmax.f32 %v6666, %v6674
  %v6715 = vmax.f32 %v6667, %v6675
  %v6716 = vmax.f32 %v6668, %v6676
  %v6717 = vmax.f32 %v6669, %v6677
  %v6718 = vmax.f32 %v6670, %v6678
  %v6719 = vmax.f32 %v6671, %v6679
  %v6720 = vmax.f32 %v6672, %v6680
  %v6721 = vmax.f32 %v3857, %v6713
  %v6722 = vmax.f32 %v3858, %v6714
  %v6723 = vmax.f32 %v3859, %v6715
  %v6724 = vmax.f32 %v3860, %v6716
  %v6725 = vmax.f32 %v3861, %v6717
  %v6726 = vmax.f32 %v3862, %v6718
  %v6727 = vmax.f32 %v3863, %v6719
  %v6728 = vmax.f32 %v3864, %v6720
  %v6729 = vmax.f32 %v6681, %v6689
  %v6730 = vmax.f32 %v6682, %v6690
  %v6731 = vmax.f32 %v6683, %v6691
  %v6732 = vmax.f32 %v6684, %v6692
  %v6733 = vmax.f32 %v6685, %v6693
  %v6734 = vmax.f32 %v6686, %v6694
  %v6735 = vmax.f32 %v6687, %v6695
  %v6736 = vmax.f32 %v6688, %v6696
  %v6737 = vmax.f32 %v3865, %v6729
  %v6738 = vmax.f32 %v3866, %v6730
  %v6739 = vmax.f32 %v3867, %v6731
  %v6740 = vmax.f32 %v3868, %v6732
  %v6741 = vmax.f32 %v3869, %v6733
  %v6742 = vmax.f32 %v3870, %v6734
  %v6743 = vmax.f32 %v3871, %v6735
  %v6744 = vmax.f32 %v3872, %v6736
  %v6745 = vmax.f32 %v6697, %v6705
  %v6746 = vmax.f32 %v6698, %v6706
  %v6747 = vmax.f32 %v6699, %v6707
  %v6748 = vmax.f32 %v6700, %v6708
  %v6749 = vmax.f32 %v6701, %v6709
  %v6750 = vmax.f32 %v6702, %v6710
  %v6751 = vmax.f32 %v6703, %v6711
  %v6752 = vmax.f32 %v6704, %v6712
  %v6753 = vmax.f32 %v3873, %v6745
  %v6754 = vmax.f32 %v3874, %v6746
  %v6755 = vmax.f32 %v3875, %v6747
  %v6756 = vmax.f32 %v3876, %v6748
  %v6757 = vmax.f32 %v3877, %v6749
  %v6758 = vmax.f32 %v3878, %v6750
  %v6759 = vmax.f32 %v3879, %v6751
  %v6760 = vmax.f32 %v3880, %v6752
  %v6761 = vpack.c.bf16 %v6721, %v6721
  %v6762 = vpack.c.bf16 %v6722, %v6722
  %v6763 = vpack.c.bf16 %v6723, %v6723
  %v6764 = vpack.c.bf16 %v6724, %v6724
  %v6765 = vpack.c.bf16 %v6725, %v6725
  %v6766 = vpack.c.bf16 %v6726, %v6726
  %v6767 = vpack.c.bf16 %v6727, %v6727
  %v6768 = vpack.c.bf16 %v6728, %v6728
  %6769 = vst [vmem:[%s5] sm:$0xf] %v6761
  %6770 = vst [vmem:[%s5 + $0x4] sm:$0xf] %v6762
  %6771 = vst [vmem:[%s5 + $0x8] sm:$0xf] %v6763
  %6772 = vst [vmem:[%s5 + $0xc] sm:$0xf] %v6764
  %6773 = vst [vmem:[%s5 + $0x10] sm:$0xf] %v6765
  %6774 = vst [vmem:[%s5 + $0x14] sm:$0xf] %v6766
  %6775 = vst [vmem:[%s5 + $0x18] sm:$0xf] %v6767
  %6776 = vst [vmem:[%s5 + $0x1c] sm:$0x7] %v6768
  %v6777 = vpack.c.bf16 %v6737, %v6737
  %v6778 = vpack.c.bf16 %v6738, %v6738
  %v6779 = vpack.c.bf16 %v6739, %v6739
  %v6780 = vpack.c.bf16 %v6740, %v6740
  %v6781 = vpack.c.bf16 %v6741, %v6741
  %v6782 = vpack.c.bf16 %v6742, %v6742
  %v6783 = vpack.c.bf16 %v6743, %v6743
  %v6784 = vpack.c.bf16 %v6744, %v6744
  %s6785 = scalar_lea.vmem %s5, 32
  %6786 = vst [vmem:[%s6785] sm:$0xf] %v6777
  %6787 = vst [vmem:[%s6785 + $0x4] sm:$0xf] %v6778
  %6788 = vst [vmem:[%s6785 + $0x8] sm:$0xf] %v6779
  %6789 = vst [vmem:[%s6785 + $0xc] sm:$0xf] %v6780
  %6790 = vst [vmem:[%s6785 + $0x10] sm:$0xf] %v6781
  %6791 = vst [vmem:[%s6785 + $0x14] sm:$0xf] %v6782
  %6792 = vst [vmem:[%s6785 + $0x18] sm:$0xf] %v6783
  %6793 = vst [vmem:[%s6785 + $0x1c] sm:$0x7] %v6784
  %v6794 = vpack.c.bf16 %v6753, %v6753
  %v6795 = vpack.c.bf16 %v6754, %v6754
  %v6796 = vpack.c.bf16 %v6755, %v6755
  %v6797 = vpack.c.bf16 %v6756, %v6756
  %v6798 = vpack.c.bf16 %v6757, %v6757
  %v6799 = vpack.c.bf16 %v6758, %v6758
  %v6800 = vpack.c.bf16 %v6759, %v6759
  %v6801 = vpack.c.bf16 %v6760, %v6760
  %s6802 = scalar_lea.vmem %s5, 64
  %6803 = vst [vmem:[%s6802] sm:$0xf] %v6794
  %6804 = vst [vmem:[%s6802 + $0x4] sm:$0xf] %v6795
  %6805 = vst [vmem:[%s6802 + $0x8] sm:$0xf] %v6796
  %6806 = vst [vmem:[%s6802 + $0xc] sm:$0xf] %v6797
  %6807 = vst [vmem:[%s6802 + $0x10] sm:$0xf] %v6798
  %6808 = vst [vmem:[%s6802 + $0x14] sm:$0xf] %v6799
  %6809 = vst [vmem:[%s6802 + $0x18] sm:$0xf] %v6800
  %6810 = vst [vmem:[%s6802 + $0x1c] sm:$0x7] %v6801
  // Predicated region
  $region22: #{embedding_net_vggish_small.2} parent=0 // pred_check
    _
  $region23: #{embedding_net_vggish_small.2} parent=0 // pred_check_branch
    %6812 = sbr.rel (0) target = $region25
  $region24: #{embedding_net_vggish_small.2} parent=0 // pred_region
    _
  $region25: #{embedding_net_vggish_small.2} parent=0 // pred_fallthru
    _
  // Predicated region
  $region26: #{embedding_net_vggish_small.2} parent=0 // pred_check
    _
  $region27: #{embedding_net_vggish_small.2} parent=0 // pred_check_branch
    %6814 = sbr.rel (0) target = $region29
  $region28: #{embedding_net_vggish_small.2} parent=0 // pred_region
    _
  $region29: #{embedding_net_vggish_small.2} parent=0 // pred_fallthru
    _

// kernel: embedding_net_vggish_small.3
$region0: #{embedding_net_vggish_small.3}
  #allocation0 [shape = 'u32[]', space=smem, size = 0x4, offset = 0x4, fixed_abs, tag = 'smem constant byte address 0x4 - core index']
  #allocation1 [shape = 'u32[72,128]{1,0:T(1,128)}', space=vmem, size = 0x9000, scoped, tag = 'internal scratch']
  #allocation2 [shape = 'f32[1]{0:T(128)S(6)}', space=smem, size = 0x200, scoped, tag = 'scoped memory for embedding_net_vggish_small.3']
  %s0 = inlined_call_operand.<no memory space> [shape: f32[1], index: 0, kind: input, shape index: {}]
  %s1 = inlined_call_operand.vmem [shape: bf16[4,5952], index: 1, kind: input, shape index: {}]
  %s2 = inlined_call_operand.vmem [shape: bf16[5952,256], index: 2, kind: input, shape index: {}]
  %s3 = inlined_call_operand.vmem [shape: f32[1,256], index: 3, kind: input, shape index: {}]
  %s4 = inlined_call_operand.vmem [shape: f32[256,2], index: 4, kind: input, shape index: {}]
  %s5 = inlined_call_operand.vmem [shape: f32[1,2], index: 5, kind: input, shape index: {}]
  %s6 = inlined_call_operand.vmem [shape: f32[4,2], index: 6, kind: output, shape index: {}]
  %s7 = sld [smem:[#allocation0]]
  $region34: #{embedding_net_vggish_small.3} parent=0
    _
  %s9 = ssub.s32 1, %s7
  %s10 = scalar_select 0, %s9, %s7
  %11 = sst [smem:[#allocation2]] %s0
  // Predicated region
  $region2: #{embedding_net_vggish_small.3} parent=0 // pred_check
    _
  $region3: #{embedding_net_vggish_small.3} parent=0 // pred_check_branch
    %13 = sbr.rel (0) target = $region5
  $region4: #{embedding_net_vggish_small.3} parent=0 // pred_region
    _
  $region5: #{embedding_net_vggish_small.3} parent=0 // pred_fallthru
    _
  // Predicated region
  $region6: #{embedding_net_vggish_small.3} parent=0 // pred_check
    _
  $region7: #{embedding_net_vggish_small.3} parent=0 // pred_check_branch
    %15 = sbr.rel (0) target = $region9
  $region8: #{embedding_net_vggish_small.3} parent=0 // pred_region
    _
  $region9: #{embedding_net_vggish_small.3} parent=0 // pred_fallthru
    _
  // Predicated region
  $region10: #{embedding_net_vggish_small.3} parent=0 // pred_check
    _
  $region11: #{embedding_net_vggish_small.3} parent=0 // pred_check_branch
    %17 = sbr.rel (0) target = $region13
  $region12: #{embedding_net_vggish_small.3} parent=0 // pred_region
    _
  $region13: #{embedding_net_vggish_small.3} parent=0 // pred_fallthru
    _
  // Predicated region
  $region14: #{embedding_net_vggish_small.3} parent=0 // pred_check
    _
  $region15: #{embedding_net_vggish_small.3} parent=0 // pred_check_branch
    %19 = sbr.rel (0) target = $region17
  $region16: #{embedding_net_vggish_small.3} parent=0 // pred_region
    _
  $region17: #{embedding_net_vggish_small.3} parent=0 // pred_fallthru
    _
  // Predicated region
  $region18: #{embedding_net_vggish_small.3} parent=0 // pred_check
    _
  $region19: #{embedding_net_vggish_small.3} parent=0 // pred_check_branch
    %21 = sbr.rel (0) target = $region21
  $region20: #{embedding_net_vggish_small.3} parent=0 // pred_region
    _
  $region21: #{embedding_net_vggish_small.3} parent=0 // pred_fallthru
    _
  // Predicated region
  $region22: #{embedding_net_vggish_small.3} parent=0 // pred_check
    _
  $region23: #{embedding_net_vggish_small.3} parent=0 // pred_check_branch
    %23 = sbr.rel (0) target = $region25
  $region24: #{embedding_net_vggish_small.3} parent=0 // pred_region
    _
  $region25: #{embedding_net_vggish_small.3} parent=0 // pred_fallthru
    _
  %v25 = vld [vmem:[%s1] sm:$0xff]
  %v26 = vld [vmem:[%s1 + $0x8] sm:$0xff]
  %v27 = vld [vmem:[%s1 + $0x10] sm:$0xff]
  %v28 = vld [vmem:[%s1 + $0x18] sm:$0xff]
  %v29 = vld [vmem:[%s1 + $0x20] sm:$0xff]
  %v30 = vld [vmem:[%s1 + $0x28] sm:$0xff]
  %v31 = vld [vmem:[%s1 + $0x30] sm:$0xff]
  %v32 = vld [vmem:[%s1 + $0x38] sm:$0xff]
  %v33 = vld [vmem:[%s1 + $0x40] sm:$0xff]
  %v34 = vld [vmem:[%s1 + $0x48] sm:$0xff]
  %v35 = vld [vmem:[%s1 + $0x50] sm:$0xff]
  %v36 = vld [vmem:[%s1 + $0x58] sm:$0x3f]
  %v37 = vld [vmem:[%s2] sm:$0xff]
  %v38 = vld [vmem:[%s2 + $0x8] sm:$0xff]
  %v39 = vld [vmem:[%s2 + $0x10] sm:$0xff]
  %v40 = vld [vmem:[%s2 + $0x18] sm:$0xff]
  %v41 = vld [vmem:[%s2 + $0x20] sm:$0xff]
  %v42 = vld [vmem:[%s2 + $0x28] sm:$0xff]
  %v43 = vld [vmem:[%s2 + $0x30] sm:$0xff]
  %v44 = vld [vmem:[%s2 + $0x38] sm:$0xff]
  %v45 = vld [vmem:[%s2 + $0x40] sm:$0xff]
  %v46 = vld [vmem:[%s2 + $0x48] sm:$0xff]
  %v47 = vld [vmem:[%s2 + $0x50] sm:$0xff]
  %v48 = vld [vmem:[%s2 + $0x58] sm:$0xff]
  %v49 = vld [vmem:[%s2 + $0x60] sm:$0xff]
  %v50 = vld [vmem:[%s2 + $0x68] sm:$0xff]
  %v51 = vld [vmem:[%s2 + $0x70] sm:$0xff]
  %v52 = vld [vmem:[%s2 + $0x78] sm:$0xff]
  %v53 = vld [vmem:[%s2 + $0x80] sm:$0xff]
  %v54 = vld [vmem:[%s2 + $0x88] sm:$0xff]
  %v55 = vld [vmem:[%s2 + $0x90] sm:$0xff]
  %v56 = vld [vmem:[%s2 + $0x98] sm:$0xff]
  %v57 = vld [vmem:[%s2 + $0xa0] sm:$0xff]
  %v58 = vld [vmem:[%s2 + $0xa8] sm:$0xff]
  %v59 = vld [vmem:[%s2 + $0xb0] sm:$0xff]
  %v60 = vld [vmem:[%s2 + $0xb8] sm:$0xff]
  %v61 = vld [vmem:[%s2 + $0xc0] sm:$0xff]
  %v62 = vld [vmem:[%s2 + $0xc8] sm:$0xff]
  %v63 = vld [vmem:[%s2 + $0xd0] sm:$0xff]
  %v64 = vld [vmem:[%s2 + $0xd8] sm:$0xff]
  %v65 = vld [vmem:[%s2 + $0xe0] sm:$0xff]
  %v66 = vld [vmem:[%s2 + $0xe8] sm:$0xff]
  %v67 = vld [vmem:[%s2 + $0xf0] sm:$0xff]
  %v68 = vld [vmem:[%s2 + $0xf8] sm:$0xff]
  %v69 = vld [vmem:[%s2 + $0x100] sm:$0xff]
  %v70 = vld [vmem:[%s2 + $0x108] sm:$0xff]
  %v71 = vld [vmem:[%s2 + $0x110] sm:$0xff]
  %v72 = vld [vmem:[%s2 + $0x118] sm:$0xff]
  %v73 = vld [vmem:[%s2 + $0x120] sm:$0xff]
  %v74 = vld [vmem:[%s2 + $0x128] sm:$0xff]
  %v75 = vld [vmem:[%s2 + $0x130] sm:$0xff]
  %v76 = vld [vmem:[%s2 + $0x138] sm:$0xff]
  %v77 = vld [vmem:[%s2 + $0x140] sm:$0xff]
  %v78 = vld [vmem:[%s2 + $0x148] sm:$0xff]
  %v79 = vld [vmem:[%s2 + $0x150] sm:$0xff]
  %v80 = vld [vmem:[%s2 + $0x158] sm:$0xff]
  %v81 = vld [vmem:[%s2 + $0x160] sm:$0xff]
  %v82 = vld [vmem:[%s2 + $0x168] sm:$0xff]
  %v83 = vld [vmem:[%s2 + $0x170] sm:$0xff]
  %v84 = vld [vmem:[%s2 + $0x178] sm:$0xff]
  %v85 = vld [vmem:[%s2 + $0x180] sm:$0xff]
  %v86 = vld [vmem:[%s2 + $0x188] sm:$0xff]
  %v87 = vld [vmem:[%s2 + $0x190] sm:$0xff]
  %v88 = vld [vmem:[%s2 + $0x198] sm:$0xff]
  %v89 = vld [vmem:[%s2 + $0x1a0] sm:$0xff]
  %v90 = vld [vmem:[%s2 + $0x1a8] sm:$0xff]
  %v91 = vld [vmem:[%s2 + $0x1b0] sm:$0xff]
  %v92 = vld [vmem:[%s2 + $0x1b8] sm:$0xff]
  %v93 = vld [vmem:[%s2 + $0x1c0] sm:$0xff]
  %v94 = vld [vmem:[%s2 + $0x1c8] sm:$0xff]
  %v95 = vld [vmem:[%s2 + $0x1d0] sm:$0xff]
  %v96 = vld [vmem:[%s2 + $0x1d8] sm:$0xff]
  %v97 = vld [vmem:[%s2 + $0x1e0] sm:$0xff]
  %v98 = vld [vmem:[%s2 + $0x1e8] sm:$0xff]
  %v99 = vld [vmem:[%s2 + $0x1f0] sm:$0xff]
  %v100 = vld [vmem:[%s2 + $0x1f8] sm:$0xff]
  %v101 = vld [vmem:[%s2 + $0x200] sm:$0xff]
  %v102 = vld [vmem:[%s2 + $0x208] sm:$0xff]
  %v103 = vld [vmem:[%s2 + $0x210] sm:$0xff]
  %v104 = vld [vmem:[%s2 + $0x218] sm:$0xff]
  %v105 = vld [vmem:[%s2 + $0x220] sm:$0xff]
  %v106 = vld [vmem:[%s2 + $0x228] sm:$0xff]
  %v107 = vld [vmem:[%s2 + $0x230] sm:$0xff]
  %v108 = vld [vmem:[%s2 + $0x238] sm:$0xff]
  %v109 = vld [vmem:[%s2 + $0x240] sm:$0xff]
  %v110 = vld [vmem:[%s2 + $0x248] sm:$0xff]
  %v111 = vld [vmem:[%s2 + $0x250] sm:$0xff]
  %v112 = vld [vmem:[%s2 + $0x258] sm:$0xff]
  %v113 = vld [vmem:[%s2 + $0x260] sm:$0xff]
  %v114 = vld [vmem:[%s2 + $0x268] sm:$0xff]
  %v115 = vld [vmem:[%s2 + $0x270] sm:$0xff]
  %v116 = vld [vmem:[%s2 + $0x278] sm:$0xff]
  %v117 = vld [vmem:[%s2 + $0x280] sm:$0xff]
  %v118 = vld [vmem:[%s2 + $0x288] sm:$0xff]
  %v119 = vld [vmem:[%s2 + $0x290] sm:$0xff]
  %v120 = vld [vmem:[%s2 + $0x298] sm:$0xff]
  %v121 = vld [vmem:[%s2 + $0x2a0] sm:$0xff]
  %v122 = vld [vmem:[%s2 + $0x2a8] sm:$0xff]
  %v123 = vld [vmem:[%s2 + $0x2b0] sm:$0xff]
  %v124 = vld [vmem:[%s2 + $0x2b8] sm:$0xff]
  %v125 = vld [vmem:[%s2 + $0x2c0] sm:$0xff]
  %v126 = vld [vmem:[%s2 + $0x2c8] sm:$0xff]
  %v127 = vld [vmem:[%s2 + $0x2d0] sm:$0xff]
  %v128 = vld [vmem:[%s2 + $0x2d8] sm:$0xff]
  %v129 = vld [vmem:[%s2 + $0x2e0] sm:$0xff]
  %v130 = vld [vmem:[%s2 + $0x2e8] sm:$0xff]
  %v131 = vld [vmem:[%s2 + $0x2f0] sm:$0xff]
  %v132 = vld [vmem:[%s2 + $0x2f8] sm:$0xff]
  %v133 = vld [vmem:[%s2 + $0x300] sm:$0xff]
  %v134 = vld [vmem:[%s2 + $0x308] sm:$0xff]
  %v135 = vld [vmem:[%s2 + $0x310] sm:$0xff]
  %v136 = vld [vmem:[%s2 + $0x318] sm:$0xff]
  %v137 = vld [vmem:[%s2 + $0x320] sm:$0xff]
  %v138 = vld [vmem:[%s2 + $0x328] sm:$0xff]
  %v139 = vld [vmem:[%s2 + $0x330] sm:$0xff]
  %v140 = vld [vmem:[%s2 + $0x338] sm:$0xff]
  %v141 = vld [vmem:[%s2 + $0x340] sm:$0xff]
  %v142 = vld [vmem:[%s2 + $0x348] sm:$0xff]
  %v143 = vld [vmem:[%s2 + $0x350] sm:$0xff]
  %v144 = vld [vmem:[%s2 + $0x358] sm:$0xff]
  %v145 = vld [vmem:[%s2 + $0x360] sm:$0xff]
  %v146 = vld [vmem:[%s2 + $0x368] sm:$0xff]
  %v147 = vld [vmem:[%s2 + $0x370] sm:$0xff]
  %v148 = vld [vmem:[%s2 + $0x378] sm:$0xff]
  %v149 = vld [vmem:[%s2 + $0x380] sm:$0xff]
  %v150 = vld [vmem:[%s2 + $0x388] sm:$0xff]
  %v151 = vld [vmem:[%s2 + $0x390] sm:$0xff]
  %v152 = vld [vmem:[%s2 + $0x398] sm:$0xff]
  %v153 = vld [vmem:[%s2 + $0x3a0] sm:$0xff]
  %v154 = vld [vmem:[%s2 + $0x3a8] sm:$0xff]
  %v155 = vld [vmem:[%s2 + $0x3b0] sm:$0xff]
  %v156 = vld [vmem:[%s2 + $0x3b8] sm:$0xff]
  %v157 = vld [vmem:[%s2 + $0x3c0] sm:$0xff]
  %v158 = vld [vmem:[%s2 + $0x3c8] sm:$0xff]
  %v159 = vld [vmem:[%s2 + $0x3d0] sm:$0xff]
  %v160 = vld [vmem:[%s2 + $0x3d8] sm:$0xff]
  %v161 = vld [vmem:[%s2 + $0x3e0] sm:$0xff]
  %v162 = vld [vmem:[%s2 + $0x3e8] sm:$0xff]
  %v163 = vld [vmem:[%s2 + $0x3f0] sm:$0xff]
  %v164 = vld [vmem:[%s2 + $0x3f8] sm:$0xff]
  %v165 = vld [vmem:[%s2 + $0x400] sm:$0xff]
  %v166 = vld [vmem:[%s2 + $0x408] sm:$0xff]
  %v167 = vld [vmem:[%s2 + $0x410] sm:$0xff]
  %v168 = vld [vmem:[%s2 + $0x418] sm:$0xff]
  %v169 = vld [vmem:[%s2 + $0x420] sm:$0xff]
  %v170 = vld [vmem:[%s2 + $0x428] sm:$0xff]
  %v171 = vld [vmem:[%s2 + $0x430] sm:$0xff]
  %v172 = vld [vmem:[%s2 + $0x438] sm:$0xff]
  %v173 = vld [vmem:[%s2 + $0x440] sm:$0xff]
  %v174 = vld [vmem:[%s2 + $0x448] sm:$0xff]
  %v175 = vld [vmem:[%s2 + $0x450] sm:$0xff]
  %v176 = vld [vmem:[%s2 + $0x458] sm:$0xff]
  %v177 = vld [vmem:[%s2 + $0x460] sm:$0xff]
  %v178 = vld [vmem:[%s2 + $0x468] sm:$0xff]
  %v179 = vld [vmem:[%s2 + $0x470] sm:$0xff]
  %v180 = vld [vmem:[%s2 + $0x478] sm:$0xff]
  %v181 = vld [vmem:[%s2 + $0x480] sm:$0xff]
  %v182 = vld [vmem:[%s2 + $0x488] sm:$0xff]
  %v183 = vld [vmem:[%s2 + $0x490] sm:$0xff]
  %v184 = vld [vmem:[%s2 + $0x498] sm:$0xff]
  %v185 = vld [vmem:[%s2 + $0x4a0] sm:$0xff]
  %v186 = vld [vmem:[%s2 + $0x4a8] sm:$0xff]
  %v187 = vld [vmem:[%s2 + $0x4b0] sm:$0xff]
  %v188 = vld [vmem:[%s2 + $0x4b8] sm:$0xff]
  %v189 = vld [vmem:[%s2 + $0x4c0] sm:$0xff]
  %v190 = vld [vmem:[%s2 + $0x4c8] sm:$0xff]
  %v191 = vld [vmem:[%s2 + $0x4d0] sm:$0xff]
  %v192 = vld [vmem:[%s2 + $0x4d8] sm:$0xff]
  %v193 = vld [vmem:[%s2 + $0x4e0] sm:$0xff]
  %v194 = vld [vmem:[%s2 + $0x4e8] sm:$0xff]
  %v195 = vld [vmem:[%s2 + $0x4f0] sm:$0xff]
  %v196 = vld [vmem:[%s2 + $0x4f8] sm:$0xff]
  %v197 = vld [vmem:[%s2 + $0x500] sm:$0xff]
  %v198 = vld [vmem:[%s2 + $0x508] sm:$0xff]
  %v199 = vld [vmem:[%s2 + $0x510] sm:$0xff]
  %v200 = vld [vmem:[%s2 + $0x518] sm:$0xff]
  %v201 = vld [vmem:[%s2 + $0x520] sm:$0xff]
  %v202 = vld [vmem:[%s2 + $0x528] sm:$0xff]
  %v203 = vld [vmem:[%s2 + $0x530] sm:$0xff]
  %v204 = vld [vmem:[%s2 + $0x538] sm:$0xff]
  %v205 = vld [vmem:[%s2 + $0x540] sm:$0xff]
  %v206 = vld [vmem:[%s2 + $0x548] sm:$0xff]
  %v207 = vld [vmem:[%s2 + $0x550] sm:$0xff]
  %v208 = vld [vmem:[%s2 + $0x558] sm:$0xff]
  %v209 = vld [vmem:[%s2 + $0x560] sm:$0xff]
  %v210 = vld [vmem:[%s2 + $0x568] sm:$0xff]
  %v211 = vld [vmem:[%s2 + $0x570] sm:$0xff]
  %v212 = vld [vmem:[%s2 + $0x578] sm:$0xff]
  %v213 = vld [vmem:[%s2 + $0x580] sm:$0xff]
  %v214 = vld [vmem:[%s2 + $0x588] sm:$0xff]
  %v215 = vld [vmem:[%s2 + $0x590] sm:$0xff]
  %v216 = vld [vmem:[%s2 + $0x598] sm:$0xff]
  %v217 = vld [vmem:[%s2 + $0x5a0] sm:$0xff]
  %v218 = vld [vmem:[%s2 + $0x5a8] sm:$0xff]
  %v219 = vld [vmem:[%s2 + $0x5b0] sm:$0xff]
  %v220 = vld [vmem:[%s2 + $0x5b8] sm:$0xff]
  %v221 = vld [vmem:[%s2 + $0x5c0] sm:$0xff]
  %v222 = vld [vmem:[%s2 + $0x5c8] sm:$0xff]
  %v223 = vld [vmem:[%s2 + $0x5d0] sm:$0xff]
  %v224 = vld [vmem:[%s2 + $0x5d8] sm:$0xff]
  %v225 = vld [vmem:[%s2 + $0x5e0] sm:$0xff]
  %v226 = vld [vmem:[%s2 + $0x5e8] sm:$0xff]
  %v227 = vld [vmem:[%s2 + $0x5f0] sm:$0xff]
  %v228 = vld [vmem:[%s2 + $0x5f8] sm:$0xff]
  %v229 = vld [vmem:[%s2 + $0x600] sm:$0xff]
  %v230 = vld [vmem:[%s2 + $0x608] sm:$0xff]
  %v231 = vld [vmem:[%s2 + $0x610] sm:$0xff]
  %v232 = vld [vmem:[%s2 + $0x618] sm:$0xff]
  %v233 = vld [vmem:[%s2 + $0x620] sm:$0xff]
  %v234 = vld [vmem:[%s2 + $0x628] sm:$0xff]
  %v235 = vld [vmem:[%s2 + $0x630] sm:$0xff]
  %v236 = vld [vmem:[%s2 + $0x638] sm:$0xff]
  %v237 = vld [vmem:[%s2 + $0x640] sm:$0xff]
  %v238 = vld [vmem:[%s2 + $0x648] sm:$0xff]
  %v239 = vld [vmem:[%s2 + $0x650] sm:$0xff]
  %v240 = vld [vmem:[%s2 + $0x658] sm:$0xff]
  %v241 = vld [vmem:[%s2 + $0x660] sm:$0xff]
  %v242 = vld [vmem:[%s2 + $0x668] sm:$0xff]
  %v243 = vld [vmem:[%s2 + $0x670] sm:$0xff]
  %v244 = vld [vmem:[%s2 + $0x678] sm:$0xff]
  %v245 = vld [vmem:[%s2 + $0x680] sm:$0xff]
  %v246 = vld [vmem:[%s2 + $0x688] sm:$0xff]
  %v247 = vld [vmem:[%s2 + $0x690] sm:$0xff]
  %v248 = vld [vmem:[%s2 + $0x698] sm:$0xff]
  %v249 = vld [vmem:[%s2 + $0x6a0] sm:$0xff]
  %v250 = vld [vmem:[%s2 + $0x6a8] sm:$0xff]
  %v251 = vld [vmem:[%s2 + $0x6b0] sm:$0xff]
  %v252 = vld [vmem:[%s2 + $0x6b8] sm:$0xff]
  %v253 = vld [vmem:[%s2 + $0x6c0] sm:$0xff]
  %v254 = vld [vmem:[%s2 + $0x6c8] sm:$0xff]
  %v255 = vld [vmem:[%s2 + $0x6d0] sm:$0xff]
  %v256 = vld [vmem:[%s2 + $0x6d8] sm:$0xff]
  %v257 = vld [vmem:[%s2 + $0x6e0] sm:$0xff]
  %v258 = vld [vmem:[%s2 + $0x6e8] sm:$0xff]
  %v259 = vld [vmem:[%s2 + $0x6f0] sm:$0xff]
  %v260 = vld [vmem:[%s2 + $0x6f8] sm:$0xff]
  %v261 = vld [vmem:[%s2 + $0x700] sm:$0xff]
  %v262 = vld [vmem:[%s2 + $0x708] sm:$0xff]
  %v263 = vld [vmem:[%s2 + $0x710] sm:$0xff]
  %v264 = vld [vmem:[%s2 + $0x718] sm:$0xff]
  %v265 = vld [vmem:[%s2 + $0x720] sm:$0xff]
  %v266 = vld [vmem:[%s2 + $0x728] sm:$0xff]
  %v267 = vld [vmem:[%s2 + $0x730] sm:$0xff]
  %v268 = vld [vmem:[%s2 + $0x738] sm:$0xff]
  %v269 = vld [vmem:[%s2 + $0x740] sm:$0xff]
  %v270 = vld [vmem:[%s2 + $0x748] sm:$0xff]
  %v271 = vld [vmem:[%s2 + $0x750] sm:$0xff]
  %v272 = vld [vmem:[%s2 + $0x758] sm:$0xff]
  %v273 = vld [vmem:[%s2 + $0x760] sm:$0xff]
  %v274 = vld [vmem:[%s2 + $0x768] sm:$0xff]
  %v275 = vld [vmem:[%s2 + $0x770] sm:$0xff]
  %v276 = vld [vmem:[%s2 + $0x778] sm:$0xff]
  %v277 = vld [vmem:[%s2 + $0x780] sm:$0xff]
  %v278 = vld [vmem:[%s2 + $0x788] sm:$0xff]
  %v279 = vld [vmem:[%s2 + $0x790] sm:$0xff]
  %v280 = vld [vmem:[%s2 + $0x798] sm:$0xff]
  %v281 = vld [vmem:[%s2 + $0x7a0] sm:$0xff]
  %v282 = vld [vmem:[%s2 + $0x7a8] sm:$0xff]
  %v283 = vld [vmem:[%s2 + $0x7b0] sm:$0xff]
  %v284 = vld [vmem:[%s2 + $0x7b8] sm:$0xff]
  %v285 = vld [vmem:[%s2 + $0x7c0] sm:$0xff]
  %v286 = vld [vmem:[%s2 + $0x7c8] sm:$0xff]
  %v287 = vld [vmem:[%s2 + $0x7d0] sm:$0xff]
  %v288 = vld [vmem:[%s2 + $0x7d8] sm:$0xff]
  %v289 = vld [vmem:[%s2 + $0x7e0] sm:$0xff]
  %v290 = vld [vmem:[%s2 + $0x7e8] sm:$0xff]
  %v291 = vld [vmem:[%s2 + $0x7f0] sm:$0xff]
  %v292 = vld [vmem:[%s2 + $0x7f8] sm:$0xff]
  %v293 = vld [vmem:[%s2 + $0x800] sm:$0xff]
  %v294 = vld [vmem:[%s2 + $0x808] sm:$0xff]
  %v295 = vld [vmem:[%s2 + $0x810] sm:$0xff]
  %v296 = vld [vmem:[%s2 + $0x818] sm:$0xff]
  %v297 = vld [vmem:[%s2 + $0x820] sm:$0xff]
  %v298 = vld [vmem:[%s2 + $0x828] sm:$0xff]
  %v299 = vld [vmem:[%s2 + $0x830] sm:$0xff]
  %v300 = vld [vmem:[%s2 + $0x838] sm:$0xff]
  %v301 = vld [vmem:[%s2 + $0x840] sm:$0xff]
  %v302 = vld [vmem:[%s2 + $0x848] sm:$0xff]
  %v303 = vld [vmem:[%s2 + $0x850] sm:$0xff]
  %v304 = vld [vmem:[%s2 + $0x858] sm:$0xff]
  %v305 = vld [vmem:[%s2 + $0x860] sm:$0xff]
  %v306 = vld [vmem:[%s2 + $0x868] sm:$0xff]
  %v307 = vld [vmem:[%s2 + $0x870] sm:$0xff]
  %v308 = vld [vmem:[%s2 + $0x878] sm:$0xff]
  %v309 = vld [vmem:[%s2 + $0x880] sm:$0xff]
  %v310 = vld [vmem:[%s2 + $0x888] sm:$0xff]
  %v311 = vld [vmem:[%s2 + $0x890] sm:$0xff]
  %v312 = vld [vmem:[%s2 + $0x898] sm:$0xff]
  %v313 = vld [vmem:[%s2 + $0x8a0] sm:$0xff]
  %v314 = vld [vmem:[%s2 + $0x8a8] sm:$0xff]
  %v315 = vld [vmem:[%s2 + $0x8b0] sm:$0xff]
  %v316 = vld [vmem:[%s2 + $0x8b8] sm:$0xff]
  %v317 = vld [vmem:[%s2 + $0x8c0] sm:$0xff]
  %v318 = vld [vmem:[%s2 + $0x8c8] sm:$0xff]
  %v319 = vld [vmem:[%s2 + $0x8d0] sm:$0xff]
  %v320 = vld [vmem:[%s2 + $0x8d8] sm:$0xff]
  %v321 = vld [vmem:[%s2 + $0x8e0] sm:$0xff]
  %v322 = vld [vmem:[%s2 + $0x8e8] sm:$0xff]
  %v323 = vld [vmem:[%s2 + $0x8f0] sm:$0xff]
  %v324 = vld [vmem:[%s2 + $0x8f8] sm:$0xff]
  %v325 = vld [vmem:[%s2 + $0x900] sm:$0xff]
  %v326 = vld [vmem:[%s2 + $0x908] sm:$0xff]
  %v327 = vld [vmem:[%s2 + $0x910] sm:$0xff]
  %v328 = vld [vmem:[%s2 + $0x918] sm:$0xff]
  %v329 = vld [vmem:[%s2 + $0x920] sm:$0xff]
  %v330 = vld [vmem:[%s2 + $0x928] sm:$0xff]
  %v331 = vld [vmem:[%s2 + $0x930] sm:$0xff]
  %v332 = vld [vmem:[%s2 + $0x938] sm:$0xff]
  %v333 = vld [vmem:[%s2 + $0x940] sm:$0xff]
  %v334 = vld [vmem:[%s2 + $0x948] sm:$0xff]
  %v335 = vld [vmem:[%s2 + $0x950] sm:$0xff]
  %v336 = vld [vmem:[%s2 + $0x958] sm:$0xff]
  %v337 = vld [vmem:[%s2 + $0x960] sm:$0xff]
  %v338 = vld [vmem:[%s2 + $0x968] sm:$0xff]
  %v339 = vld [vmem:[%s2 + $0x970] sm:$0xff]
  %v340 = vld [vmem:[%s2 + $0x978] sm:$0xff]
  %v341 = vld [vmem:[%s2 + $0x980] sm:$0xff]
  %v342 = vld [vmem:[%s2 + $0x988] sm:$0xff]
  %v343 = vld [vmem:[%s2 + $0x990] sm:$0xff]
  %v344 = vld [vmem:[%s2 + $0x998] sm:$0xff]
  %v345 = vld [vmem:[%s2 + $0x9a0] sm:$0xff]
  %v346 = vld [vmem:[%s2 + $0x9a8] sm:$0xff]
  %v347 = vld [vmem:[%s2 + $0x9b0] sm:$0xff]
  %v348 = vld [vmem:[%s2 + $0x9b8] sm:$0xff]
  %v349 = vld [vmem:[%s2 + $0x9c0] sm:$0xff]
  %v350 = vld [vmem:[%s2 + $0x9c8] sm:$0xff]
  %v351 = vld [vmem:[%s2 + $0x9d0] sm:$0xff]
  %v352 = vld [vmem:[%s2 + $0x9d8] sm:$0xff]
  %v353 = vld [vmem:[%s2 + $0x9e0] sm:$0xff]
  %v354 = vld [vmem:[%s2 + $0x9e8] sm:$0xff]
  %v355 = vld [vmem:[%s2 + $0x9f0] sm:$0xff]
  %v356 = vld [vmem:[%s2 + $0x9f8] sm:$0xff]
  %v357 = vld [vmem:[%s2 + $0xa00] sm:$0xff]
  %v358 = vld [vmem:[%s2 + $0xa08] sm:$0xff]
  %v359 = vld [vmem:[%s2 + $0xa10] sm:$0xff]
  %v360 = vld [vmem:[%s2 + $0xa18] sm:$0xff]
  %v361 = vld [vmem:[%s2 + $0xa20] sm:$0xff]
  %v362 = vld [vmem:[%s2 + $0xa28] sm:$0xff]
  %v363 = vld [vmem:[%s2 + $0xa30] sm:$0xff]
  %v364 = vld [vmem:[%s2 + $0xa38] sm:$0xff]
  %v365 = vld [vmem:[%s2 + $0xa40] sm:$0xff]
  %v366 = vld [vmem:[%s2 + $0xa48] sm:$0xff]
  %v367 = vld [vmem:[%s2 + $0xa50] sm:$0xff]
  %v368 = vld [vmem:[%s2 + $0xa58] sm:$0xff]
  %v369 = vld [vmem:[%s2 + $0xa60] sm:$0xff]
  %v370 = vld [vmem:[%s2 + $0xa68] sm:$0xff]
  %v371 = vld [vmem:[%s2 + $0xa70] sm:$0xff]
  %v372 = vld [vmem:[%s2 + $0xa78] sm:$0xff]
  %v373 = vld [vmem:[%s2 + $0xa80] sm:$0xff]
  %v374 = vld [vmem:[%s2 + $0xa88] sm:$0xff]
  %v375 = vld [vmem:[%s2 + $0xa90] sm:$0xff]
  %v376 = vld [vmem:[%s2 + $0xa98] sm:$0xff]
  %v377 = vld [vmem:[%s2 + $0xaa0] sm:$0xff]
  %v378 = vld [vmem:[%s2 + $0xaa8] sm:$0xff]
  %v379 = vld [vmem:[%s2 + $0xab0] sm:$0xff]
  %v380 = vld [vmem:[%s2 + $0xab8] sm:$0xff]
  %v381 = vld [vmem:[%s2 + $0xac0] sm:$0xff]
  %v382 = vld [vmem:[%s2 + $0xac8] sm:$0xff]
  %v383 = vld [vmem:[%s2 + $0xad0] sm:$0xff]
  %v384 = vld [vmem:[%s2 + $0xad8] sm:$0xff]
  %v385 = vld [vmem:[%s2 + $0xae0] sm:$0xff]
  %v386 = vld [vmem:[%s2 + $0xae8] sm:$0xff]
  %v387 = vld [vmem:[%s2 + $0xaf0] sm:$0xff]
  %v388 = vld [vmem:[%s2 + $0xaf8] sm:$0xff]
  %v389 = vld [vmem:[%s2 + $0xb00] sm:$0xff]
  %v390 = vld [vmem:[%s2 + $0xb08] sm:$0xff]
  %v391 = vld [vmem:[%s2 + $0xb10] sm:$0xff]
  %v392 = vld [vmem:[%s2 + $0xb18] sm:$0xff]
  %v393 = vld [vmem:[%s2 + $0xb20] sm:$0xff]
  %v394 = vld [vmem:[%s2 + $0xb28] sm:$0xff]
  %v395 = vld [vmem:[%s2 + $0xb30] sm:$0xff]
  %v396 = vld [vmem:[%s2 + $0xb38] sm:$0xff]
  %v397 = vld [vmem:[%s2 + $0xb40] sm:$0xff]
  %v398 = vld [vmem:[%s2 + $0xb48] sm:$0xff]
  %v399 = vld [vmem:[%s2 + $0xb50] sm:$0xff]
  %v400 = vld [vmem:[%s2 + $0xb58] sm:$0xff]
  %v401 = vld [vmem:[%s2 + $0xb60] sm:$0xff]
  %v402 = vld [vmem:[%s2 + $0xb68] sm:$0xff]
  %v403 = vld [vmem:[%s2 + $0xb70] sm:$0xff]
  %v404 = vld [vmem:[%s2 + $0xb78] sm:$0xff]
  %v405 = vld [vmem:[%s2 + $0xb80] sm:$0xff]
  %v406 = vld [vmem:[%s2 + $0xb88] sm:$0xff]
  %v407 = vld [vmem:[%s2 + $0xb90] sm:$0xff]
  %v408 = vld [vmem:[%s2 + $0xb98] sm:$0xff]
  %v409 = vld [vmem:[%s2 + $0xba0] sm:$0xff]
  %v410 = vld [vmem:[%s2 + $0xba8] sm:$0xff]
  %v411 = vld [vmem:[%s2 + $0xbb0] sm:$0xff]
  %v412 = vld [vmem:[%s2 + $0xbb8] sm:$0xff]
  %v413 = vld [vmem:[%s2 + $0xbc0] sm:$0xff]
  %v414 = vld [vmem:[%s2 + $0xbc8] sm:$0xff]
  %v415 = vld [vmem:[%s2 + $0xbd0] sm:$0xff]
  %v416 = vld [vmem:[%s2 + $0xbd8] sm:$0xff]
  %v417 = vld [vmem:[%s2 + $0xbe0] sm:$0xff]
  %v418 = vld [vmem:[%s2 + $0xbe8] sm:$0xff]
  %v419 = vld [vmem:[%s2 + $0xbf0] sm:$0xff]
  %v420 = vld [vmem:[%s2 + $0xbf8] sm:$0xff]
  %v421 = vld [vmem:[%s2 + $0xc00] sm:$0xff]
  %v422 = vld [vmem:[%s2 + $0xc08] sm:$0xff]
  %v423 = vld [vmem:[%s2 + $0xc10] sm:$0xff]
  %v424 = vld [vmem:[%s2 + $0xc18] sm:$0xff]
  %v425 = vld [vmem:[%s2 + $0xc20] sm:$0xff]
  %v426 = vld [vmem:[%s2 + $0xc28] sm:$0xff]
  %v427 = vld [vmem:[%s2 + $0xc30] sm:$0xff]
  %v428 = vld [vmem:[%s2 + $0xc38] sm:$0xff]
  %v429 = vld [vmem:[%s2 + $0xc40] sm:$0xff]
  %v430 = vld [vmem:[%s2 + $0xc48] sm:$0xff]
  %v431 = vld [vmem:[%s2 + $0xc50] sm:$0xff]
  %v432 = vld [vmem:[%s2 + $0xc58] sm:$0xff]
  %v433 = vld [vmem:[%s2 + $0xc60] sm:$0xff]
  %v434 = vld [vmem:[%s2 + $0xc68] sm:$0xff]
  %v435 = vld [vmem:[%s2 + $0xc70] sm:$0xff]
  %v436 = vld [vmem:[%s2 + $0xc78] sm:$0xff]
  %v437 = vld [vmem:[%s2 + $0xc80] sm:$0xff]
  %v438 = vld [vmem:[%s2 + $0xc88] sm:$0xff]
  %v439 = vld [vmem:[%s2 + $0xc90] sm:$0xff]
  %v440 = vld [vmem:[%s2 + $0xc98] sm:$0xff]
  %v441 = vld [vmem:[%s2 + $0xca0] sm:$0xff]
  %v442 = vld [vmem:[%s2 + $0xca8] sm:$0xff]
  %v443 = vld [vmem:[%s2 + $0xcb0] sm:$0xff]
  %v444 = vld [vmem:[%s2 + $0xcb8] sm:$0xff]
  %v445 = vld [vmem:[%s2 + $0xcc0] sm:$0xff]
  %v446 = vld [vmem:[%s2 + $0xcc8] sm:$0xff]
  %v447 = vld [vmem:[%s2 + $0xcd0] sm:$0xff]
  %v448 = vld [vmem:[%s2 + $0xcd8] sm:$0xff]
  %v449 = vld [vmem:[%s2 + $0xce0] sm:$0xff]
  %v450 = vld [vmem:[%s2 + $0xce8] sm:$0xff]
  %v451 = vld [vmem:[%s2 + $0xcf0] sm:$0xff]
  %v452 = vld [vmem:[%s2 + $0xcf8] sm:$0xff]
  %v453 = vld [vmem:[%s2 + $0xd00] sm:$0xff]
  %v454 = vld [vmem:[%s2 + $0xd08] sm:$0xff]
  %v455 = vld [vmem:[%s2 + $0xd10] sm:$0xff]
  %v456 = vld [vmem:[%s2 + $0xd18] sm:$0xff]
  %v457 = vld [vmem:[%s2 + $0xd20] sm:$0xff]
  %v458 = vld [vmem:[%s2 + $0xd28] sm:$0xff]
  %v459 = vld [vmem:[%s2 + $0xd30] sm:$0xff]
  %v460 = vld [vmem:[%s2 + $0xd38] sm:$0xff]
  %v461 = vld [vmem:[%s2 + $0xd40] sm:$0xff]
  %v462 = vld [vmem:[%s2 + $0xd48] sm:$0xff]
  %v463 = vld [vmem:[%s2 + $0xd50] sm:$0xff]
  %v464 = vld [vmem:[%s2 + $0xd58] sm:$0xff]
  %v465 = vld [vmem:[%s2 + $0xd60] sm:$0xff]
  %v466 = vld [vmem:[%s2 + $0xd68] sm:$0xff]
  %v467 = vld [vmem:[%s2 + $0xd70] sm:$0xff]
  %v468 = vld [vmem:[%s2 + $0xd78] sm:$0xff]
  %v469 = vld [vmem:[%s2 + $0xd80] sm:$0xff]
  %v470 = vld [vmem:[%s2 + $0xd88] sm:$0xff]
  %v471 = vld [vmem:[%s2 + $0xd90] sm:$0xff]
  %v472 = vld [vmem:[%s2 + $0xd98] sm:$0xff]
  %v473 = vld [vmem:[%s2 + $0xda0] sm:$0xff]
  %v474 = vld [vmem:[%s2 + $0xda8] sm:$0xff]
  %v475 = vld [vmem:[%s2 + $0xdb0] sm:$0xff]
  %v476 = vld [vmem:[%s2 + $0xdb8] sm:$0xff]
  %v477 = vld [vmem:[%s2 + $0xdc0] sm:$0xff]
  %v478 = vld [vmem:[%s2 + $0xdc8] sm:$0xff]
  %v479 = vld [vmem:[%s2 + $0xdd0] sm:$0xff]
  %v480 = vld [vmem:[%s2 + $0xdd8] sm:$0xff]
  %v481 = vld [vmem:[%s2 + $0xde0] sm:$0xff]
  %v482 = vld [vmem:[%s2 + $0xde8] sm:$0xff]
  %v483 = vld [vmem:[%s2 + $0xdf0] sm:$0xff]
  %v484 = vld [vmem:[%s2 + $0xdf8] sm:$0xff]
  %v485 = vld [vmem:[%s2 + $0xe00] sm:$0xff]
  %v486 = vld [vmem:[%s2 + $0xe08] sm:$0xff]
  %v487 = vld [vmem:[%s2 + $0xe10] sm:$0xff]
  %v488 = vld [vmem:[%s2 + $0xe18] sm:$0xff]
  %v489 = vld [vmem:[%s2 + $0xe20] sm:$0xff]
  %v490 = vld [vmem:[%s2 + $0xe28] sm:$0xff]
  %v491 = vld [vmem:[%s2 + $0xe30] sm:$0xff]
  %v492 = vld [vmem:[%s2 + $0xe38] sm:$0xff]
  %v493 = vld [vmem:[%s2 + $0xe40] sm:$0xff]
  %v494 = vld [vmem:[%s2 + $0xe48] sm:$0xff]
  %v495 = vld [vmem:[%s2 + $0xe50] sm:$0xff]
  %v496 = vld [vmem:[%s2 + $0xe58] sm:$0xff]
  %v497 = vld [vmem:[%s2 + $0xe60] sm:$0xff]
  %v498 = vld [vmem:[%s2 + $0xe68] sm:$0xff]
  %v499 = vld [vmem:[%s2 + $0xe70] sm:$0xff]
  %v500 = vld [vmem:[%s2 + $0xe78] sm:$0xff]
  %v501 = vld [vmem:[%s2 + $0xe80] sm:$0xff]
  %v502 = vld [vmem:[%s2 + $0xe88] sm:$0xff]
  %v503 = vld [vmem:[%s2 + $0xe90] sm:$0xff]
  %v504 = vld [vmem:[%s2 + $0xe98] sm:$0xff]
  %v505 = vld [vmem:[%s2 + $0xea0] sm:$0xff]
  %v506 = vld [vmem:[%s2 + $0xea8] sm:$0xff]
  %v507 = vld [vmem:[%s2 + $0xeb0] sm:$0xff]
  %v508 = vld [vmem:[%s2 + $0xeb8] sm:$0xff]
  %v509 = vld [vmem:[%s2 + $0xec0] sm:$0xff]
  %v510 = vld [vmem:[%s2 + $0xec8] sm:$0xff]
  %v511 = vld [vmem:[%s2 + $0xed0] sm:$0xff]
  %v512 = vld [vmem:[%s2 + $0xed8] sm:$0xff]
  %v513 = vld [vmem:[%s2 + $0xee0] sm:$0xff]
  %v514 = vld [vmem:[%s2 + $0xee8] sm:$0xff]
  %v515 = vld [vmem:[%s2 + $0xef0] sm:$0xff]
  %v516 = vld [vmem:[%s2 + $0xef8] sm:$0xff]
  %v517 = vld [vmem:[%s2 + $0xf00] sm:$0xff]
  %v518 = vld [vmem:[%s2 + $0xf08] sm:$0xff]
  %v519 = vld [vmem:[%s2 + $0xf10] sm:$0xff]
  %v520 = vld [vmem:[%s2 + $0xf18] sm:$0xff]
  %v521 = vld [vmem:[%s2 + $0xf20] sm:$0xff]
  %v522 = vld [vmem:[%s2 + $0xf28] sm:$0xff]
  %v523 = vld [vmem:[%s2 + $0xf30] sm:$0xff]
  %v524 = vld [vmem:[%s2 + $0xf38] sm:$0xff]
  %v525 = vld [vmem:[%s2 + $0xf40] sm:$0xff]
  %v526 = vld [vmem:[%s2 + $0xf48] sm:$0xff]
  %v527 = vld [vmem:[%s2 + $0xf50] sm:$0xff]
  %v528 = vld [vmem:[%s2 + $0xf58] sm:$0xff]
  %v529 = vld [vmem:[%s2 + $0xf60] sm:$0xff]
  %v530 = vld [vmem:[%s2 + $0xf68] sm:$0xff]
  %v531 = vld [vmem:[%s2 + $0xf70] sm:$0xff]
  %v532 = vld [vmem:[%s2 + $0xf78] sm:$0xff]
  %v533 = vld [vmem:[%s2 + $0xf80] sm:$0xff]
  %v534 = vld [vmem:[%s2 + $0xf88] sm:$0xff]
  %v535 = vld [vmem:[%s2 + $0xf90] sm:$0xff]
  %v536 = vld [vmem:[%s2 + $0xf98] sm:$0xff]
  %v537 = vld [vmem:[%s2 + $0xfa0] sm:$0xff]
  %v538 = vld [vmem:[%s2 + $0xfa8] sm:$0xff]
  %v539 = vld [vmem:[%s2 + $0xfb0] sm:$0xff]
  %v540 = vld [vmem:[%s2 + $0xfb8] sm:$0xff]
  %v541 = vld [vmem:[%s2 + $0xfc0] sm:$0xff]
  %v542 = vld [vmem:[%s2 + $0xfc8] sm:$0xff]
  %v543 = vld [vmem:[%s2 + $0xfd0] sm:$0xff]
  %v544 = vld [vmem:[%s2 + $0xfd8] sm:$0xff]
  %v545 = vld [vmem:[%s2 + $0xfe0] sm:$0xff]
  %v546 = vld [vmem:[%s2 + $0xfe8] sm:$0xff]
  %v547 = vld [vmem:[%s2 + $0xff0] sm:$0xff]
  %v548 = vld [vmem:[%s2 + $0xff8] sm:$0xff]
  %v549 = vld [vmem:[%s2 + $0x1000] sm:$0xff]
  %v550 = vld [vmem:[%s2 + $0x1008] sm:$0xff]
  %v551 = vld [vmem:[%s2 + $0x1010] sm:$0xff]
  %v552 = vld [vmem:[%s2 + $0x1018] sm:$0xff]
  %v553 = vld [vmem:[%s2 + $0x1020] sm:$0xff]
  %v554 = vld [vmem:[%s2 + $0x1028] sm:$0xff]
  %v555 = vld [vmem:[%s2 + $0x1030] sm:$0xff]
  %v556 = vld [vmem:[%s2 + $0x1038] sm:$0xff]
  %v557 = vld [vmem:[%s2 + $0x1040] sm:$0xff]
  %v558 = vld [vmem:[%s2 + $0x1048] sm:$0xff]
  %v559 = vld [vmem:[%s2 + $0x1050] sm:$0xff]
  %v560 = vld [vmem:[%s2 + $0x1058] sm:$0xff]
  %v561 = vld [vmem:[%s2 + $0x1060] sm:$0xff]
  %v562 = vld [vmem:[%s2 + $0x1068] sm:$0xff]
  %v563 = vld [vmem:[%s2 + $0x1070] sm:$0xff]
  %v564 = vld [vmem:[%s2 + $0x1078] sm:$0xff]
  %v565 = vld [vmem:[%s2 + $0x1080] sm:$0xff]
  %v566 = vld [vmem:[%s2 + $0x1088] sm:$0xff]
  %v567 = vld [vmem:[%s2 + $0x1090] sm:$0xff]
  %v568 = vld [vmem:[%s2 + $0x1098] sm:$0xff]
  %v569 = vld [vmem:[%s2 + $0x10a0] sm:$0xff]
  %v570 = vld [vmem:[%s2 + $0x10a8] sm:$0xff]
  %v571 = vld [vmem:[%s2 + $0x10b0] sm:$0xff]
  %v572 = vld [vmem:[%s2 + $0x10b8] sm:$0xff]
  %v573 = vld [vmem:[%s2 + $0x10c0] sm:$0xff]
  %v574 = vld [vmem:[%s2 + $0x10c8] sm:$0xff]
  %v575 = vld [vmem:[%s2 + $0x10d0] sm:$0xff]
  %v576 = vld [vmem:[%s2 + $0x10d8] sm:$0xff]
  %v577 = vld [vmem:[%s2 + $0x10e0] sm:$0xff]
  %v578 = vld [vmem:[%s2 + $0x10e8] sm:$0xff]
  %v579 = vld [vmem:[%s2 + $0x10f0] sm:$0xff]
  %v580 = vld [vmem:[%s2 + $0x10f8] sm:$0xff]
  %v581 = vld [vmem:[%s2 + $0x1100] sm:$0xff]
  %v582 = vld [vmem:[%s2 + $0x1108] sm:$0xff]
  %v583 = vld [vmem:[%s2 + $0x1110] sm:$0xff]
  %v584 = vld [vmem:[%s2 + $0x1118] sm:$0xff]
  %v585 = vld [vmem:[%s2 + $0x1120] sm:$0xff]
  %v586 = vld [vmem:[%s2 + $0x1128] sm:$0xff]
  %v587 = vld [vmem:[%s2 + $0x1130] sm:$0xff]
  %v588 = vld [vmem:[%s2 + $0x1138] sm:$0xff]
  %v589 = vld [vmem:[%s2 + $0x1140] sm:$0xff]
  %v590 = vld [vmem:[%s2 + $0x1148] sm:$0xff]
  %v591 = vld [vmem:[%s2 + $0x1150] sm:$0xff]
  %v592 = vld [vmem:[%s2 + $0x1158] sm:$0xff]
  %v593 = vld [vmem:[%s2 + $0x1160] sm:$0xff]
  %v594 = vld [vmem:[%s2 + $0x1168] sm:$0xff]
  %v595 = vld [vmem:[%s2 + $0x1170] sm:$0xff]
  %v596 = vld [vmem:[%s2 + $0x1178] sm:$0xff]
  %v597 = vld [vmem:[%s2 + $0x1180] sm:$0xff]
  %v598 = vld [vmem:[%s2 + $0x1188] sm:$0xff]
  %v599 = vld [vmem:[%s2 + $0x1190] sm:$0xff]
  %v600 = vld [vmem:[%s2 + $0x1198] sm:$0xff]
  %v601 = vld [vmem:[%s2 + $0x11a0] sm:$0xff]
  %v602 = vld [vmem:[%s2 + $0x11a8] sm:$0xff]
  %v603 = vld [vmem:[%s2 + $0x11b0] sm:$0xff]
  %v604 = vld [vmem:[%s2 + $0x11b8] sm:$0xff]
  %v605 = vld [vmem:[%s2 + $0x11c0] sm:$0xff]
  %v606 = vld [vmem:[%s2 + $0x11c8] sm:$0xff]
  %v607 = vld [vmem:[%s2 + $0x11d0] sm:$0xff]
  %v608 = vld [vmem:[%s2 + $0x11d8] sm:$0xff]
  %v609 = vld [vmem:[%s2 + $0x11e0] sm:$0xff]
  %v610 = vld [vmem:[%s2 + $0x11e8] sm:$0xff]
  %v611 = vld [vmem:[%s2 + $0x11f0] sm:$0xff]
  %v612 = vld [vmem:[%s2 + $0x11f8] sm:$0xff]
  %v613 = vld [vmem:[%s2 + $0x1200] sm:$0xff]
  %v614 = vld [vmem:[%s2 + $0x1208] sm:$0xff]
  %v615 = vld [vmem:[%s2 + $0x1210] sm:$0xff]
  %v616 = vld [vmem:[%s2 + $0x1218] sm:$0xff]
  %v617 = vld [vmem:[%s2 + $0x1220] sm:$0xff]
  %v618 = vld [vmem:[%s2 + $0x1228] sm:$0xff]
  %v619 = vld [vmem:[%s2 + $0x1230] sm:$0xff]
  %v620 = vld [vmem:[%s2 + $0x1238] sm:$0xff]
  %v621 = vld [vmem:[%s2 + $0x1240] sm:$0xff]
  %v622 = vld [vmem:[%s2 + $0x1248] sm:$0xff]
  %v623 = vld [vmem:[%s2 + $0x1250] sm:$0xff]
  %v624 = vld [vmem:[%s2 + $0x1258] sm:$0xff]
  %v625 = vld [vmem:[%s2 + $0x1260] sm:$0xff]
  %v626 = vld [vmem:[%s2 + $0x1268] sm:$0xff]
  %v627 = vld [vmem:[%s2 + $0x1270] sm:$0xff]
  %v628 = vld [vmem:[%s2 + $0x1278] sm:$0xff]
  %v629 = vld [vmem:[%s2 + $0x1280] sm:$0xff]
  %v630 = vld [vmem:[%s2 + $0x1288] sm:$0xff]
  %v631 = vld [vmem:[%s2 + $0x1290] sm:$0xff]
  %v632 = vld [vmem:[%s2 + $0x1298] sm:$0xff]
  %v633 = vld [vmem:[%s2 + $0x12a0] sm:$0xff]
  %v634 = vld [vmem:[%s2 + $0x12a8] sm:$0xff]
  %v635 = vld [vmem:[%s2 + $0x12b0] sm:$0xff]
  %v636 = vld [vmem:[%s2 + $0x12b8] sm:$0xff]
  %v637 = vld [vmem:[%s2 + $0x12c0] sm:$0xff]
  %v638 = vld [vmem:[%s2 + $0x12c8] sm:$0xff]
  %v639 = vld [vmem:[%s2 + $0x12d0] sm:$0xff]
  %v640 = vld [vmem:[%s2 + $0x12d8] sm:$0xff]
  %v641 = vld [vmem:[%s2 + $0x12e0] sm:$0xff]
  %v642 = vld [vmem:[%s2 + $0x12e8] sm:$0xff]
  %v643 = vld [vmem:[%s2 + $0x12f0] sm:$0xff]
  %v644 = vld [vmem:[%s2 + $0x12f8] sm:$0xff]
  %v645 = vld [vmem:[%s2 + $0x1300] sm:$0xff]
  %v646 = vld [vmem:[%s2 + $0x1308] sm:$0xff]
  %v647 = vld [vmem:[%s2 + $0x1310] sm:$0xff]
  %v648 = vld [vmem:[%s2 + $0x1318] sm:$0xff]
  %v649 = vld [vmem:[%s2 + $0x1320] sm:$0xff]
  %v650 = vld [vmem:[%s2 + $0x1328] sm:$0xff]
  %v651 = vld [vmem:[%s2 + $0x1330] sm:$0xff]
  %v652 = vld [vmem:[%s2 + $0x1338] sm:$0xff]
  %v653 = vld [vmem:[%s2 + $0x1340] sm:$0xff]
  %v654 = vld [vmem:[%s2 + $0x1348] sm:$0xff]
  %v655 = vld [vmem:[%s2 + $0x1350] sm:$0xff]
  %v656 = vld [vmem:[%s2 + $0x1358] sm:$0xff]
  %v657 = vld [vmem:[%s2 + $0x1360] sm:$0xff]
  %v658 = vld [vmem:[%s2 + $0x1368] sm:$0xff]
  %v659 = vld [vmem:[%s2 + $0x1370] sm:$0xff]
  %v660 = vld [vmem:[%s2 + $0x1378] sm:$0xff]
  %v661 = vld [vmem:[%s2 + $0x1380] sm:$0xff]
  %v662 = vld [vmem:[%s2 + $0x1388] sm:$0xff]
  %v663 = vld [vmem:[%s2 + $0x1390] sm:$0xff]
  %v664 = vld [vmem:[%s2 + $0x1398] sm:$0xff]
  %v665 = vld [vmem:[%s2 + $0x13a0] sm:$0xff]
  %v666 = vld [vmem:[%s2 + $0x13a8] sm:$0xff]
  %v667 = vld [vmem:[%s2 + $0x13b0] sm:$0xff]
  %v668 = vld [vmem:[%s2 + $0x13b8] sm:$0xff]
  %v669 = vld [vmem:[%s2 + $0x13c0] sm:$0xff]
  %v670 = vld [vmem:[%s2 + $0x13c8] sm:$0xff]
  %v671 = vld [vmem:[%s2 + $0x13d0] sm:$0xff]
  %v672 = vld [vmem:[%s2 + $0x13d8] sm:$0xff]
  %v673 = vld [vmem:[%s2 + $0x13e0] sm:$0xff]
  %v674 = vld [vmem:[%s2 + $0x13e8] sm:$0xff]
  %v675 = vld [vmem:[%s2 + $0x13f0] sm:$0xff]
  %v676 = vld [vmem:[%s2 + $0x13f8] sm:$0xff]
  %v677 = vld [vmem:[%s2 + $0x1400] sm:$0xff]
  %v678 = vld [vmem:[%s2 + $0x1408] sm:$0xff]
  %v679 = vld [vmem:[%s2 + $0x1410] sm:$0xff]
  %v680 = vld [vmem:[%s2 + $0x1418] sm:$0xff]
  %v681 = vld [vmem:[%s2 + $0x1420] sm:$0xff]
  %v682 = vld [vmem:[%s2 + $0x1428] sm:$0xff]
  %v683 = vld [vmem:[%s2 + $0x1430] sm:$0xff]
  %v684 = vld [vmem:[%s2 + $0x1438] sm:$0xff]
  %v685 = vld [vmem:[%s2 + $0x1440] sm:$0xff]
  %v686 = vld [vmem:[%s2 + $0x1448] sm:$0xff]
  %v687 = vld [vmem:[%s2 + $0x1450] sm:$0xff]
  %v688 = vld [vmem:[%s2 + $0x1458] sm:$0xff]
  %v689 = vld [vmem:[%s2 + $0x1460] sm:$0xff]
  %v690 = vld [vmem:[%s2 + $0x1468] sm:$0xff]
  %v691 = vld [vmem:[%s2 + $0x1470] sm:$0xff]
  %v692 = vld [vmem:[%s2 + $0x1478] sm:$0xff]
  %v693 = vld [vmem:[%s2 + $0x1480] sm:$0xff]
  %v694 = vld [vmem:[%s2 + $0x1488] sm:$0xff]
  %v695 = vld [vmem:[%s2 + $0x1490] sm:$0xff]
  %v696 = vld [vmem:[%s2 + $0x1498] sm:$0xff]
  %v697 = vld [vmem:[%s2 + $0x14a0] sm:$0xff]
  %v698 = vld [vmem:[%s2 + $0x14a8] sm:$0xff]
  %v699 = vld [vmem:[%s2 + $0x14b0] sm:$0xff]
  %v700 = vld [vmem:[%s2 + $0x14b8] sm:$0xff]
  %v701 = vld [vmem:[%s2 + $0x14c0] sm:$0xff]
  %v702 = vld [vmem:[%s2 + $0x14c8] sm:$0xff]
  %v703 = vld [vmem:[%s2 + $0x14d0] sm:$0xff]
  %v704 = vld [vmem:[%s2 + $0x14d8] sm:$0xff]
  %v705 = vld [vmem:[%s2 + $0x14e0] sm:$0xff]
  %v706 = vld [vmem:[%s2 + $0x14e8] sm:$0xff]
  %v707 = vld [vmem:[%s2 + $0x14f0] sm:$0xff]
  %v708 = vld [vmem:[%s2 + $0x14f8] sm:$0xff]
  %v709 = vld [vmem:[%s2 + $0x1500] sm:$0xff]
  %v710 = vld [vmem:[%s2 + $0x1508] sm:$0xff]
  %v711 = vld [vmem:[%s2 + $0x1510] sm:$0xff]
  %v712 = vld [vmem:[%s2 + $0x1518] sm:$0xff]
  %v713 = vld [vmem:[%s2 + $0x1520] sm:$0xff]
  %v714 = vld [vmem:[%s2 + $0x1528] sm:$0xff]
  %v715 = vld [vmem:[%s2 + $0x1530] sm:$0xff]
  %v716 = vld [vmem:[%s2 + $0x1538] sm:$0xff]
  %v717 = vld [vmem:[%s2 + $0x1540] sm:$0xff]
  %v718 = vld [vmem:[%s2 + $0x1548] sm:$0xff]
  %v719 = vld [vmem:[%s2 + $0x1550] sm:$0xff]
  %v720 = vld [vmem:[%s2 + $0x1558] sm:$0xff]
  %v721 = vld [vmem:[%s2 + $0x1560] sm:$0xff]
  %v722 = vld [vmem:[%s2 + $0x1568] sm:$0xff]
  %v723 = vld [vmem:[%s2 + $0x1570] sm:$0xff]
  %v724 = vld [vmem:[%s2 + $0x1578] sm:$0xff]
  %v725 = vld [vmem:[%s2 + $0x1580] sm:$0xff]
  %v726 = vld [vmem:[%s2 + $0x1588] sm:$0xff]
  %v727 = vld [vmem:[%s2 + $0x1590] sm:$0xff]
  %v728 = vld [vmem:[%s2 + $0x1598] sm:$0xff]
  %v729 = vld [vmem:[%s2 + $0x15a0] sm:$0xff]
  %v730 = vld [vmem:[%s2 + $0x15a8] sm:$0xff]
  %v731 = vld [vmem:[%s2 + $0x15b0] sm:$0xff]
  %v732 = vld [vmem:[%s2 + $0x15b8] sm:$0xff]
  %v733 = vld [vmem:[%s2 + $0x15c0] sm:$0xff]
  %v734 = vld [vmem:[%s2 + $0x15c8] sm:$0xff]
  %v735 = vld [vmem:[%s2 + $0x15d0] sm:$0xff]
  %v736 = vld [vmem:[%s2 + $0x15d8] sm:$0xff]
  %v737 = vld [vmem:[%s2 + $0x15e0] sm:$0xff]
  %v738 = vld [vmem:[%s2 + $0x15e8] sm:$0xff]
  %v739 = vld [vmem:[%s2 + $0x15f0] sm:$0xff]
  %v740 = vld [vmem:[%s2 + $0x15f8] sm:$0xff]
  %v741 = vld [vmem:[%s2 + $0x1600] sm:$0xff]
  %v742 = vld [vmem:[%s2 + $0x1608] sm:$0xff]
  %v743 = vld [vmem:[%s2 + $0x1610] sm:$0xff]
  %v744 = vld [vmem:[%s2 + $0x1618] sm:$0xff]
  %v745 = vld [vmem:[%s2 + $0x1620] sm:$0xff]
  %v746 = vld [vmem:[%s2 + $0x1628] sm:$0xff]
  %v747 = vld [vmem:[%s2 + $0x1630] sm:$0xff]
  %v748 = vld [vmem:[%s2 + $0x1638] sm:$0xff]
  %v749 = vld [vmem:[%s2 + $0x1640] sm:$0xff]
  %v750 = vld [vmem:[%s2 + $0x1648] sm:$0xff]
  %v751 = vld [vmem:[%s2 + $0x1650] sm:$0xff]
  %v752 = vld [vmem:[%s2 + $0x1658] sm:$0xff]
  %v753 = vld [vmem:[%s2 + $0x1660] sm:$0xff]
  %v754 = vld [vmem:[%s2 + $0x1668] sm:$0xff]
  %v755 = vld [vmem:[%s2 + $0x1670] sm:$0xff]
  %v756 = vld [vmem:[%s2 + $0x1678] sm:$0xff]
  %v757 = vld [vmem:[%s2 + $0x1680] sm:$0xff]
  %v758 = vld [vmem:[%s2 + $0x1688] sm:$0xff]
  %v759 = vld [vmem:[%s2 + $0x1690] sm:$0xff]
  %v760 = vld [vmem:[%s2 + $0x1698] sm:$0xff]
  %v761 = vld [vmem:[%s2 + $0x16a0] sm:$0xff]
  %v762 = vld [vmem:[%s2 + $0x16a8] sm:$0xff]
  %v763 = vld [vmem:[%s2 + $0x16b0] sm:$0xff]
  %v764 = vld [vmem:[%s2 + $0x16b8] sm:$0xff]
  %v765 = vld [vmem:[%s2 + $0x16c0] sm:$0xff]
  %v766 = vld [vmem:[%s2 + $0x16c8] sm:$0xff]
  %v767 = vld [vmem:[%s2 + $0x16d0] sm:$0xff]
  %v768 = vld [vmem:[%s2 + $0x16d8] sm:$0xff]
  %v769 = vld [vmem:[%s2 + $0x16e0] sm:$0xff]
  %v770 = vld [vmem:[%s2 + $0x16e8] sm:$0xff]
  %v771 = vld [vmem:[%s2 + $0x16f0] sm:$0xff]
  %v772 = vld [vmem:[%s2 + $0x16f8] sm:$0xff]
  %v773 = vld [vmem:[%s2 + $0x1700] sm:$0xff]
  %v774 = vld [vmem:[%s2 + $0x1708] sm:$0xff]
  %v775 = vld [vmem:[%s2 + $0x1710] sm:$0xff]
  %v776 = vld [vmem:[%s2 + $0x1718] sm:$0xff]
  %v777 = vld [vmem:[%s2 + $0x1720] sm:$0xff]
  %v778 = vld [vmem:[%s2 + $0x1728] sm:$0xff]
  %v779 = vld [vmem:[%s2 + $0x1730] sm:$0xff]
  %v780 = vld [vmem:[%s2 + $0x1738] sm:$0xff]
  %v781 = vld [vmem:[%s3] sm:$0x3]
  %v783 = vperm.slane %v781, 0
  %v784 = vperm.slane %v781, 1
  %788 = vst [vmem:[#allocation1] ss:$4 sm:$0xff] %v25
  %s790 = scalar_lea.vmem [#allocation1], 32
  %791 = vst [vmem:[%s790] ss:$4 sm:$0xff] %v26
  %v792 = vld.sshfl [vmem:[#allocation1] sm:$0xff pattern:$0x73625140]
  %v793 = vld.sshfl [vmem:[#allocation1 + $0x8] sm:$0xff pattern:$0x73625140]
  %v794 = vld.sshfl [vmem:[#allocation1 + $0x10] sm:$0xff pattern:$0x73625140]
  %v795 = vld.sshfl [vmem:[#allocation1 + $0x18] sm:$0xff pattern:$0x73625140]
  %v796 = vld.sshfl [vmem:[#allocation1 + $0x20] sm:$0xff pattern:$0x73625140]
  %v797 = vld.sshfl [vmem:[#allocation1 + $0x28] sm:$0xff pattern:$0x73625140]
  %v798 = vld.sshfl [vmem:[#allocation1 + $0x30] sm:$0xff pattern:$0x73625140]
  %v799 = vld.sshfl [vmem:[#allocation1 + $0x38] sm:$0xff pattern:$0x73625140]
  %801 = vst [vmem:[#allocation1] ss:$4 sm:$0xff] %v27
  %803 = vst [vmem:[%s790] ss:$4 sm:$0xff] %v28
  %v804 = vld.sshfl [vmem:[#allocation1] sm:$0xff pattern:$0x73625140]
  %v805 = vld.sshfl [vmem:[#allocation1 + $0x8] sm:$0xff pattern:$0x73625140]
  %v806 = vld.sshfl [vmem:[#allocation1 + $0x10] sm:$0xff pattern:$0x73625140]
  %v807 = vld.sshfl [vmem:[#allocation1 + $0x18] sm:$0xff pattern:$0x73625140]
  %v808 = vld.sshfl [vmem:[#allocation1 + $0x20] sm:$0xff pattern:$0x73625140]
  %v809 = vld.sshfl [vmem:[#allocation1 + $0x28] sm:$0xff pattern:$0x73625140]
  %v810 = vld.sshfl [vmem:[#allocation1 + $0x30] sm:$0xff pattern:$0x73625140]
  %v811 = vld.sshfl [vmem:[#allocation1 + $0x38] sm:$0xff pattern:$0x73625140]
  %813 = vst [vmem:[#allocation1] ss:$4 sm:$0xff] %v29
  %815 = vst [vmem:[%s790] ss:$4 sm:$0xff] %v30
  %v816 = vld.sshfl [vmem:[#allocation1] sm:$0xff pattern:$0x73625140]
  %v817 = vld.sshfl [vmem:[#allocation1 + $0x8] sm:$0xff pattern:$0x73625140]
  %v818 = vld.sshfl [vmem:[#allocation1 + $0x10] sm:$0xff pattern:$0x73625140]
  %v819 = vld.sshfl [vmem:[#allocation1 + $0x18] sm:$0xff pattern:$0x73625140]
  %v820 = vld.sshfl [vmem:[#allocation1 + $0x20] sm:$0xff pattern:$0x73625140]
  %v821 = vld.sshfl [vmem:[#allocation1 + $0x28] sm:$0xff pattern:$0x73625140]
  %v822 = vld.sshfl [vmem:[#allocation1 + $0x30] sm:$0xff pattern:$0x73625140]
  %v823 = vld.sshfl [vmem:[#allocation1 + $0x38] sm:$0xff pattern:$0x73625140]
  %825 = vst [vmem:[#allocation1] ss:$4 sm:$0xff] %v31
  %827 = vst [vmem:[%s790] ss:$4 sm:$0xff] %v32
  %v828 = vld.sshfl [vmem:[#allocation1] sm:$0xff pattern:$0x73625140]
  %v829 = vld.sshfl [vmem:[#allocation1 + $0x8] sm:$0xff pattern:$0x73625140]
  %v830 = vld.sshfl [vmem:[#allocation1 + $0x10] sm:$0xff pattern:$0x73625140]
  %v831 = vld.sshfl [vmem:[#allocation1 + $0x18] sm:$0xff pattern:$0x73625140]
  %v832 = vld.sshfl [vmem:[#allocation1 + $0x20] sm:$0xff pattern:$0x73625140]
  %v833 = vld.sshfl [vmem:[#allocation1 + $0x28] sm:$0xff pattern:$0x73625140]
  %v834 = vld.sshfl [vmem:[#allocation1 + $0x30] sm:$0xff pattern:$0x73625140]
  %v835 = vld.sshfl [vmem:[#allocation1 + $0x38] sm:$0xff pattern:$0x73625140]
  %837 = vst [vmem:[#allocation1] ss:$4 sm:$0xff] %v33
  %839 = vst [vmem:[%s790] ss:$4 sm:$0xff] %v34
  %v840 = vld.sshfl [vmem:[#allocation1] sm:$0xff pattern:$0x73625140]
  %v841 = vld.sshfl [vmem:[#allocation1 + $0x8] sm:$0xff pattern:$0x73625140]
  %v842 = vld.sshfl [vmem:[#allocation1 + $0x10] sm:$0xff pattern:$0x73625140]
  %v843 = vld.sshfl [vmem:[#allocation1 + $0x18] sm:$0xff pattern:$0x73625140]
  %v844 = vld.sshfl [vmem:[#allocation1 + $0x20] sm:$0xff pattern:$0x73625140]
  %v845 = vld.sshfl [vmem:[#allocation1 + $0x28] sm:$0xff pattern:$0x73625140]
  %v846 = vld.sshfl [vmem:[#allocation1 + $0x30] sm:$0xff pattern:$0x73625140]
  %v847 = vld.sshfl [vmem:[#allocation1 + $0x38] sm:$0xff pattern:$0x73625140]
  %849 = vst [vmem:[#allocation1] ss:$4 sm:$0xff] %v35
  %851 = vst [vmem:[%s790] ss:$4 sm:$0xff] %v36
  %v852 = vld.sshfl [vmem:[#allocation1] sm:$0xff pattern:$0x73625140]
  %v853 = vld.sshfl [vmem:[#allocation1 + $0x8] sm:$0xff pattern:$0x73625140]
  %v854 = vld.sshfl [vmem:[#allocation1 + $0x10] sm:$0xff pattern:$0x73625140]
  %v855 = vld.sshfl [vmem:[#allocation1 + $0x18] sm:$0xff pattern:$0x73625140]
  %v856 = vld.sshfl [vmem:[#allocation1 + $0x20] sm:$0xff pattern:$0x73625140]
  %v857 = vld.sshfl [vmem:[#allocation1 + $0x28] sm:$0xff pattern:$0x73625140]
  %v858 = vld.sshfl [vmem:[#allocation1 + $0x30] sm:$0xff pattern:$0x73625140]
  %v1649 = vunpack.c.l.b16 %v37
  %v1650 = vunpack.c.h.b16 %v37
  %v1651 = vunpack.c.l.b16 %v38
  %v1652 = vunpack.c.h.b16 %v38
  %v1653 = vunpack.c.l.b16 %v39
  %v1654 = vunpack.c.h.b16 %v39
  %v1655 = vunpack.c.l.b16 %v40
  %v1656 = vunpack.c.h.b16 %v40
  %v1657 = vunpack.c.l.b16 %v41
  %v1658 = vunpack.c.h.b16 %v41
  %v1659 = vunpack.c.l.b16 %v42
  %v1660 = vunpack.c.h.b16 %v42
  %v1661 = vunpack.c.l.b16 %v43
  %v1662 = vunpack.c.h.b16 %v43
  %v1663 = vunpack.c.l.b16 %v44
  %v1664 = vunpack.c.h.b16 %v44
  %v1665 = vunpack.c.l.b16 %v45
  %v1666 = vunpack.c.h.b16 %v45
  %v1667 = vunpack.c.l.b16 %v46
  %v1668 = vunpack.c.h.b16 %v46
  %v1669 = vunpack.c.l.b16 %v47
  %v1670 = vunpack.c.h.b16 %v47
  %v1671 = vunpack.c.l.b16 %v48
  %v1672 = vunpack.c.h.b16 %v48
  %v1673 = vunpack.c.l.b16 %v49
  %v1674 = vunpack.c.h.b16 %v49
  %v1675 = vunpack.c.l.b16 %v50
  %v1676 = vunpack.c.h.b16 %v50
  %v1677 = vunpack.c.l.b16 %v51
  %v1678 = vunpack.c.h.b16 %v51
  %v1679 = vunpack.c.l.b16 %v52
  %v1680 = vunpack.c.h.b16 %v52
  %v1681 = vunpack.c.l.b16 %v53
  %v1682 = vunpack.c.h.b16 %v53
  %v1683 = vunpack.c.l.b16 %v54
  %v1684 = vunpack.c.h.b16 %v54
  %v1685 = vunpack.c.l.b16 %v55
  %v1686 = vunpack.c.h.b16 %v55
  %v1687 = vunpack.c.l.b16 %v56
  %v1688 = vunpack.c.h.b16 %v56
  %v1689 = vunpack.c.l.b16 %v57
  %v1690 = vunpack.c.h.b16 %v57
  %v1691 = vunpack.c.l.b16 %v58
  %v1692 = vunpack.c.h.b16 %v58
  %v1693 = vunpack.c.l.b16 %v59
  %v1694 = vunpack.c.h.b16 %v59
  %v1695 = vunpack.c.l.b16 %v60
  %v1696 = vunpack.c.h.b16 %v60
  %v1697 = vunpack.c.l.b16 %v61
  %v1698 = vunpack.c.h.b16 %v61
  %v1699 = vunpack.c.l.b16 %v62
  %v1700 = vunpack.c.h.b16 %v62
  %v1701 = vunpack.c.l.b16 %v63
  %v1702 = vunpack.c.h.b16 %v63
  %v1703 = vunpack.c.l.b16 %v64
  %v1704 = vunpack.c.h.b16 %v64
  %v1705 = vunpack.c.l.b16 %v65
  %v1706 = vunpack.c.h.b16 %v65
  %v1707 = vunpack.c.l.b16 %v66
  %v1708 = vunpack.c.h.b16 %v66
  %v1709 = vunpack.c.l.b16 %v67
  %v1710 = vunpack.c.h.b16 %v67
  %v1711 = vunpack.c.l.b16 %v68
  %v1712 = vunpack.c.h.b16 %v68
  %v1713 = vunpack.c.l.b16 %v69
  %v1714 = vunpack.c.h.b16 %v69
  %v1715 = vunpack.c.l.b16 %v70
  %v1716 = vunpack.c.h.b16 %v70
  %v1717 = vunpack.c.l.b16 %v71
  %v1718 = vunpack.c.h.b16 %v71
  %v1719 = vunpack.c.l.b16 %v72
  %v1720 = vunpack.c.h.b16 %v72
  %v1721 = vunpack.c.l.b16 %v73
  %v1722 = vunpack.c.h.b16 %v73
  %v1723 = vunpack.c.l.b16 %v74
  %v1724 = vunpack.c.h.b16 %v74
  %v1725 = vunpack.c.l.b16 %v75
  %v1726 = vunpack.c.h.b16 %v75
  %v1727 = vunpack.c.l.b16 %v76
  %v1728 = vunpack.c.h.b16 %v76
  %v1729 = vunpack.c.l.b16 %v77
  %v1730 = vunpack.c.h.b16 %v77
  %v1731 = vunpack.c.l.b16 %v78
  %v1732 = vunpack.c.h.b16 %v78
  %v1733 = vunpack.c.l.b16 %v79
  %v1734 = vunpack.c.h.b16 %v79
  %v1735 = vunpack.c.l.b16 %v80
  %v1736 = vunpack.c.h.b16 %v80
  %v1737 = vunpack.c.l.b16 %v81
  %v1738 = vunpack.c.h.b16 %v81
  %v1739 = vunpack.c.l.b16 %v82
  %v1740 = vunpack.c.h.b16 %v82
  %v1741 = vunpack.c.l.b16 %v83
  %v1742 = vunpack.c.h.b16 %v83
  %v1743 = vunpack.c.l.b16 %v84
  %v1744 = vunpack.c.h.b16 %v84
  %v1745 = vunpack.c.l.b16 %v85
  %v1746 = vunpack.c.h.b16 %v85
  %v1747 = vunpack.c.l.b16 %v86
  %v1748 = vunpack.c.h.b16 %v86
  %v1749 = vunpack.c.l.b16 %v87
  %v1750 = vunpack.c.h.b16 %v87
  %v1751 = vunpack.c.l.b16 %v88
  %v1752 = vunpack.c.h.b16 %v88
  %v1753 = vunpack.c.l.b16 %v89
  %v1754 = vunpack.c.h.b16 %v89
  %v1755 = vunpack.c.l.b16 %v90
  %v1756 = vunpack.c.h.b16 %v90
  %v1757 = vunpack.c.l.b16 %v91
  %v1758 = vunpack.c.h.b16 %v91
  %v1759 = vunpack.c.l.b16 %v92
  %v1760 = vunpack.c.h.b16 %v92
  %v1761 = vunpack.c.l.b16 %v93
  %v1762 = vunpack.c.h.b16 %v93
  %v1763 = vunpack.c.l.b16 %v94
  %v1764 = vunpack.c.h.b16 %v94
  %v1765 = vunpack.c.l.b16 %v95
  %v1766 = vunpack.c.h.b16 %v95
  %v1767 = vunpack.c.l.b16 %v96
  %v1768 = vunpack.c.h.b16 %v96
  %v1769 = vunpack.c.l.b16 %v97
  %v1770 = vunpack.c.h.b16 %v97
  %v1771 = vunpack.c.l.b16 %v98
  %v1772 = vunpack.c.h.b16 %v98
  %v1773 = vunpack.c.l.b16 %v99
  %v1774 = vunpack.c.h.b16 %v99
  %v1775 = vunpack.c.l.b16 %v100
  %v1776 = vunpack.c.h.b16 %v100
  %v1777 = vunpack.c.l.b16 %v101
  %v1778 = vunpack.c.h.b16 %v101
  %v1779 = vunpack.c.l.b16 %v102
  %v1780 = vunpack.c.h.b16 %v102
  %v1781 = vunpack.c.l.b16 %v103
  %v1782 = vunpack.c.h.b16 %v103
  %v1783 = vunpack.c.l.b16 %v104
  %v1784 = vunpack.c.h.b16 %v104
  %v1785 = vunpack.c.l.b16 %v105
  %v1786 = vunpack.c.h.b16 %v105
  %v1787 = vunpack.c.l.b16 %v106
  %v1788 = vunpack.c.h.b16 %v106
  %v1789 = vunpack.c.l.b16 %v107
  %v1790 = vunpack.c.h.b16 %v107
  %v1791 = vunpack.c.l.b16 %v108
  %v1792 = vunpack.c.h.b16 %v108
  %v1793 = vunpack.c.l.b16 %v109
  %v1794 = vunpack.c.h.b16 %v109
  %v1795 = vunpack.c.l.b16 %v110
  %v1796 = vunpack.c.h.b16 %v110
  %v1797 = vunpack.c.l.b16 %v111
  %v1798 = vunpack.c.h.b16 %v111
  %v1799 = vunpack.c.l.b16 %v112
  %v1800 = vunpack.c.h.b16 %v112
  %v1801 = vunpack.c.l.b16 %v113
  %v1802 = vunpack.c.h.b16 %v113
  %v1803 = vunpack.c.l.b16 %v114
  %v1804 = vunpack.c.h.b16 %v114
  %v1805 = vunpack.c.l.b16 %v115
  %v1806 = vunpack.c.h.b16 %v115
  %v1807 = vunpack.c.l.b16 %v116
  %v1808 = vunpack.c.h.b16 %v116
  %v1809 = vunpack.c.l.b16 %v117
  %v1810 = vunpack.c.h.b16 %v117
  %v1811 = vunpack.c.l.b16 %v118
  %v1812 = vunpack.c.h.b16 %v118
  %v1813 = vunpack.c.l.b16 %v119
  %v1814 = vunpack.c.h.b16 %v119
  %v1815 = vunpack.c.l.b16 %v120
  %v1816 = vunpack.c.h.b16 %v120
  %v1817 = vunpack.c.l.b16 %v121
  %v1818 = vunpack.c.h.b16 %v121
  %v1819 = vunpack.c.l.b16 %v122
  %v1820 = vunpack.c.h.b16 %v122
  %v1821 = vunpack.c.l.b16 %v123
  %v1822 = vunpack.c.h.b16 %v123
  %v1823 = vunpack.c.l.b16 %v124
  %v1824 = vunpack.c.h.b16 %v124
  %v1825 = vunpack.c.l.b16 %v125
  %v1826 = vunpack.c.h.b16 %v125
  %v1827 = vunpack.c.l.b16 %v126
  %v1828 = vunpack.c.h.b16 %v126
  %v1829 = vunpack.c.l.b16 %v127
  %v1830 = vunpack.c.h.b16 %v127
  %v1831 = vunpack.c.l.b16 %v128
  %v1832 = vunpack.c.h.b16 %v128
  %v1833 = vunpack.c.l.b16 %v129
  %v1834 = vunpack.c.h.b16 %v129
  %v1835 = vunpack.c.l.b16 %v130
  %v1836 = vunpack.c.h.b16 %v130
  %v1837 = vunpack.c.l.b16 %v131
  %v1838 = vunpack.c.h.b16 %v131
  %v1839 = vunpack.c.l.b16 %v132
  %v1840 = vunpack.c.h.b16 %v132
  %v1841 = vunpack.c.l.b16 %v133
  %v1842 = vunpack.c.h.b16 %v133
  %v1843 = vunpack.c.l.b16 %v134
  %v1844 = vunpack.c.h.b16 %v134
  %v1845 = vunpack.c.l.b16 %v135
  %v1846 = vunpack.c.h.b16 %v135
  %v1847 = vunpack.c.l.b16 %v136
  %v1848 = vunpack.c.h.b16 %v136
  %v1849 = vunpack.c.l.b16 %v137
  %v1850 = vunpack.c.h.b16 %v137
  %v1851 = vunpack.c.l.b16 %v138
  %v1852 = vunpack.c.h.b16 %v138
  %v1853 = vunpack.c.l.b16 %v139
  %v1854 = vunpack.c.h.b16 %v139
  %v1855 = vunpack.c.l.b16 %v140
  %v1856 = vunpack.c.h.b16 %v140
  %v1857 = vunpack.c.l.b16 %v141
  %v1858 = vunpack.c.h.b16 %v141
  %v1859 = vunpack.c.l.b16 %v142
  %v1860 = vunpack.c.h.b16 %v142
  %v1861 = vunpack.c.l.b16 %v143
  %v1862 = vunpack.c.h.b16 %v143
  %v1863 = vunpack.c.l.b16 %v144
  %v1864 = vunpack.c.h.b16 %v144
  %v1865 = vunpack.c.l.b16 %v145
  %v1866 = vunpack.c.h.b16 %v145
  %v1867 = vunpack.c.l.b16 %v146
  %v1868 = vunpack.c.h.b16 %v146
  %v1869 = vunpack.c.l.b16 %v147
  %v1870 = vunpack.c.h.b16 %v147
  %v1871 = vunpack.c.l.b16 %v148
  %v1872 = vunpack.c.h.b16 %v148
  %v1873 = vunpack.c.l.b16 %v149
  %v1874 = vunpack.c.h.b16 %v149
  %v1875 = vunpack.c.l.b16 %v150
  %v1876 = vunpack.c.h.b16 %v150
  %v1877 = vunpack.c.l.b16 %v151
  %v1878 = vunpack.c.h.b16 %v151
  %v1879 = vunpack.c.l.b16 %v152
  %v1880 = vunpack.c.h.b16 %v152
  %v1881 = vunpack.c.l.b16 %v153
  %v1882 = vunpack.c.h.b16 %v153
  %v1883 = vunpack.c.l.b16 %v154
  %v1884 = vunpack.c.h.b16 %v154
  %v1885 = vunpack.c.l.b16 %v155
  %v1886 = vunpack.c.h.b16 %v155
  %v1887 = vunpack.c.l.b16 %v156
  %v1888 = vunpack.c.h.b16 %v156
  %v1889 = vunpack.c.l.b16 %v157
  %v1890 = vunpack.c.h.b16 %v157
  %v1891 = vunpack.c.l.b16 %v158
  %v1892 = vunpack.c.h.b16 %v158
  %v1893 = vunpack.c.l.b16 %v159
  %v1894 = vunpack.c.h.b16 %v159
  %v1895 = vunpack.c.l.b16 %v160
  %v1896 = vunpack.c.h.b16 %v160
  %v1897 = vunpack.c.l.b16 %v161
  %v1898 = vunpack.c.h.b16 %v161
  %v1899 = vunpack.c.l.b16 %v162
  %v1900 = vunpack.c.h.b16 %v162
  %v1901 = vunpack.c.l.b16 %v163
  %v1902 = vunpack.c.h.b16 %v163
  %v1903 = vunpack.c.l.b16 %v164
  %v1904 = vunpack.c.h.b16 %v164
  %v1905 = vunpack.c.l.b16 %v165
  %v1906 = vunpack.c.h.b16 %v165
  %v1907 = vunpack.c.l.b16 %v166
  %v1908 = vunpack.c.h.b16 %v166
  %v1909 = vunpack.c.l.b16 %v167
  %v1910 = vunpack.c.h.b16 %v167
  %v1911 = vunpack.c.l.b16 %v168
  %v1912 = vunpack.c.h.b16 %v168
  %v1913 = vunpack.c.l.b16 %v169
  %v1914 = vunpack.c.h.b16 %v169
  %v1915 = vunpack.c.l.b16 %v170
  %v1916 = vunpack.c.h.b16 %v170
  %v1917 = vunpack.c.l.b16 %v171
  %v1918 = vunpack.c.h.b16 %v171
  %v1919 = vunpack.c.l.b16 %v172
  %v1920 = vunpack.c.h.b16 %v172
  %v1921 = vunpack.c.l.b16 %v173
  %v1922 = vunpack.c.h.b16 %v173
  %v1923 = vunpack.c.l.b16 %v174
  %v1924 = vunpack.c.h.b16 %v174
  %v1925 = vunpack.c.l.b16 %v175
  %v1926 = vunpack.c.h.b16 %v175
  %v1927 = vunpack.c.l.b16 %v176
  %v1928 = vunpack.c.h.b16 %v176
  %v1929 = vunpack.c.l.b16 %v177
  %v1930 = vunpack.c.h.b16 %v177
  %v1931 = vunpack.c.l.b16 %v178
  %v1932 = vunpack.c.h.b16 %v178
  %v1933 = vunpack.c.l.b16 %v179
  %v1934 = vunpack.c.h.b16 %v179
  %v1935 = vunpack.c.l.b16 %v180
  %v1936 = vunpack.c.h.b16 %v180
  %v1937 = vunpack.c.l.b16 %v181
  %v1938 = vunpack.c.h.b16 %v181
  %v1939 = vunpack.c.l.b16 %v182
  %v1940 = vunpack.c.h.b16 %v182
  %v1941 = vunpack.c.l.b16 %v183
  %v1942 = vunpack.c.h.b16 %v183
  %v1943 = vunpack.c.l.b16 %v184
  %v1944 = vunpack.c.h.b16 %v184
  %v1945 = vunpack.c.l.b16 %v185
  %v1946 = vunpack.c.h.b16 %v185
  %v1947 = vunpack.c.l.b16 %v186
  %v1948 = vunpack.c.h.b16 %v186
  %v1949 = vunpack.c.l.b16 %v187
  %v1950 = vunpack.c.h.b16 %v187
  %v1951 = vunpack.c.l.b16 %v188
  %v1952 = vunpack.c.h.b16 %v188
  %v1953 = vunpack.c.l.b16 %v189
  %v1954 = vunpack.c.h.b16 %v189
  %v1955 = vunpack.c.l.b16 %v190
  %v1956 = vunpack.c.h.b16 %v190
  %v1957 = vunpack.c.l.b16 %v191
  %v1958 = vunpack.c.h.b16 %v191
  %v1959 = vunpack.c.l.b16 %v192
  %v1960 = vunpack.c.h.b16 %v192
  %v1961 = vunpack.c.l.b16 %v193
  %v1962 = vunpack.c.h.b16 %v193
  %v1963 = vunpack.c.l.b16 %v194
  %v1964 = vunpack.c.h.b16 %v194
  %v1965 = vunpack.c.l.b16 %v195
  %v1966 = vunpack.c.h.b16 %v195
  %v1967 = vunpack.c.l.b16 %v196
  %v1968 = vunpack.c.h.b16 %v196
  %v1969 = vunpack.c.l.b16 %v197
  %v1970 = vunpack.c.h.b16 %v197
  %v1971 = vunpack.c.l.b16 %v198
  %v1972 = vunpack.c.h.b16 %v198
  %v1973 = vunpack.c.l.b16 %v199
  %v1974 = vunpack.c.h.b16 %v199
  %v1975 = vunpack.c.l.b16 %v200
  %v1976 = vunpack.c.h.b16 %v200
  %v1977 = vunpack.c.l.b16 %v201
  %v1978 = vunpack.c.h.b16 %v201
  %v1979 = vunpack.c.l.b16 %v202
  %v1980 = vunpack.c.h.b16 %v202
  %v1981 = vunpack.c.l.b16 %v203
  %v1982 = vunpack.c.h.b16 %v203
  %v1983 = vunpack.c.l.b16 %v204
  %v1984 = vunpack.c.h.b16 %v204
  %v1985 = vunpack.c.l.b16 %v205
  %v1986 = vunpack.c.h.b16 %v205
  %v1987 = vunpack.c.l.b16 %v206
  %v1988 = vunpack.c.h.b16 %v206
  %v1989 = vunpack.c.l.b16 %v207
  %v1990 = vunpack.c.h.b16 %v207
  %v1991 = vunpack.c.l.b16 %v208
  %v1992 = vunpack.c.h.b16 %v208
  %v1993 = vunpack.c.l.b16 %v209
  %v1994 = vunpack.c.h.b16 %v209
  %v1995 = vunpack.c.l.b16 %v210
  %v1996 = vunpack.c.h.b16 %v210
  %v1997 = vunpack.c.l.b16 %v211
  %v1998 = vunpack.c.h.b16 %v211
  %v1999 = vunpack.c.l.b16 %v212
  %v2000 = vunpack.c.h.b16 %v212
  %v2001 = vunpack.c.l.b16 %v213
  %v2002 = vunpack.c.h.b16 %v213
  %v2003 = vunpack.c.l.b16 %v214
  %v2004 = vunpack.c.h.b16 %v214
  %v2005 = vunpack.c.l.b16 %v215
  %v2006 = vunpack.c.h.b16 %v215
  %v2007 = vunpack.c.l.b16 %v216
  %v2008 = vunpack.c.h.b16 %v216
  %v2009 = vunpack.c.l.b16 %v217
  %v2010 = vunpack.c.h.b16 %v217
  %v2011 = vunpack.c.l.b16 %v218
  %v2012 = vunpack.c.h.b16 %v218
  %v2013 = vunpack.c.l.b16 %v219
  %v2014 = vunpack.c.h.b16 %v219
  %v2015 = vunpack.c.l.b16 %v220
  %v2016 = vunpack.c.h.b16 %v220
  %v2017 = vunpack.c.l.b16 %v221
  %v2018 = vunpack.c.h.b16 %v221
  %v2019 = vunpack.c.l.b16 %v222
  %v2020 = vunpack.c.h.b16 %v222
  %v2021 = vunpack.c.l.b16 %v223
  %v2022 = vunpack.c.h.b16 %v223
  %v2023 = vunpack.c.l.b16 %v224
  %v2024 = vunpack.c.h.b16 %v224
  %v2025 = vunpack.c.l.b16 %v225
  %v2026 = vunpack.c.h.b16 %v225
  %v2027 = vunpack.c.l.b16 %v226
  %v2028 = vunpack.c.h.b16 %v226
  %v2029 = vunpack.c.l.b16 %v227
  %v2030 = vunpack.c.h.b16 %v227
  %v2031 = vunpack.c.l.b16 %v228
  %v2032 = vunpack.c.h.b16 %v228
  %v2033 = vunpack.c.l.b16 %v229
  %v2034 = vunpack.c.h.b16 %v229
  %v2035 = vunpack.c.l.b16 %v230
  %v2036 = vunpack.c.h.b16 %v230
  %v2037 = vunpack.c.l.b16 %v231
  %v2038 = vunpack.c.h.b16 %v231
  %v2039 = vunpack.c.l.b16 %v232
  %v2040 = vunpack.c.h.b16 %v232
  %v2041 = vunpack.c.l.b16 %v233
  %v2042 = vunpack.c.h.b16 %v233
  %v2043 = vunpack.c.l.b16 %v234
  %v2044 = vunpack.c.h.b16 %v234
  %v2045 = vunpack.c.l.b16 %v235
  %v2046 = vunpack.c.h.b16 %v235
  %v2047 = vunpack.c.l.b16 %v236
  %v2048 = vunpack.c.h.b16 %v236
  %v2049 = vunpack.c.l.b16 %v237
  %v2050 = vunpack.c.h.b16 %v237
  %v2051 = vunpack.c.l.b16 %v238
  %v2052 = vunpack.c.h.b16 %v238
  %v2053 = vunpack.c.l.b16 %v239
  %v2054 = vunpack.c.h.b16 %v239
  %v2055 = vunpack.c.l.b16 %v240
  %v2056 = vunpack.c.h.b16 %v240
  %v2057 = vunpack.c.l.b16 %v241
  %v2058 = vunpack.c.h.b16 %v241
  %v2059 = vunpack.c.l.b16 %v242
  %v2060 = vunpack.c.h.b16 %v242
  %v2061 = vunpack.c.l.b16 %v243
  %v2062 = vunpack.c.h.b16 %v243
  %v2063 = vunpack.c.l.b16 %v244
  %v2064 = vunpack.c.h.b16 %v244
  %v2065 = vunpack.c.l.b16 %v245
  %v2066 = vunpack.c.h.b16 %v245
  %v2067 = vunpack.c.l.b16 %v246
  %v2068 = vunpack.c.h.b16 %v246
  %v2069 = vunpack.c.l.b16 %v247
  %v2070 = vunpack.c.h.b16 %v247
  %v2071 = vunpack.c.l.b16 %v248
  %v2072 = vunpack.c.h.b16 %v248
  %v2073 = vunpack.c.l.b16 %v249
  %v2074 = vunpack.c.h.b16 %v249
  %v2075 = vunpack.c.l.b16 %v250
  %v2076 = vunpack.c.h.b16 %v250
  %v2077 = vunpack.c.l.b16 %v251
  %v2078 = vunpack.c.h.b16 %v251
  %v2079 = vunpack.c.l.b16 %v252
  %v2080 = vunpack.c.h.b16 %v252
  %v2081 = vunpack.c.l.b16 %v253
  %v2082 = vunpack.c.h.b16 %v253
  %v2083 = vunpack.c.l.b16 %v254
  %v2084 = vunpack.c.h.b16 %v254
  %v2085 = vunpack.c.l.b16 %v255
  %v2086 = vunpack.c.h.b16 %v255
  %v2087 = vunpack.c.l.b16 %v256
  %v2088 = vunpack.c.h.b16 %v256
  %v2089 = vunpack.c.l.b16 %v257
  %v2090 = vunpack.c.h.b16 %v257
  %v2091 = vunpack.c.l.b16 %v258
  %v2092 = vunpack.c.h.b16 %v258
  %v2093 = vunpack.c.l.b16 %v259
  %v2094 = vunpack.c.h.b16 %v259
  %v2095 = vunpack.c.l.b16 %v260
  %v2096 = vunpack.c.h.b16 %v260
  %v2097 = vunpack.c.l.b16 %v261
  %v2098 = vunpack.c.h.b16 %v261
  %v2099 = vunpack.c.l.b16 %v262
  %v2100 = vunpack.c.h.b16 %v262
  %v2101 = vunpack.c.l.b16 %v263
  %v2102 = vunpack.c.h.b16 %v263
  %v2103 = vunpack.c.l.b16 %v264
  %v2104 = vunpack.c.h.b16 %v264
  %v2105 = vunpack.c.l.b16 %v265
  %v2106 = vunpack.c.h.b16 %v265
  %v2107 = vunpack.c.l.b16 %v266
  %v2108 = vunpack.c.h.b16 %v266
  %v2109 = vunpack.c.l.b16 %v267
  %v2110 = vunpack.c.h.b16 %v267
  %v2111 = vunpack.c.l.b16 %v268
  %v2112 = vunpack.c.h.b16 %v268
  %v2113 = vunpack.c.l.b16 %v269
  %v2114 = vunpack.c.h.b16 %v269
  %v2115 = vunpack.c.l.b16 %v270
  %v2116 = vunpack.c.h.b16 %v270
  %v2117 = vunpack.c.l.b16 %v271
  %v2118 = vunpack.c.h.b16 %v271
  %v2119 = vunpack.c.l.b16 %v272
  %v2120 = vunpack.c.h.b16 %v272
  %v2121 = vunpack.c.l.b16 %v273
  %v2122 = vunpack.c.h.b16 %v273
  %v2123 = vunpack.c.l.b16 %v274
  %v2124 = vunpack.c.h.b16 %v274
  %v2125 = vunpack.c.l.b16 %v275
  %v2126 = vunpack.c.h.b16 %v275
  %v2127 = vunpack.c.l.b16 %v276
  %v2128 = vunpack.c.h.b16 %v276
  %v2129 = vunpack.c.l.b16 %v277
  %v2130 = vunpack.c.h.b16 %v277
  %v2131 = vunpack.c.l.b16 %v278
  %v2132 = vunpack.c.h.b16 %v278
  %v2133 = vunpack.c.l.b16 %v279
  %v2134 = vunpack.c.h.b16 %v279
  %v2135 = vunpack.c.l.b16 %v280
  %v2136 = vunpack.c.h.b16 %v280
  %v2137 = vunpack.c.l.b16 %v281
  %v2138 = vunpack.c.h.b16 %v281
  %v2139 = vunpack.c.l.b16 %v282
  %v2140 = vunpack.c.h.b16 %v282
  %v2141 = vunpack.c.l.b16 %v283
  %v2142 = vunpack.c.h.b16 %v283
  %v2143 = vunpack.c.l.b16 %v284
  %v2144 = vunpack.c.h.b16 %v284
  %v2145 = vunpack.c.l.b16 %v285
  %v2146 = vunpack.c.h.b16 %v285
  %v2147 = vunpack.c.l.b16 %v286
  %v2148 = vunpack.c.h.b16 %v286
  %v2149 = vunpack.c.l.b16 %v287
  %v2150 = vunpack.c.h.b16 %v287
  %v2151 = vunpack.c.l.b16 %v288
  %v2152 = vunpack.c.h.b16 %v288
  %v2153 = vunpack.c.l.b16 %v289
  %v2154 = vunpack.c.h.b16 %v289
  %v2155 = vunpack.c.l.b16 %v290
  %v2156 = vunpack.c.h.b16 %v290
  %v2157 = vunpack.c.l.b16 %v291
  %v2158 = vunpack.c.h.b16 %v291
  %v2159 = vunpack.c.l.b16 %v292
  %v2160 = vunpack.c.h.b16 %v292
  %v2161 = vunpack.c.l.b16 %v293
  %v2162 = vunpack.c.h.b16 %v293
  %v2163 = vunpack.c.l.b16 %v294
  %v2164 = vunpack.c.h.b16 %v294
  %v2165 = vunpack.c.l.b16 %v295
  %v2166 = vunpack.c.h.b16 %v295
  %v2167 = vunpack.c.l.b16 %v296
  %v2168 = vunpack.c.h.b16 %v296
  %v2169 = vunpack.c.l.b16 %v297
  %v2170 = vunpack.c.h.b16 %v297
  %v2171 = vunpack.c.l.b16 %v298
  %v2172 = vunpack.c.h.b16 %v298
  %v2173 = vunpack.c.l.b16 %v299
  %v2174 = vunpack.c.h.b16 %v299
  %v2175 = vunpack.c.l.b16 %v300
  %v2176 = vunpack.c.h.b16 %v300
  %v2177 = vunpack.c.l.b16 %v301
  %v2178 = vunpack.c.h.b16 %v301
  %v2179 = vunpack.c.l.b16 %v302
  %v2180 = vunpack.c.h.b16 %v302
  %v2181 = vunpack.c.l.b16 %v303
  %v2182 = vunpack.c.h.b16 %v303
  %v2183 = vunpack.c.l.b16 %v304
  %v2184 = vunpack.c.h.b16 %v304
  %v2185 = vunpack.c.l.b16 %v305
  %v2186 = vunpack.c.h.b16 %v305
  %v2187 = vunpack.c.l.b16 %v306
  %v2188 = vunpack.c.h.b16 %v306
  %v2189 = vunpack.c.l.b16 %v307
  %v2190 = vunpack.c.h.b16 %v307
  %v2191 = vunpack.c.l.b16 %v308
  %v2192 = vunpack.c.h.b16 %v308
  %v2193 = vunpack.c.l.b16 %v309
  %v2194 = vunpack.c.h.b16 %v309
  %v2195 = vunpack.c.l.b16 %v310
  %v2196 = vunpack.c.h.b16 %v310
  %v2197 = vunpack.c.l.b16 %v311
  %v2198 = vunpack.c.h.b16 %v311
  %v2199 = vunpack.c.l.b16 %v312
  %v2200 = vunpack.c.h.b16 %v312
  %v2201 = vunpack.c.l.b16 %v313
  %v2202 = vunpack.c.h.b16 %v313
  %v2203 = vunpack.c.l.b16 %v314
  %v2204 = vunpack.c.h.b16 %v314
  %v2205 = vunpack.c.l.b16 %v315
  %v2206 = vunpack.c.h.b16 %v315
  %v2207 = vunpack.c.l.b16 %v316
  %v2208 = vunpack.c.h.b16 %v316
  %v2209 = vunpack.c.l.b16 %v317
  %v2210 = vunpack.c.h.b16 %v317
  %v2211 = vunpack.c.l.b16 %v318
  %v2212 = vunpack.c.h.b16 %v318
  %v2213 = vunpack.c.l.b16 %v319
  %v2214 = vunpack.c.h.b16 %v319
  %v2215 = vunpack.c.l.b16 %v320
  %v2216 = vunpack.c.h.b16 %v320
  %v2217 = vunpack.c.l.b16 %v321
  %v2218 = vunpack.c.h.b16 %v321
  %v2219 = vunpack.c.l.b16 %v322
  %v2220 = vunpack.c.h.b16 %v322
  %v2221 = vunpack.c.l.b16 %v323
  %v2222 = vunpack.c.h.b16 %v323
  %v2223 = vunpack.c.l.b16 %v324
  %v2224 = vunpack.c.h.b16 %v324
  %v2225 = vunpack.c.l.b16 %v325
  %v2226 = vunpack.c.h.b16 %v325
  %v2227 = vunpack.c.l.b16 %v326
  %v2228 = vunpack.c.h.b16 %v326
  %v2229 = vunpack.c.l.b16 %v327
  %v2230 = vunpack.c.h.b16 %v327
  %v2231 = vunpack.c.l.b16 %v328
  %v2232 = vunpack.c.h.b16 %v328
  %v2233 = vunpack.c.l.b16 %v329
  %v2234 = vunpack.c.h.b16 %v329
  %v2235 = vunpack.c.l.b16 %v330
  %v2236 = vunpack.c.h.b16 %v330
  %v2237 = vunpack.c.l.b16 %v331
  %v2238 = vunpack.c.h.b16 %v331
  %v2239 = vunpack.c.l.b16 %v332
  %v2240 = vunpack.c.h.b16 %v332
  %v2241 = vunpack.c.l.b16 %v333
  %v2242 = vunpack.c.h.b16 %v333
  %v2243 = vunpack.c.l.b16 %v334
  %v2244 = vunpack.c.h.b16 %v334
  %v2245 = vunpack.c.l.b16 %v335
  %v2246 = vunpack.c.h.b16 %v335
  %v2247 = vunpack.c.l.b16 %v336
  %v2248 = vunpack.c.h.b16 %v336
  %v2249 = vunpack.c.l.b16 %v337
  %v2250 = vunpack.c.h.b16 %v337
  %v2251 = vunpack.c.l.b16 %v338
  %v2252 = vunpack.c.h.b16 %v338
  %v2253 = vunpack.c.l.b16 %v339
  %v2254 = vunpack.c.h.b16 %v339
  %v2255 = vunpack.c.l.b16 %v340
  %v2256 = vunpack.c.h.b16 %v340
  %v2257 = vunpack.c.l.b16 %v341
  %v2258 = vunpack.c.h.b16 %v341
  %v2259 = vunpack.c.l.b16 %v342
  %v2260 = vunpack.c.h.b16 %v342
  %v2261 = vunpack.c.l.b16 %v343
  %v2262 = vunpack.c.h.b16 %v343
  %v2263 = vunpack.c.l.b16 %v344
  %v2264 = vunpack.c.h.b16 %v344
  %v2265 = vunpack.c.l.b16 %v345
  %v2266 = vunpack.c.h.b16 %v345
  %v2267 = vunpack.c.l.b16 %v346
  %v2268 = vunpack.c.h.b16 %v346
  %v2269 = vunpack.c.l.b16 %v347
  %v2270 = vunpack.c.h.b16 %v347
  %v2271 = vunpack.c.l.b16 %v348
  %v2272 = vunpack.c.h.b16 %v348
  %v2273 = vunpack.c.l.b16 %v349
  %v2274 = vunpack.c.h.b16 %v349
  %v2275 = vunpack.c.l.b16 %v350
  %v2276 = vunpack.c.h.b16 %v350
  %v2277 = vunpack.c.l.b16 %v351
  %v2278 = vunpack.c.h.b16 %v351
  %v2279 = vunpack.c.l.b16 %v352
  %v2280 = vunpack.c.h.b16 %v352
  %v2281 = vunpack.c.l.b16 %v353
  %v2282 = vunpack.c.h.b16 %v353
  %v2283 = vunpack.c.l.b16 %v354
  %v2284 = vunpack.c.h.b16 %v354
  %v2285 = vunpack.c.l.b16 %v355
  %v2286 = vunpack.c.h.b16 %v355
  %v2287 = vunpack.c.l.b16 %v356
  %v2288 = vunpack.c.h.b16 %v356
  %v2289 = vunpack.c.l.b16 %v357
  %v2290 = vunpack.c.h.b16 %v357
  %v2291 = vunpack.c.l.b16 %v358
  %v2292 = vunpack.c.h.b16 %v358
  %v2293 = vunpack.c.l.b16 %v359
  %v2294 = vunpack.c.h.b16 %v359
  %v2295 = vunpack.c.l.b16 %v360
  %v2296 = vunpack.c.h.b16 %v360
  %v2297 = vunpack.c.l.b16 %v361
  %v2298 = vunpack.c.h.b16 %v361
  %v2299 = vunpack.c.l.b16 %v362
  %v2300 = vunpack.c.h.b16 %v362
  %v2301 = vunpack.c.l.b16 %v363
  %v2302 = vunpack.c.h.b16 %v363
  %v2303 = vunpack.c.l.b16 %v364
  %v2304 = vunpack.c.h.b16 %v364
  %v2305 = vunpack.c.l.b16 %v365
  %v2306 = vunpack.c.h.b16 %v365
  %v2307 = vunpack.c.l.b16 %v366
  %v2308 = vunpack.c.h.b16 %v366
  %v2309 = vunpack.c.l.b16 %v367
  %v2310 = vunpack.c.h.b16 %v367
  %v2311 = vunpack.c.l.b16 %v368
  %v2312 = vunpack.c.h.b16 %v368
  %v2313 = vunpack.c.l.b16 %v369
  %v2314 = vunpack.c.h.b16 %v369
  %v2315 = vunpack.c.l.b16 %v370
  %v2316 = vunpack.c.h.b16 %v370
  %v2317 = vunpack.c.l.b16 %v371
  %v2318 = vunpack.c.h.b16 %v371
  %v2319 = vunpack.c.l.b16 %v372
  %v2320 = vunpack.c.h.b16 %v372
  %v2321 = vunpack.c.l.b16 %v373
  %v2322 = vunpack.c.h.b16 %v373
  %v2323 = vunpack.c.l.b16 %v374
  %v2324 = vunpack.c.h.b16 %v374
  %v2325 = vunpack.c.l.b16 %v375
  %v2326 = vunpack.c.h.b16 %v375
  %v2327 = vunpack.c.l.b16 %v376
  %v2328 = vunpack.c.h.b16 %v376
  %v2329 = vunpack.c.l.b16 %v377
  %v2330 = vunpack.c.h.b16 %v377
  %v2331 = vunpack.c.l.b16 %v378
  %v2332 = vunpack.c.h.b16 %v378
  %v2333 = vunpack.c.l.b16 %v379
  %v2334 = vunpack.c.h.b16 %v379
  %v2335 = vunpack.c.l.b16 %v380
  %v2336 = vunpack.c.h.b16 %v380
  %v2337 = vunpack.c.l.b16 %v381
  %v2338 = vunpack.c.h.b16 %v381
  %v2339 = vunpack.c.l.b16 %v382
  %v2340 = vunpack.c.h.b16 %v382
  %v2341 = vunpack.c.l.b16 %v383
  %v2342 = vunpack.c.h.b16 %v383
  %v2343 = vunpack.c.l.b16 %v384
  %v2344 = vunpack.c.h.b16 %v384
  %v2345 = vunpack.c.l.b16 %v385
  %v2346 = vunpack.c.h.b16 %v385
  %v2347 = vunpack.c.l.b16 %v386
  %v2348 = vunpack.c.h.b16 %v386
  %v2349 = vunpack.c.l.b16 %v387
  %v2350 = vunpack.c.h.b16 %v387
  %v2351 = vunpack.c.l.b16 %v388
  %v2352 = vunpack.c.h.b16 %v388
  %v2353 = vunpack.c.l.b16 %v389
  %v2354 = vunpack.c.h.b16 %v389
  %v2355 = vunpack.c.l.b16 %v390
  %v2356 = vunpack.c.h.b16 %v390
  %v2357 = vunpack.c.l.b16 %v391
  %v2358 = vunpack.c.h.b16 %v391
  %v2359 = vunpack.c.l.b16 %v392
  %v2360 = vunpack.c.h.b16 %v392
  %v2361 = vunpack.c.l.b16 %v393
  %v2362 = vunpack.c.h.b16 %v393
  %v2363 = vunpack.c.l.b16 %v394
  %v2364 = vunpack.c.h.b16 %v394
  %v2365 = vunpack.c.l.b16 %v395
  %v2366 = vunpack.c.h.b16 %v395
  %v2367 = vunpack.c.l.b16 %v396
  %v2368 = vunpack.c.h.b16 %v396
  %v2369 = vunpack.c.l.b16 %v397
  %v2370 = vunpack.c.h.b16 %v397
  %v2371 = vunpack.c.l.b16 %v398
  %v2372 = vunpack.c.h.b16 %v398
  %v2373 = vunpack.c.l.b16 %v399
  %v2374 = vunpack.c.h.b16 %v399
  %v2375 = vunpack.c.l.b16 %v400
  %v2376 = vunpack.c.h.b16 %v400
  %v2377 = vunpack.c.l.b16 %v401
  %v2378 = vunpack.c.h.b16 %v401
  %v2379 = vunpack.c.l.b16 %v402
  %v2380 = vunpack.c.h.b16 %v402
  %v2381 = vunpack.c.l.b16 %v403
  %v2382 = vunpack.c.h.b16 %v403
  %v2383 = vunpack.c.l.b16 %v404
  %v2384 = vunpack.c.h.b16 %v404
  %v2385 = vunpack.c.l.b16 %v405
  %v2386 = vunpack.c.h.b16 %v405
  %v2387 = vunpack.c.l.b16 %v406
  %v2388 = vunpack.c.h.b16 %v406
  %v2389 = vunpack.c.l.b16 %v407
  %v2390 = vunpack.c.h.b16 %v407
  %v2391 = vunpack.c.l.b16 %v408
  %v2392 = vunpack.c.h.b16 %v408
  %v2393 = vunpack.c.l.b16 %v409
  %v2394 = vunpack.c.h.b16 %v409
  %v2395 = vunpack.c.l.b16 %v410
  %v2396 = vunpack.c.h.b16 %v410
  %v2397 = vunpack.c.l.b16 %v411
  %v2398 = vunpack.c.h.b16 %v411
  %v2399 = vunpack.c.l.b16 %v412
  %v2400 = vunpack.c.h.b16 %v412
  %v2401 = vunpack.c.l.b16 %v413
  %v2402 = vunpack.c.h.b16 %v413
  %v2403 = vunpack.c.l.b16 %v414
  %v2404 = vunpack.c.h.b16 %v414
  %v2405 = vunpack.c.l.b16 %v415
  %v2406 = vunpack.c.h.b16 %v415
  %v2407 = vunpack.c.l.b16 %v416
  %v2408 = vunpack.c.h.b16 %v416
  %v2409 = vunpack.c.l.b16 %v417
  %v2410 = vunpack.c.h.b16 %v417
  %v2411 = vunpack.c.l.b16 %v418
  %v2412 = vunpack.c.h.b16 %v418
  %v2413 = vunpack.c.l.b16 %v419
  %v2414 = vunpack.c.h.b16 %v419
  %v2415 = vunpack.c.l.b16 %v420
  %v2416 = vunpack.c.h.b16 %v420
  %v2417 = vunpack.c.l.b16 %v421
  %v2418 = vunpack.c.h.b16 %v421
  %v2419 = vunpack.c.l.b16 %v422
  %v2420 = vunpack.c.h.b16 %v422
  %v2421 = vunpack.c.l.b16 %v423
  %v2422 = vunpack.c.h.b16 %v423
  %v2423 = vunpack.c.l.b16 %v424
  %v2424 = vunpack.c.h.b16 %v424
  %v2425 = vunpack.c.l.b16 %v425
  %v2426 = vunpack.c.h.b16 %v425
  %v2427 = vunpack.c.l.b16 %v426
  %v2428 = vunpack.c.h.b16 %v426
  %v2429 = vunpack.c.l.b16 %v427
  %v2430 = vunpack.c.h.b16 %v427
  %v2431 = vunpack.c.l.b16 %v428
  %v2432 = vunpack.c.h.b16 %v428
  %v2433 = vunpack.c.l.b16 %v429
  %v2434 = vunpack.c.h.b16 %v429
  %v2435 = vunpack.c.l.b16 %v430
  %v2436 = vunpack.c.h.b16 %v430
  %v2437 = vunpack.c.l.b16 %v431
  %v2438 = vunpack.c.h.b16 %v431
  %v2439 = vunpack.c.l.b16 %v432
  %v2440 = vunpack.c.h.b16 %v432
  %v2441 = vunpack.c.l.b16 %v433
  %v2442 = vunpack.c.h.b16 %v433
  %v2443 = vunpack.c.l.b16 %v434
  %v2444 = vunpack.c.h.b16 %v434
  %v2445 = vunpack.c.l.b16 %v435
  %v2446 = vunpack.c.h.b16 %v435
  %v2447 = vunpack.c.l.b16 %v436
  %v2448 = vunpack.c.h.b16 %v436
  %v2449 = vunpack.c.l.b16 %v437
  %v2450 = vunpack.c.h.b16 %v437
  %v2451 = vunpack.c.l.b16 %v438
  %v2452 = vunpack.c.h.b16 %v438
  %v2453 = vunpack.c.l.b16 %v439
  %v2454 = vunpack.c.h.b16 %v439
  %v2455 = vunpack.c.l.b16 %v440
  %v2456 = vunpack.c.h.b16 %v440
  %v2457 = vunpack.c.l.b16 %v441
  %v2458 = vunpack.c.h.b16 %v441
  %v2459 = vunpack.c.l.b16 %v442
  %v2460 = vunpack.c.h.b16 %v442
  %v2461 = vunpack.c.l.b16 %v443
  %v2462 = vunpack.c.h.b16 %v443
  %v2463 = vunpack.c.l.b16 %v444
  %v2464 = vunpack.c.h.b16 %v444
  %v2465 = vunpack.c.l.b16 %v445
  %v2466 = vunpack.c.h.b16 %v445
  %v2467 = vunpack.c.l.b16 %v446
  %v2468 = vunpack.c.h.b16 %v446
  %v2469 = vunpack.c.l.b16 %v447
  %v2470 = vunpack.c.h.b16 %v447
  %v2471 = vunpack.c.l.b16 %v448
  %v2472 = vunpack.c.h.b16 %v448
  %v2473 = vunpack.c.l.b16 %v449
  %v2474 = vunpack.c.h.b16 %v449
  %v2475 = vunpack.c.l.b16 %v450
  %v2476 = vunpack.c.h.b16 %v450
  %v2477 = vunpack.c.l.b16 %v451
  %v2478 = vunpack.c.h.b16 %v451
  %v2479 = vunpack.c.l.b16 %v452
  %v2480 = vunpack.c.h.b16 %v452
  %v2481 = vunpack.c.l.b16 %v453
  %v2482 = vunpack.c.h.b16 %v453
  %v2483 = vunpack.c.l.b16 %v454
  %v2484 = vunpack.c.h.b16 %v454
  %v2485 = vunpack.c.l.b16 %v455
  %v2486 = vunpack.c.h.b16 %v455
  %v2487 = vunpack.c.l.b16 %v456
  %v2488 = vunpack.c.h.b16 %v456
  %v2489 = vunpack.c.l.b16 %v457
  %v2490 = vunpack.c.h.b16 %v457
  %v2491 = vunpack.c.l.b16 %v458
  %v2492 = vunpack.c.h.b16 %v458
  %v2493 = vunpack.c.l.b16 %v459
  %v2494 = vunpack.c.h.b16 %v459
  %v2495 = vunpack.c.l.b16 %v460
  %v2496 = vunpack.c.h.b16 %v460
  %v2497 = vunpack.c.l.b16 %v461
  %v2498 = vunpack.c.h.b16 %v461
  %v2499 = vunpack.c.l.b16 %v462
  %v2500 = vunpack.c.h.b16 %v462
  %v2501 = vunpack.c.l.b16 %v463
  %v2502 = vunpack.c.h.b16 %v463
  %v2503 = vunpack.c.l.b16 %v464
  %v2504 = vunpack.c.h.b16 %v464
  %v2505 = vunpack.c.l.b16 %v465
  %v2506 = vunpack.c.h.b16 %v465
  %v2507 = vunpack.c.l.b16 %v466
  %v2508 = vunpack.c.h.b16 %v466
  %v2509 = vunpack.c.l.b16 %v467
  %v2510 = vunpack.c.h.b16 %v467
  %v2511 = vunpack.c.l.b16 %v468
  %v2512 = vunpack.c.h.b16 %v468
  %v2513 = vunpack.c.l.b16 %v469
  %v2514 = vunpack.c.h.b16 %v469
  %v2515 = vunpack.c.l.b16 %v470
  %v2516 = vunpack.c.h.b16 %v470
  %v2517 = vunpack.c.l.b16 %v471
  %v2518 = vunpack.c.h.b16 %v471
  %v2519 = vunpack.c.l.b16 %v472
  %v2520 = vunpack.c.h.b16 %v472
  %v2521 = vunpack.c.l.b16 %v473
  %v2522 = vunpack.c.h.b16 %v473
  %v2523 = vunpack.c.l.b16 %v474
  %v2524 = vunpack.c.h.b16 %v474
  %v2525 = vunpack.c.l.b16 %v475
  %v2526 = vunpack.c.h.b16 %v475
  %v2527 = vunpack.c.l.b16 %v476
  %v2528 = vunpack.c.h.b16 %v476
  %v2529 = vunpack.c.l.b16 %v477
  %v2530 = vunpack.c.h.b16 %v477
  %v2531 = vunpack.c.l.b16 %v478
  %v2532 = vunpack.c.h.b16 %v478
  %v2533 = vunpack.c.l.b16 %v479
  %v2534 = vunpack.c.h.b16 %v479
  %v2535 = vunpack.c.l.b16 %v480
  %v2536 = vunpack.c.h.b16 %v480
  %v2537 = vunpack.c.l.b16 %v481
  %v2538 = vunpack.c.h.b16 %v481
  %v2539 = vunpack.c.l.b16 %v482
  %v2540 = vunpack.c.h.b16 %v482
  %v2541 = vunpack.c.l.b16 %v483
  %v2542 = vunpack.c.h.b16 %v483
  %v2543 = vunpack.c.l.b16 %v484
  %v2544 = vunpack.c.h.b16 %v484
  %v2545 = vunpack.c.l.b16 %v485
  %v2546 = vunpack.c.h.b16 %v485
  %v2547 = vunpack.c.l.b16 %v486
  %v2548 = vunpack.c.h.b16 %v486
  %v2549 = vunpack.c.l.b16 %v487
  %v2550 = vunpack.c.h.b16 %v487
  %v2551 = vunpack.c.l.b16 %v488
  %v2552 = vunpack.c.h.b16 %v488
  %v2553 = vunpack.c.l.b16 %v489
  %v2554 = vunpack.c.h.b16 %v489
  %v2555 = vunpack.c.l.b16 %v490
  %v2556 = vunpack.c.h.b16 %v490
  %v2557 = vunpack.c.l.b16 %v491
  %v2558 = vunpack.c.h.b16 %v491
  %v2559 = vunpack.c.l.b16 %v492
  %v2560 = vunpack.c.h.b16 %v492
  %v2561 = vunpack.c.l.b16 %v493
  %v2562 = vunpack.c.h.b16 %v493
  %v2563 = vunpack.c.l.b16 %v494
  %v2564 = vunpack.c.h.b16 %v494
  %v2565 = vunpack.c.l.b16 %v495
  %v2566 = vunpack.c.h.b16 %v495
  %v2567 = vunpack.c.l.b16 %v496
  %v2568 = vunpack.c.h.b16 %v496
  %v2569 = vunpack.c.l.b16 %v497
  %v2570 = vunpack.c.h.b16 %v497
  %v2571 = vunpack.c.l.b16 %v498
  %v2572 = vunpack.c.h.b16 %v498
  %v2573 = vunpack.c.l.b16 %v499
  %v2574 = vunpack.c.h.b16 %v499
  %v2575 = vunpack.c.l.b16 %v500
  %v2576 = vunpack.c.h.b16 %v500
  %v2577 = vunpack.c.l.b16 %v501
  %v2578 = vunpack.c.h.b16 %v501
  %v2579 = vunpack.c.l.b16 %v502
  %v2580 = vunpack.c.h.b16 %v502
  %v2581 = vunpack.c.l.b16 %v503
  %v2582 = vunpack.c.h.b16 %v503
  %v2583 = vunpack.c.l.b16 %v504
  %v2584 = vunpack.c.h.b16 %v504
  %v2585 = vunpack.c.l.b16 %v505
  %v2586 = vunpack.c.h.b16 %v505
  %v2587 = vunpack.c.l.b16 %v506
  %v2588 = vunpack.c.h.b16 %v506
  %v2589 = vunpack.c.l.b16 %v507
  %v2590 = vunpack.c.h.b16 %v507
  %v2591 = vunpack.c.l.b16 %v508
  %v2592 = vunpack.c.h.b16 %v508
  %v2593 = vunpack.c.l.b16 %v509
  %v2594 = vunpack.c.h.b16 %v509
  %v2595 = vunpack.c.l.b16 %v510
  %v2596 = vunpack.c.h.b16 %v510
  %v2597 = vunpack.c.l.b16 %v511
  %v2598 = vunpack.c.h.b16 %v511
  %v2599 = vunpack.c.l.b16 %v512
  %v2600 = vunpack.c.h.b16 %v512
  %v2601 = vunpack.c.l.b16 %v513
  %v2602 = vunpack.c.h.b16 %v513
  %v2603 = vunpack.c.l.b16 %v514
  %v2604 = vunpack.c.h.b16 %v514
  %v2605 = vunpack.c.l.b16 %v515
  %v2606 = vunpack.c.h.b16 %v515
  %v2607 = vunpack.c.l.b16 %v516
  %v2608 = vunpack.c.h.b16 %v516
  %v2609 = vunpack.c.l.b16 %v517
  %v2610 = vunpack.c.h.b16 %v517
  %v2611 = vunpack.c.l.b16 %v518
  %v2612 = vunpack.c.h.b16 %v518
  %v2613 = vunpack.c.l.b16 %v519
  %v2614 = vunpack.c.h.b16 %v519
  %v2615 = vunpack.c.l.b16 %v520
  %v2616 = vunpack.c.h.b16 %v520
  %v2617 = vunpack.c.l.b16 %v521
  %v2618 = vunpack.c.h.b16 %v521
  %v2619 = vunpack.c.l.b16 %v522
  %v2620 = vunpack.c.h.b16 %v522
  %v2621 = vunpack.c.l.b16 %v523
  %v2622 = vunpack.c.h.b16 %v523
  %v2623 = vunpack.c.l.b16 %v524
  %v2624 = vunpack.c.h.b16 %v524
  %v2625 = vunpack.c.l.b16 %v525
  %v2626 = vunpack.c.h.b16 %v525
  %v2627 = vunpack.c.l.b16 %v526
  %v2628 = vunpack.c.h.b16 %v526
  %v2629 = vunpack.c.l.b16 %v527
  %v2630 = vunpack.c.h.b16 %v527
  %v2631 = vunpack.c.l.b16 %v528
  %v2632 = vunpack.c.h.b16 %v528
  %v2633 = vunpack.c.l.b16 %v529
  %v2634 = vunpack.c.h.b16 %v529
  %v2635 = vunpack.c.l.b16 %v530
  %v2636 = vunpack.c.h.b16 %v530
  %v2637 = vunpack.c.l.b16 %v531
  %v2638 = vunpack.c.h.b16 %v531
  %v2639 = vunpack.c.l.b16 %v532
  %v2640 = vunpack.c.h.b16 %v532
  %v2641 = vunpack.c.l.b16 %v533
  %v2642 = vunpack.c.h.b16 %v533
  %v2643 = vunpack.c.l.b16 %v534
  %v2644 = vunpack.c.h.b16 %v534
  %v2645 = vunpack.c.l.b16 %v535
  %v2646 = vunpack.c.h.b16 %v535
  %v2647 = vunpack.c.l.b16 %v536
  %v2648 = vunpack.c.h.b16 %v536
  %v2649 = vunpack.c.l.b16 %v537
  %v2650 = vunpack.c.h.b16 %v537
  %v2651 = vunpack.c.l.b16 %v538
  %v2652 = vunpack.c.h.b16 %v538
  %v2653 = vunpack.c.l.b16 %v539
  %v2654 = vunpack.c.h.b16 %v539
  %v2655 = vunpack.c.l.b16 %v540
  %v2656 = vunpack.c.h.b16 %v540
  %v2657 = vunpack.c.l.b16 %v541
  %v2658 = vunpack.c.h.b16 %v541
  %v2659 = vunpack.c.l.b16 %v542
  %v2660 = vunpack.c.h.b16 %v542
  %v2661 = vunpack.c.l.b16 %v543
  %v2662 = vunpack.c.h.b16 %v543
  %v2663 = vunpack.c.l.b16 %v544
  %v2664 = vunpack.c.h.b16 %v544
  %v2665 = vunpack.c.l.b16 %v545
  %v2666 = vunpack.c.h.b16 %v545
  %v2667 = vunpack.c.l.b16 %v546
  %v2668 = vunpack.c.h.b16 %v546
  %v2669 = vunpack.c.l.b16 %v547
  %v2670 = vunpack.c.h.b16 %v547
  %v2671 = vunpack.c.l.b16 %v548
  %v2672 = vunpack.c.h.b16 %v548
  %v2673 = vunpack.c.l.b16 %v549
  %v2674 = vunpack.c.h.b16 %v549
  %v2675 = vunpack.c.l.b16 %v550
  %v2676 = vunpack.c.h.b16 %v550
  %v2677 = vunpack.c.l.b16 %v551
  %v2678 = vunpack.c.h.b16 %v551
  %v2679 = vunpack.c.l.b16 %v552
  %v2680 = vunpack.c.h.b16 %v552
  %v2681 = vunpack.c.l.b16 %v553
  %v2682 = vunpack.c.h.b16 %v553
  %v2683 = vunpack.c.l.b16 %v554
  %v2684 = vunpack.c.h.b16 %v554
  %v2685 = vunpack.c.l.b16 %v555
  %v2686 = vunpack.c.h.b16 %v555
  %v2687 = vunpack.c.l.b16 %v556
  %v2688 = vunpack.c.h.b16 %v556
  %v2689 = vunpack.c.l.b16 %v557
  %v2690 = vunpack.c.h.b16 %v557
  %v2691 = vunpack.c.l.b16 %v558
  %v2692 = vunpack.c.h.b16 %v558
  %v2693 = vunpack.c.l.b16 %v559
  %v2694 = vunpack.c.h.b16 %v559
  %v2695 = vunpack.c.l.b16 %v560
  %v2696 = vunpack.c.h.b16 %v560
  %v2697 = vunpack.c.l.b16 %v561
  %v2698 = vunpack.c.h.b16 %v561
  %v2699 = vunpack.c.l.b16 %v562
  %v2700 = vunpack.c.h.b16 %v562
  %v2701 = vunpack.c.l.b16 %v563
  %v2702 = vunpack.c.h.b16 %v563
  %v2703 = vunpack.c.l.b16 %v564
  %v2704 = vunpack.c.h.b16 %v564
  %v2705 = vunpack.c.l.b16 %v565
  %v2706 = vunpack.c.h.b16 %v565
  %v2707 = vunpack.c.l.b16 %v566
  %v2708 = vunpack.c.h.b16 %v566
  %v2709 = vunpack.c.l.b16 %v567
  %v2710 = vunpack.c.h.b16 %v567
  %v2711 = vunpack.c.l.b16 %v568
  %v2712 = vunpack.c.h.b16 %v568
  %v2713 = vunpack.c.l.b16 %v569
  %v2714 = vunpack.c.h.b16 %v569
  %v2715 = vunpack.c.l.b16 %v570
  %v2716 = vunpack.c.h.b16 %v570
  %v2717 = vunpack.c.l.b16 %v571
  %v2718 = vunpack.c.h.b16 %v571
  %v2719 = vunpack.c.l.b16 %v572
  %v2720 = vunpack.c.h.b16 %v572
  %v2721 = vunpack.c.l.b16 %v573
  %v2722 = vunpack.c.h.b16 %v573
  %v2723 = vunpack.c.l.b16 %v574
  %v2724 = vunpack.c.h.b16 %v574
  %v2725 = vunpack.c.l.b16 %v575
  %v2726 = vunpack.c.h.b16 %v575
  %v2727 = vunpack.c.l.b16 %v576
  %v2728 = vunpack.c.h.b16 %v576
  %v2729 = vunpack.c.l.b16 %v577
  %v2730 = vunpack.c.h.b16 %v577
  %v2731 = vunpack.c.l.b16 %v578
  %v2732 = vunpack.c.h.b16 %v578
  %v2733 = vunpack.c.l.b16 %v579
  %v2734 = vunpack.c.h.b16 %v579
  %v2735 = vunpack.c.l.b16 %v580
  %v2736 = vunpack.c.h.b16 %v580
  %v2737 = vunpack.c.l.b16 %v581
  %v2738 = vunpack.c.h.b16 %v581
  %v2739 = vunpack.c.l.b16 %v582
  %v2740 = vunpack.c.h.b16 %v582
  %v2741 = vunpack.c.l.b16 %v583
  %v2742 = vunpack.c.h.b16 %v583
  %v2743 = vunpack.c.l.b16 %v584
  %v2744 = vunpack.c.h.b16 %v584
  %v2745 = vunpack.c.l.b16 %v585
  %v2746 = vunpack.c.h.b16 %v585
  %v2747 = vunpack.c.l.b16 %v586
  %v2748 = vunpack.c.h.b16 %v586
  %v2749 = vunpack.c.l.b16 %v587
  %v2750 = vunpack.c.h.b16 %v587
  %v2751 = vunpack.c.l.b16 %v588
  %v2752 = vunpack.c.h.b16 %v588
  %v2753 = vunpack.c.l.b16 %v589
  %v2754 = vunpack.c.h.b16 %v589
  %v2755 = vunpack.c.l.b16 %v590
  %v2756 = vunpack.c.h.b16 %v590
  %v2757 = vunpack.c.l.b16 %v591
  %v2758 = vunpack.c.h.b16 %v591
  %v2759 = vunpack.c.l.b16 %v592
  %v2760 = vunpack.c.h.b16 %v592
  %v2761 = vunpack.c.l.b16 %v593
  %v2762 = vunpack.c.h.b16 %v593
  %v2763 = vunpack.c.l.b16 %v594
  %v2764 = vunpack.c.h.b16 %v594
  %v2765 = vunpack.c.l.b16 %v595
  %v2766 = vunpack.c.h.b16 %v595
  %v2767 = vunpack.c.l.b16 %v596
  %v2768 = vunpack.c.h.b16 %v596
  %v2769 = vunpack.c.l.b16 %v597
  %v2770 = vunpack.c.h.b16 %v597
  %v2771 = vunpack.c.l.b16 %v598
  %v2772 = vunpack.c.h.b16 %v598
  %v2773 = vunpack.c.l.b16 %v599
  %v2774 = vunpack.c.h.b16 %v599
  %v2775 = vunpack.c.l.b16 %v600
  %v2776 = vunpack.c.h.b16 %v600
  %v2777 = vunpack.c.l.b16 %v601
  %v2778 = vunpack.c.h.b16 %v601
  %v2779 = vunpack.c.l.b16 %v602
  %v2780 = vunpack.c.h.b16 %v602
  %v2781 = vunpack.c.l.b16 %v603
  %v2782 = vunpack.c.h.b16 %v603
  %v2783 = vunpack.c.l.b16 %v604
  %v2784 = vunpack.c.h.b16 %v604
  %v2785 = vunpack.c.l.b16 %v605
  %v2786 = vunpack.c.h.b16 %v605
  %v2787 = vunpack.c.l.b16 %v606
  %v2788 = vunpack.c.h.b16 %v606
  %v2789 = vunpack.c.l.b16 %v607
  %v2790 = vunpack.c.h.b16 %v607
  %v2791 = vunpack.c.l.b16 %v608
  %v2792 = vunpack.c.h.b16 %v608
  %v2793 = vunpack.c.l.b16 %v609
  %v2794 = vunpack.c.h.b16 %v609
  %v2795 = vunpack.c.l.b16 %v610
  %v2796 = vunpack.c.h.b16 %v610
  %v2797 = vunpack.c.l.b16 %v611
  %v2798 = vunpack.c.h.b16 %v611
  %v2799 = vunpack.c.l.b16 %v612
  %v2800 = vunpack.c.h.b16 %v612
  %v2801 = vunpack.c.l.b16 %v613
  %v2802 = vunpack.c.h.b16 %v613
  %v2803 = vunpack.c.l.b16 %v614
  %v2804 = vunpack.c.h.b16 %v614
  %v2805 = vunpack.c.l.b16 %v615
  %v2806 = vunpack.c.h.b16 %v615
  %v2807 = vunpack.c.l.b16 %v616
  %v2808 = vunpack.c.h.b16 %v616
  %v2809 = vunpack.c.l.b16 %v617
  %v2810 = vunpack.c.h.b16 %v617
  %v2811 = vunpack.c.l.b16 %v618
  %v2812 = vunpack.c.h.b16 %v618
  %v2813 = vunpack.c.l.b16 %v619
  %v2814 = vunpack.c.h.b16 %v619
  %v2815 = vunpack.c.l.b16 %v620
  %v2816 = vunpack.c.h.b16 %v620
  %v2817 = vunpack.c.l.b16 %v621
  %v2818 = vunpack.c.h.b16 %v621
  %v2819 = vunpack.c.l.b16 %v622
  %v2820 = vunpack.c.h.b16 %v622
  %v2821 = vunpack.c.l.b16 %v623
  %v2822 = vunpack.c.h.b16 %v623
  %v2823 = vunpack.c.l.b16 %v624
  %v2824 = vunpack.c.h.b16 %v624
  %v2825 = vunpack.c.l.b16 %v625
  %v2826 = vunpack.c.h.b16 %v625
  %v2827 = vunpack.c.l.b16 %v626
  %v2828 = vunpack.c.h.b16 %v626
  %v2829 = vunpack.c.l.b16 %v627
  %v2830 = vunpack.c.h.b16 %v627
  %v2831 = vunpack.c.l.b16 %v628
  %v2832 = vunpack.c.h.b16 %v628
  %v2833 = vunpack.c.l.b16 %v629
  %v2834 = vunpack.c.h.b16 %v629
  %v2835 = vunpack.c.l.b16 %v630
  %v2836 = vunpack.c.h.b16 %v630
  %v2837 = vunpack.c.l.b16 %v631
  %v2838 = vunpack.c.h.b16 %v631
  %v2839 = vunpack.c.l.b16 %v632
  %v2840 = vunpack.c.h.b16 %v632
  %v2841 = vunpack.c.l.b16 %v633
  %v2842 = vunpack.c.h.b16 %v633
  %v2843 = vunpack.c.l.b16 %v634
  %v2844 = vunpack.c.h.b16 %v634
  %v2845 = vunpack.c.l.b16 %v635
  %v2846 = vunpack.c.h.b16 %v635
  %v2847 = vunpack.c.l.b16 %v636
  %v2848 = vunpack.c.h.b16 %v636
  %v2849 = vunpack.c.l.b16 %v637
  %v2850 = vunpack.c.h.b16 %v637
  %v2851 = vunpack.c.l.b16 %v638
  %v2852 = vunpack.c.h.b16 %v638
  %v2853 = vunpack.c.l.b16 %v639
  %v2854 = vunpack.c.h.b16 %v639
  %v2855 = vunpack.c.l.b16 %v640
  %v2856 = vunpack.c.h.b16 %v640
  %v2857 = vunpack.c.l.b16 %v641
  %v2858 = vunpack.c.h.b16 %v641
  %v2859 = vunpack.c.l.b16 %v642
  %v2860 = vunpack.c.h.b16 %v642
  %v2861 = vunpack.c.l.b16 %v643
  %v2862 = vunpack.c.h.b16 %v643
  %v2863 = vunpack.c.l.b16 %v644
  %v2864 = vunpack.c.h.b16 %v644
  %v2865 = vunpack.c.l.b16 %v645
  %v2866 = vunpack.c.h.b16 %v645
  %v2867 = vunpack.c.l.b16 %v646
  %v2868 = vunpack.c.h.b16 %v646
  %v2869 = vunpack.c.l.b16 %v647
  %v2870 = vunpack.c.h.b16 %v647
  %v2871 = vunpack.c.l.b16 %v648
  %v2872 = vunpack.c.h.b16 %v648
  %v2873 = vunpack.c.l.b16 %v649
  %v2874 = vunpack.c.h.b16 %v649
  %v2875 = vunpack.c.l.b16 %v650
  %v2876 = vunpack.c.h.b16 %v650
  %v2877 = vunpack.c.l.b16 %v651
  %v2878 = vunpack.c.h.b16 %v651
  %v2879 = vunpack.c.l.b16 %v652
  %v2880 = vunpack.c.h.b16 %v652
  %v2881 = vunpack.c.l.b16 %v653
  %v2882 = vunpack.c.h.b16 %v653
  %v2883 = vunpack.c.l.b16 %v654
  %v2884 = vunpack.c.h.b16 %v654
  %v2885 = vunpack.c.l.b16 %v655
  %v2886 = vunpack.c.h.b16 %v655
  %v2887 = vunpack.c.l.b16 %v656
  %v2888 = vunpack.c.h.b16 %v656
  %v2889 = vunpack.c.l.b16 %v657
  %v2890 = vunpack.c.h.b16 %v657
  %v2891 = vunpack.c.l.b16 %v658
  %v2892 = vunpack.c.h.b16 %v658
  %v2893 = vunpack.c.l.b16 %v659
  %v2894 = vunpack.c.h.b16 %v659
  %v2895 = vunpack.c.l.b16 %v660
  %v2896 = vunpack.c.h.b16 %v660
  %v2897 = vunpack.c.l.b16 %v661
  %v2898 = vunpack.c.h.b16 %v661
  %v2899 = vunpack.c.l.b16 %v662
  %v2900 = vunpack.c.h.b16 %v662
  %v2901 = vunpack.c.l.b16 %v663
  %v2902 = vunpack.c.h.b16 %v663
  %v2903 = vunpack.c.l.b16 %v664
  %v2904 = vunpack.c.h.b16 %v664
  %v2905 = vunpack.c.l.b16 %v665
  %v2906 = vunpack.c.h.b16 %v665
  %v2907 = vunpack.c.l.b16 %v666
  %v2908 = vunpack.c.h.b16 %v666
  %v2909 = vunpack.c.l.b16 %v667
  %v2910 = vunpack.c.h.b16 %v667
  %v2911 = vunpack.c.l.b16 %v668
  %v2912 = vunpack.c.h.b16 %v668
  %v2913 = vunpack.c.l.b16 %v669
  %v2914 = vunpack.c.h.b16 %v669
  %v2915 = vunpack.c.l.b16 %v670
  %v2916 = vunpack.c.h.b16 %v670
  %v2917 = vunpack.c.l.b16 %v671
  %v2918 = vunpack.c.h.b16 %v671
  %v2919 = vunpack.c.l.b16 %v672
  %v2920 = vunpack.c.h.b16 %v672
  %v2921 = vunpack.c.l.b16 %v673
  %v2922 = vunpack.c.h.b16 %v673
  %v2923 = vunpack.c.l.b16 %v674
  %v2924 = vunpack.c.h.b16 %v674
  %v2925 = vunpack.c.l.b16 %v675
  %v2926 = vunpack.c.h.b16 %v675
  %v2927 = vunpack.c.l.b16 %v676
  %v2928 = vunpack.c.h.b16 %v676
  %v2929 = vunpack.c.l.b16 %v677
  %v2930 = vunpack.c.h.b16 %v677
  %v2931 = vunpack.c.l.b16 %v678
  %v2932 = vunpack.c.h.b16 %v678
  %v2933 = vunpack.c.l.b16 %v679
  %v2934 = vunpack.c.h.b16 %v679
  %v2935 = vunpack.c.l.b16 %v680
  %v2936 = vunpack.c.h.b16 %v680
  %v2937 = vunpack.c.l.b16 %v681
  %v2938 = vunpack.c.h.b16 %v681
  %v2939 = vunpack.c.l.b16 %v682
  %v2940 = vunpack.c.h.b16 %v682
  %v2941 = vunpack.c.l.b16 %v683
  %v2942 = vunpack.c.h.b16 %v683
  %v2943 = vunpack.c.l.b16 %v684
  %v2944 = vunpack.c.h.b16 %v684
  %v2945 = vunpack.c.l.b16 %v685
  %v2946 = vunpack.c.h.b16 %v685
  %v2947 = vunpack.c.l.b16 %v686
  %v2948 = vunpack.c.h.b16 %v686
  %v2949 = vunpack.c.l.b16 %v687
  %v2950 = vunpack.c.h.b16 %v687
  %v2951 = vunpack.c.l.b16 %v688
  %v2952 = vunpack.c.h.b16 %v688
  %v2953 = vunpack.c.l.b16 %v689
  %v2954 = vunpack.c.h.b16 %v689
  %v2955 = vunpack.c.l.b16 %v690
  %v2956 = vunpack.c.h.b16 %v690
  %v2957 = vunpack.c.l.b16 %v691
  %v2958 = vunpack.c.h.b16 %v691
  %v2959 = vunpack.c.l.b16 %v692
  %v2960 = vunpack.c.h.b16 %v692
  %v2961 = vunpack.c.l.b16 %v693
  %v2962 = vunpack.c.h.b16 %v693
  %v2963 = vunpack.c.l.b16 %v694
  %v2964 = vunpack.c.h.b16 %v694
  %v2965 = vunpack.c.l.b16 %v695
  %v2966 = vunpack.c.h.b16 %v695
  %v2967 = vunpack.c.l.b16 %v696
  %v2968 = vunpack.c.h.b16 %v696
  %v2969 = vunpack.c.l.b16 %v697
  %v2970 = vunpack.c.h.b16 %v697
  %v2971 = vunpack.c.l.b16 %v698
  %v2972 = vunpack.c.h.b16 %v698
  %v2973 = vunpack.c.l.b16 %v699
  %v2974 = vunpack.c.h.b16 %v699
  %v2975 = vunpack.c.l.b16 %v700
  %v2976 = vunpack.c.h.b16 %v700
  %v2977 = vunpack.c.l.b16 %v701
  %v2978 = vunpack.c.h.b16 %v701
  %v2979 = vunpack.c.l.b16 %v702
  %v2980 = vunpack.c.h.b16 %v702
  %v2981 = vunpack.c.l.b16 %v703
  %v2982 = vunpack.c.h.b16 %v703
  %v2983 = vunpack.c.l.b16 %v704
  %v2984 = vunpack.c.h.b16 %v704
  %v2985 = vunpack.c.l.b16 %v705
  %v2986 = vunpack.c.h.b16 %v705
  %v2987 = vunpack.c.l.b16 %v706
  %v2988 = vunpack.c.h.b16 %v706
  %v2989 = vunpack.c.l.b16 %v707
  %v2990 = vunpack.c.h.b16 %v707
  %v2991 = vunpack.c.l.b16 %v708
  %v2992 = vunpack.c.h.b16 %v708
  %v2993 = vunpack.c.l.b16 %v709
  %v2994 = vunpack.c.h.b16 %v709
  %v2995 = vunpack.c.l.b16 %v710
  %v2996 = vunpack.c.h.b16 %v710
  %v2997 = vunpack.c.l.b16 %v711
  %v2998 = vunpack.c.h.b16 %v711
  %v2999 = vunpack.c.l.b16 %v712
  %v3000 = vunpack.c.h.b16 %v712
  %v3001 = vunpack.c.l.b16 %v713
  %v3002 = vunpack.c.h.b16 %v713
  %v3003 = vunpack.c.l.b16 %v714
  %v3004 = vunpack.c.h.b16 %v714
  %v3005 = vunpack.c.l.b16 %v715
  %v3006 = vunpack.c.h.b16 %v715
  %v3007 = vunpack.c.l.b16 %v716
  %v3008 = vunpack.c.h.b16 %v716
  %v3009 = vunpack.c.l.b16 %v717
  %v3010 = vunpack.c.h.b16 %v717
  %v3011 = vunpack.c.l.b16 %v718
  %v3012 = vunpack.c.h.b16 %v718
  %v3013 = vunpack.c.l.b16 %v719
  %v3014 = vunpack.c.h.b16 %v719
  %v3015 = vunpack.c.l.b16 %v720
  %v3016 = vunpack.c.h.b16 %v720
  %v3017 = vunpack.c.l.b16 %v721
  %v3018 = vunpack.c.h.b16 %v721
  %v3019 = vunpack.c.l.b16 %v722
  %v3020 = vunpack.c.h.b16 %v722
  %v3021 = vunpack.c.l.b16 %v723
  %v3022 = vunpack.c.h.b16 %v723
  %v3023 = vunpack.c.l.b16 %v724
  %v3024 = vunpack.c.h.b16 %v724
  %v3025 = vunpack.c.l.b16 %v725
  %v3026 = vunpack.c.h.b16 %v725
  %v3027 = vunpack.c.l.b16 %v726
  %v3028 = vunpack.c.h.b16 %v726
  %v3029 = vunpack.c.l.b16 %v727
  %v3030 = vunpack.c.h.b16 %v727
  %v3031 = vunpack.c.l.b16 %v728
  %v3032 = vunpack.c.h.b16 %v728
  %v3033 = vunpack.c.l.b16 %v729
  %v3034 = vunpack.c.h.b16 %v729
  %v3035 = vunpack.c.l.b16 %v730
  %v3036 = vunpack.c.h.b16 %v730
  %v3037 = vunpack.c.l.b16 %v731
  %v3038 = vunpack.c.h.b16 %v731
  %v3039 = vunpack.c.l.b16 %v732
  %v3040 = vunpack.c.h.b16 %v732
  %v3041 = vunpack.c.l.b16 %v733
  %v3042 = vunpack.c.h.b16 %v733
  %v3043 = vunpack.c.l.b16 %v734
  %v3044 = vunpack.c.h.b16 %v734
  %v3045 = vunpack.c.l.b16 %v735
  %v3046 = vunpack.c.h.b16 %v735
  %v3047 = vunpack.c.l.b16 %v736
  %v3048 = vunpack.c.h.b16 %v736
  %v3049 = vunpack.c.l.b16 %v737
  %v3050 = vunpack.c.h.b16 %v737
  %v3051 = vunpack.c.l.b16 %v738
  %v3052 = vunpack.c.h.b16 %v738
  %v3053 = vunpack.c.l.b16 %v739
  %v3054 = vunpack.c.h.b16 %v739
  %v3055 = vunpack.c.l.b16 %v740
  %v3056 = vunpack.c.h.b16 %v740
  %v3057 = vunpack.c.l.b16 %v741
  %v3058 = vunpack.c.h.b16 %v741
  %v3059 = vunpack.c.l.b16 %v742
  %v3060 = vunpack.c.h.b16 %v742
  %v3061 = vunpack.c.l.b16 %v743
  %v3062 = vunpack.c.h.b16 %v743
  %v3063 = vunpack.c.l.b16 %v744
  %v3064 = vunpack.c.h.b16 %v744
  %v3065 = vunpack.c.l.b16 %v745
  %v3066 = vunpack.c.h.b16 %v745
  %v3067 = vunpack.c.l.b16 %v746
  %v3068 = vunpack.c.h.b16 %v746
  %v3069 = vunpack.c.l.b16 %v747
  %v3070 = vunpack.c.h.b16 %v747
  %v3071 = vunpack.c.l.b16 %v748
  %v3072 = vunpack.c.h.b16 %v748
  %v3073 = vunpack.c.l.b16 %v749
  %v3074 = vunpack.c.h.b16 %v749
  %v3075 = vunpack.c.l.b16 %v750
  %v3076 = vunpack.c.h.b16 %v750
  %v3077 = vunpack.c.l.b16 %v751
  %v3078 = vunpack.c.h.b16 %v751
  %v3079 = vunpack.c.l.b16 %v752
  %v3080 = vunpack.c.h.b16 %v752
  %v3081 = vunpack.c.l.b16 %v753
  %v3082 = vunpack.c.h.b16 %v753
  %v3083 = vunpack.c.l.b16 %v754
  %v3084 = vunpack.c.h.b16 %v754
  %v3085 = vunpack.c.l.b16 %v755
  %v3086 = vunpack.c.h.b16 %v755
  %v3087 = vunpack.c.l.b16 %v756
  %v3088 = vunpack.c.h.b16 %v756
  %v3089 = vunpack.c.l.b16 %v757
  %v3090 = vunpack.c.h.b16 %v757
  %v3091 = vunpack.c.l.b16 %v758
  %v3092 = vunpack.c.h.b16 %v758
  %v3093 = vunpack.c.l.b16 %v759
  %v3094 = vunpack.c.h.b16 %v759
  %v3095 = vunpack.c.l.b16 %v760
  %v3096 = vunpack.c.h.b16 %v760
  %v3097 = vunpack.c.l.b16 %v761
  %v3098 = vunpack.c.h.b16 %v761
  %v3099 = vunpack.c.l.b16 %v762
  %v3100 = vunpack.c.h.b16 %v762
  %v3101 = vunpack.c.l.b16 %v763
  %v3102 = vunpack.c.h.b16 %v763
  %v3103 = vunpack.c.l.b16 %v764
  %v3104 = vunpack.c.h.b16 %v764
  %v3105 = vunpack.c.l.b16 %v765
  %v3106 = vunpack.c.h.b16 %v765
  %v3107 = vunpack.c.l.b16 %v766
  %v3108 = vunpack.c.h.b16 %v766
  %v3109 = vunpack.c.l.b16 %v767
  %v3110 = vunpack.c.h.b16 %v767
  %v3111 = vunpack.c.l.b16 %v768
  %v3112 = vunpack.c.h.b16 %v768
  %v3113 = vunpack.c.l.b16 %v769
  %v3114 = vunpack.c.h.b16 %v769
  %v3115 = vunpack.c.l.b16 %v770
  %v3116 = vunpack.c.h.b16 %v770
  %v3117 = vunpack.c.l.b16 %v771
  %v3118 = vunpack.c.h.b16 %v771
  %v3119 = vunpack.c.l.b16 %v772
  %v3120 = vunpack.c.h.b16 %v772
  %v3121 = vunpack.c.l.b16 %v773
  %v3122 = vunpack.c.h.b16 %v773
  %v3123 = vunpack.c.l.b16 %v774
  %v3124 = vunpack.c.h.b16 %v774
  %v3125 = vunpack.c.l.b16 %v775
  %v3126 = vunpack.c.h.b16 %v775
  %v3127 = vunpack.c.l.b16 %v776
  %v3128 = vunpack.c.h.b16 %v776
  %v3129 = vunpack.c.l.b16 %v777
  %v3130 = vunpack.c.h.b16 %v777
  %v3131 = vunpack.c.l.b16 %v778
  %v3132 = vunpack.c.h.b16 %v778
  %v3133 = vunpack.c.l.b16 %v779
  %v3134 = vunpack.c.h.b16 %v779
  %v3135 = vunpack.c.l.b16 %v780
  %v3136 = vunpack.c.h.b16 %v780
  %v3137 = vpack.c.b16 %v1651, %v1649
  %v3138 = vpack.c.b16 %v1652, %v1650
  %v3139 = vpack.c.b16 %v1655, %v1653
  %v3140 = vpack.c.b16 %v1656, %v1654
  %v3141 = vpack.c.b16 %v1659, %v1657
  %v3142 = vpack.c.b16 %v1660, %v1658
  %v3143 = vpack.c.b16 %v1663, %v1661
  %v3144 = vpack.c.b16 %v1664, %v1662
  %v3145 = vpack.c.b16 %v1667, %v1665
  %v3146 = vpack.c.b16 %v1668, %v1666
  %v3147 = vpack.c.b16 %v1671, %v1669
  %v3148 = vpack.c.b16 %v1672, %v1670
  %v3149 = vpack.c.b16 %v1675, %v1673
  %v3150 = vpack.c.b16 %v1676, %v1674
  %v3151 = vpack.c.b16 %v1679, %v1677
  %v3152 = vpack.c.b16 %v1680, %v1678
  %v3153 = vpack.c.b16 %v1683, %v1681
  %v3154 = vpack.c.b16 %v1684, %v1682
  %v3155 = vpack.c.b16 %v1687, %v1685
  %v3156 = vpack.c.b16 %v1688, %v1686
  %v3157 = vpack.c.b16 %v1691, %v1689
  %v3158 = vpack.c.b16 %v1692, %v1690
  %v3159 = vpack.c.b16 %v1695, %v1693
  %v3160 = vpack.c.b16 %v1696, %v1694
  %v3161 = vpack.c.b16 %v1699, %v1697
  %v3162 = vpack.c.b16 %v1700, %v1698
  %v3163 = vpack.c.b16 %v1703, %v1701
  %v3164 = vpack.c.b16 %v1704, %v1702
  %v3165 = vpack.c.b16 %v1707, %v1705
  %v3166 = vpack.c.b16 %v1708, %v1706
  %v3167 = vpack.c.b16 %v1711, %v1709
  %v3168 = vpack.c.b16 %v1712, %v1710
  %v3169 = vpack.c.b16 %v1715, %v1713
  %v3170 = vpack.c.b16 %v1716, %v1714
  %v3171 = vpack.c.b16 %v1719, %v1717
  %v3172 = vpack.c.b16 %v1720, %v1718
  %v3173 = vpack.c.b16 %v1723, %v1721
  %v3174 = vpack.c.b16 %v1724, %v1722
  %v3175 = vpack.c.b16 %v1727, %v1725
  %v3176 = vpack.c.b16 %v1728, %v1726
  %v3177 = vpack.c.b16 %v1731, %v1729
  %v3178 = vpack.c.b16 %v1732, %v1730
  %v3179 = vpack.c.b16 %v1735, %v1733
  %v3180 = vpack.c.b16 %v1736, %v1734
  %v3181 = vpack.c.b16 %v1739, %v1737
  %v3182 = vpack.c.b16 %v1740, %v1738
  %v3183 = vpack.c.b16 %v1743, %v1741
  %v3184 = vpack.c.b16 %v1744, %v1742
  %v3185 = vpack.c.b16 %v1747, %v1745
  %v3186 = vpack.c.b16 %v1748, %v1746
  %v3187 = vpack.c.b16 %v1751, %v1749
  %v3188 = vpack.c.b16 %v1752, %v1750
  %v3189 = vpack.c.b16 %v1755, %v1753
  %v3190 = vpack.c.b16 %v1756, %v1754
  %v3191 = vpack.c.b16 %v1759, %v1757
  %v3192 = vpack.c.b16 %v1760, %v1758
  %v3193 = vpack.c.b16 %v1763, %v1761
  %v3194 = vpack.c.b16 %v1764, %v1762
  %v3195 = vpack.c.b16 %v1767, %v1765
  %v3196 = vpack.c.b16 %v1768, %v1766
  %v3197 = vpack.c.b16 %v1771, %v1769
  %v3198 = vpack.c.b16 %v1772, %v1770
  %v3199 = vpack.c.b16 %v1775, %v1773
  %v3200 = vpack.c.b16 %v1776, %v1774
  %v3201 = vpack.c.b16 %v1779, %v1777
  %v3202 = vpack.c.b16 %v1780, %v1778
  %v3203 = vpack.c.b16 %v1783, %v1781
  %v3204 = vpack.c.b16 %v1784, %v1782
  %v3205 = vpack.c.b16 %v1787, %v1785
  %v3206 = vpack.c.b16 %v1788, %v1786
  %v3207 = vpack.c.b16 %v1791, %v1789
  %v3208 = vpack.c.b16 %v1792, %v1790
  %v3209 = vpack.c.b16 %v1795, %v1793
  %v3210 = vpack.c.b16 %v1796, %v1794
  %v3211 = vpack.c.b16 %v1799, %v1797
  %v3212 = vpack.c.b16 %v1800, %v1798
  %v3213 = vpack.c.b16 %v1803, %v1801
  %v3214 = vpack.c.b16 %v1804, %v1802
  %v3215 = vpack.c.b16 %v1807, %v1805
  %v3216 = vpack.c.b16 %v1808, %v1806
  %v3217 = vpack.c.b16 %v1811, %v1809
  %v3218 = vpack.c.b16 %v1812, %v1810
  %v3219 = vpack.c.b16 %v1815, %v1813
  %v3220 = vpack.c.b16 %v1816, %v1814
  %v3221 = vpack.c.b16 %v1819, %v1817
  %v3222 = vpack.c.b16 %v1820, %v1818
  %v3223 = vpack.c.b16 %v1823, %v1821
  %v3224 = vpack.c.b16 %v1824, %v1822
  %v3225 = vpack.c.b16 %v1827, %v1825
  %v3226 = vpack.c.b16 %v1828, %v1826
  %v3227 = vpack.c.b16 %v1831, %v1829
  %v3228 = vpack.c.b16 %v1832, %v1830
  %v3229 = vpack.c.b16 %v1835, %v1833
  %v3230 = vpack.c.b16 %v1836, %v1834
  %v3231 = vpack.c.b16 %v1839, %v1837
  %v3232 = vpack.c.b16 %v1840, %v1838
  %v3233 = vpack.c.b16 %v1843, %v1841
  %v3234 = vpack.c.b16 %v1844, %v1842
  %v3235 = vpack.c.b16 %v1847, %v1845
  %v3236 = vpack.c.b16 %v1848, %v1846
  %v3237 = vpack.c.b16 %v1851, %v1849
  %v3238 = vpack.c.b16 %v1852, %v1850
  %v3239 = vpack.c.b16 %v1855, %v1853
  %v3240 = vpack.c.b16 %v1856, %v1854
  %v3241 = vpack.c.b16 %v1859, %v1857
  %v3242 = vpack.c.b16 %v1860, %v1858
  %v3243 = vpack.c.b16 %v1863, %v1861
  %v3244 = vpack.c.b16 %v1864, %v1862
  %v3245 = vpack.c.b16 %v1867, %v1865
  %v3246 = vpack.c.b16 %v1868, %v1866
  %v3247 = vpack.c.b16 %v1871, %v1869
  %v3248 = vpack.c.b16 %v1872, %v1870
  %v3249 = vpack.c.b16 %v1875, %v1873
  %v3250 = vpack.c.b16 %v1876, %v1874
  %v3251 = vpack.c.b16 %v1879, %v1877
  %v3252 = vpack.c.b16 %v1880, %v1878
  %v3253 = vpack.c.b16 %v1883, %v1881
  %v3254 = vpack.c.b16 %v1884, %v1882
  %v3255 = vpack.c.b16 %v1887, %v1885
  %v3256 = vpack.c.b16 %v1888, %v1886
  %v3257 = vpack.c.b16 %v1891, %v1889
  %v3258 = vpack.c.b16 %v1892, %v1890
  %v3259 = vpack.c.b16 %v1895, %v1893
  %v3260 = vpack.c.b16 %v1896, %v1894
  %v3261 = vpack.c.b16 %v1899, %v1897
  %v3262 = vpack.c.b16 %v1900, %v1898
  %v3263 = vpack.c.b16 %v1903, %v1901
  %v3264 = vpack.c.b16 %v1904, %v1902
  %v3265 = vpack.c.b16 %v1907, %v1905
  %v3266 = vpack.c.b16 %v1908, %v1906
  %v3267 = vpack.c.b16 %v1911, %v1909
  %v3268 = vpack.c.b16 %v1912, %v1910
  %v3269 = vpack.c.b16 %v1915, %v1913
  %v3270 = vpack.c.b16 %v1916, %v1914
  %v3271 = vpack.c.b16 %v1919, %v1917
  %v3272 = vpack.c.b16 %v1920, %v1918
  %v3273 = vpack.c.b16 %v1923, %v1921
  %v3274 = vpack.c.b16 %v1924, %v1922
  %v3275 = vpack.c.b16 %v1927, %v1925
  %v3276 = vpack.c.b16 %v1928, %v1926
  %v3277 = vpack.c.b16 %v1931, %v1929
  %v3278 = vpack.c.b16 %v1932, %v1930
  %v3279 = vpack.c.b16 %v1935, %v1933
  %v3280 = vpack.c.b16 %v1936, %v1934
  %v3281 = vpack.c.b16 %v1939, %v1937
  %v3282 = vpack.c.b16 %v1940, %v1938
  %v3283 = vpack.c.b16 %v1943, %v1941
  %v3284 = vpack.c.b16 %v1944, %v1942
  %v3285 = vpack.c.b16 %v1947, %v1945
  %v3286 = vpack.c.b16 %v1948, %v1946
  %v3287 = vpack.c.b16 %v1951, %v1949
  %v3288 = vpack.c.b16 %v1952, %v1950
  %v3289 = vpack.c.b16 %v1955, %v1953
  %v3290 = vpack.c.b16 %v1956, %v1954
  %v3291 = vpack.c.b16 %v1959, %v1957
  %v3292 = vpack.c.b16 %v1960, %v1958
  %v3293 = vpack.c.b16 %v1963, %v1961
  %v3294 = vpack.c.b16 %v1964, %v1962
  %v3295 = vpack.c.b16 %v1967, %v1965
  %v3296 = vpack.c.b16 %v1968, %v1966
  %v3297 = vpack.c.b16 %v1971, %v1969
  %v3298 = vpack.c.b16 %v1972, %v1970
  %v3299 = vpack.c.b16 %v1975, %v1973
  %v3300 = vpack.c.b16 %v1976, %v1974
  %v3301 = vpack.c.b16 %v1979, %v1977
  %v3302 = vpack.c.b16 %v1980, %v1978
  %v3303 = vpack.c.b16 %v1983, %v1981
  %v3304 = vpack.c.b16 %v1984, %v1982
  %v3305 = vpack.c.b16 %v1987, %v1985
  %v3306 = vpack.c.b16 %v1988, %v1986
  %v3307 = vpack.c.b16 %v1991, %v1989
  %v3308 = vpack.c.b16 %v1992, %v1990
  %v3309 = vpack.c.b16 %v1995, %v1993
  %v3310 = vpack.c.b16 %v1996, %v1994
  %v3311 = vpack.c.b16 %v1999, %v1997
  %v3312 = vpack.c.b16 %v2000, %v1998
  %v3313 = vpack.c.b16 %v2003, %v2001
  %v3314 = vpack.c.b16 %v2004, %v2002
  %v3315 = vpack.c.b16 %v2007, %v2005
  %v3316 = vpack.c.b16 %v2008, %v2006
  %v3317 = vpack.c.b16 %v2011, %v2009
  %v3318 = vpack.c.b16 %v2012, %v2010
  %v3319 = vpack.c.b16 %v2015, %v2013
  %v3320 = vpack.c.b16 %v2016, %v2014
  %v3321 = vpack.c.b16 %v2019, %v2017
  %v3322 = vpack.c.b16 %v2020, %v2018
  %v3323 = vpack.c.b16 %v2023, %v2021
  %v3324 = vpack.c.b16 %v2024, %v2022
  %v3325 = vpack.c.b16 %v2027, %v2025
  %v3326 = vpack.c.b16 %v2028, %v2026
  %v3327 = vpack.c.b16 %v2031, %v2029
  %v3328 = vpack.c.b16 %v2032, %v2030
  %v3329 = vpack.c.b16 %v2035, %v2033
  %v3330 = vpack.c.b16 %v2036, %v2034
  %v3331 = vpack.c.b16 %v2039, %v2037
  %v3332 = vpack.c.b16 %v2040, %v2038
  %v3333 = vpack.c.b16 %v2043, %v2041
  %v3334 = vpack.c.b16 %v2044, %v2042
  %v3335 = vpack.c.b16 %v2047, %v2045
  %v3336 = vpack.c.b16 %v2048, %v2046
  %v3337 = vpack.c.b16 %v2051, %v2049
  %v3338 = vpack.c.b16 %v2052, %v2050
  %v3339 = vpack.c.b16 %v2055, %v2053
  %v3340 = vpack.c.b16 %v2056, %v2054
  %v3341 = vpack.c.b16 %v2059, %v2057
  %v3342 = vpack.c.b16 %v2060, %v2058
  %v3343 = vpack.c.b16 %v2063, %v2061
  %v3344 = vpack.c.b16 %v2064, %v2062
  %v3345 = vpack.c.b16 %v2067, %v2065
  %v3346 = vpack.c.b16 %v2068, %v2066
  %v3347 = vpack.c.b16 %v2071, %v2069
  %v3348 = vpack.c.b16 %v2072, %v2070
  %v3349 = vpack.c.b16 %v2075, %v2073
  %v3350 = vpack.c.b16 %v2076, %v2074
  %v3351 = vpack.c.b16 %v2079, %v2077
  %v3352 = vpack.c.b16 %v2080, %v2078
  %v3353 = vpack.c.b16 %v2083, %v2081
  %v3354 = vpack.c.b16 %v2084, %v2082
  %v3355 = vpack.c.b16 %v2087, %v2085
  %v3356 = vpack.c.b16 %v2088, %v2086
  %v3357 = vpack.c.b16 %v2091, %v2089
  %v3358 = vpack.c.b16 %v2092, %v2090
  %v3359 = vpack.c.b16 %v2095, %v2093
  %v3360 = vpack.c.b16 %v2096, %v2094
  %v3361 = vpack.c.b16 %v2099, %v2097
  %v3362 = vpack.c.b16 %v2100, %v2098
  %v3363 = vpack.c.b16 %v2103, %v2101
  %v3364 = vpack.c.b16 %v2104, %v2102
  %v3365 = vpack.c.b16 %v2107, %v2105
  %v3366 = vpack.c.b16 %v2108, %v2106
  %v3367 = vpack.c.b16 %v2111, %v2109
  %v3368 = vpack.c.b16 %v2112, %v2110
  %v3369 = vpack.c.b16 %v2115, %v2113
  %v3370 = vpack.c.b16 %v2116, %v2114
  %v3371 = vpack.c.b16 %v2119, %v2117
  %v3372 = vpack.c.b16 %v2120, %v2118
  %v3373 = vpack.c.b16 %v2123, %v2121
  %v3374 = vpack.c.b16 %v2124, %v2122
  %v3375 = vpack.c.b16 %v2127, %v2125
  %v3376 = vpack.c.b16 %v2128, %v2126
  %v3377 = vpack.c.b16 %v2131, %v2129
  %v3378 = vpack.c.b16 %v2132, %v2130
  %v3379 = vpack.c.b16 %v2135, %v2133
  %v3380 = vpack.c.b16 %v2136, %v2134
  %v3381 = vpack.c.b16 %v2139, %v2137
  %v3382 = vpack.c.b16 %v2140, %v2138
  %v3383 = vpack.c.b16 %v2143, %v2141
  %v3384 = vpack.c.b16 %v2144, %v2142
  %v3385 = vpack.c.b16 %v2147, %v2145
  %v3386 = vpack.c.b16 %v2148, %v2146
  %v3387 = vpack.c.b16 %v2151, %v2149
  %v3388 = vpack.c.b16 %v2152, %v2150
  %v3389 = vpack.c.b16 %v2155, %v2153
  %v3390 = vpack.c.b16 %v2156, %v2154
  %v3391 = vpack.c.b16 %v2159, %v2157
  %v3392 = vpack.c.b16 %v2160, %v2158
  %v3393 = vpack.c.b16 %v2163, %v2161
  %v3394 = vpack.c.b16 %v2164, %v2162
  %v3395 = vpack.c.b16 %v2167, %v2165
  %v3396 = vpack.c.b16 %v2168, %v2166
  %v3397 = vpack.c.b16 %v2171, %v2169
  %v3398 = vpack.c.b16 %v2172, %v2170
  %v3399 = vpack.c.b16 %v2175, %v2173
  %v3400 = vpack.c.b16 %v2176, %v2174
  %v3401 = vpack.c.b16 %v2179, %v2177
  %v3402 = vpack.c.b16 %v2180, %v2178
  %v3403 = vpack.c.b16 %v2183, %v2181
  %v3404 = vpack.c.b16 %v2184, %v2182
  %v3405 = vpack.c.b16 %v2187, %v2185
  %v3406 = vpack.c.b16 %v2188, %v2186
  %v3407 = vpack.c.b16 %v2191, %v2189
  %v3408 = vpack.c.b16 %v2192, %v2190
  %v3409 = vpack.c.b16 %v2195, %v2193
  %v3410 = vpack.c.b16 %v2196, %v2194
  %v3411 = vpack.c.b16 %v2199, %v2197
  %v3412 = vpack.c.b16 %v2200, %v2198
  %v3413 = vpack.c.b16 %v2203, %v2201
  %v3414 = vpack.c.b16 %v2204, %v2202
  %v3415 = vpack.c.b16 %v2207, %v2205
  %v3416 = vpack.c.b16 %v2208, %v2206
  %v3417 = vpack.c.b16 %v2211, %v2209
  %v3418 = vpack.c.b16 %v2212, %v2210
  %v3419 = vpack.c.b16 %v2215, %v2213
  %v3420 = vpack.c.b16 %v2216, %v2214
  %v3421 = vpack.c.b16 %v2219, %v2217
  %v3422 = vpack.c.b16 %v2220, %v2218
  %v3423 = vpack.c.b16 %v2223, %v2221
  %v3424 = vpack.c.b16 %v2224, %v2222
  %v3425 = vpack.c.b16 %v2227, %v2225
  %v3426 = vpack.c.b16 %v2228, %v2226
  %v3427 = vpack.c.b16 %v2231, %v2229
  %v3428 = vpack.c.b16 %v2232, %v2230
  %v3429 = vpack.c.b16 %v2235, %v2233
  %v3430 = vpack.c.b16 %v2236, %v2234
  %v3431 = vpack.c.b16 %v2239, %v2237
  %v3432 = vpack.c.b16 %v2240, %v2238
  %v3433 = vpack.c.b16 %v2243, %v2241
  %v3434 = vpack.c.b16 %v2244, %v2242
  %v3435 = vpack.c.b16 %v2247, %v2245
  %v3436 = vpack.c.b16 %v2248, %v2246
  %v3437 = vpack.c.b16 %v2251, %v2249
  %v3438 = vpack.c.b16 %v2252, %v2250
  %v3439 = vpack.c.b16 %v2255, %v2253
  %v3440 = vpack.c.b16 %v2256, %v2254
  %v3441 = vpack.c.b16 %v2259, %v2257
  %v3442 = vpack.c.b16 %v2260, %v2258
  %v3443 = vpack.c.b16 %v2263, %v2261
  %v3444 = vpack.c.b16 %v2264, %v2262
  %v3445 = vpack.c.b16 %v2267, %v2265
  %v3446 = vpack.c.b16 %v2268, %v2266
  %v3447 = vpack.c.b16 %v2271, %v2269
  %v3448 = vpack.c.b16 %v2272, %v2270
  %v3449 = vpack.c.b16 %v2275, %v2273
  %v3450 = vpack.c.b16 %v2276, %v2274
  %v3451 = vpack.c.b16 %v2279, %v2277
  %v3452 = vpack.c.b16 %v2280, %v2278
  %v3453 = vpack.c.b16 %v2283, %v2281
  %v3454 = vpack.c.b16 %v2284, %v2282
  %v3455 = vpack.c.b16 %v2287, %v2285
  %v3456 = vpack.c.b16 %v2288, %v2286
  %v3457 = vpack.c.b16 %v2291, %v2289
  %v3458 = vpack.c.b16 %v2292, %v2290
  %v3459 = vpack.c.b16 %v2295, %v2293
  %v3460 = vpack.c.b16 %v2296, %v2294
  %v3461 = vpack.c.b16 %v2299, %v2297
  %v3462 = vpack.c.b16 %v2300, %v2298
  %v3463 = vpack.c.b16 %v2303, %v2301
  %v3464 = vpack.c.b16 %v2304, %v2302
  %v3465 = vpack.c.b16 %v2307, %v2305
  %v3466 = vpack.c.b16 %v2308, %v2306
  %v3467 = vpack.c.b16 %v2311, %v2309
  %v3468 = vpack.c.b16 %v2312, %v2310
  %v3469 = vpack.c.b16 %v2315, %v2313
  %v3470 = vpack.c.b16 %v2316, %v2314
  %v3471 = vpack.c.b16 %v2319, %v2317
  %v3472 = vpack.c.b16 %v2320, %v2318
  %v3473 = vpack.c.b16 %v2323, %v2321
  %v3474 = vpack.c.b16 %v2324, %v2322
  %v3475 = vpack.c.b16 %v2327, %v2325
  %v3476 = vpack.c.b16 %v2328, %v2326
  %v3477 = vpack.c.b16 %v2331, %v2329
  %v3478 = vpack.c.b16 %v2332, %v2330
  %v3479 = vpack.c.b16 %v2335, %v2333
  %v3480 = vpack.c.b16 %v2336, %v2334
  %v3481 = vpack.c.b16 %v2339, %v2337
  %v3482 = vpack.c.b16 %v2340, %v2338
  %v3483 = vpack.c.b16 %v2343, %v2341
  %v3484 = vpack.c.b16 %v2344, %v2342
  %v3485 = vpack.c.b16 %v2347, %v2345
  %v3486 = vpack.c.b16 %v2348, %v2346
  %v3487 = vpack.c.b16 %v2351, %v2349
  %v3488 = vpack.c.b16 %v2352, %v2350
  %v3489 = vpack.c.b16 %v2355, %v2353
  %v3490 = vpack.c.b16 %v2356, %v2354
  %v3491 = vpack.c.b16 %v2359, %v2357
  %v3492 = vpack.c.b16 %v2360, %v2358
  %v3493 = vpack.c.b16 %v2363, %v2361
  %v3494 = vpack.c.b16 %v2364, %v2362
  %v3495 = vpack.c.b16 %v2367, %v2365
  %v3496 = vpack.c.b16 %v2368, %v2366
  %v3497 = vpack.c.b16 %v2371, %v2369
  %v3498 = vpack.c.b16 %v2372, %v2370
  %v3499 = vpack.c.b16 %v2375, %v2373
  %v3500 = vpack.c.b16 %v2376, %v2374
  %v3501 = vpack.c.b16 %v2379, %v2377
  %v3502 = vpack.c.b16 %v2380, %v2378
  %v3503 = vpack.c.b16 %v2383, %v2381
  %v3504 = vpack.c.b16 %v2384, %v2382
  %v3505 = vpack.c.b16 %v2387, %v2385
  %v3506 = vpack.c.b16 %v2388, %v2386
  %v3507 = vpack.c.b16 %v2391, %v2389
  %v3508 = vpack.c.b16 %v2392, %v2390
  %v3509 = vpack.c.b16 %v2395, %v2393
  %v3510 = vpack.c.b16 %v2396, %v2394
  %v3511 = vpack.c.b16 %v2399, %v2397
  %v3512 = vpack.c.b16 %v2400, %v2398
  %v3513 = vpack.c.b16 %v2403, %v2401
  %v3514 = vpack.c.b16 %v2404, %v2402
  %v3515 = vpack.c.b16 %v2407, %v2405
  %v3516 = vpack.c.b16 %v2408, %v2406
  %v3517 = vpack.c.b16 %v2411, %v2409
  %v3518 = vpack.c.b16 %v2412, %v2410
  %v3519 = vpack.c.b16 %v2415, %v2413
  %v3520 = vpack.c.b16 %v2416, %v2414
  %v3521 = vpack.c.b16 %v2419, %v2417
  %v3522 = vpack.c.b16 %v2420, %v2418
  %v3523 = vpack.c.b16 %v2423, %v2421
  %v3524 = vpack.c.b16 %v2424, %v2422
  %v3525 = vpack.c.b16 %v2427, %v2425
  %v3526 = vpack.c.b16 %v2428, %v2426
  %v3527 = vpack.c.b16 %v2431, %v2429
  %v3528 = vpack.c.b16 %v2432, %v2430
  %v3529 = vpack.c.b16 %v2435, %v2433
  %v3530 = vpack.c.b16 %v2436, %v2434
  %v3531 = vpack.c.b16 %v2439, %v2437
  %v3532 = vpack.c.b16 %v2440, %v2438
  %v3533 = vpack.c.b16 %v2443, %v2441
  %v3534 = vpack.c.b16 %v2444, %v2442
  %v3535 = vpack.c.b16 %v2447, %v2445
  %v3536 = vpack.c.b16 %v2448, %v2446
  %v3537 = vpack.c.b16 %v2451, %v2449
  %v3538 = vpack.c.b16 %v2452, %v2450
  %v3539 = vpack.c.b16 %v2455, %v2453
  %v3540 = vpack.c.b16 %v2456, %v2454
  %v3541 = vpack.c.b16 %v2459, %v2457
  %v3542 = vpack.c.b16 %v2460, %v2458
  %v3543 = vpack.c.b16 %v2463, %v2461
  %v3544 = vpack.c.b16 %v2464, %v2462
  %v3545 = vpack.c.b16 %v2467, %v2465
  %v3546 = vpack.c.b16 %v2468, %v2466
  %v3547 = vpack.c.b16 %v2471, %v2469
  %v3548 = vpack.c.b16 %v2472, %v2470
  %v3549 = vpack.c.b16 %v2475, %v2473
  %v3550 = vpack.c.b16 %v2476, %v2474
  %v3551 = vpack.c.b16 %v2479, %v2477
  %v3552 = vpack.c.b16 %v2480, %v2478
  %v3553 = vpack.c.b16 %v2483, %v2481
  %v3554 = vpack.c.b16 %v2484, %v2482
  %v3555 = vpack.c.b16 %v2487, %v2485
  %v3556 = vpack.c.b16 %v2488, %v2486
  %v3557 = vpack.c.b16 %v2491, %v2489
  %v3558 = vpack.c.b16 %v2492, %v2490
  %v3559 = vpack.c.b16 %v2495, %v2493
  %v3560 = vpack.c.b16 %v2496, %v2494
  %v3561 = vpack.c.b16 %v2499, %v2497
  %v3562 = vpack.c.b16 %v2500, %v2498
  %v3563 = vpack.c.b16 %v2503, %v2501
  %v3564 = vpack.c.b16 %v2504, %v2502
  %v3565 = vpack.c.b16 %v2507, %v2505
  %v3566 = vpack.c.b16 %v2508, %v2506
  %v3567 = vpack.c.b16 %v2511, %v2509
  %v3568 = vpack.c.b16 %v2512, %v2510
  %v3569 = vpack.c.b16 %v2515, %v2513
  %v3570 = vpack.c.b16 %v2516, %v2514
  %v3571 = vpack.c.b16 %v2519, %v2517
  %v3572 = vpack.c.b16 %v2520, %v2518
  %v3573 = vpack.c.b16 %v2523, %v2521
  %v3574 = vpack.c.b16 %v2524, %v2522
  %v3575 = vpack.c.b16 %v2527, %v2525
  %v3576 = vpack.c.b16 %v2528, %v2526
  %v3577 = vpack.c.b16 %v2531, %v2529
  %v3578 = vpack.c.b16 %v2532, %v2530
  %v3579 = vpack.c.b16 %v2535, %v2533
  %v3580 = vpack.c.b16 %v2536, %v2534
  %v3581 = vpack.c.b16 %v2539, %v2537
  %v3582 = vpack.c.b16 %v2540, %v2538
  %v3583 = vpack.c.b16 %v2543, %v2541
  %v3584 = vpack.c.b16 %v2544, %v2542
  %v3585 = vpack.c.b16 %v2547, %v2545
  %v3586 = vpack.c.b16 %v2548, %v2546
  %v3587 = vpack.c.b16 %v2551, %v2549
  %v3588 = vpack.c.b16 %v2552, %v2550
  %v3589 = vpack.c.b16 %v2555, %v2553
  %v3590 = vpack.c.b16 %v2556, %v2554
  %v3591 = vpack.c.b16 %v2559, %v2557
  %v3592 = vpack.c.b16 %v2560, %v2558
  %v3593 = vpack.c.b16 %v2563, %v2561
  %v3594 = vpack.c.b16 %v2564, %v2562
  %v3595 = vpack.c.b16 %v2567, %v2565
  %v3596 = vpack.c.b16 %v2568, %v2566
  %v3597 = vpack.c.b16 %v2571, %v2569
  %v3598 = vpack.c.b16 %v2572, %v2570
  %v3599 = vpack.c.b16 %v2575, %v2573
  %v3600 = vpack.c.b16 %v2576, %v2574
  %v3601 = vpack.c.b16 %v2579, %v2577
  %v3602 = vpack.c.b16 %v2580, %v2578
  %v3603 = vpack.c.b16 %v2583, %v2581
  %v3604 = vpack.c.b16 %v2584, %v2582
  %v3605 = vpack.c.b16 %v2587, %v2585
  %v3606 = vpack.c.b16 %v2588, %v2586
  %v3607 = vpack.c.b16 %v2591, %v2589
  %v3608 = vpack.c.b16 %v2592, %v2590
  %v3609 = vpack.c.b16 %v2595, %v2593
  %v3610 = vpack.c.b16 %v2596, %v2594
  %v3611 = vpack.c.b16 %v2599, %v2597
  %v3612 = vpack.c.b16 %v2600, %v2598
  %v3613 = vpack.c.b16 %v2603, %v2601
  %v3614 = vpack.c.b16 %v2604, %v2602
  %v3615 = vpack.c.b16 %v2607, %v2605
  %v3616 = vpack.c.b16 %v2608, %v2606
  %v3617 = vpack.c.b16 %v2611, %v2609
  %v3618 = vpack.c.b16 %v2612, %v2610
  %v3619 = vpack.c.b16 %v2615, %v2613
  %v3620 = vpack.c.b16 %v2616, %v2614
  %v3621 = vpack.c.b16 %v2619, %v2617
  %v3622 = vpack.c.b16 %v2620, %v2618
  %v3623 = vpack.c.b16 %v2623, %v2621
  %v3624 = vpack.c.b16 %v2624, %v2622
  %v3625 = vpack.c.b16 %v2627, %v2625
  %v3626 = vpack.c.b16 %v2628, %v2626
  %v3627 = vpack.c.b16 %v2631, %v2629
  %v3628 = vpack.c.b16 %v2632, %v2630
  %v3629 = vpack.c.b16 %v2635, %v2633
  %v3630 = vpack.c.b16 %v2636, %v2634
  %v3631 = vpack.c.b16 %v2639, %v2637
  %v3632 = vpack.c.b16 %v2640, %v2638
  %v3633 = vpack.c.b16 %v2643, %v2641
  %v3634 = vpack.c.b16 %v2644, %v2642
  %v3635 = vpack.c.b16 %v2647, %v2645
  %v3636 = vpack.c.b16 %v2648, %v2646
  %v3637 = vpack.c.b16 %v2651, %v2649
  %v3638 = vpack.c.b16 %v2652, %v2650
  %v3639 = vpack.c.b16 %v2655, %v2653
  %v3640 = vpack.c.b16 %v2656, %v2654
  %v3641 = vpack.c.b16 %v2659, %v2657
  %v3642 = vpack.c.b16 %v2660, %v2658
  %v3643 = vpack.c.b16 %v2663, %v2661
  %v3644 = vpack.c.b16 %v2664, %v2662
  %v3645 = vpack.c.b16 %v2667, %v2665
  %v3646 = vpack.c.b16 %v2668, %v2666
  %v3647 = vpack.c.b16 %v2671, %v2669
  %v3648 = vpack.c.b16 %v2672, %v2670
  %v3649 = vpack.c.b16 %v2675, %v2673
  %v3650 = vpack.c.b16 %v2676, %v2674
  %v3651 = vpack.c.b16 %v2679, %v2677
  %v3652 = vpack.c.b16 %v2680, %v2678
  %v3653 = vpack.c.b16 %v2683, %v2681
  %v3654 = vpack.c.b16 %v2684, %v2682
  %v3655 = vpack.c.b16 %v2687, %v2685
  %v3656 = vpack.c.b16 %v2688, %v2686
  %v3657 = vpack.c.b16 %v2691, %v2689
  %v3658 = vpack.c.b16 %v2692, %v2690
  %v3659 = vpack.c.b16 %v2695, %v2693
  %v3660 = vpack.c.b16 %v2696, %v2694
  %v3661 = vpack.c.b16 %v2699, %v2697
  %v3662 = vpack.c.b16 %v2700, %v2698
  %v3663 = vpack.c.b16 %v2703, %v2701
  %v3664 = vpack.c.b16 %v2704, %v2702
  %v3665 = vpack.c.b16 %v2707, %v2705
  %v3666 = vpack.c.b16 %v2708, %v2706
  %v3667 = vpack.c.b16 %v2711, %v2709
  %v3668 = vpack.c.b16 %v2712, %v2710
  %v3669 = vpack.c.b16 %v2715, %v2713
  %v3670 = vpack.c.b16 %v2716, %v2714
  %v3671 = vpack.c.b16 %v2719, %v2717
  %v3672 = vpack.c.b16 %v2720, %v2718
  %v3673 = vpack.c.b16 %v2723, %v2721
  %v3674 = vpack.c.b16 %v2724, %v2722
  %v3675 = vpack.c.b16 %v2727, %v2725
  %v3676 = vpack.c.b16 %v2728, %v2726
  %v3677 = vpack.c.b16 %v2731, %v2729
  %v3678 = vpack.c.b16 %v2732, %v2730
  %v3679 = vpack.c.b16 %v2735, %v2733
  %v3680 = vpack.c.b16 %v2736, %v2734
  %v3681 = vpack.c.b16 %v2739, %v2737
  %v3682 = vpack.c.b16 %v2740, %v2738
  %v3683 = vpack.c.b16 %v2743, %v2741
  %v3684 = vpack.c.b16 %v2744, %v2742
  %v3685 = vpack.c.b16 %v2747, %v2745
  %v3686 = vpack.c.b16 %v2748, %v2746
  %v3687 = vpack.c.b16 %v2751, %v2749
  %v3688 = vpack.c.b16 %v2752, %v2750
  %v3689 = vpack.c.b16 %v2755, %v2753
  %v3690 = vpack.c.b16 %v2756, %v2754
  %v3691 = vpack.c.b16 %v2759, %v2757
  %v3692 = vpack.c.b16 %v2760, %v2758
  %v3693 = vpack.c.b16 %v2763, %v2761
  %v3694 = vpack.c.b16 %v2764, %v2762
  %v3695 = vpack.c.b16 %v2767, %v2765
  %v3696 = vpack.c.b16 %v2768, %v2766
  %v3697 = vpack.c.b16 %v2771, %v2769
  %v3698 = vpack.c.b16 %v2772, %v2770
  %v3699 = vpack.c.b16 %v2775, %v2773
  %v3700 = vpack.c.b16 %v2776, %v2774
  %v3701 = vpack.c.b16 %v2779, %v2777
  %v3702 = vpack.c.b16 %v2780, %v2778
  %v3703 = vpack.c.b16 %v2783, %v2781
  %v3704 = vpack.c.b16 %v2784, %v2782
  %v3705 = vpack.c.b16 %v2787, %v2785
  %v3706 = vpack.c.b16 %v2788, %v2786
  %v3707 = vpack.c.b16 %v2791, %v2789
  %v3708 = vpack.c.b16 %v2792, %v2790
  %v3709 = vpack.c.b16 %v2795, %v2793
  %v3710 = vpack.c.b16 %v2796, %v2794
  %v3711 = vpack.c.b16 %v2799, %v2797
  %v3712 = vpack.c.b16 %v2800, %v2798
  %v3713 = vpack.c.b16 %v2803, %v2801
  %v3714 = vpack.c.b16 %v2804, %v2802
  %v3715 = vpack.c.b16 %v2807, %v2805
  %v3716 = vpack.c.b16 %v2808, %v2806
  %v3717 = vpack.c.b16 %v2811, %v2809
  %v3718 = vpack.c.b16 %v2812, %v2810
  %v3719 = vpack.c.b16 %v2815, %v2813
  %v3720 = vpack.c.b16 %v2816, %v2814
  %v3721 = vpack.c.b16 %v2819, %v2817
  %v3722 = vpack.c.b16 %v2820, %v2818
  %v3723 = vpack.c.b16 %v2823, %v2821
  %v3724 = vpack.c.b16 %v2824, %v2822
  %v3725 = vpack.c.b16 %v2827, %v2825
  %v3726 = vpack.c.b16 %v2828, %v2826
  %v3727 = vpack.c.b16 %v2831, %v2829
  %v3728 = vpack.c.b16 %v2832, %v2830
  %v3729 = vpack.c.b16 %v2835, %v2833
  %v3730 = vpack.c.b16 %v2836, %v2834
  %v3731 = vpack.c.b16 %v2839, %v2837
  %v3732 = vpack.c.b16 %v2840, %v2838
  %v3733 = vpack.c.b16 %v2843, %v2841
  %v3734 = vpack.c.b16 %v2844, %v2842
  %v3735 = vpack.c.b16 %v2847, %v2845
  %v3736 = vpack.c.b16 %v2848, %v2846
  %v3737 = vpack.c.b16 %v2851, %v2849
  %v3738 = vpack.c.b16 %v2852, %v2850
  %v3739 = vpack.c.b16 %v2855, %v2853
  %v3740 = vpack.c.b16 %v2856, %v2854
  %v3741 = vpack.c.b16 %v2859, %v2857
  %v3742 = vpack.c.b16 %v2860, %v2858
  %v3743 = vpack.c.b16 %v2863, %v2861
  %v3744 = vpack.c.b16 %v2864, %v2862
  %v3745 = vpack.c.b16 %v2867, %v2865
  %v3746 = vpack.c.b16 %v2868, %v2866
  %v3747 = vpack.c.b16 %v2871, %v2869
  %v3748 = vpack.c.b16 %v2872, %v2870
  %v3749 = vpack.c.b16 %v2875, %v2873
  %v3750 = vpack.c.b16 %v2876, %v2874
  %v3751 = vpack.c.b16 %v2879, %v2877
  %v3752 = vpack.c.b16 %v2880, %v2878
  %v3753 = vpack.c.b16 %v2883, %v2881
  %v3754 = vpack.c.b16 %v2884, %v2882
  %v3755 = vpack.c.b16 %v2887, %v2885
  %v3756 = vpack.c.b16 %v2888, %v2886
  %v3757 = vpack.c.b16 %v2891, %v2889
  %v3758 = vpack.c.b16 %v2892, %v2890
  %v3759 = vpack.c.b16 %v2895, %v2893
  %v3760 = vpack.c.b16 %v2896, %v2894
  %v3761 = vpack.c.b16 %v2899, %v2897
  %v3762 = vpack.c.b16 %v2900, %v2898
  %v3763 = vpack.c.b16 %v2903, %v2901
  %v3764 = vpack.c.b16 %v2904, %v2902
  %v3765 = vpack.c.b16 %v2907, %v2905
  %v3766 = vpack.c.b16 %v2908, %v2906
  %v3767 = vpack.c.b16 %v2911, %v2909
  %v3768 = vpack.c.b16 %v2912, %v2910
  %v3769 = vpack.c.b16 %v2915, %v2913
  %v3770 = vpack.c.b16 %v2916, %v2914
  %v3771 = vpack.c.b16 %v2919, %v2917
  %v3772 = vpack.c.b16 %v2920, %v2918
  %v3773 = vpack.c.b16 %v2923, %v2921
  %v3774 = vpack.c.b16 %v2924, %v2922
  %v3775 = vpack.c.b16 %v2927, %v2925
  %v3776 = vpack.c.b16 %v2928, %v2926
  %v3777 = vpack.c.b16 %v2931, %v2929
  %v3778 = vpack.c.b16 %v2932, %v2930
  %v3779 = vpack.c.b16 %v2935, %v2933
  %v3780 = vpack.c.b16 %v2936, %v2934
  %v3781 = vpack.c.b16 %v2939, %v2937
  %v3782 = vpack.c.b16 %v2940, %v2938
  %v3783 = vpack.c.b16 %v2943, %v2941
  %v3784 = vpack.c.b16 %v2944, %v2942
  %v3785 = vpack.c.b16 %v2947, %v2945
  %v3786 = vpack.c.b16 %v2948, %v2946
  %v3787 = vpack.c.b16 %v2951, %v2949
  %v3788 = vpack.c.b16 %v2952, %v2950
  %v3789 = vpack.c.b16 %v2955, %v2953
  %v3790 = vpack.c.b16 %v2956, %v2954
  %v3791 = vpack.c.b16 %v2959, %v2957
  %v3792 = vpack.c.b16 %v2960, %v2958
  %v3793 = vpack.c.b16 %v2963, %v2961
  %v3794 = vpack.c.b16 %v2964, %v2962
  %v3795 = vpack.c.b16 %v2967, %v2965
  %v3796 = vpack.c.b16 %v2968, %v2966
  %v3797 = vpack.c.b16 %v2971, %v2969
  %v3798 = vpack.c.b16 %v2972, %v2970
  %v3799 = vpack.c.b16 %v2975, %v2973
  %v3800 = vpack.c.b16 %v2976, %v2974
  %v3801 = vpack.c.b16 %v2979, %v2977
  %v3802 = vpack.c.b16 %v2980, %v2978
  %v3803 = vpack.c.b16 %v2983, %v2981
  %v3804 = vpack.c.b16 %v2984, %v2982
  %v3805 = vpack.c.b16 %v2987, %v2985
  %v3806 = vpack.c.b16 %v2988, %v2986
  %v3807 = vpack.c.b16 %v2991, %v2989
  %v3808 = vpack.c.b16 %v2992, %v2990
  %v3809 = vpack.c.b16 %v2995, %v2993
  %v3810 = vpack.c.b16 %v2996, %v2994
  %v3811 = vpack.c.b16 %v2999, %v2997
  %v3812 = vpack.c.b16 %v3000, %v2998
  %v3813 = vpack.c.b16 %v3003, %v3001
  %v3814 = vpack.c.b16 %v3004, %v3002
  %v3815 = vpack.c.b16 %v3007, %v3005
  %v3816 = vpack.c.b16 %v3008, %v3006
  %v3817 = vpack.c.b16 %v3011, %v3009
  %v3818 = vpack.c.b16 %v3012, %v3010
  %v3819 = vpack.c.b16 %v3015, %v3013
  %v3820 = vpack.c.b16 %v3016, %v3014
  %v3821 = vpack.c.b16 %v3019, %v3017
  %v3822 = vpack.c.b16 %v3020, %v3018
  %v3823 = vpack.c.b16 %v3023, %v3021
  %v3824 = vpack.c.b16 %v3024, %v3022
  %v3825 = vpack.c.b16 %v3027, %v3025
  %v3826 = vpack.c.b16 %v3028, %v3026
  %v3827 = vpack.c.b16 %v3031, %v3029
  %v3828 = vpack.c.b16 %v3032, %v3030
  %v3829 = vpack.c.b16 %v3035, %v3033
  %v3830 = vpack.c.b16 %v3036, %v3034
  %v3831 = vpack.c.b16 %v3039, %v3037
  %v3832 = vpack.c.b16 %v3040, %v3038
  %v3833 = vpack.c.b16 %v3043, %v3041
  %v3834 = vpack.c.b16 %v3044, %v3042
  %v3835 = vpack.c.b16 %v3047, %v3045
  %v3836 = vpack.c.b16 %v3048, %v3046
  %v3837 = vpack.c.b16 %v3051, %v3049
  %v3838 = vpack.c.b16 %v3052, %v3050
  %v3839 = vpack.c.b16 %v3055, %v3053
  %v3840 = vpack.c.b16 %v3056, %v3054
  %v3841 = vpack.c.b16 %v3059, %v3057
  %v3842 = vpack.c.b16 %v3060, %v3058
  %v3843 = vpack.c.b16 %v3063, %v3061
  %v3844 = vpack.c.b16 %v3064, %v3062
  %v3845 = vpack.c.b16 %v3067, %v3065
  %v3846 = vpack.c.b16 %v3068, %v3066
  %v3847 = vpack.c.b16 %v3071, %v3069
  %v3848 = vpack.c.b16 %v3072, %v3070
  %v3849 = vpack.c.b16 %v3075, %v3073
  %v3850 = vpack.c.b16 %v3076, %v3074
  %v3851 = vpack.c.b16 %v3079, %v3077
  %v3852 = vpack.c.b16 %v3080, %v3078
  %v3853 = vpack.c.b16 %v3083, %v3081
  %v3854 = vpack.c.b16 %v3084, %v3082
  %v3855 = vpack.c.b16 %v3087, %v3085
  %v3856 = vpack.c.b16 %v3088, %v3086
  %v3857 = vpack.c.b16 %v3091, %v3089
  %v3858 = vpack.c.b16 %v3092, %v3090
  %v3859 = vpack.c.b16 %v3095, %v3093
  %v3860 = vpack.c.b16 %v3096, %v3094
  %v3861 = vpack.c.b16 %v3099, %v3097
  %v3862 = vpack.c.b16 %v3100, %v3098
  %v3863 = vpack.c.b16 %v3103, %v3101
  %v3864 = vpack.c.b16 %v3104, %v3102
  %v3865 = vpack.c.b16 %v3107, %v3105
  %v3866 = vpack.c.b16 %v3108, %v3106
  %v3867 = vpack.c.b16 %v3111, %v3109
  %v3868 = vpack.c.b16 %v3112, %v3110
  %v3869 = vpack.c.b16 %v3115, %v3113
  %v3870 = vpack.c.b16 %v3116, %v3114
  %v3871 = vpack.c.b16 %v3119, %v3117
  %v3872 = vpack.c.b16 %v3120, %v3118
  %v3873 = vpack.c.b16 %v3123, %v3121
  %v3874 = vpack.c.b16 %v3124, %v3122
  %v3875 = vpack.c.b16 %v3127, %v3125
  %v3876 = vpack.c.b16 %v3128, %v3126
  %v3877 = vpack.c.b16 %v3131, %v3129
  %v3878 = vpack.c.b16 %v3132, %v3130
  %v3879 = vpack.c.b16 %v3135, %v3133
  %v3880 = vpack.c.b16 %v3136, %v3134
  %vm4625 = vcmask 523264
  %v4626 = vsel %vm4625, %v858, 0
  %4628 = vmatpush.bf16.msra.mxu0 %v3151
  %4629 = vmatpush.bf16.msra.mxu0 %v3149
  %4630 = vmatpush.bf16.msra.mxu0 %v3147
  %4631 = vmatpush.bf16.msra.mxu0 %v3145
  %4632 = vmatpush.bf16.msra.mxu0 %v3143
  %4633 = vmatpush.bf16.msra.mxu0 %v3141
  %4634 = vmatpush.bf16.msra.mxu0 %v3139
  %4635 = vmatpush.bf16.msra.mxu0 %v3137
  %4636 = vmatmul.bf16.gmra.mxu0 %v792
  %v4637 = vpop.f32.mrf.mxu0
  %v4638 = vadd.f32 %v783, %v4637
  %v4639 = vpop.f32.mrf.mxu0
  %4640 = vdwg.mxu0
  %4641 = vmatpush.bf16.msra.mxu0 %v3167
  %4642 = vmatpush.bf16.msra.mxu0 %v3165
  %4643 = vmatpush.bf16.msra.mxu0 %v3163
  %4644 = vmatpush.bf16.msra.mxu0 %v3161
  %4645 = vmatpush.bf16.msra.mxu0 %v3159
  %4646 = vmatpush.bf16.msra.mxu0 %v3157
  %4647 = vmatpush.bf16.msra.mxu0 %v3155
  %4648 = vmatpush.bf16.msra.mxu0 %v3153
  %4649 = vmatmul.bf16.gmra.mxu0 %v793
  %v4650 = vpop.f32.mrf.mxu0
  %v4651 = vadd.f32 %v4638, %v4650
  %v4652 = vpop.f32.mrf.mxu0
  %4653 = vdwg.mxu0
  %4654 = vmatpush.bf16.msra.mxu0 %v3183
  %4655 = vmatpush.bf16.msra.mxu0 %v3181
  %4656 = vmatpush.bf16.msra.mxu0 %v3179
  %4657 = vmatpush.bf16.msra.mxu0 %v3177
  %4658 = vmatpush.bf16.msra.mxu0 %v3175
  %4659 = vmatpush.bf16.msra.mxu0 %v3173
  %4660 = vmatpush.bf16.msra.mxu0 %v3171
  %4661 = vmatpush.bf16.msra.mxu0 %v3169
  %4662 = vmatmul.bf16.gmra.mxu0 %v794
  %v4663 = vpop.f32.mrf.mxu0
  %v4664 = vadd.f32 %v4651, %v4663
  %v4665 = vpop.f32.mrf.mxu0
  %4666 = vdwg.mxu0
  %4667 = vmatpush.bf16.msra.mxu0 %v3199
  %4668 = vmatpush.bf16.msra.mxu0 %v3197
  %4669 = vmatpush.bf16.msra.mxu0 %v3195
  %4670 = vmatpush.bf16.msra.mxu0 %v3193
  %4671 = vmatpush.bf16.msra.mxu0 %v3191
  %4672 = vmatpush.bf16.msra.mxu0 %v3189
  %4673 = vmatpush.bf16.msra.mxu0 %v3187
  %4674 = vmatpush.bf16.msra.mxu0 %v3185
  %4675 = vmatmul.bf16.gmra.mxu0 %v795
  %v4676 = vpop.f32.mrf.mxu0
  %v4677 = vadd.f32 %v4664, %v4676
  %v4678 = vpop.f32.mrf.mxu0
  %4679 = vdwg.mxu0
  %4680 = vmatpush.bf16.msra.mxu0 %v3215
  %4681 = vmatpush.bf16.msra.mxu0 %v3213
  %4682 = vmatpush.bf16.msra.mxu0 %v3211
  %4683 = vmatpush.bf16.msra.mxu0 %v3209
  %4684 = vmatpush.bf16.msra.mxu0 %v3207
  %4685 = vmatpush.bf16.msra.mxu0 %v3205
  %4686 = vmatpush.bf16.msra.mxu0 %v3203
  %4687 = vmatpush.bf16.msra.mxu0 %v3201
  %4688 = vmatmul.bf16.gmra.mxu0 %v796
  %v4689 = vpop.f32.mrf.mxu0
  %v4690 = vadd.f32 %v4677, %v4689
  %v4691 = vpop.f32.mrf.mxu0
  %4692 = vdwg.mxu0
  %4693 = vmatpush.bf16.msra.mxu0 %v3231
  %4694 = vmatpush.bf16.msra.mxu0 %v3229
  %4695 = vmatpush.bf16.msra.mxu0 %v3227
  %4696 = vmatpush.bf16.msra.mxu0 %v3225
  %4697 = vmatpush.bf16.msra.mxu0 %v3223
  %4698 = vmatpush.bf16.msra.mxu0 %v3221
  %4699 = vmatpush.bf16.msra.mxu0 %v3219
  %4700 = vmatpush.bf16.msra.mxu0 %v3217
  %4701 = vmatmul.bf16.gmra.mxu0 %v797
  %v4702 = vpop.f32.mrf.mxu0
  %v4703 = vadd.f32 %v4690, %v4702
  %v4704 = vpop.f32.mrf.mxu0
  %4705 = vdwg.mxu0
  %4706 = vmatpush.bf16.msra.mxu0 %v3247
  %4707 = vmatpush.bf16.msra.mxu0 %v3245
  %4708 = vmatpush.bf16.msra.mxu0 %v3243
  %4709 = vmatpush.bf16.msra.mxu0 %v3241
  %4710 = vmatpush.bf16.msra.mxu0 %v3239
  %4711 = vmatpush.bf16.msra.mxu0 %v3237
  %4712 = vmatpush.bf16.msra.mxu0 %v3235
  %4713 = vmatpush.bf16.msra.mxu0 %v3233
  %4714 = vmatmul.bf16.gmra.mxu0 %v798
  %v4715 = vpop.f32.mrf.mxu0
  %v4716 = vadd.f32 %v4703, %v4715
  %v4717 = vpop.f32.mrf.mxu0
  %4718 = vdwg.mxu0
  %4719 = vmatpush.bf16.msra.mxu0 %v3263
  %4720 = vmatpush.bf16.msra.mxu0 %v3261
  %4721 = vmatpush.bf16.msra.mxu0 %v3259
  %4722 = vmatpush.bf16.msra.mxu0 %v3257
  %4723 = vmatpush.bf16.msra.mxu0 %v3255
  %4724 = vmatpush.bf16.msra.mxu0 %v3253
  %4725 = vmatpush.bf16.msra.mxu0 %v3251
  %4726 = vmatpush.bf16.msra.mxu0 %v3249
  %4727 = vmatmul.bf16.gmra.mxu0 %v799
  %v4728 = vpop.f32.mrf.mxu0
  %v4729 = vadd.f32 %v4716, %v4728
  %v4730 = vpop.f32.mrf.mxu0
  %4731 = vdwg.mxu0
  %4732 = vmatpush.bf16.msra.mxu0 %v3279
  %4733 = vmatpush.bf16.msra.mxu0 %v3277
  %4734 = vmatpush.bf16.msra.mxu0 %v3275
  %4735 = vmatpush.bf16.msra.mxu0 %v3273
  %4736 = vmatpush.bf16.msra.mxu0 %v3271
  %4737 = vmatpush.bf16.msra.mxu0 %v3269
  %4738 = vmatpush.bf16.msra.mxu0 %v3267
  %4739 = vmatpush.bf16.msra.mxu0 %v3265
  %4740 = vmatmul.bf16.gmra.mxu0 %v804
  %v4741 = vpop.f32.mrf.mxu0
  %v4742 = vadd.f32 %v4729, %v4741
  %v4743 = vpop.f32.mrf.mxu0
  %4744 = vdwg.mxu0
  %4745 = vmatpush.bf16.msra.mxu0 %v3295
  %4746 = vmatpush.bf16.msra.mxu0 %v3293
  %4747 = vmatpush.bf16.msra.mxu0 %v3291
  %4748 = vmatpush.bf16.msra.mxu0 %v3289
  %4749 = vmatpush.bf16.msra.mxu0 %v3287
  %4750 = vmatpush.bf16.msra.mxu0 %v3285
  %4751 = vmatpush.bf16.msra.mxu0 %v3283
  %4752 = vmatpush.bf16.msra.mxu0 %v3281
  %4753 = vmatmul.bf16.gmra.mxu0 %v805
  %v4754 = vpop.f32.mrf.mxu0
  %v4755 = vadd.f32 %v4742, %v4754
  %v4756 = vpop.f32.mrf.mxu0
  %4757 = vdwg.mxu0
  %4758 = vmatpush.bf16.msra.mxu0 %v3311
  %4759 = vmatpush.bf16.msra.mxu0 %v3309
  %4760 = vmatpush.bf16.msra.mxu0 %v3307
  %4761 = vmatpush.bf16.msra.mxu0 %v3305
  %4762 = vmatpush.bf16.msra.mxu0 %v3303
  %4763 = vmatpush.bf16.msra.mxu0 %v3301
  %4764 = vmatpush.bf16.msra.mxu0 %v3299
  %4765 = vmatpush.bf16.msra.mxu0 %v3297
  %4766 = vmatmul.bf16.gmra.mxu0 %v806
  %v4767 = vpop.f32.mrf.mxu0
  %v4768 = vadd.f32 %v4755, %v4767
  %v4769 = vpop.f32.mrf.mxu0
  %4770 = vdwg.mxu0
  %4771 = vmatpush.bf16.msra.mxu0 %v3327
  %4772 = vmatpush.bf16.msra.mxu0 %v3325
  %4773 = vmatpush.bf16.msra.mxu0 %v3323
  %4774 = vmatpush.bf16.msra.mxu0 %v3321
  %4775 = vmatpush.bf16.msra.mxu0 %v3319
  %4776 = vmatpush.bf16.msra.mxu0 %v3317
  %4777 = vmatpush.bf16.msra.mxu0 %v3315
  %4778 = vmatpush.bf16.msra.mxu0 %v3313
  %4779 = vmatmul.bf16.gmra.mxu0 %v807
  %v4780 = vpop.f32.mrf.mxu0
  %v4781 = vadd.f32 %v4768, %v4780
  %v4782 = vpop.f32.mrf.mxu0
  %4783 = vdwg.mxu0
  %4784 = vmatpush.bf16.msra.mxu0 %v3343
  %4785 = vmatpush.bf16.msra.mxu0 %v3341
  %4786 = vmatpush.bf16.msra.mxu0 %v3339
  %4787 = vmatpush.bf16.msra.mxu0 %v3337
  %4788 = vmatpush.bf16.msra.mxu0 %v3335
  %4789 = vmatpush.bf16.msra.mxu0 %v3333
  %4790 = vmatpush.bf16.msra.mxu0 %v3331
  %4791 = vmatpush.bf16.msra.mxu0 %v3329
  %4792 = vmatmul.bf16.gmra.mxu0 %v808
  %v4793 = vpop.f32.mrf.mxu0
  %v4794 = vadd.f32 %v4781, %v4793
  %v4795 = vpop.f32.mrf.mxu0
  %4796 = vdwg.mxu0
  %4797 = vmatpush.bf16.msra.mxu0 %v3359
  %4798 = vmatpush.bf16.msra.mxu0 %v3357
  %4799 = vmatpush.bf16.msra.mxu0 %v3355
  %4800 = vmatpush.bf16.msra.mxu0 %v3353
  %4801 = vmatpush.bf16.msra.mxu0 %v3351
  %4802 = vmatpush.bf16.msra.mxu0 %v3349
  %4803 = vmatpush.bf16.msra.mxu0 %v3347
  %4804 = vmatpush.bf16.msra.mxu0 %v3345
  %4805 = vmatmul.bf16.gmra.mxu0 %v809
  %v4806 = vpop.f32.mrf.mxu0
  %v4807 = vadd.f32 %v4794, %v4806
  %v4808 = vpop.f32.mrf.mxu0
  %4809 = vdwg.mxu0
  %4810 = vmatpush.bf16.msra.mxu0 %v3375
  %4811 = vmatpush.bf16.msra.mxu0 %v3373
  %4812 = vmatpush.bf16.msra.mxu0 %v3371
  %4813 = vmatpush.bf16.msra.mxu0 %v3369
  %4814 = vmatpush.bf16.msra.mxu0 %v3367
  %4815 = vmatpush.bf16.msra.mxu0 %v3365
  %4816 = vmatpush.bf16.msra.mxu0 %v3363
  %4817 = vmatpush.bf16.msra.mxu0 %v3361
  %4818 = vmatmul.bf16.gmra.mxu0 %v810
  %v4819 = vpop.f32.mrf.mxu0
  %v4820 = vadd.f32 %v4807, %v4819
  %v4821 = vpop.f32.mrf.mxu0
  %4822 = vdwg.mxu0
  %4823 = vmatpush.bf16.msra.mxu0 %v3391
  %4824 = vmatpush.bf16.msra.mxu0 %v3389
  %4825 = vmatpush.bf16.msra.mxu0 %v3387
  %4826 = vmatpush.bf16.msra.mxu0 %v3385
  %4827 = vmatpush.bf16.msra.mxu0 %v3383
  %4828 = vmatpush.bf16.msra.mxu0 %v3381
  %4829 = vmatpush.bf16.msra.mxu0 %v3379
  %4830 = vmatpush.bf16.msra.mxu0 %v3377
  %4831 = vmatmul.bf16.gmra.mxu0 %v811
  %v4832 = vpop.f32.mrf.mxu0
  %v4833 = vadd.f32 %v4820, %v4832
  %v4834 = vpop.f32.mrf.mxu0
  %4835 = vdwg.mxu0
  %4836 = vmatpush.bf16.msra.mxu0 %v3407
  %4837 = vmatpush.bf16.msra.mxu0 %v3405
  %4838 = vmatpush.bf16.msra.mxu0 %v3403
  %4839 = vmatpush.bf16.msra.mxu0 %v3401
  %4840 = vmatpush.bf16.msra.mxu0 %v3399
  %4841 = vmatpush.bf16.msra.mxu0 %v3397
  %4842 = vmatpush.bf16.msra.mxu0 %v3395
  %4843 = vmatpush.bf16.msra.mxu0 %v3393
  %4844 = vmatmul.bf16.gmra.mxu0 %v816
  %v4845 = vpop.f32.mrf.mxu0
  %v4846 = vadd.f32 %v4833, %v4845
  %v4847 = vpop.f32.mrf.mxu0
  %4848 = vdwg.mxu0
  %4849 = vmatpush.bf16.msra.mxu0 %v3423
  %4850 = vmatpush.bf16.msra.mxu0 %v3421
  %4851 = vmatpush.bf16.msra.mxu0 %v3419
  %4852 = vmatpush.bf16.msra.mxu0 %v3417
  %4853 = vmatpush.bf16.msra.mxu0 %v3415
  %4854 = vmatpush.bf16.msra.mxu0 %v3413
  %4855 = vmatpush.bf16.msra.mxu0 %v3411
  %4856 = vmatpush.bf16.msra.mxu0 %v3409
  %4857 = vmatmul.bf16.gmra.mxu0 %v817
  %v4858 = vpop.f32.mrf.mxu0
  %v4859 = vadd.f32 %v4846, %v4858
  %v4860 = vpop.f32.mrf.mxu0
  %4861 = vdwg.mxu0
  %4862 = vmatpush.bf16.msra.mxu0 %v3439
  %4863 = vmatpush.bf16.msra.mxu0 %v3437
  %4864 = vmatpush.bf16.msra.mxu0 %v3435
  %4865 = vmatpush.bf16.msra.mxu0 %v3433
  %4866 = vmatpush.bf16.msra.mxu0 %v3431
  %4867 = vmatpush.bf16.msra.mxu0 %v3429
  %4868 = vmatpush.bf16.msra.mxu0 %v3427
  %4869 = vmatpush.bf16.msra.mxu0 %v3425
  %4870 = vmatmul.bf16.gmra.mxu0 %v818
  %v4871 = vpop.f32.mrf.mxu0
  %v4872 = vadd.f32 %v4859, %v4871
  %v4873 = vpop.f32.mrf.mxu0
  %4874 = vdwg.mxu0
  %4875 = vmatpush.bf16.msra.mxu0 %v3455
  %4876 = vmatpush.bf16.msra.mxu0 %v3453
  %4877 = vmatpush.bf16.msra.mxu0 %v3451
  %4878 = vmatpush.bf16.msra.mxu0 %v3449
  %4879 = vmatpush.bf16.msra.mxu0 %v3447
  %4880 = vmatpush.bf16.msra.mxu0 %v3445
  %4881 = vmatpush.bf16.msra.mxu0 %v3443
  %4882 = vmatpush.bf16.msra.mxu0 %v3441
  %4883 = vmatmul.bf16.gmra.mxu0 %v819
  %v4884 = vpop.f32.mrf.mxu0
  %v4885 = vadd.f32 %v4872, %v4884
  %v4886 = vpop.f32.mrf.mxu0
  %4887 = vdwg.mxu0
  %4888 = vmatpush.bf16.msra.mxu0 %v3471
  %4889 = vmatpush.bf16.msra.mxu0 %v3469
  %4890 = vmatpush.bf16.msra.mxu0 %v3467
  %4891 = vmatpush.bf16.msra.mxu0 %v3465
  %4892 = vmatpush.bf16.msra.mxu0 %v3463
  %4893 = vmatpush.bf16.msra.mxu0 %v3461
  %4894 = vmatpush.bf16.msra.mxu0 %v3459
  %4895 = vmatpush.bf16.msra.mxu0 %v3457
  %4896 = vmatmul.bf16.gmra.mxu0 %v820
  %v4897 = vpop.f32.mrf.mxu0
  %v4898 = vadd.f32 %v4885, %v4897
  %v4899 = vpop.f32.mrf.mxu0
  %4900 = vdwg.mxu0
  %4901 = vmatpush.bf16.msra.mxu0 %v3487
  %4902 = vmatpush.bf16.msra.mxu0 %v3485
  %4903 = vmatpush.bf16.msra.mxu0 %v3483
  %4904 = vmatpush.bf16.msra.mxu0 %v3481
  %4905 = vmatpush.bf16.msra.mxu0 %v3479
  %4906 = vmatpush.bf16.msra.mxu0 %v3477
  %4907 = vmatpush.bf16.msra.mxu0 %v3475
  %4908 = vmatpush.bf16.msra.mxu0 %v3473
  %4909 = vmatmul.bf16.gmra.mxu0 %v821
  %v4910 = vpop.f32.mrf.mxu0
  %v4911 = vadd.f32 %v4898, %v4910
  %v4912 = vpop.f32.mrf.mxu0
  %4913 = vdwg.mxu0
  %4914 = vmatpush.bf16.msra.mxu0 %v3503
  %4915 = vmatpush.bf16.msra.mxu0 %v3501
  %4916 = vmatpush.bf16.msra.mxu0 %v3499
  %4917 = vmatpush.bf16.msra.mxu0 %v3497
  %4918 = vmatpush.bf16.msra.mxu0 %v3495
  %4919 = vmatpush.bf16.msra.mxu0 %v3493
  %4920 = vmatpush.bf16.msra.mxu0 %v3491
  %4921 = vmatpush.bf16.msra.mxu0 %v3489
  %4922 = vmatmul.bf16.gmra.mxu0 %v822
  %v4923 = vpop.f32.mrf.mxu0
  %v4924 = vadd.f32 %v4911, %v4923
  %v4925 = vpop.f32.mrf.mxu0
  %4926 = vdwg.mxu0
  %4927 = vmatpush.bf16.msra.mxu0 %v3519
  %4928 = vmatpush.bf16.msra.mxu0 %v3517
  %4929 = vmatpush.bf16.msra.mxu0 %v3515
  %4930 = vmatpush.bf16.msra.mxu0 %v3513
  %4931 = vmatpush.bf16.msra.mxu0 %v3511
  %4932 = vmatpush.bf16.msra.mxu0 %v3509
  %4933 = vmatpush.bf16.msra.mxu0 %v3507
  %4934 = vmatpush.bf16.msra.mxu0 %v3505
  %4935 = vmatmul.bf16.gmra.mxu0 %v823
  %v4936 = vpop.f32.mrf.mxu0
  %v4937 = vadd.f32 %v4924, %v4936
  %v4938 = vpop.f32.mrf.mxu0
  %4939 = vdwg.mxu0
  %4940 = vmatpush.bf16.msra.mxu0 %v3535
  %4941 = vmatpush.bf16.msra.mxu0 %v3533
  %4942 = vmatpush.bf16.msra.mxu0 %v3531
  %4943 = vmatpush.bf16.msra.mxu0 %v3529
  %4944 = vmatpush.bf16.msra.mxu0 %v3527
  %4945 = vmatpush.bf16.msra.mxu0 %v3525
  %4946 = vmatpush.bf16.msra.mxu0 %v3523
  %4947 = vmatpush.bf16.msra.mxu0 %v3521
  %4948 = vmatmul.bf16.gmra.mxu0 %v828
  %v4949 = vpop.f32.mrf.mxu0
  %v4950 = vadd.f32 %v4937, %v4949
  %v4951 = vpop.f32.mrf.mxu0
  %4952 = vdwg.mxu0
  %4953 = vmatpush.bf16.msra.mxu0 %v3551
  %4954 = vmatpush.bf16.msra.mxu0 %v3549
  %4955 = vmatpush.bf16.msra.mxu0 %v3547
  %4956 = vmatpush.bf16.msra.mxu0 %v3545
  %4957 = vmatpush.bf16.msra.mxu0 %v3543
  %4958 = vmatpush.bf16.msra.mxu0 %v3541
  %4959 = vmatpush.bf16.msra.mxu0 %v3539
  %4960 = vmatpush.bf16.msra.mxu0 %v3537
  %4961 = vmatmul.bf16.gmra.mxu0 %v829
  %v4962 = vpop.f32.mrf.mxu0
  %v4963 = vadd.f32 %v4950, %v4962
  %v4964 = vpop.f32.mrf.mxu0
  %4965 = vdwg.mxu0
  %4966 = vmatpush.bf16.msra.mxu0 %v3567
  %4967 = vmatpush.bf16.msra.mxu0 %v3565
  %4968 = vmatpush.bf16.msra.mxu0 %v3563
  %4969 = vmatpush.bf16.msra.mxu0 %v3561
  %4970 = vmatpush.bf16.msra.mxu0 %v3559
  %4971 = vmatpush.bf16.msra.mxu0 %v3557
  %4972 = vmatpush.bf16.msra.mxu0 %v3555
  %4973 = vmatpush.bf16.msra.mxu0 %v3553
  %4974 = vmatmul.bf16.gmra.mxu0 %v830
  %v4975 = vpop.f32.mrf.mxu0
  %v4976 = vadd.f32 %v4963, %v4975
  %v4977 = vpop.f32.mrf.mxu0
  %4978 = vdwg.mxu0
  %4979 = vmatpush.bf16.msra.mxu0 %v3583
  %4980 = vmatpush.bf16.msra.mxu0 %v3581
  %4981 = vmatpush.bf16.msra.mxu0 %v3579
  %4982 = vmatpush.bf16.msra.mxu0 %v3577
  %4983 = vmatpush.bf16.msra.mxu0 %v3575
  %4984 = vmatpush.bf16.msra.mxu0 %v3573
  %4985 = vmatpush.bf16.msra.mxu0 %v3571
  %4986 = vmatpush.bf16.msra.mxu0 %v3569
  %4987 = vmatmul.bf16.gmra.mxu0 %v831
  %v4988 = vpop.f32.mrf.mxu0
  %v4989 = vadd.f32 %v4976, %v4988
  %v4990 = vpop.f32.mrf.mxu0
  %4991 = vdwg.mxu0
  %4992 = vmatpush.bf16.msra.mxu0 %v3599
  %4993 = vmatpush.bf16.msra.mxu0 %v3597
  %4994 = vmatpush.bf16.msra.mxu0 %v3595
  %4995 = vmatpush.bf16.msra.mxu0 %v3593
  %4996 = vmatpush.bf16.msra.mxu0 %v3591
  %4997 = vmatpush.bf16.msra.mxu0 %v3589
  %4998 = vmatpush.bf16.msra.mxu0 %v3587
  %4999 = vmatpush.bf16.msra.mxu0 %v3585
  %5000 = vmatmul.bf16.gmra.mxu0 %v832
  %v5001 = vpop.f32.mrf.mxu0
  %v5002 = vadd.f32 %v4989, %v5001
  %v5003 = vpop.f32.mrf.mxu0
  %5004 = vdwg.mxu0
  %5005 = vmatpush.bf16.msra.mxu0 %v3615
  %5006 = vmatpush.bf16.msra.mxu0 %v3613
  %5007 = vmatpush.bf16.msra.mxu0 %v3611
  %5008 = vmatpush.bf16.msra.mxu0 %v3609
  %5009 = vmatpush.bf16.msra.mxu0 %v3607
  %5010 = vmatpush.bf16.msra.mxu0 %v3605
  %5011 = vmatpush.bf16.msra.mxu0 %v3603
  %5012 = vmatpush.bf16.msra.mxu0 %v3601
  %5013 = vmatmul.bf16.gmra.mxu0 %v833
  %v5014 = vpop.f32.mrf.mxu0
  %v5015 = vadd.f32 %v5002, %v5014
  %v5016 = vpop.f32.mrf.mxu0
  %5017 = vdwg.mxu0
  %5018 = vmatpush.bf16.msra.mxu0 %v3631
  %5019 = vmatpush.bf16.msra.mxu0 %v3629
  %5020 = vmatpush.bf16.msra.mxu0 %v3627
  %5021 = vmatpush.bf16.msra.mxu0 %v3625
  %5022 = vmatpush.bf16.msra.mxu0 %v3623
  %5023 = vmatpush.bf16.msra.mxu0 %v3621
  %5024 = vmatpush.bf16.msra.mxu0 %v3619
  %5025 = vmatpush.bf16.msra.mxu0 %v3617
  %5026 = vmatmul.bf16.gmra.mxu0 %v834
  %v5027 = vpop.f32.mrf.mxu0
  %v5028 = vadd.f32 %v5015, %v5027
  %v5029 = vpop.f32.mrf.mxu0
  %5030 = vdwg.mxu0
  %5031 = vmatpush.bf16.msra.mxu0 %v3647
  %5032 = vmatpush.bf16.msra.mxu0 %v3645
  %5033 = vmatpush.bf16.msra.mxu0 %v3643
  %5034 = vmatpush.bf16.msra.mxu0 %v3641
  %5035 = vmatpush.bf16.msra.mxu0 %v3639
  %5036 = vmatpush.bf16.msra.mxu0 %v3637
  %5037 = vmatpush.bf16.msra.mxu0 %v3635
  %5038 = vmatpush.bf16.msra.mxu0 %v3633
  %5039 = vmatmul.bf16.gmra.mxu0 %v835
  %v5040 = vpop.f32.mrf.mxu0
  %v5041 = vadd.f32 %v5028, %v5040
  %v5042 = vpop.f32.mrf.mxu0
  %5043 = vdwg.mxu0
  %5044 = vmatpush.bf16.msra.mxu0 %v3663
  %5045 = vmatpush.bf16.msra.mxu0 %v3661
  %5046 = vmatpush.bf16.msra.mxu0 %v3659
  %5047 = vmatpush.bf16.msra.mxu0 %v3657
  %5048 = vmatpush.bf16.msra.mxu0 %v3655
  %5049 = vmatpush.bf16.msra.mxu0 %v3653
  %5050 = vmatpush.bf16.msra.mxu0 %v3651
  %5051 = vmatpush.bf16.msra.mxu0 %v3649
  %5052 = vmatmul.bf16.gmra.mxu0 %v840
  %v5053 = vpop.f32.mrf.mxu0
  %v5054 = vadd.f32 %v5041, %v5053
  %v5055 = vpop.f32.mrf.mxu0
  %5056 = vdwg.mxu0
  %5057 = vmatpush.bf16.msra.mxu0 %v3679
  %5058 = vmatpush.bf16.msra.mxu0 %v3677
  %5059 = vmatpush.bf16.msra.mxu0 %v3675
  %5060 = vmatpush.bf16.msra.mxu0 %v3673
  %5061 = vmatpush.bf16.msra.mxu0 %v3671
  %5062 = vmatpush.bf16.msra.mxu0 %v3669
  %5063 = vmatpush.bf16.msra.mxu0 %v3667
  %5064 = vmatpush.bf16.msra.mxu0 %v3665
  %5065 = vmatmul.bf16.gmra.mxu0 %v841
  %v5066 = vpop.f32.mrf.mxu0
  %v5067 = vadd.f32 %v5054, %v5066
  %v5068 = vpop.f32.mrf.mxu0
  %5069 = vdwg.mxu0
  %5070 = vmatpush.bf16.msra.mxu0 %v3695
  %5071 = vmatpush.bf16.msra.mxu0 %v3693
  %5072 = vmatpush.bf16.msra.mxu0 %v3691
  %5073 = vmatpush.bf16.msra.mxu0 %v3689
  %5074 = vmatpush.bf16.msra.mxu0 %v3687
  %5075 = vmatpush.bf16.msra.mxu0 %v3685
  %5076 = vmatpush.bf16.msra.mxu0 %v3683
  %5077 = vmatpush.bf16.msra.mxu0 %v3681
  %5078 = vmatmul.bf16.gmra.mxu0 %v842
  %v5079 = vpop.f32.mrf.mxu0
  %v5080 = vadd.f32 %v5067, %v5079
  %v5081 = vpop.f32.mrf.mxu0
  %5082 = vdwg.mxu0
  %5083 = vmatpush.bf16.msra.mxu0 %v3711
  %5084 = vmatpush.bf16.msra.mxu0 %v3709
  %5085 = vmatpush.bf16.msra.mxu0 %v3707
  %5086 = vmatpush.bf16.msra.mxu0 %v3705
  %5087 = vmatpush.bf16.msra.mxu0 %v3703
  %5088 = vmatpush.bf16.msra.mxu0 %v3701
  %5089 = vmatpush.bf16.msra.mxu0 %v3699
  %5090 = vmatpush.bf16.msra.mxu0 %v3697
  %5091 = vmatmul.bf16.gmra.mxu0 %v843
  %v5092 = vpop.f32.mrf.mxu0
  %v5093 = vadd.f32 %v5080, %v5092
  %v5094 = vpop.f32.mrf.mxu0
  %5095 = vdwg.mxu0
  %5096 = vmatpush.bf16.msra.mxu0 %v3727
  %5097 = vmatpush.bf16.msra.mxu0 %v3725
  %5098 = vmatpush.bf16.msra.mxu0 %v3723
  %5099 = vmatpush.bf16.msra.mxu0 %v3721
  %5100 = vmatpush.bf16.msra.mxu0 %v3719
  %5101 = vmatpush.bf16.msra.mxu0 %v3717
  %5102 = vmatpush.bf16.msra.mxu0 %v3715
  %5103 = vmatpush.bf16.msra.mxu0 %v3713
  %5104 = vmatmul.bf16.gmra.mxu0 %v844
  %v5105 = vpop.f32.mrf.mxu0
  %v5106 = vadd.f32 %v5093, %v5105
  %v5107 = vpop.f32.mrf.mxu0
  %5108 = vdwg.mxu0
  %5109 = vmatpush.bf16.msra.mxu0 %v3743
  %5110 = vmatpush.bf16.msra.mxu0 %v3741
  %5111 = vmatpush.bf16.msra.mxu0 %v3739
  %5112 = vmatpush.bf16.msra.mxu0 %v3737
  %5113 = vmatpush.bf16.msra.mxu0 %v3735
  %5114 = vmatpush.bf16.msra.mxu0 %v3733
  %5115 = vmatpush.bf16.msra.mxu0 %v3731
  %5116 = vmatpush.bf16.msra.mxu0 %v3729
  %5117 = vmatmul.bf16.gmra.mxu0 %v845
  %v5118 = vpop.f32.mrf.mxu0
  %v5119 = vadd.f32 %v5106, %v5118
  %v5120 = vpop.f32.mrf.mxu0
  %5121 = vdwg.mxu0
  %5122 = vmatpush.bf16.msra.mxu0 %v3759
  %5123 = vmatpush.bf16.msra.mxu0 %v3757
  %5124 = vmatpush.bf16.msra.mxu0 %v3755
  %5125 = vmatpush.bf16.msra.mxu0 %v3753
  %5126 = vmatpush.bf16.msra.mxu0 %v3751
  %5127 = vmatpush.bf16.msra.mxu0 %v3749
  %5128 = vmatpush.bf16.msra.mxu0 %v3747
  %5129 = vmatpush.bf16.msra.mxu0 %v3745
  %5130 = vmatmul.bf16.gmra.mxu0 %v846
  %v5131 = vpop.f32.mrf.mxu0
  %v5132 = vadd.f32 %v5119, %v5131
  %v5133 = vpop.f32.mrf.mxu0
  %5134 = vdwg.mxu0
  %5135 = vmatpush.bf16.msra.mxu0 %v3775
  %5136 = vmatpush.bf16.msra.mxu0 %v3773
  %5137 = vmatpush.bf16.msra.mxu0 %v3771
  %5138 = vmatpush.bf16.msra.mxu0 %v3769
  %5139 = vmatpush.bf16.msra.mxu0 %v3767
  %5140 = vmatpush.bf16.msra.mxu0 %v3765
  %5141 = vmatpush.bf16.msra.mxu0 %v3763
  %5142 = vmatpush.bf16.msra.mxu0 %v3761
  %5143 = vmatmul.bf16.gmra.mxu0 %v847
  %v5144 = vpop.f32.mrf.mxu0
  %v5145 = vadd.f32 %v5132, %v5144
  %v5146 = vpop.f32.mrf.mxu0
  %5147 = vdwg.mxu0
  %5148 = vmatpush.bf16.msra.mxu0 %v3791
  %5149 = vmatpush.bf16.msra.mxu0 %v3789
  %5150 = vmatpush.bf16.msra.mxu0 %v3787
  %5151 = vmatpush.bf16.msra.mxu0 %v3785
  %5152 = vmatpush.bf16.msra.mxu0 %v3783
  %5153 = vmatpush.bf16.msra.mxu0 %v3781
  %5154 = vmatpush.bf16.msra.mxu0 %v3779
  %5155 = vmatpush.bf16.msra.mxu0 %v3777
  %5156 = vmatmul.bf16.gmra.mxu0 %v852
  %v5157 = vpop.f32.mrf.mxu0
  %v5158 = vadd.f32 %v5145, %v5157
  %v5159 = vpop.f32.mrf.mxu0
  %5160 = vdwg.mxu0
  %5161 = vmatpush.bf16.msra.mxu0 %v3807
  %5162 = vmatpush.bf16.msra.mxu0 %v3805
  %5163 = vmatpush.bf16.msra.mxu0 %v3803
  %5164 = vmatpush.bf16.msra.mxu0 %v3801
  %5165 = vmatpush.bf16.msra.mxu0 %v3799
  %5166 = vmatpush.bf16.msra.mxu0 %v3797
  %5167 = vmatpush.bf16.msra.mxu0 %v3795
  %5168 = vmatpush.bf16.msra.mxu0 %v3793
  %5169 = vmatmul.bf16.gmra.mxu0 %v853
  %v5170 = vpop.f32.mrf.mxu0
  %v5171 = vadd.f32 %v5158, %v5170
  %v5172 = vpop.f32.mrf.mxu0
  %5173 = vdwg.mxu0
  %5174 = vmatpush.bf16.msra.mxu0 %v3823
  %5175 = vmatpush.bf16.msra.mxu0 %v3821
  %5176 = vmatpush.bf16.msra.mxu0 %v3819
  %5177 = vmatpush.bf16.msra.mxu0 %v3817
  %5178 = vmatpush.bf16.msra.mxu0 %v3815
  %5179 = vmatpush.bf16.msra.mxu0 %v3813
  %5180 = vmatpush.bf16.msra.mxu0 %v3811
  %5181 = vmatpush.bf16.msra.mxu0 %v3809
  %5182 = vmatmul.bf16.gmra.mxu0 %v854
  %v5183 = vpop.f32.mrf.mxu0
  %v5184 = vadd.f32 %v5171, %v5183
  %v5185 = vpop.f32.mrf.mxu0
  %5186 = vdwg.mxu0
  %5187 = vmatpush.bf16.msra.mxu0 %v3839
  %5188 = vmatpush.bf16.msra.mxu0 %v3837
  %5189 = vmatpush.bf16.msra.mxu0 %v3835
  %5190 = vmatpush.bf16.msra.mxu0 %v3833
  %5191 = vmatpush.bf16.msra.mxu0 %v3831
  %5192 = vmatpush.bf16.msra.mxu0 %v3829
  %5193 = vmatpush.bf16.msra.mxu0 %v3827
  %5194 = vmatpush.bf16.msra.mxu0 %v3825
  %5195 = vmatmul.bf16.gmra.mxu0 %v855
  %v5196 = vpop.f32.mrf.mxu0
  %v5197 = vadd.f32 %v5184, %v5196
  %v5198 = vpop.f32.mrf.mxu0
  %5199 = vdwg.mxu0
  %5200 = vmatpush.bf16.msra.mxu0 %v3855
  %5201 = vmatpush.bf16.msra.mxu0 %v3853
  %5202 = vmatpush.bf16.msra.mxu0 %v3851
  %5203 = vmatpush.bf16.msra.mxu0 %v3849
  %5204 = vmatpush.bf16.msra.mxu0 %v3847
  %5205 = vmatpush.bf16.msra.mxu0 %v3845
  %5206 = vmatpush.bf16.msra.mxu0 %v3843
  %5207 = vmatpush.bf16.msra.mxu0 %v3841
  %5208 = vmatmul.bf16.gmra.mxu0 %v856
  %v5209 = vpop.f32.mrf.mxu0
  %v5210 = vadd.f32 %v5197, %v5209
  %v5211 = vpop.f32.mrf.mxu0
  %5212 = vdwg.mxu0
  %5213 = vmatpush.bf16.msra.mxu0 %v3871
  %5214 = vmatpush.bf16.msra.mxu0 %v3869
  %5215 = vmatpush.bf16.msra.mxu0 %v3867
  %5216 = vmatpush.bf16.msra.mxu0 %v3865
  %5217 = vmatpush.bf16.msra.mxu0 %v3863
  %5218 = vmatpush.bf16.msra.mxu0 %v3861
  %5219 = vmatpush.bf16.msra.mxu0 %v3859
  %5220 = vmatpush.bf16.msra.mxu0 %v3857
  %5221 = vmatmul.bf16.gmra.mxu0 %v857
  %v5222 = vpop.f32.mrf.mxu0
  %v5223 = vadd.f32 %v5210, %v5222
  %v5224 = vpop.f32.mrf.mxu0
  %5225 = vdwg.mxu0
  %5226 = vmatpush.bf16.msra.mxu0 0
  %5227 = vmatpush.bf16.msra.mxu0 0
  %5228 = vmatpush.bf16.msra.mxu0 0
  %5229 = vmatpush.bf16.msra.mxu0 0
  %5230 = vmatpush.bf16.msra.mxu0 %v3879
  %5231 = vmatpush.bf16.msra.mxu0 %v3877
  %5232 = vmatpush.bf16.msra.mxu0 %v3875
  %5233 = vmatpush.bf16.msra.mxu0 %v3873
  %5234 = vmatmul.bf16.gmra.mxu0 %v4626
  %v5235 = vpop.f32.mrf.mxu0
  %v5236 = vadd.f32 %v5223, %v5235
  %v5237 = vpop.f32.mrf.mxu0
  %5238 = vdwg.mxu0
  %5239 = vmatpush.bf16.msra.mxu0 %v3152
  %5240 = vmatpush.bf16.msra.mxu0 %v3150
  %5241 = vmatpush.bf16.msra.mxu0 %v3148
  %5242 = vmatpush.bf16.msra.mxu0 %v3146
  %5243 = vmatpush.bf16.msra.mxu0 %v3144
  %5244 = vmatpush.bf16.msra.mxu0 %v3142
  %5245 = vmatpush.bf16.msra.mxu0 %v3140
  %5246 = vmatpush.bf16.msra.mxu0 %v3138
  %5247 = vmatmul.bf16.gmra.mxu0 %v792
  %v5248 = vpop.f32.mrf.mxu0
  %v5249 = vadd.f32 %v784, %v5248
  %v5250 = vpop.f32.mrf.mxu0
  %5251 = vdwg.mxu0
  %5252 = vmatpush.bf16.msra.mxu0 %v3168
  %5253 = vmatpush.bf16.msra.mxu0 %v3166
  %5254 = vmatpush.bf16.msra.mxu0 %v3164
  %5255 = vmatpush.bf16.msra.mxu0 %v3162
  %5256 = vmatpush.bf16.msra.mxu0 %v3160
  %5257 = vmatpush.bf16.msra.mxu0 %v3158
  %5258 = vmatpush.bf16.msra.mxu0 %v3156
  %5259 = vmatpush.bf16.msra.mxu0 %v3154
  %5260 = vmatmul.bf16.gmra.mxu0 %v793
  %v5261 = vpop.f32.mrf.mxu0
  %v5262 = vadd.f32 %v5249, %v5261
  %v5263 = vpop.f32.mrf.mxu0
  %5264 = vdwg.mxu0
  %5265 = vmatpush.bf16.msra.mxu0 %v3184
  %5266 = vmatpush.bf16.msra.mxu0 %v3182
  %5267 = vmatpush.bf16.msra.mxu0 %v3180
  %5268 = vmatpush.bf16.msra.mxu0 %v3178
  %5269 = vmatpush.bf16.msra.mxu0 %v3176
  %5270 = vmatpush.bf16.msra.mxu0 %v3174
  %5271 = vmatpush.bf16.msra.mxu0 %v3172
  %5272 = vmatpush.bf16.msra.mxu0 %v3170
  %5273 = vmatmul.bf16.gmra.mxu0 %v794
  %v5274 = vpop.f32.mrf.mxu0
  %v5275 = vadd.f32 %v5262, %v5274
  %v5276 = vpop.f32.mrf.mxu0
  %5277 = vdwg.mxu0
  %5278 = vmatpush.bf16.msra.mxu0 %v3200
  %5279 = vmatpush.bf16.msra.mxu0 %v3198
  %5280 = vmatpush.bf16.msra.mxu0 %v3196
  %5281 = vmatpush.bf16.msra.mxu0 %v3194
  %5282 = vmatpush.bf16.msra.mxu0 %v3192
  %5283 = vmatpush.bf16.msra.mxu0 %v3190
  %5284 = vmatpush.bf16.msra.mxu0 %v3188
  %5285 = vmatpush.bf16.msra.mxu0 %v3186
  %5286 = vmatmul.bf16.gmra.mxu0 %v795
  %v5287 = vpop.f32.mrf.mxu0
  %v5288 = vadd.f32 %v5275, %v5287
  %v5289 = vpop.f32.mrf.mxu0
  %5290 = vdwg.mxu0
  %5291 = vmatpush.bf16.msra.mxu0 %v3216
  %5292 = vmatpush.bf16.msra.mxu0 %v3214
  %5293 = vmatpush.bf16.msra.mxu0 %v3212
  %5294 = vmatpush.bf16.msra.mxu0 %v3210
  %5295 = vmatpush.bf16.msra.mxu0 %v3208
  %5296 = vmatpush.bf16.msra.mxu0 %v3206
  %5297 = vmatpush.bf16.msra.mxu0 %v3204
  %5298 = vmatpush.bf16.msra.mxu0 %v3202
  %5299 = vmatmul.bf16.gmra.mxu0 %v796
  %v5300 = vpop.f32.mrf.mxu0
  %v5301 = vadd.f32 %v5288, %v5300
  %v5302 = vpop.f32.mrf.mxu0
  %5303 = vdwg.mxu0
  %5304 = vmatpush.bf16.msra.mxu0 %v3232
  %5305 = vmatpush.bf16.msra.mxu0 %v3230
  %5306 = vmatpush.bf16.msra.mxu0 %v3228
  %5307 = vmatpush.bf16.msra.mxu0 %v3226
  %5308 = vmatpush.bf16.msra.mxu0 %v3224
  %5309 = vmatpush.bf16.msra.mxu0 %v3222
  %5310 = vmatpush.bf16.msra.mxu0 %v3220
  %5311 = vmatpush.bf16.msra.mxu0 %v3218
  %5312 = vmatmul.bf16.gmra.mxu0 %v797
  %v5313 = vpop.f32.mrf.mxu0
  %v5314 = vadd.f32 %v5301, %v5313
  %v5315 = vpop.f32.mrf.mxu0
  %5316 = vdwg.mxu0
  %5317 = vmatpush.bf16.msra.mxu0 %v3248
  %5318 = vmatpush.bf16.msra.mxu0 %v3246
  %5319 = vmatpush.bf16.msra.mxu0 %v3244
  %5320 = vmatpush.bf16.msra.mxu0 %v3242
  %5321 = vmatpush.bf16.msra.mxu0 %v3240
  %5322 = vmatpush.bf16.msra.mxu0 %v3238
  %5323 = vmatpush.bf16.msra.mxu0 %v3236
  %5324 = vmatpush.bf16.msra.mxu0 %v3234
  %5325 = vmatmul.bf16.gmra.mxu0 %v798
  %v5326 = vpop.f32.mrf.mxu0
  %v5327 = vadd.f32 %v5314, %v5326
  %v5328 = vpop.f32.mrf.mxu0
  %5329 = vdwg.mxu0
  %5330 = vmatpush.bf16.msra.mxu0 %v3264
  %5331 = vmatpush.bf16.msra.mxu0 %v3262
  %5332 = vmatpush.bf16.msra.mxu0 %v3260
  %5333 = vmatpush.bf16.msra.mxu0 %v3258
  %5334 = vmatpush.bf16.msra.mxu0 %v3256
  %5335 = vmatpush.bf16.msra.mxu0 %v3254
  %5336 = vmatpush.bf16.msra.mxu0 %v3252
  %5337 = vmatpush.bf16.msra.mxu0 %v3250
  %5338 = vmatmul.bf16.gmra.mxu0 %v799
  %v5339 = vpop.f32.mrf.mxu0
  %v5340 = vadd.f32 %v5327, %v5339
  %v5341 = vpop.f32.mrf.mxu0
  %5342 = vdwg.mxu0
  %5343 = vmatpush.bf16.msra.mxu0 %v3280
  %5344 = vmatpush.bf16.msra.mxu0 %v3278
  %5345 = vmatpush.bf16.msra.mxu0 %v3276
  %5346 = vmatpush.bf16.msra.mxu0 %v3274
  %5347 = vmatpush.bf16.msra.mxu0 %v3272
  %5348 = vmatpush.bf16.msra.mxu0 %v3270
  %5349 = vmatpush.bf16.msra.mxu0 %v3268
  %5350 = vmatpush.bf16.msra.mxu0 %v3266
  %5351 = vmatmul.bf16.gmra.mxu0 %v804
  %v5352 = vpop.f32.mrf.mxu0
  %v5353 = vadd.f32 %v5340, %v5352
  %v5354 = vpop.f32.mrf.mxu0
  %5355 = vdwg.mxu0
  %5356 = vmatpush.bf16.msra.mxu0 %v3296
  %5357 = vmatpush.bf16.msra.mxu0 %v3294
  %5358 = vmatpush.bf16.msra.mxu0 %v3292
  %5359 = vmatpush.bf16.msra.mxu0 %v3290
  %5360 = vmatpush.bf16.msra.mxu0 %v3288
  %5361 = vmatpush.bf16.msra.mxu0 %v3286
  %5362 = vmatpush.bf16.msra.mxu0 %v3284
  %5363 = vmatpush.bf16.msra.mxu0 %v3282
  %5364 = vmatmul.bf16.gmra.mxu0 %v805
  %v5365 = vpop.f32.mrf.mxu0
  %v5366 = vadd.f32 %v5353, %v5365
  %v5367 = vpop.f32.mrf.mxu0
  %5368 = vdwg.mxu0
  %5369 = vmatpush.bf16.msra.mxu0 %v3312
  %5370 = vmatpush.bf16.msra.mxu0 %v3310
  %5371 = vmatpush.bf16.msra.mxu0 %v3308
  %5372 = vmatpush.bf16.msra.mxu0 %v3306
  %5373 = vmatpush.bf16.msra.mxu0 %v3304
  %5374 = vmatpush.bf16.msra.mxu0 %v3302
  %5375 = vmatpush.bf16.msra.mxu0 %v3300
  %5376 = vmatpush.bf16.msra.mxu0 %v3298
  %5377 = vmatmul.bf16.gmra.mxu0 %v806
  %v5378 = vpop.f32.mrf.mxu0
  %v5379 = vadd.f32 %v5366, %v5378
  %v5380 = vpop.f32.mrf.mxu0
  %5381 = vdwg.mxu0
  %5382 = vmatpush.bf16.msra.mxu0 %v3328
  %5383 = vmatpush.bf16.msra.mxu0 %v3326
  %5384 = vmatpush.bf16.msra.mxu0 %v3324
  %5385 = vmatpush.bf16.msra.mxu0 %v3322
  %5386 = vmatpush.bf16.msra.mxu0 %v3320
  %5387 = vmatpush.bf16.msra.mxu0 %v3318
  %5388 = vmatpush.bf16.msra.mxu0 %v3316
  %5389 = vmatpush.bf16.msra.mxu0 %v3314
  %5390 = vmatmul.bf16.gmra.mxu0 %v807
  %v5391 = vpop.f32.mrf.mxu0
  %v5392 = vadd.f32 %v5379, %v5391
  %v5393 = vpop.f32.mrf.mxu0
  %5394 = vdwg.mxu0
  %5395 = vmatpush.bf16.msra.mxu0 %v3344
  %5396 = vmatpush.bf16.msra.mxu0 %v3342
  %5397 = vmatpush.bf16.msra.mxu0 %v3340
  %5398 = vmatpush.bf16.msra.mxu0 %v3338
  %5399 = vmatpush.bf16.msra.mxu0 %v3336
  %5400 = vmatpush.bf16.msra.mxu0 %v3334
  %5401 = vmatpush.bf16.msra.mxu0 %v3332
  %5402 = vmatpush.bf16.msra.mxu0 %v3330
  %5403 = vmatmul.bf16.gmra.mxu0 %v808
  %v5404 = vpop.f32.mrf.mxu0
  %v5405 = vadd.f32 %v5392, %v5404
  %v5406 = vpop.f32.mrf.mxu0
  %5407 = vdwg.mxu0
  %5408 = vmatpush.bf16.msra.mxu0 %v3360
  %5409 = vmatpush.bf16.msra.mxu0 %v3358
  %5410 = vmatpush.bf16.msra.mxu0 %v3356
  %5411 = vmatpush.bf16.msra.mxu0 %v3354
  %5412 = vmatpush.bf16.msra.mxu0 %v3352
  %5413 = vmatpush.bf16.msra.mxu0 %v3350
  %5414 = vmatpush.bf16.msra.mxu0 %v3348
  %5415 = vmatpush.bf16.msra.mxu0 %v3346
  %5416 = vmatmul.bf16.gmra.mxu0 %v809
  %v5417 = vpop.f32.mrf.mxu0
  %v5418 = vadd.f32 %v5405, %v5417
  %v5419 = vpop.f32.mrf.mxu0
  %5420 = vdwg.mxu0
  %5421 = vmatpush.bf16.msra.mxu0 %v3376
  %5422 = vmatpush.bf16.msra.mxu0 %v3374
  %5423 = vmatpush.bf16.msra.mxu0 %v3372
  %5424 = vmatpush.bf16.msra.mxu0 %v3370
  %5425 = vmatpush.bf16.msra.mxu0 %v3368
  %5426 = vmatpush.bf16.msra.mxu0 %v3366
  %5427 = vmatpush.bf16.msra.mxu0 %v3364
  %5428 = vmatpush.bf16.msra.mxu0 %v3362
  %5429 = vmatmul.bf16.gmra.mxu0 %v810
  %v5430 = vpop.f32.mrf.mxu0
  %v5431 = vadd.f32 %v5418, %v5430
  %v5432 = vpop.f32.mrf.mxu0
  %5433 = vdwg.mxu0
  %5434 = vmatpush.bf16.msra.mxu0 %v3392
  %5435 = vmatpush.bf16.msra.mxu0 %v3390
  %5436 = vmatpush.bf16.msra.mxu0 %v3388
  %5437 = vmatpush.bf16.msra.mxu0 %v3386
  %5438 = vmatpush.bf16.msra.mxu0 %v3384
  %5439 = vmatpush.bf16.msra.mxu0 %v3382
  %5440 = vmatpush.bf16.msra.mxu0 %v3380
  %5441 = vmatpush.bf16.msra.mxu0 %v3378
  %5442 = vmatmul.bf16.gmra.mxu0 %v811
  %v5443 = vpop.f32.mrf.mxu0
  %v5444 = vadd.f32 %v5431, %v5443
  %v5445 = vpop.f32.mrf.mxu0
  %5446 = vdwg.mxu0
  %5447 = vmatpush.bf16.msra.mxu0 %v3408
  %5448 = vmatpush.bf16.msra.mxu0 %v3406
  %5449 = vmatpush.bf16.msra.mxu0 %v3404
  %5450 = vmatpush.bf16.msra.mxu0 %v3402
  %5451 = vmatpush.bf16.msra.mxu0 %v3400
  %5452 = vmatpush.bf16.msra.mxu0 %v3398
  %5453 = vmatpush.bf16.msra.mxu0 %v3396
  %5454 = vmatpush.bf16.msra.mxu0 %v3394
  %5455 = vmatmul.bf16.gmra.mxu0 %v816
  %v5456 = vpop.f32.mrf.mxu0
  %v5457 = vadd.f32 %v5444, %v5456
  %v5458 = vpop.f32.mrf.mxu0
  %5459 = vdwg.mxu0
  %5460 = vmatpush.bf16.msra.mxu0 %v3424
  %5461 = vmatpush.bf16.msra.mxu0 %v3422
  %5462 = vmatpush.bf16.msra.mxu0 %v3420
  %5463 = vmatpush.bf16.msra.mxu0 %v3418
  %5464 = vmatpush.bf16.msra.mxu0 %v3416
  %5465 = vmatpush.bf16.msra.mxu0 %v3414
  %5466 = vmatpush.bf16.msra.mxu0 %v3412
  %5467 = vmatpush.bf16.msra.mxu0 %v3410
  %5468 = vmatmul.bf16.gmra.mxu0 %v817
  %v5469 = vpop.f32.mrf.mxu0
  %v5470 = vadd.f32 %v5457, %v5469
  %v5471 = vpop.f32.mrf.mxu0
  %5472 = vdwg.mxu0
  %5473 = vmatpush.bf16.msra.mxu0 %v3440
  %5474 = vmatpush.bf16.msra.mxu0 %v3438
  %5475 = vmatpush.bf16.msra.mxu0 %v3436
  %5476 = vmatpush.bf16.msra.mxu0 %v3434
  %5477 = vmatpush.bf16.msra.mxu0 %v3432
  %5478 = vmatpush.bf16.msra.mxu0 %v3430
  %5479 = vmatpush.bf16.msra.mxu0 %v3428
  %5480 = vmatpush.bf16.msra.mxu0 %v3426
  %5481 = vmatmul.bf16.gmra.mxu0 %v818
  %v5482 = vpop.f32.mrf.mxu0
  %v5483 = vadd.f32 %v5470, %v5482
  %v5484 = vpop.f32.mrf.mxu0
  %5485 = vdwg.mxu0
  %5486 = vmatpush.bf16.msra.mxu0 %v3456
  %5487 = vmatpush.bf16.msra.mxu0 %v3454
  %5488 = vmatpush.bf16.msra.mxu0 %v3452
  %5489 = vmatpush.bf16.msra.mxu0 %v3450
  %5490 = vmatpush.bf16.msra.mxu0 %v3448
  %5491 = vmatpush.bf16.msra.mxu0 %v3446
  %5492 = vmatpush.bf16.msra.mxu0 %v3444
  %5493 = vmatpush.bf16.msra.mxu0 %v3442
  %5494 = vmatmul.bf16.gmra.mxu0 %v819
  %v5495 = vpop.f32.mrf.mxu0
  %v5496 = vadd.f32 %v5483, %v5495
  %v5497 = vpop.f32.mrf.mxu0
  %5498 = vdwg.mxu0
  %5499 = vmatpush.bf16.msra.mxu0 %v3472
  %5500 = vmatpush.bf16.msra.mxu0 %v3470
  %5501 = vmatpush.bf16.msra.mxu0 %v3468
  %5502 = vmatpush.bf16.msra.mxu0 %v3466
  %5503 = vmatpush.bf16.msra.mxu0 %v3464
  %5504 = vmatpush.bf16.msra.mxu0 %v3462
  %5505 = vmatpush.bf16.msra.mxu0 %v3460
  %5506 = vmatpush.bf16.msra.mxu0 %v3458
  %5507 = vmatmul.bf16.gmra.mxu0 %v820
  %v5508 = vpop.f32.mrf.mxu0
  %v5509 = vadd.f32 %v5496, %v5508
  %v5510 = vpop.f32.mrf.mxu0
  %5511 = vdwg.mxu0
  %5512 = vmatpush.bf16.msra.mxu0 %v3488
  %5513 = vmatpush.bf16.msra.mxu0 %v3486
  %5514 = vmatpush.bf16.msra.mxu0 %v3484
  %5515 = vmatpush.bf16.msra.mxu0 %v3482
  %5516 = vmatpush.bf16.msra.mxu0 %v3480
  %5517 = vmatpush.bf16.msra.mxu0 %v3478
  %5518 = vmatpush.bf16.msra.mxu0 %v3476
  %5519 = vmatpush.bf16.msra.mxu0 %v3474
  %5520 = vmatmul.bf16.gmra.mxu0 %v821
  %v5521 = vpop.f32.mrf.mxu0
  %v5522 = vadd.f32 %v5509, %v5521
  %v5523 = vpop.f32.mrf.mxu0
  %5524 = vdwg.mxu0
  %5525 = vmatpush.bf16.msra.mxu0 %v3504
  %5526 = vmatpush.bf16.msra.mxu0 %v3502
  %5527 = vmatpush.bf16.msra.mxu0 %v3500
  %5528 = vmatpush.bf16.msra.mxu0 %v3498
  %5529 = vmatpush.bf16.msra.mxu0 %v3496
  %5530 = vmatpush.bf16.msra.mxu0 %v3494
  %5531 = vmatpush.bf16.msra.mxu0 %v3492
  %5532 = vmatpush.bf16.msra.mxu0 %v3490
  %5533 = vmatmul.bf16.gmra.mxu0 %v822
  %v5534 = vpop.f32.mrf.mxu0
  %v5535 = vadd.f32 %v5522, %v5534
  %v5536 = vpop.f32.mrf.mxu0
  %5537 = vdwg.mxu0
  %5538 = vmatpush.bf16.msra.mxu0 %v3520
  %5539 = vmatpush.bf16.msra.mxu0 %v3518
  %5540 = vmatpush.bf16.msra.mxu0 %v3516
  %5541 = vmatpush.bf16.msra.mxu0 %v3514
  %5542 = vmatpush.bf16.msra.mxu0 %v3512
  %5543 = vmatpush.bf16.msra.mxu0 %v3510
  %5544 = vmatpush.bf16.msra.mxu0 %v3508
  %5545 = vmatpush.bf16.msra.mxu0 %v3506
  %5546 = vmatmul.bf16.gmra.mxu0 %v823
  %v5547 = vpop.f32.mrf.mxu0
  %v5548 = vadd.f32 %v5535, %v5547
  %v5549 = vpop.f32.mrf.mxu0
  %5550 = vdwg.mxu0
  %5551 = vmatpush.bf16.msra.mxu0 %v3536
  %5552 = vmatpush.bf16.msra.mxu0 %v3534
  %5553 = vmatpush.bf16.msra.mxu0 %v3532
  %5554 = vmatpush.bf16.msra.mxu0 %v3530
  %5555 = vmatpush.bf16.msra.mxu0 %v3528
  %5556 = vmatpush.bf16.msra.mxu0 %v3526
  %5557 = vmatpush.bf16.msra.mxu0 %v3524
  %5558 = vmatpush.bf16.msra.mxu0 %v3522
  %5559 = vmatmul.bf16.gmra.mxu0 %v828
  %v5560 = vpop.f32.mrf.mxu0
  %v5561 = vadd.f32 %v5548, %v5560
  %v5562 = vpop.f32.mrf.mxu0
  %5563 = vdwg.mxu0
  %5564 = vmatpush.bf16.msra.mxu0 %v3552
  %5565 = vmatpush.bf16.msra.mxu0 %v3550
  %5566 = vmatpush.bf16.msra.mxu0 %v3548
  %5567 = vmatpush.bf16.msra.mxu0 %v3546
  %5568 = vmatpush.bf16.msra.mxu0 %v3544
  %5569 = vmatpush.bf16.msra.mxu0 %v3542
  %5570 = vmatpush.bf16.msra.mxu0 %v3540
  %5571 = vmatpush.bf16.msra.mxu0 %v3538
  %5572 = vmatmul.bf16.gmra.mxu0 %v829
  %v5573 = vpop.f32.mrf.mxu0
  %v5574 = vadd.f32 %v5561, %v5573
  %v5575 = vpop.f32.mrf.mxu0
  %5576 = vdwg.mxu0
  %5577 = vmatpush.bf16.msra.mxu0 %v3568
  %5578 = vmatpush.bf16.msra.mxu0 %v3566
  %5579 = vmatpush.bf16.msra.mxu0 %v3564
  %5580 = vmatpush.bf16.msra.mxu0 %v3562
  %5581 = vmatpush.bf16.msra.mxu0 %v3560
  %5582 = vmatpush.bf16.msra.mxu0 %v3558
  %5583 = vmatpush.bf16.msra.mxu0 %v3556
  %5584 = vmatpush.bf16.msra.mxu0 %v3554
  %5585 = vmatmul.bf16.gmra.mxu0 %v830
  %v5586 = vpop.f32.mrf.mxu0
  %v5587 = vadd.f32 %v5574, %v5586
  %v5588 = vpop.f32.mrf.mxu0
  %5589 = vdwg.mxu0
  %5590 = vmatpush.bf16.msra.mxu0 %v3584
  %5591 = vmatpush.bf16.msra.mxu0 %v3582
  %5592 = vmatpush.bf16.msra.mxu0 %v3580
  %5593 = vmatpush.bf16.msra.mxu0 %v3578
  %5594 = vmatpush.bf16.msra.mxu0 %v3576
  %5595 = vmatpush.bf16.msra.mxu0 %v3574
  %5596 = vmatpush.bf16.msra.mxu0 %v3572
  %5597 = vmatpush.bf16.msra.mxu0 %v3570
  %5598 = vmatmul.bf16.gmra.mxu0 %v831
  %v5599 = vpop.f32.mrf.mxu0
  %v5600 = vadd.f32 %v5587, %v5599
  %v5601 = vpop.f32.mrf.mxu0
  %5602 = vdwg.mxu0
  %5603 = vmatpush.bf16.msra.mxu0 %v3600
  %5604 = vmatpush.bf16.msra.mxu0 %v3598
  %5605 = vmatpush.bf16.msra.mxu0 %v3596
  %5606 = vmatpush.bf16.msra.mxu0 %v3594
  %5607 = vmatpush.bf16.msra.mxu0 %v3592
  %5608 = vmatpush.bf16.msra.mxu0 %v3590
  %5609 = vmatpush.bf16.msra.mxu0 %v3588
  %5610 = vmatpush.bf16.msra.mxu0 %v3586
  %5611 = vmatmul.bf16.gmra.mxu0 %v832
  %v5612 = vpop.f32.mrf.mxu0
  %v5613 = vadd.f32 %v5600, %v5612
  %v5614 = vpop.f32.mrf.mxu0
  %5615 = vdwg.mxu0
  %5616 = vmatpush.bf16.msra.mxu0 %v3616
  %5617 = vmatpush.bf16.msra.mxu0 %v3614
  %5618 = vmatpush.bf16.msra.mxu0 %v3612
  %5619 = vmatpush.bf16.msra.mxu0 %v3610
  %5620 = vmatpush.bf16.msra.mxu0 %v3608
  %5621 = vmatpush.bf16.msra.mxu0 %v3606
  %5622 = vmatpush.bf16.msra.mxu0 %v3604
  %5623 = vmatpush.bf16.msra.mxu0 %v3602
  %5624 = vmatmul.bf16.gmra.mxu0 %v833
  %v5625 = vpop.f32.mrf.mxu0
  %v5626 = vadd.f32 %v5613, %v5625
  %v5627 = vpop.f32.mrf.mxu0
  %5628 = vdwg.mxu0
  %5629 = vmatpush.bf16.msra.mxu0 %v3632
  %5630 = vmatpush.bf16.msra.mxu0 %v3630
  %5631 = vmatpush.bf16.msra.mxu0 %v3628
  %5632 = vmatpush.bf16.msra.mxu0 %v3626
  %5633 = vmatpush.bf16.msra.mxu0 %v3624
  %5634 = vmatpush.bf16.msra.mxu0 %v3622
  %5635 = vmatpush.bf16.msra.mxu0 %v3620
  %5636 = vmatpush.bf16.msra.mxu0 %v3618
  %5637 = vmatmul.bf16.gmra.mxu0 %v834
  %v5638 = vpop.f32.mrf.mxu0
  %v5639 = vadd.f32 %v5626, %v5638
  %v5640 = vpop.f32.mrf.mxu0
  %5641 = vdwg.mxu0
  %5642 = vmatpush.bf16.msra.mxu0 %v3648
  %5643 = vmatpush.bf16.msra.mxu0 %v3646
  %5644 = vmatpush.bf16.msra.mxu0 %v3644
  %5645 = vmatpush.bf16.msra.mxu0 %v3642
  %5646 = vmatpush.bf16.msra.mxu0 %v3640
  %5647 = vmatpush.bf16.msra.mxu0 %v3638
  %5648 = vmatpush.bf16.msra.mxu0 %v3636
  %5649 = vmatpush.bf16.msra.mxu0 %v3634
  %5650 = vmatmul.bf16.gmra.mxu0 %v835
  %v5651 = vpop.f32.mrf.mxu0
  %v5652 = vadd.f32 %v5639, %v5651
  %v5653 = vpop.f32.mrf.mxu0
  %5654 = vdwg.mxu0
  %5655 = vmatpush.bf16.msra.mxu0 %v3664
  %5656 = vmatpush.bf16.msra.mxu0 %v3662
  %5657 = vmatpush.bf16.msra.mxu0 %v3660
  %5658 = vmatpush.bf16.msra.mxu0 %v3658
  %5659 = vmatpush.bf16.msra.mxu0 %v3656
  %5660 = vmatpush.bf16.msra.mxu0 %v3654
  %5661 = vmatpush.bf16.msra.mxu0 %v3652
  %5662 = vmatpush.bf16.msra.mxu0 %v3650
  %5663 = vmatmul.bf16.gmra.mxu0 %v840
  %v5664 = vpop.f32.mrf.mxu0
  %v5665 = vadd.f32 %v5652, %v5664
  %v5666 = vpop.f32.mrf.mxu0
  %5667 = vdwg.mxu0
  %5668 = vmatpush.bf16.msra.mxu0 %v3680
  %5669 = vmatpush.bf16.msra.mxu0 %v3678
  %5670 = vmatpush.bf16.msra.mxu0 %v3676
  %5671 = vmatpush.bf16.msra.mxu0 %v3674
  %5672 = vmatpush.bf16.msra.mxu0 %v3672
  %5673 = vmatpush.bf16.msra.mxu0 %v3670
  %5674 = vmatpush.bf16.msra.mxu0 %v3668
  %5675 = vmatpush.bf16.msra.mxu0 %v3666
  %5676 = vmatmul.bf16.gmra.mxu0 %v841
  %v5677 = vpop.f32.mrf.mxu0
  %v5678 = vadd.f32 %v5665, %v5677
  %v5679 = vpop.f32.mrf.mxu0
  %5680 = vdwg.mxu0
  %5681 = vmatpush.bf16.msra.mxu0 %v3696
  %5682 = vmatpush.bf16.msra.mxu0 %v3694
  %5683 = vmatpush.bf16.msra.mxu0 %v3692
  %5684 = vmatpush.bf16.msra.mxu0 %v3690
  %5685 = vmatpush.bf16.msra.mxu0 %v3688
  %5686 = vmatpush.bf16.msra.mxu0 %v3686
  %5687 = vmatpush.bf16.msra.mxu0 %v3684
  %5688 = vmatpush.bf16.msra.mxu0 %v3682
  %5689 = vmatmul.bf16.gmra.mxu0 %v842
  %v5690 = vpop.f32.mrf.mxu0
  %v5691 = vadd.f32 %v5678, %v5690
  %v5692 = vpop.f32.mrf.mxu0
  %5693 = vdwg.mxu0
  %5694 = vmatpush.bf16.msra.mxu0 %v3712
  %5695 = vmatpush.bf16.msra.mxu0 %v3710
  %5696 = vmatpush.bf16.msra.mxu0 %v3708
  %5697 = vmatpush.bf16.msra.mxu0 %v3706
  %5698 = vmatpush.bf16.msra.mxu0 %v3704
  %5699 = vmatpush.bf16.msra.mxu0 %v3702
  %5700 = vmatpush.bf16.msra.mxu0 %v3700
  %5701 = vmatpush.bf16.msra.mxu0 %v3698
  %5702 = vmatmul.bf16.gmra.mxu0 %v843
  %v5703 = vpop.f32.mrf.mxu0
  %v5704 = vadd.f32 %v5691, %v5703
  %v5705 = vpop.f32.mrf.mxu0
  %5706 = vdwg.mxu0
  %5707 = vmatpush.bf16.msra.mxu0 %v3728
  %5708 = vmatpush.bf16.msra.mxu0 %v3726
  %5709 = vmatpush.bf16.msra.mxu0 %v3724
  %5710 = vmatpush.bf16.msra.mxu0 %v3722
  %5711 = vmatpush.bf16.msra.mxu0 %v3720
  %5712 = vmatpush.bf16.msra.mxu0 %v3718
  %5713 = vmatpush.bf16.msra.mxu0 %v3716
  %5714 = vmatpush.bf16.msra.mxu0 %v3714
  %5715 = vmatmul.bf16.gmra.mxu0 %v844
  %v5716 = vpop.f32.mrf.mxu0
  %v5717 = vadd.f32 %v5704, %v5716
  %v5718 = vpop.f32.mrf.mxu0
  %5719 = vdwg.mxu0
  %5720 = vmatpush.bf16.msra.mxu0 %v3744
  %5721 = vmatpush.bf16.msra.mxu0 %v3742
  %5722 = vmatpush.bf16.msra.mxu0 %v3740
  %5723 = vmatpush.bf16.msra.mxu0 %v3738
  %5724 = vmatpush.bf16.msra.mxu0 %v3736
  %5725 = vmatpush.bf16.msra.mxu0 %v3734
  %5726 = vmatpush.bf16.msra.mxu0 %v3732
  %5727 = vmatpush.bf16.msra.mxu0 %v3730
  %5728 = vmatmul.bf16.gmra.mxu0 %v845
  %v5729 = vpop.f32.mrf.mxu0
  %v5730 = vadd.f32 %v5717, %v5729
  %v5731 = vpop.f32.mrf.mxu0
  %5732 = vdwg.mxu0
  %5733 = vmatpush.bf16.msra.mxu0 %v3760
  %5734 = vmatpush.bf16.msra.mxu0 %v3758
  %5735 = vmatpush.bf16.msra.mxu0 %v3756
  %5736 = vmatpush.bf16.msra.mxu0 %v3754
  %5737 = vmatpush.bf16.msra.mxu0 %v3752
  %5738 = vmatpush.bf16.msra.mxu0 %v3750
  %5739 = vmatpush.bf16.msra.mxu0 %v3748
  %5740 = vmatpush.bf16.msra.mxu0 %v3746
  %5741 = vmatmul.bf16.gmra.mxu0 %v846
  %v5742 = vpop.f32.mrf.mxu0
  %v5743 = vadd.f32 %v5730, %v5742
  %v5744 = vpop.f32.mrf.mxu0
  %5745 = vdwg.mxu0
  %5746 = vmatpush.bf16.msra.mxu0 %v3776
  %5747 = vmatpush.bf16.msra.mxu0 %v3774
  %5748 = vmatpush.bf16.msra.mxu0 %v3772
  %5749 = vmatpush.bf16.msra.mxu0 %v3770
  %5750 = vmatpush.bf16.msra.mxu0 %v3768
  %5751 = vmatpush.bf16.msra.mxu0 %v3766
  %5752 = vmatpush.bf16.msra.mxu0 %v3764
  %5753 = vmatpush.bf16.msra.mxu0 %v3762
  %5754 = vmatmul.bf16.gmra.mxu0 %v847
  %v5755 = vpop.f32.mrf.mxu0
  %v5756 = vadd.f32 %v5743, %v5755
  %v5757 = vpop.f32.mrf.mxu0
  %5758 = vdwg.mxu0
  %5759 = vmatpush.bf16.msra.mxu0 %v3792
  %5760 = vmatpush.bf16.msra.mxu0 %v3790
  %5761 = vmatpush.bf16.msra.mxu0 %v3788
  %5762 = vmatpush.bf16.msra.mxu0 %v3786
  %5763 = vmatpush.bf16.msra.mxu0 %v3784
  %5764 = vmatpush.bf16.msra.mxu0 %v3782
  %5765 = vmatpush.bf16.msra.mxu0 %v3780
  %5766 = vmatpush.bf16.msra.mxu0 %v3778
  %5767 = vmatmul.bf16.gmra.mxu0 %v852
  %v5768 = vpop.f32.mrf.mxu0
  %v5769 = vadd.f32 %v5756, %v5768
  %v5770 = vpop.f32.mrf.mxu0
  %5771 = vdwg.mxu0
  %5772 = vmatpush.bf16.msra.mxu0 %v3808
  %5773 = vmatpush.bf16.msra.mxu0 %v3806
  %5774 = vmatpush.bf16.msra.mxu0 %v3804
  %5775 = vmatpush.bf16.msra.mxu0 %v3802
  %5776 = vmatpush.bf16.msra.mxu0 %v3800
  %5777 = vmatpush.bf16.msra.mxu0 %v3798
  %5778 = vmatpush.bf16.msra.mxu0 %v3796
  %5779 = vmatpush.bf16.msra.mxu0 %v3794
  %5780 = vmatmul.bf16.gmra.mxu0 %v853
  %v5781 = vpop.f32.mrf.mxu0
  %v5782 = vadd.f32 %v5769, %v5781
  %v5783 = vpop.f32.mrf.mxu0
  %5784 = vdwg.mxu0
  %5785 = vmatpush.bf16.msra.mxu0 %v3824
  %5786 = vmatpush.bf16.msra.mxu0 %v3822
  %5787 = vmatpush.bf16.msra.mxu0 %v3820
  %5788 = vmatpush.bf16.msra.mxu0 %v3818
  %5789 = vmatpush.bf16.msra.mxu0 %v3816
  %5790 = vmatpush.bf16.msra.mxu0 %v3814
  %5791 = vmatpush.bf16.msra.mxu0 %v3812
  %5792 = vmatpush.bf16.msra.mxu0 %v3810
  %5793 = vmatmul.bf16.gmra.mxu0 %v854
  %v5794 = vpop.f32.mrf.mxu0
  %v5795 = vadd.f32 %v5782, %v5794
  %v5796 = vpop.f32.mrf.mxu0
  %5797 = vdwg.mxu0
  %5798 = vmatpush.bf16.msra.mxu0 %v3840
  %5799 = vmatpush.bf16.msra.mxu0 %v3838
  %5800 = vmatpush.bf16.msra.mxu0 %v3836
  %5801 = vmatpush.bf16.msra.mxu0 %v3834
  %5802 = vmatpush.bf16.msra.mxu0 %v3832
  %5803 = vmatpush.bf16.msra.mxu0 %v3830
  %5804 = vmatpush.bf16.msra.mxu0 %v3828
  %5805 = vmatpush.bf16.msra.mxu0 %v3826
  %5806 = vmatmul.bf16.gmra.mxu0 %v855
  %v5807 = vpop.f32.mrf.mxu0
  %v5808 = vadd.f32 %v5795, %v5807
  %v5809 = vpop.f32.mrf.mxu0
  %5810 = vdwg.mxu0
  %5811 = vmatpush.bf16.msra.mxu0 %v3856
  %5812 = vmatpush.bf16.msra.mxu0 %v3854
  %5813 = vmatpush.bf16.msra.mxu0 %v3852
  %5814 = vmatpush.bf16.msra.mxu0 %v3850
  %5815 = vmatpush.bf16.msra.mxu0 %v3848
  %5816 = vmatpush.bf16.msra.mxu0 %v3846
  %5817 = vmatpush.bf16.msra.mxu0 %v3844
  %5818 = vmatpush.bf16.msra.mxu0 %v3842
  %5819 = vmatmul.bf16.gmra.mxu0 %v856
  %v5820 = vpop.f32.mrf.mxu0
  %v5821 = vadd.f32 %v5808, %v5820
  %v5822 = vpop.f32.mrf.mxu0
  %5823 = vdwg.mxu0
  %5824 = vmatpush.bf16.msra.mxu0 %v3872
  %5825 = vmatpush.bf16.msra.mxu0 %v3870
  %5826 = vmatpush.bf16.msra.mxu0 %v3868
  %5827 = vmatpush.bf16.msra.mxu0 %v3866
  %5828 = vmatpush.bf16.msra.mxu0 %v3864
  %5829 = vmatpush.bf16.msra.mxu0 %v3862
  %5830 = vmatpush.bf16.msra.mxu0 %v3860
  %5831 = vmatpush.bf16.msra.mxu0 %v3858
  %5832 = vmatmul.bf16.gmra.mxu0 %v857
  %v5833 = vpop.f32.mrf.mxu0
  %v5834 = vadd.f32 %v5821, %v5833
  %v5835 = vpop.f32.mrf.mxu0
  %5836 = vdwg.mxu0
  %5837 = vmatpush.bf16.msra.mxu0 0
  %5838 = vmatpush.bf16.msra.mxu0 0
  %5839 = vmatpush.bf16.msra.mxu0 0
  %5840 = vmatpush.bf16.msra.mxu0 0
  %5841 = vmatpush.bf16.msra.mxu0 %v3880
  %5842 = vmatpush.bf16.msra.mxu0 %v3878
  %5843 = vmatpush.bf16.msra.mxu0 %v3876
  %5844 = vmatpush.bf16.msra.mxu0 %v3874
  %5845 = vmatmul.bf16.gmra.mxu0 %v4626
  %v5846 = vpop.f32.mrf.mxu0
  %v5847 = vadd.f32 %v5834, %v5846
  %v5848 = vpop.f32.mrf.mxu0
  %5849 = vdwg.mxu0
  %s5850 = sld [smem:[#allocation2]]
  %v5851 = vmax.f32 %v5236, 0.0
  %v5852 = vmax.f32 %v5847, 0.0
  %v5853 = vmin.f32 %v5236, 0.0
  %v5854 = vmin.f32 %v5847, 0.0
  %v5855 = vstv %s5850
  %v5856 = vmul.f32 %v5855, %v5853
  %v5857 = vmul.f32 %v5855, %v5854
  %v5858 = vadd.f32 %v5851, %v5856
  %v5859 = vadd.f32 %v5852, %v5857
  %v5860 = vld [vmem:[%s4] sm:$0xff]
  %v5861 = vld [vmem:[%s4 + $0x8] sm:$0xff]
  %v5862 = vld [vmem:[%s4 + $0x10] sm:$0xff]
  %v5863 = vld [vmem:[%s4 + $0x18] sm:$0xff]
  %v5864 = vld [vmem:[%s4 + $0x20] sm:$0xff]
  %v5865 = vld [vmem:[%s4 + $0x28] sm:$0xff]
  %v5866 = vld [vmem:[%s4 + $0x30] sm:$0xff]
  %v5867 = vld [vmem:[%s4 + $0x38] sm:$0xff]
  %v5868 = vld [vmem:[%s4 + $0x40] sm:$0xff]
  %v5869 = vld [vmem:[%s4 + $0x48] sm:$0xff]
  %v5870 = vld [vmem:[%s4 + $0x50] sm:$0xff]
  %v5871 = vld [vmem:[%s4 + $0x58] sm:$0xff]
  %v5872 = vld [vmem:[%s4 + $0x60] sm:$0xff]
  %v5873 = vld [vmem:[%s4 + $0x68] sm:$0xff]
  %v5874 = vld [vmem:[%s4 + $0x70] sm:$0xff]
  %v5875 = vld [vmem:[%s4 + $0x78] sm:$0xff]
  %v5876 = vld [vmem:[%s4 + $0x80] sm:$0xff]
  %v5877 = vld [vmem:[%s4 + $0x88] sm:$0xff]
  %v5878 = vld [vmem:[%s4 + $0x90] sm:$0xff]
  %v5879 = vld [vmem:[%s4 + $0x98] sm:$0xff]
  %v5880 = vld [vmem:[%s4 + $0xa0] sm:$0xff]
  %v5881 = vld [vmem:[%s4 + $0xa8] sm:$0xff]
  %v5882 = vld [vmem:[%s4 + $0xb0] sm:$0xff]
  %v5883 = vld [vmem:[%s4 + $0xb8] sm:$0xff]
  %v5884 = vld [vmem:[%s4 + $0xc0] sm:$0xff]
  %v5885 = vld [vmem:[%s4 + $0xc8] sm:$0xff]
  %v5886 = vld [vmem:[%s4 + $0xd0] sm:$0xff]
  %v5887 = vld [vmem:[%s4 + $0xd8] sm:$0xff]
  %v5888 = vld [vmem:[%s4 + $0xe0] sm:$0xff]
  %v5889 = vld [vmem:[%s4 + $0xe8] sm:$0xff]
  %v5890 = vld [vmem:[%s4 + $0xf0] sm:$0xff]
  %v5891 = vld [vmem:[%s4 + $0xf8] sm:$0xff]
  %v5892 = vld [vmem:[%s5] sm:$0x1]
  %v5894 = vperm.slane %v5892, 0
  %5896 = vmatpush.msra.mxu0 %v5875
  %5897 = vmatpush.msra.mxu0 %v5874
  %5898 = vmatpush.msra.mxu0 %v5873
  %5899 = vmatpush.msra.mxu0 %v5872
  %5900 = vmatpush.msra.mxu0 %v5871
  %5901 = vmatpush.msra.mxu0 %v5870
  %5902 = vmatpush.msra.mxu0 %v5869
  %5903 = vmatpush.msra.mxu0 %v5868
  %5904 = vmatpush.msra.mxu0 %v5867
  %5905 = vmatpush.msra.mxu0 %v5866
  %5906 = vmatpush.msra.mxu0 %v5865
  %5907 = vmatpush.msra.mxu0 %v5864
  %5908 = vmatpush.msra.mxu0 %v5863
  %5909 = vmatpush.msra.mxu0 %v5862
  %5910 = vmatpush.msra.mxu0 %v5861
  %5911 = vmatpush.msra.mxu0 %v5860
  %5912 = vmatmul.f32.gmra.mxu0 %v5858
  %v5913 = vpop.f32.mrf.mxu0
  %v5914 = vadd.f32 %v5894, %v5913
  %5915 = vdwg.mxu0
  %5916 = vmatpush.msra.mxu0 %v5891
  %5917 = vmatpush.msra.mxu0 %v5890
  %5918 = vmatpush.msra.mxu0 %v5889
  %5919 = vmatpush.msra.mxu0 %v5888
  %5920 = vmatpush.msra.mxu0 %v5887
  %5921 = vmatpush.msra.mxu0 %v5886
  %5922 = vmatpush.msra.mxu0 %v5885
  %5923 = vmatpush.msra.mxu0 %v5884
  %5924 = vmatpush.msra.mxu0 %v5883
  %5925 = vmatpush.msra.mxu0 %v5882
  %5926 = vmatpush.msra.mxu0 %v5881
  %5927 = vmatpush.msra.mxu0 %v5880
  %5928 = vmatpush.msra.mxu0 %v5879
  %5929 = vmatpush.msra.mxu0 %v5878
  %5930 = vmatpush.msra.mxu0 %v5877
  %5931 = vmatpush.msra.mxu0 %v5876
  %5932 = vmatmul.f32.gmra.mxu0 %v5859
  %v5933 = vpop.f32.mrf.mxu0
  %v5934 = vadd.f32 %v5914, %v5933
  %5935 = vdwg.mxu0
  %vm5936 = vcmask 11264
  %5937 = vst.msk [vmem:[%s6] sm:$0xf] %vm5936, %v5934
  // Predicated region
  $region26: #{embedding_net_vggish_small.3} parent=0 // pred_check
    _
  $region27: #{embedding_net_vggish_small.3} parent=0 // pred_check_branch
    %5939 = sbr.rel (0) target = $region29
  $region28: #{embedding_net_vggish_small.3} parent=0 // pred_region
    _
  $region29: #{embedding_net_vggish_small.3} parent=0 // pred_fallthru
    _
  // Predicated region
  $region30: #{embedding_net_vggish_small.3} parent=0 // pred_check
    _
  $region31: #{embedding_net_vggish_small.3} parent=0 // pred_check_branch
    %5941 = sbr.rel (0) target = $region33
  $region32: #{embedding_net_vggish_small.3} parent=0 // pred_region
    _
  $region33: #{embedding_net_vggish_small.3} parent=0 // pred_fallthru
    _

</llo_original>
